<compile_context>
chip_gen: v5e
topology: v5e:2x2
jax: 0.10.0
libtpu: 0.0.40
codegen_flags: <defaults>
</compile_context>

<pallas_src>
import numpy as np
import jax
import jax.numpy as jnp
from jax.experimental import pallas as pl
from jax.experimental.pallas import tpu as pltpu

NUM_CLASSES = 10
N_MELS = 64
C = 128
ATT_C = 32
# eval-mode BatchNorm1d, running stats (mean=0, var=1), affine identity:
#   bn(x) = x / sqrt(1 + eps)
BN_SCALE = float((1.0 + 1e-5) ** -0.5)
# (kernel_size, dilation) of the five TDNN layers; receptive field = 30 + 1.
CONVS = ((5, 1), (5, 2), (7, 3), (1, 1), (1, 1))
RECEPTIVE = sum(d * (k - 1) for k, d in CONVS)   # 30
NEG_INF = -1e30                                  # additive softmax mask


def _make_kernel(bblk, T):
    """Kernel closure over static batch-block size and time length."""
    W = bblk * T                                  # constant lane width

    def kernel(x_ref, w1, w2, w3, w4, w5, wa1, wa2, fcw_ref,
               bias_ref, sel_ref, mask_ref, o_ref):
        bias = bias_ref[...]                      # (128, 8) f32
        conv_w = (w1, w2, w3, w4, w5)             # (K, C_out, C_in) bf16 each

        # ---- TDNN stack: bn(relu(conv(x))), bn scale pre-folded, dropout=id --
        # Full constant width W; invalid columns carry garbage that never
        # feeds a valid column and is masked at pooling.
        h = x_ref[...].astype(jnp.float32)        # (64, W)
        for li, (ksz, dil) in enumerate(CONVS):
            w_ref = conv_w[li]
            acc = jnp.dot(w_ref[0], h.astype(jnp.bfloat16),
                          preferred_element_type=jnp.float32)
            for k in range(1, ksz):               # tap k reads column t + k*dil
                shifted = pltpu.roll(h, W - k * dil, axis=1)   # == roll(h,-k*dil)
                acc = acc + jnp.dot(w_ref[k], shifted.astype(jnp.bfloat16),
                                    preferred_element_type=jnp.float32)
            h = jnp.maximum(acc + bias[:, li:li + 1], 0.0)     # (128, W) f32

        # ---- attention: conv1x1 -> relu -> bn -> conv1x1 -> softmax(time) ----
        h_bf = h.astype(jnp.bfloat16)
        a = jnp.dot(wa1[0], h_bf, preferred_element_type=jnp.float32)
        a = jnp.maximum(a + bias[:ATT_C, 5:6], 0.0)            # bn folded in wa1
        logits = jnp.dot(wa2[0], a.astype(jnp.bfloat16),
                         preferred_element_type=jnp.float32) + bias[:, 6:7]

        # ---- masked softmax + attentive stats pooling via selector matmuls ---
        logits = logits + mask_ref[...]           # (1,W): 0 valid / -1e30 invalid
        m = jnp.max(logits, axis=1, keepdims=True)             # (128, 1)
        e = jnp.exp(logits - m)                   # 0 exactly at invalid columns
        sel = sel_ref[...]                        # (W, bblk) block one-hot, f32
        he = h * e
        denom = jnp.dot(e, sel, preferred_element_type=jnp.float32)   # (128,bblk)
        mu_u = jnp.dot(he, sel, preferred_element_type=jnp.float32)
        x2_u = jnp.dot(he * h, sel, preferred_element_type=jnp.float32)
        inv = pl.reciprocal(denom, approx=True)   # EUP slot, nearly free
        mu = mu_u * inv
        sg = jnp.sqrt(jnp.maximum(x2_u * inv - mu * mu, 1e-5))

        # ---- final FC in f32: stats = [mu; sg], out = fcw @ stats + fcb ------
        fcw = fcw_ref[...]                        # (10, 256) f32
        out = (jnp.dot(fcw[:, :C], mu, preferred_element_type=jnp.float32)
               + jnp.dot(fcw[:, C:], sg, preferred_element_type=jnp.float32)
               + bias[:NUM_CLASSES, 7:8])
        o_ref[0] = out                            # (10, bblk)

    return kernel


def _tensorcores_per_chip():
    """Best effort: 2 on v7x / megacore chips, else 1 (v5e, v6e)."""
    try:
        kind = jax.devices()[0].device_kind.lower()
    except Exception:
        return 1
    if "v7" in kind:
        return 2
    if "v4" in kind or "v5p" in kind:             # megacore: parallel axes shard
        return 2
    return 1


def _pick_batch_block(B, T, n_cores):
    """Single block on 1-TC chips; two 128-aligned, >=256-lane blocks on 2-TC."""
    if n_cores >= 2 and B % 2 == 0:
        bblk = B // 2
        if bblk * T >= 256 and (bblk * T) % 128 == 0:
            return bblk
    return B


def pack_params(params):
    """One-time host-side packing: BN fold, per-tap weight stacking, bias pack."""
    (w1, b1, w2, b2, w3, b3, w4, b4, w5, b5,
     wa1, ba1, wa2, ba2, fcw, fcb) = params
    s = BN_SCALE

    def taps(w, scale):      # (C_out, C_in, K) -> (K, C_out, C_in) bf16
        return (jnp.transpose(w, (2, 0, 1)) * scale).astype(jnp.bfloat16)

    def padc(b):
        return jnp.pad(b, (0, C - b.shape[0]))

    conv_w = tuple(taps(w, s) for w in (w1, w2, w3, w4, w5))
    att_w = (taps(wa1, s), taps(wa2, 1.0))
    bias_pack = jnp.stack(
        [b1 * s, b2 * s, b3 * s, b4 * s, b5 * s,
         padc(ba1 * s), ba2, padc(fcb)], axis=1).astype(jnp.float32)
    return conv_w + att_w + (fcw.astype(jnp.float32), bias_pack)


@jax.jit
def xvec_forward(x, packed):
    """x: (B, 1, n_mels, T) f32, packed = pack_params(...) -> (B, num_classes)."""
    x = jnp.squeeze(x, axis=1)                    # (B, 64, T)
    B, n_mels, T = x.shape
    assert n_mels == N_MELS
    assert T > RECEPTIVE, f"need T > {RECEPTIVE} for valid convs, got {T}"
    t5 = T - RECEPTIVE

    bblk = _pick_batch_block(B, T, _tensorcores_per_chip())
    nblk = B // bblk
    W = bblk * T

    # Batch packed onto lanes OUTSIDE the kernel, bf16 halves the input DMA.
    x_packed = (jnp.transpose(x, (1, 0, 2)).reshape(N_MELS, B * T)
                .astype(jnp.bfloat16))

    # Trace-time constants: block-one-hot selector + additive softmax mask.
    col = np.arange(W)
    valid = (col % T) < t5
    sel_np = (((col[:, None] // T) == np.arange(bblk)[None, :])
              & valid[:, None]).astype(np.float32)              # (W, bblk)
    mask_np = np.where(valid, 0.0, NEG_INF).astype(np.float32)[None, :]
    sel = jnp.asarray(sel_np)
    maskneg = jnp.asarray(mask_np)

    ins = [x_packed, *packed, sel, maskneg]

    def full_spec(a):
        return pl.BlockSpec(a.shape, lambda g, _n=a.ndim: (0,) * _n)

    in_specs = [pl.BlockSpec((N_MELS, W), lambda g: (0, g))]
    in_specs += [full_spec(a) for a in ins[1:]]

    # Advisory cost estimate for XLA scheduling around the custom call.
    flops = 0
    for (c_out, c_in), (k, _d) in zip(((C, N_MELS),) + ((C, C),) * 4, CONVS):
        flops += 2 * c_out * c_in * k * W
    flops += 2 * ATT_C * C * W + 2 * C * ATT_C * W
    flops += 3 * 2 * C * W * bblk + 2 * NUM_CLASSES * 2 * C * bblk
    flops *= nblk
    bytes_accessed = int(x_packed.size * 2 + sel.size * 4 + maskneg.size * 4
                         + sum(a.size * a.dtype.itemsize for a in packed)
                         + B * NUM_CLASSES * 4)
    cost = pl.CostEstimate(flops=int(flops), transcendentals=int(B * C * T),
                           bytes_accessed=bytes_accessed)

    out = pl.pallas_call(
        _make_kernel(bblk, T),
        out_shape=jax.ShapeDtypeStruct((nblk, NUM_CLASSES, bblk), jnp.float32),
        grid=(nblk,),
        in_specs=in_specs,
        out_specs=pl.BlockSpec((1, NUM_CLASSES, bblk), lambda g: (g, 0, 0)),
        compiler_params=pltpu.CompilerParams(
            dimension_semantics=("parallel",)),
        cost_estimate=cost,
    )(*ins)
    # (nblk, 10, bblk) -> (B, 10): layout plumbing outside the kernel.
    return jnp.transpose(out, (0, 2, 1)).reshape(B, NUM_CLASSES)


# ---------------- pure-JAX f32 reference (correctness check) ----------------
def ref_forward(x, params):
    x = jnp.squeeze(x, axis=1)
    (w1, b1, w2, b2, w3, b3, w4, b4, w5, b5,
     wa1, ba1, wa2, ba2, fcw, fcb) = params

    def conv(x, w, b, d):
        y = jax.lax.conv_general_dilated(
            x, w, window_strides=(1,), padding='VALID', rhs_dilation=(d,),
            dimension_numbers=('NCH', 'OIH', 'NCH'))
        return y + b[None, :, None]

    def block(x, w, b, d):
        return jnp.maximum(conv(x, w, b, d), 0.0) * BN_SCALE

    h = block(x, w1, b1, 1)
    h = block(h, w2, b2, 2)
    h = block(h, w3, b3, 3)
    h = block(h, w4, b4, 1)
    h = block(h, w5, b5, 1)

    a = jnp.maximum(conv(h, wa1, ba1, 1), 0.0) * BN_SCALE
    w = jax.nn.softmax(conv(a, wa2, ba2, 1), axis=2)

    mu = jnp.sum(h * w, axis=2)
    sg = jnp.sqrt(jnp.maximum(jnp.sum(h * h * w, axis=2) - mu * mu, 1e-5))
    stats = jnp.concatenate([mu, sg], axis=1)
    return stats @ fcw.T + fcb[None, :]


# ---------------- deterministic synthetic parameters ----------------
def init_params(key):
    ks = jax.random.split(key, 16)

    def cw(k, c_out, c_in, ksz):
        return (jax.random.normal(k, (c_out, c_in, ksz), jnp.float32)
                / jnp.sqrt(float(c_in * ksz)))

    def cb(k, c_out):
        return 0.01 * jax.random.normal(k, (c_out,), jnp.float32)

    w1, b1 = cw(ks[0], C, N_MELS, 5), cb(ks[1], C)
    w2, b2 = cw(ks[2], C, C, 5), cb(ks[3], C)
    w3, b3 = cw(ks[4], C, C, 7), cb(ks[5], C)
    w4, b4 = cw(ks[6], C, C, 1), cb(ks[7], C)
    w5, b5 = cw(ks[8], C, C, 1), cb(ks[9], C)
    wa1, ba1 = cw(ks[10], ATT_C, C, 1), cb(ks[11], ATT_C)
    wa2, ba2 = cw(ks[12], C, ATT_C, 1), cb(ks[13], C)
    fcw = jax.random.normal(ks[14], (NUM_CLASSES, 2 * C), jnp.float32) / 16.0
    fcb = 0.01 * jax.random.normal(ks[15], (NUM_CLASSES,), jnp.float32)
    return (w1, b1, w2, b2, w3, b3, w4, b4, w5, b5,
            wa1, ba1, wa2, ba2, fcw, fcb)


if __name__ == "__main__":
    key = jax.random.PRNGKey(0)
    pkey, xkey = jax.random.split(key)
    params = init_params(pkey)
    packed = pack_params(params)      # one-time host-side packing

    B, T = 8, 64                      # T5 = 64 - 30 = 34; W = 512 (or 2 x 256)
    x = jax.random.normal(xkey, (B, 1, N_MELS, T), jnp.float32)

    out = jax.block_until_ready(xvec_forward(x, packed))
    ref = jax.block_until_ready(ref_forward(x, params))

    assert out.shape == (B, NUM_CLASSES)
    # bf16 matmul operands + EUP approx reciprocal -> compare loosely vs f32 ref
    assert jnp.allclose(out, ref, atol=2e-2, rtol=2e-2), (out, ref)

    print("KERNEL_OK")
</pallas_src>

<mosaic_0001>
module attributes {stable_mosaic.version = 11 : i64} {
  func.func @kernel(%arg0: i32, %arg1: memref<64x512xbf16, #tpu.memory_space<vmem>>, %arg2: memref<5x128x64xbf16, #tpu.memory_space<vmem>>, %arg3: memref<5x128x128xbf16, #tpu.memory_space<vmem>>, %arg4: memref<7x128x128xbf16, #tpu.memory_space<vmem>>, %arg5: memref<1x128x128xbf16, #tpu.memory_space<vmem>>, %arg6: memref<1x128x128xbf16, #tpu.memory_space<vmem>>, %arg7: memref<1x32x128xbf16, #tpu.memory_space<vmem>>, %arg8: memref<1x128x32xbf16, #tpu.memory_space<vmem>>, %arg9: memref<10x256xf32, #tpu.memory_space<vmem>>, %arg10: memref<128x8xf32, #tpu.memory_space<vmem>>, %arg11: memref<512x8xf32, #tpu.memory_space<vmem>>, %arg12: memref<1x512xf32, #tpu.memory_space<vmem>>, %arg13: memref<1x10x8xf32, #tpu.memory_space<vmem>>) attributes {dimension_semantics = [#tpu.dimension_semantics<parallel>], iteration_bounds = array<i64: 1>, scalar_prefetch = 0 : i64, scratch_operands = 0 : i64, tpu.core_type = #tpu.core_type<tc>, window_params = [{transform_indices = @transform_0, window_bounds = array<i64: 64, 512>}, {pipeline_mode = #tpu.pipeline_mode<synchronous>, transform_indices = @transform_1, window_bounds = array<i64: 5, 128, 64>}, {pipeline_mode = #tpu.pipeline_mode<synchronous>, transform_indices = @transform_2, window_bounds = array<i64: 5, 128, 128>}, {pipeline_mode = #tpu.pipeline_mode<synchronous>, transform_indices = @transform_3, window_bounds = array<i64: 7, 128, 128>}, {pipeline_mode = #tpu.pipeline_mode<synchronous>, transform_indices = @transform_4, window_bounds = array<i64: 1, 128, 128>}, {pipeline_mode = #tpu.pipeline_mode<synchronous>, transform_indices = @transform_5, window_bounds = array<i64: 1, 128, 128>}, {pipeline_mode = #tpu.pipeline_mode<synchronous>, transform_indices = @transform_6, window_bounds = array<i64: 1, 32, 128>}, {pipeline_mode = #tpu.pipeline_mode<synchronous>, transform_indices = @transform_7, window_bounds = array<i64: 1, 128, 32>}, {pipeline_mode = #tpu.pipeline_mode<synchronous>, transform_indices = @transform_8, window_bounds = array<i64: 10, 256>}, {pipeline_mode = #tpu.pipeline_mode<synchronous>, transform_indices = @transform_9, window_bounds = array<i64: 128, 8>}, {pipeline_mode = #tpu.pipeline_mode<synchronous>, transform_indices = @transform_10, window_bounds = array<i64: 512, 8>}, {pipeline_mode = #tpu.pipeline_mode<synchronous>, transform_indices = @transform_11, window_bounds = array<i64: 1, 512>}, {transform_indices = @transform_12, window_bounds = array<i64: 1, 10, 8>}]} {
    %c0 = arith.constant 0 : index
    %c0_0 = arith.constant 0 : index
    %0 = vector.load %arg10[%c0, %c0_0] : memref<128x8xf32, #tpu.memory_space<vmem>>, vector<128x8xf32>
    %c0_1 = arith.constant 0 : index
    %c0_2 = arith.constant 0 : index
    %1 = vector.load %arg1[%c0_1, %c0_2] : memref<64x512xbf16, #tpu.memory_space<vmem>>, vector<64x512xbf16>
    %2 = arith.extf %1 : vector<64x512xbf16> to vector<64x512xf32>
    %c0_3 = arith.constant 0 : index
    %c0_4 = arith.constant 0 : index
    %c0_5 = arith.constant 0 : index
    %3 = vector.load %arg2[%c0_3, %c0_4, %c0_5] : memref<5x128x64xbf16, #tpu.memory_space<vmem>>, vector<1x128x64xbf16>
    %4 = vector.shape_cast %3 : vector<1x128x64xbf16> to vector<128x64xbf16>
    %5 = arith.truncf %2 : vector<64x512xf32> to vector<64x512xbf16>
    %cst = arith.constant dense<0.000000e+00> : vector<128x512xf32>
    %6 = tpu.matmul %4, %5, %cst {dimension_numbers = #tpu.dot_dimension_numbers<[1], [0], [0], [1], [0, 0, 1, 1], [], []>} : vector<128x64xbf16>, vector<64x512xbf16>, vector<128x512xf32> -> vector<128x512xf32>
    %c511_i32 = arith.constant 511 : i32
    %7 = tpu.dynamic_rotate %2 by %c511_i32 dim 1 : vector<64x512xf32>, i32 -> vector<64x512xf32>
    %c1 = arith.constant 1 : index
    %c0_6 = arith.constant 0 : index
    %c0_7 = arith.constant 0 : index
    %8 = vector.load %arg2[%c1, %c0_6, %c0_7] : memref<5x128x64xbf16, #tpu.memory_space<vmem>>, vector<1x128x64xbf16>
    %9 = vector.shape_cast %8 : vector<1x128x64xbf16> to vector<128x64xbf16>
    %10 = arith.truncf %7 : vector<64x512xf32> to vector<64x512xbf16>
    %cst_8 = arith.constant dense<0.000000e+00> : vector<128x512xf32>
    %11 = tpu.matmul %9, %10, %cst_8 {dimension_numbers = #tpu.dot_dimension_numbers<[1], [0], [0], [1], [0, 0, 1, 1], [], []>} : vector<128x64xbf16>, vector<64x512xbf16>, vector<128x512xf32> -> vector<128x512xf32>
    %12 = arith.addf %6, %11 : vector<128x512xf32>
    %c510_i32 = arith.constant 510 : i32
    %13 = tpu.dynamic_rotate %2 by %c510_i32 dim 1 : vector<64x512xf32>, i32 -> vector<64x512xf32>
    %c2 = arith.constant 2 : index
    %c0_9 = arith.constant 0 : index
    %c0_10 = arith.constant 0 : index
    %14 = vector.load %arg2[%c2, %c0_9, %c0_10] : memref<5x128x64xbf16, #tpu.memory_space<vmem>>, vector<1x128x64xbf16>
    %15 = vector.shape_cast %14 : vector<1x128x64xbf16> to vector<128x64xbf16>
    %16 = arith.truncf %13 : vector<64x512xf32> to vector<64x512xbf16>
    %cst_11 = arith.constant dense<0.000000e+00> : vector<128x512xf32>
    %17 = tpu.matmul %15, %16, %cst_11 {dimension_numbers = #tpu.dot_dimension_numbers<[1], [0], [0], [1], [0, 0, 1, 1], [], []>} : vector<128x64xbf16>, vector<64x512xbf16>, vector<128x512xf32> -> vector<128x512xf32>
    %18 = arith.addf %12, %17 : vector<128x512xf32>
    %c509_i32 = arith.constant 509 : i32
    %19 = tpu.dynamic_rotate %2 by %c509_i32 dim 1 : vector<64x512xf32>, i32 -> vector<64x512xf32>
    %c3 = arith.constant 3 : index
    %c0_12 = arith.constant 0 : index
    %c0_13 = arith.constant 0 : index
    %20 = vector.load %arg2[%c3, %c0_12, %c0_13] : memref<5x128x64xbf16, #tpu.memory_space<vmem>>, vector<1x128x64xbf16>
    %21 = vector.shape_cast %20 : vector<1x128x64xbf16> to vector<128x64xbf16>
    %22 = arith.truncf %19 : vector<64x512xf32> to vector<64x512xbf16>
    %cst_14 = arith.constant dense<0.000000e+00> : vector<128x512xf32>
    %23 = tpu.matmul %21, %22, %cst_14 {dimension_numbers = #tpu.dot_dimension_numbers<[1], [0], [0], [1], [0, 0, 1, 1], [], []>} : vector<128x64xbf16>, vector<64x512xbf16>, vector<128x512xf32> -> vector<128x512xf32>
    %24 = arith.addf %18, %23 : vector<128x512xf32>
    %c508_i32 = arith.constant 508 : i32
    %25 = tpu.dynamic_rotate %2 by %c508_i32 dim 1 : vector<64x512xf32>, i32 -> vector<64x512xf32>
    %c4 = arith.constant 4 : index
    %c0_15 = arith.constant 0 : index
    %c0_16 = arith.constant 0 : index
    %26 = vector.load %arg2[%c4, %c0_15, %c0_16] : memref<5x128x64xbf16, #tpu.memory_space<vmem>>, vector<1x128x64xbf16>
    %27 = vector.shape_cast %26 : vector<1x128x64xbf16> to vector<128x64xbf16>
    %28 = arith.truncf %25 : vector<64x512xf32> to vector<64x512xbf16>
    %cst_17 = arith.constant dense<0.000000e+00> : vector<128x512xf32>
    %29 = tpu.matmul %27, %28, %cst_17 {dimension_numbers = #tpu.dot_dimension_numbers<[1], [0], [0], [1], [0, 0, 1, 1], [], []>} : vector<128x64xbf16>, vector<64x512xbf16>, vector<128x512xf32> -> vector<128x512xf32>
    %30 = arith.addf %24, %29 : vector<128x512xf32>
    %31 = vector.extract_strided_slice %0 {offsets = [0, 0], sizes = [128, 1], strides = [1, 1]} : vector<128x8xf32> to vector<128x1xf32>
    %32 = vector.broadcast %31 : vector<128x1xf32> to vector<128x512xf32>
    %33 = arith.addf %30, %32 : vector<128x512xf32>
    %cst_18 = arith.constant 0.000000e+00 : f32
    %34 = vector.broadcast %cst_18 : f32 to vector<128x512xf32>
    %35 = arith.maximumf %33, %34 : vector<128x512xf32>
    %c0_19 = arith.constant 0 : index
    %c0_20 = arith.constant 0 : index
    %c0_21 = arith.constant 0 : index
    %36 = vector.load %arg3[%c0_19, %c0_20, %c0_21] : memref<5x128x128xbf16, #tpu.memory_space<vmem>>, vector<1x128x128xbf16>
    %37 = vector.shape_cast %36 : vector<1x128x128xbf16> to vector<128x128xbf16>
    %38 = arith.truncf %35 : vector<128x512xf32> to vector<128x512xbf16>
    %cst_22 = arith.constant dense<0.000000e+00> : vector<128x512xf32>
    %39 = tpu.matmul %37, %38, %cst_22 {dimension_numbers = #tpu.dot_dimension_numbers<[1], [0], [0], [1], [0, 0, 1, 1], [], []>} : vector<128x128xbf16>, vector<128x512xbf16>, vector<128x512xf32> -> vector<128x512xf32>
    %c510_i32_23 = arith.constant 510 : i32
    %40 = tpu.dynamic_rotate %35 by %c510_i32_23 dim 1 : vector<128x512xf32>, i32 -> vector<128x512xf32>
    %c1_24 = arith.constant 1 : index
    %c0_25 = arith.constant 0 : index
    %c0_26 = arith.constant 0 : index
    %41 = vector.load %arg3[%c1_24, %c0_25, %c0_26] : memref<5x128x128xbf16, #tpu.memory_space<vmem>>, vector<1x128x128xbf16>
    %42 = vector.shape_cast %41 : vector<1x128x128xbf16> to vector<128x128xbf16>
    %43 = arith.truncf %40 : vector<128x512xf32> to vector<128x512xbf16>
    %cst_27 = arith.constant dense<0.000000e+00> : vector<128x512xf32>
    %44 = tpu.matmul %42, %43, %cst_27 {dimension_numbers = #tpu.dot_dimension_numbers<[1], [0], [0], [1], [0, 0, 1, 1], [], []>} : vector<128x128xbf16>, vector<128x512xbf16>, vector<128x512xf32> -> vector<128x512xf32>
    %45 = arith.addf %39, %44 : vector<128x512xf32>
    %c508_i32_28 = arith.constant 508 : i32
    %46 = tpu.dynamic_rotate %35 by %c508_i32_28 dim 1 : vector<128x512xf32>, i32 -> vector<128x512xf32>
    %c2_29 = arith.constant 2 : index
    %c0_30 = arith.constant 0 : index
    %c0_31 = arith.constant 0 : index
    %47 = vector.load %arg3[%c2_29, %c0_30, %c0_31] : memref<5x128x128xbf16, #tpu.memory_space<vmem>>, vector<1x128x128xbf16>
    %48 = vector.shape_cast %47 : vector<1x128x128xbf16> to vector<128x128xbf16>
    %49 = arith.truncf %46 : vector<128x512xf32> to vector<128x512xbf16>
    %cst_32 = arith.constant dense<0.000000e+00> : vector<128x512xf32>
    %50 = tpu.matmul %48, %49, %cst_32 {dimension_numbers = #tpu.dot_dimension_numbers<[1], [0], [0], [1], [0, 0, 1, 1], [], []>} : vector<128x128xbf16>, vector<128x512xbf16>, vector<128x512xf32> -> vector<128x512xf32>
    %51 = arith.addf %45, %50 : vector<128x512xf32>
    %c506_i32 = arith.constant 506 : i32
    %52 = tpu.dynamic_rotate %35 by %c506_i32 dim 1 : vector<128x512xf32>, i32 -> vector<128x512xf32>
    %c3_33 = arith.constant 3 : index
    %c0_34 = arith.constant 0 : index
    %c0_35 = arith.constant 0 : index
    %53 = vector.load %arg3[%c3_33, %c0_34, %c0_35] : memref<5x128x128xbf16, #tpu.memory_space<vmem>>, vector<1x128x128xbf16>
    %54 = vector.shape_cast %53 : vector<1x128x128xbf16> to vector<128x128xbf16>
    %55 = arith.truncf %52 : vector<128x512xf32> to vector<128x512xbf16>
    %cst_36 = arith.constant dense<0.000000e+00> : vector<128x512xf32>
    %56 = tpu.matmul %54, %55, %cst_36 {dimension_numbers = #tpu.dot_dimension_numbers<[1], [0], [0], [1], [0, 0, 1, 1], [], []>} : vector<128x128xbf16>, vector<128x512xbf16>, vector<128x512xf32> -> vector<128x512xf32>
    %57 = arith.addf %51, %56 : vector<128x512xf32>
    %c504_i32 = arith.constant 504 : i32
    %58 = tpu.dynamic_rotate %35 by %c504_i32 dim 1 : vector<128x512xf32>, i32 -> vector<128x512xf32>
    %c4_37 = arith.constant 4 : index
    %c0_38 = arith.constant 0 : index
    %c0_39 = arith.constant 0 : index
    %59 = vector.load %arg3[%c4_37, %c0_38, %c0_39] : memref<5x128x128xbf16, #tpu.memory_space<vmem>>, vector<1x128x128xbf16>
    %60 = vector.shape_cast %59 : vector<1x128x128xbf16> to vector<128x128xbf16>
    %61 = arith.truncf %58 : vector<128x512xf32> to vector<128x512xbf16>
    %cst_40 = arith.constant dense<0.000000e+00> : vector<128x512xf32>
    %62 = tpu.matmul %60, %61, %cst_40 {dimension_numbers = #tpu.dot_dimension_numbers<[1], [0], [0], [1], [0, 0, 1, 1], [], []>} : vector<128x128xbf16>, vector<128x512xbf16>, vector<128x512xf32> -> vector<128x512xf32>
    %63 = arith.addf %57, %62 : vector<128x512xf32>
    %64 = vector.extract_strided_slice %0 {offsets = [0, 1], sizes = [128, 1], strides = [1, 1]} : vector<128x8xf32> to vector<128x1xf32>
    %65 = vector.broadcast %64 : vector<128x1xf32> to vector<128x512xf32>
    %66 = arith.addf %63, %65 : vector<128x512xf32>
    %cst_41 = arith.constant 0.000000e+00 : f32
    %67 = vector.broadcast %cst_41 : f32 to vector<128x512xf32>
    %68 = arith.maximumf %66, %67 : vector<128x512xf32>
    %c0_42 = arith.constant 0 : index
    %c0_43 = arith.constant 0 : index
    %c0_44 = arith.constant 0 : index
    %69 = vector.load %arg4[%c0_42, %c0_43, %c0_44] : memref<7x128x128xbf16, #tpu.memory_space<vmem>>, vector<1x128x128xbf16>
    %70 = vector.shape_cast %69 : vector<1x128x128xbf16> to vector<128x128xbf16>
    %71 = arith.truncf %68 : vector<128x512xf32> to vector<128x512xbf16>
    %cst_45 = arith.constant dense<0.000000e+00> : vector<128x512xf32>
    %72 = tpu.matmul %70, %71, %cst_45 {dimension_numbers = #tpu.dot_dimension_numbers<[1], [0], [0], [1], [0, 0, 1, 1], [], []>} : vector<128x128xbf16>, vector<128x512xbf16>, vector<128x512xf32> -> vector<128x512xf32>
    %c509_i32_46 = arith.constant 509 : i32
    %73 = tpu.dynamic_rotate %68 by %c509_i32_46 dim 1 : vector<128x512xf32>, i32 -> vector<128x512xf32>
    %c1_47 = arith.constant 1 : index
    %c0_48 = arith.constant 0 : index
    %c0_49 = arith.constant 0 : index
    %74 = vector.load %arg4[%c1_47, %c0_48, %c0_49] : memref<7x128x128xbf16, #tpu.memory_space<vmem>>, vector<1x128x128xbf16>
    %75 = vector.shape_cast %74 : vector<1x128x128xbf16> to vector<128x128xbf16>
    %76 = arith.truncf %73 : vector<128x512xf32> to vector<128x512xbf16>
    %cst_50 = arith.constant dense<0.000000e+00> : vector<128x512xf32>
    %77 = tpu.matmul %75, %76, %cst_50 {dimension_numbers = #tpu.dot_dimension_numbers<[1], [0], [0], [1], [0, 0, 1, 1], [], []>} : vector<128x128xbf16>, vector<128x512xbf16>, vector<128x512xf32> -> vector<128x512xf32>
    %78 = arith.addf %72, %77 : vector<128x512xf32>
    %c506_i32_51 = arith.constant 506 : i32
    %79 = tpu.dynamic_rotate %68 by %c506_i32_51 dim 1 : vector<128x512xf32>, i32 -> vector<128x512xf32>
    %c2_52 = arith.constant 2 : index
    %c0_53 = arith.constant 0 : index
    %c0_54 = arith.constant 0 : index
    %80 = vector.load %arg4[%c2_52, %c0_53, %c0_54] : memref<7x128x128xbf16, #tpu.memory_space<vmem>>, vector<1x128x128xbf16>
    %81 = vector.shape_cast %80 : vector<1x128x128xbf16> to vector<128x128xbf16>
    %82 = arith.truncf %79 : vector<128x512xf32> to vector<128x512xbf16>
    %cst_55 = arith.constant dense<0.000000e+00> : vector<128x512xf32>
    %83 = tpu.matmul %81, %82, %cst_55 {dimension_numbers = #tpu.dot_dimension_numbers<[1], [0], [0], [1], [0, 0, 1, 1], [], []>} : vector<128x128xbf16>, vector<128x512xbf16>, vector<128x512xf32> -> vector<128x512xf32>
    %84 = arith.addf %78, %83 : vector<128x512xf32>
    %c503_i32 = arith.constant 503 : i32
    %85 = tpu.dynamic_rotate %68 by %c503_i32 dim 1 : vector<128x512xf32>, i32 -> vector<128x512xf32>
    %c3_56 = arith.constant 3 : index
    %c0_57 = arith.constant 0 : index
    %c0_58 = arith.constant 0 : index
    %86 = vector.load %arg4[%c3_56, %c0_57, %c0_58] : memref<7x128x128xbf16, #tpu.memory_space<vmem>>, vector<1x128x128xbf16>
    %87 = vector.shape_cast %86 : vector<1x128x128xbf16> to vector<128x128xbf16>
    %88 = arith.truncf %85 : vector<128x512xf32> to vector<128x512xbf16>
    %cst_59 = arith.constant dense<0.000000e+00> : vector<128x512xf32>
    %89 = tpu.matmul %87, %88, %cst_59 {dimension_numbers = #tpu.dot_dimension_numbers<[1], [0], [0], [1], [0, 0, 1, 1], [], []>} : vector<128x128xbf16>, vector<128x512xbf16>, vector<128x512xf32> -> vector<128x512xf32>
    %90 = arith.addf %84, %89 : vector<128x512xf32>
    %c500_i32 = arith.constant 500 : i32
    %91 = tpu.dynamic_rotate %68 by %c500_i32 dim 1 : vector<128x512xf32>, i32 -> vector<128x512xf32>
    %c4_60 = arith.constant 4 : index
    %c0_61 = arith.constant 0 : index
    %c0_62 = arith.constant 0 : index
    %92 = vector.load %arg4[%c4_60, %c0_61, %c0_62] : memref<7x128x128xbf16, #tpu.memory_space<vmem>>, vector<1x128x128xbf16>
    %93 = vector.shape_cast %92 : vector<1x128x128xbf16> to vector<128x128xbf16>
    %94 = arith.truncf %91 : vector<128x512xf32> to vector<128x512xbf16>
    %cst_63 = arith.constant dense<0.000000e+00> : vector<128x512xf32>
    %95 = tpu.matmul %93, %94, %cst_63 {dimension_numbers = #tpu.dot_dimension_numbers<[1], [0], [0], [1], [0, 0, 1, 1], [], []>} : vector<128x128xbf16>, vector<128x512xbf16>, vector<128x512xf32> -> vector<128x512xf32>
    %96 = arith.addf %90, %95 : vector<128x512xf32>
    %c497_i32 = arith.constant 497 : i32
    %97 = tpu.dynamic_rotate %68 by %c497_i32 dim 1 : vector<128x512xf32>, i32 -> vector<128x512xf32>
    %c5 = arith.constant 5 : index
    %c0_64 = arith.constant 0 : index
    %c0_65 = arith.constant 0 : index
    %98 = vector.load %arg4[%c5, %c0_64, %c0_65] : memref<7x128x128xbf16, #tpu.memory_space<vmem>>, vector<1x128x128xbf16>
    %99 = vector.shape_cast %98 : vector<1x128x128xbf16> to vector<128x128xbf16>
    %100 = arith.truncf %97 : vector<128x512xf32> to vector<128x512xbf16>
    %cst_66 = arith.constant dense<0.000000e+00> : vector<128x512xf32>
    %101 = tpu.matmul %99, %100, %cst_66 {dimension_numbers = #tpu.dot_dimension_numbers<[1], [0], [0], [1], [0, 0, 1, 1], [], []>} : vector<128x128xbf16>, vector<128x512xbf16>, vector<128x512xf32> -> vector<128x512xf32>
    %102 = arith.addf %96, %101 : vector<128x512xf32>
    %c494_i32 = arith.constant 494 : i32
    %103 = tpu.dynamic_rotate %68 by %c494_i32 dim 1 : vector<128x512xf32>, i32 -> vector<128x512xf32>
    %c6 = arith.constant 6 : index
    %c0_67 = arith.constant 0 : index
    %c0_68 = arith.constant 0 : index
    %104 = vector.load %arg4[%c6, %c0_67, %c0_68] : memref<7x128x128xbf16, #tpu.memory_space<vmem>>, vector<1x128x128xbf16>
    %105 = vector.shape_cast %104 : vector<1x128x128xbf16> to vector<128x128xbf16>
    %106 = arith.truncf %103 : vector<128x512xf32> to vector<128x512xbf16>
    %cst_69 = arith.constant dense<0.000000e+00> : vector<128x512xf32>
    %107 = tpu.matmul %105, %106, %cst_69 {dimension_numbers = #tpu.dot_dimension_numbers<[1], [0], [0], [1], [0, 0, 1, 1], [], []>} : vector<128x128xbf16>, vector<128x512xbf16>, vector<128x512xf32> -> vector<128x512xf32>
    %108 = arith.addf %102, %107 : vector<128x512xf32>
    %109 = vector.extract_strided_slice %0 {offsets = [0, 2], sizes = [128, 1], strides = [1, 1]} : vector<128x8xf32> to vector<128x1xf32>
    %110 = vector.broadcast %109 : vector<128x1xf32> to vector<128x512xf32>
    %111 = arith.addf %108, %110 : vector<128x512xf32>
    %cst_70 = arith.constant 0.000000e+00 : f32
    %112 = vector.broadcast %cst_70 : f32 to vector<128x512xf32>
    %113 = arith.maximumf %111, %112 : vector<128x512xf32>
    %c0_71 = arith.constant 0 : index
    %c0_72 = arith.constant 0 : index
    %c0_73 = arith.constant 0 : index
    %114 = vector.load %arg5[%c0_71, %c0_72, %c0_73] : memref<1x128x128xbf16, #tpu.memory_space<vmem>>, vector<1x128x128xbf16>
    %115 = vector.shape_cast %114 : vector<1x128x128xbf16> to vector<128x128xbf16>
    %116 = arith.truncf %113 : vector<128x512xf32> to vector<128x512xbf16>
    %cst_74 = arith.constant dense<0.000000e+00> : vector<128x512xf32>
    %117 = tpu.matmul %115, %116, %cst_74 {dimension_numbers = #tpu.dot_dimension_numbers<[1], [0], [0], [1], [0, 0, 1, 1], [], []>} : vector<128x128xbf16>, vector<128x512xbf16>, vector<128x512xf32> -> vector<128x512xf32>
    %118 = vector.extract_strided_slice %0 {offsets = [0, 3], sizes = [128, 1], strides = [1, 1]} : vector<128x8xf32> to vector<128x1xf32>
    %119 = vector.broadcast %118 : vector<128x1xf32> to vector<128x512xf32>
    %120 = arith.addf %117, %119 : vector<128x512xf32>
    %cst_75 = arith.constant 0.000000e+00 : f32
    %121 = vector.broadcast %cst_75 : f32 to vector<128x512xf32>
    %122 = arith.maximumf %120, %121 : vector<128x512xf32>
    %c0_76 = arith.constant 0 : index
    %c0_77 = arith.constant 0 : index
    %c0_78 = arith.constant 0 : index
    %123 = vector.load %arg6[%c0_76, %c0_77, %c0_78] : memref<1x128x128xbf16, #tpu.memory_space<vmem>>, vector<1x128x128xbf16>
    %124 = vector.shape_cast %123 : vector<1x128x128xbf16> to vector<128x128xbf16>
    %125 = arith.truncf %122 : vector<128x512xf32> to vector<128x512xbf16>
    %cst_79 = arith.constant dense<0.000000e+00> : vector<128x512xf32>
    %126 = tpu.matmul %124, %125, %cst_79 {dimension_numbers = #tpu.dot_dimension_numbers<[1], [0], [0], [1], [0, 0, 1, 1], [], []>} : vector<128x128xbf16>, vector<128x512xbf16>, vector<128x512xf32> -> vector<128x512xf32>
    %127 = vector.extract_strided_slice %0 {offsets = [0, 4], sizes = [128, 1], strides = [1, 1]} : vector<128x8xf32> to vector<128x1xf32>
    %128 = vector.broadcast %127 : vector<128x1xf32> to vector<128x512xf32>
    %129 = arith.addf %126, %128 : vector<128x512xf32>
    %cst_80 = arith.constant 0.000000e+00 : f32
    %130 = vector.broadcast %cst_80 : f32 to vector<128x512xf32>
    %131 = arith.maximumf %129, %130 : vector<128x512xf32>
    %132 = arith.truncf %131 : vector<128x512xf32> to vector<128x512xbf16>
    %c0_81 = arith.constant 0 : index
    %c0_82 = arith.constant 0 : index
    %c0_83 = arith.constant 0 : index
    %133 = vector.load %arg7[%c0_81, %c0_82, %c0_83] : memref<1x32x128xbf16, #tpu.memory_space<vmem>>, vector<1x32x128xbf16>
    %134 = vector.shape_cast %133 : vector<1x32x128xbf16> to vector<32x128xbf16>
    %cst_84 = arith.constant dense<0.000000e+00> : vector<32x512xf32>
    %135 = tpu.matmul %134, %132, %cst_84 {dimension_numbers = #tpu.dot_dimension_numbers<[1], [0], [0], [1], [0, 0, 1, 1], [], []>} : vector<32x128xbf16>, vector<128x512xbf16>, vector<32x512xf32> -> vector<32x512xf32>
    %136 = vector.extract_strided_slice %0 {offsets = [0, 5], sizes = [32, 1], strides = [1, 1]} : vector<128x8xf32> to vector<32x1xf32>
    %137 = vector.broadcast %136 : vector<32x1xf32> to vector<32x512xf32>
    %138 = arith.addf %135, %137 : vector<32x512xf32>
    %cst_85 = arith.constant 0.000000e+00 : f32
    %139 = vector.broadcast %cst_85 : f32 to vector<32x512xf32>
    %140 = arith.maximumf %138, %139 : vector<32x512xf32>
    %c0_86 = arith.constant 0 : index
    %c0_87 = arith.constant 0 : index
    %c0_88 = arith.constant 0 : index
    %141 = vector.load %arg8[%c0_86, %c0_87, %c0_88] : memref<1x128x32xbf16, #tpu.memory_space<vmem>>, vector<1x128x32xbf16>
    %142 = vector.shape_cast %141 : vector<1x128x32xbf16> to vector<128x32xbf16>
    %143 = arith.truncf %140 : vector<32x512xf32> to vector<32x512xbf16>
    %cst_89 = arith.constant dense<0.000000e+00> : vector<128x512xf32>
    %144 = tpu.matmul %142, %143, %cst_89 {dimension_numbers = #tpu.dot_dimension_numbers<[1], [0], [0], [1], [0, 0, 1, 1], [], []>} : vector<128x32xbf16>, vector<32x512xbf16>, vector<128x512xf32> -> vector<128x512xf32>
    %145 = vector.extract_strided_slice %0 {offsets = [0, 6], sizes = [128, 1], strides = [1, 1]} : vector<128x8xf32> to vector<128x1xf32>
    %146 = vector.broadcast %145 : vector<128x1xf32> to vector<128x512xf32>
    %147 = arith.addf %144, %146 : vector<128x512xf32>
    %c0_90 = arith.constant 0 : index
    %c0_91 = arith.constant 0 : index
    %148 = vector.load %arg12[%c0_90, %c0_91] : memref<1x512xf32, #tpu.memory_space<vmem>>, vector<1x512xf32>
    %149 = vector.broadcast %148 : vector<1x512xf32> to vector<128x512xf32>
    %150 = arith.addf %147, %149 : vector<128x512xf32>
    %cst_92 = arith.constant dense<0xFF800000> : vector<128xf32>
    %151 = vector.multi_reduction <maximumf>, %150, %cst_92 [1] : vector<128x512xf32> to vector<128xf32>
    %152 = vector.shape_cast %151 : vector<128xf32> to vector<128x1xf32>
    %153 = vector.broadcast %152 : vector<128x1xf32> to vector<128x512xf32>
    %154 = arith.subf %150, %153 : vector<128x512xf32>
    %155 = math.exp %154 : vector<128x512xf32>
    %c0_93 = arith.constant 0 : index
    %c0_94 = arith.constant 0 : index
    %156 = vector.load %arg11[%c0_93, %c0_94] : memref<512x8xf32, #tpu.memory_space<vmem>>, vector<512x8xf32>
    %157 = arith.mulf %131, %155 : vector<128x512xf32>
    %cst_95 = arith.constant dense<0.000000e+00> : vector<128x8xf32>
    %158 = tpu.matmul %155, %156, %cst_95 {dimension_numbers = #tpu.dot_dimension_numbers<[1], [0], [0], [1], [0, 0, 1, 1], [], []>} : vector<128x512xf32>, vector<512x8xf32>, vector<128x8xf32> -> vector<128x8xf32>
    %cst_96 = arith.constant dense<0.000000e+00> : vector<128x8xf32>
    %159 = tpu.matmul %157, %156, %cst_96 {dimension_numbers = #tpu.dot_dimension_numbers<[1], [0], [0], [1], [0, 0, 1, 1], [], []>} : vector<128x512xf32>, vector<512x8xf32>, vector<128x8xf32> -> vector<128x8xf32>
    %160 = arith.mulf %157, %131 : vector<128x512xf32>
    %cst_97 = arith.constant dense<0.000000e+00> : vector<128x8xf32>
    %161 = tpu.matmul %160, %156, %cst_97 {dimension_numbers = #tpu.dot_dimension_numbers<[1], [0], [0], [1], [0, 0, 1, 1], [], []>} : vector<128x512xf32>, vector<512x8xf32>, vector<128x8xf32> -> vector<128x8xf32>
    %162 = tpu.reciprocal %158 {approx = true} : vector<128x8xf32> -> vector<128x8xf32>
    %163 = arith.mulf %159, %162 : vector<128x8xf32>
    %164 = arith.mulf %161, %162 : vector<128x8xf32>
    %165 = arith.mulf %163, %163 : vector<128x8xf32>
    %166 = arith.subf %164, %165 : vector<128x8xf32>
    %cst_98 = arith.constant 9.99999974E-6 : f32
    %167 = vector.broadcast %cst_98 : f32 to vector<128x8xf32>
    %168 = arith.maximumf %166, %167 : vector<128x8xf32>
    %169 = math.sqrt %168 : vector<128x8xf32>
    %c0_99 = arith.constant 0 : index
    %c0_100 = arith.constant 0 : index
    %170 = vector.load %arg9[%c0_99, %c0_100] : memref<10x256xf32, #tpu.memory_space<vmem>>, vector<10x256xf32>
    %171 = vector.extract_strided_slice %170 {offsets = [0, 0], sizes = [10, 128], strides = [1, 1]} : vector<10x256xf32> to vector<10x128xf32>
    %cst_101 = arith.constant dense<0.000000e+00> : vector<10x8xf32>
    %172 = tpu.matmul %171, %163, %cst_101 {dimension_numbers = #tpu.dot_dimension_numbers<[1], [0], [0], [1], [0, 0, 1, 1], [], []>} : vector<10x128xf32>, vector<128x8xf32>, vector<10x8xf32> -> vector<10x8xf32>
    %173 = vector.extract_strided_slice %170 {offsets = [0, 128], sizes = [10, 128], strides = [1, 1]} : vector<10x256xf32> to vector<10x128xf32>
    %cst_102 = arith.constant dense<0.000000e+00> : vector<10x8xf32>
    %174 = tpu.matmul %173, %169, %cst_102 {dimension_numbers = #tpu.dot_dimension_numbers<[1], [0], [0], [1], [0, 0, 1, 1], [], []>} : vector<10x128xf32>, vector<128x8xf32>, vector<10x8xf32> -> vector<10x8xf32>
    %175 = arith.addf %172, %174 : vector<10x8xf32>
    %176 = vector.extract_strided_slice %0 {offsets = [0, 7], sizes = [10, 1], strides = [1, 1]} : vector<128x8xf32> to vector<10x1xf32>
    %177 = vector.broadcast %176 : vector<10x1xf32> to vector<10x8xf32>
    %178 = arith.addf %175, %177 : vector<10x8xf32>
    %c0_103 = arith.constant 0 : index
    %c0_104 = arith.constant 0 : index
    %c0_105 = arith.constant 0 : index
    %179 = vector.load %arg13[%c0_103, %c0_104, %c0_105] : memref<1x10x8xf32, #tpu.memory_space<vmem>>, vector<1x10x8xf32>
    %180 = vector.shape_cast %179 : vector<1x10x8xf32> to vector<10x8xf32>
    %181 = vector.shape_cast %178 : vector<10x8xf32> to vector<1x10x8xf32>
    tpu.vector_store %arg13[%c0_103, %c0_104, %c0_105], %181 {strides = array<i32>} : memref<1x10x8xf32, #tpu.memory_space<vmem>>, vector<1x10x8xf32>,
    return
  }
  func.func @transform_0(%arg0: i32) -> (i32, i32) {
    %c0_i32 = arith.constant 0 : i32
    %c0_i32_0 = arith.constant 0 : i32
    return %c0_i32, %arg0 : i32, i32
  }
  func.func @transform_1(%arg0: i32) -> (i32, i32, i32) {
    %c0_i32 = arith.constant 0 : i32
    %c0_i32_0 = arith.constant 0 : i32
    %c0_i32_1 = arith.constant 0 : i32
    %c0_i32_2 = arith.constant 0 : i32
    return %c0_i32, %c0_i32_0, %c0_i32_1 : i32, i32, i32
  }
  func.func @transform_2(%arg0: i32) -> (i32, i32, i32) {
    %c0_i32 = arith.constant 0 : i32
    %c0_i32_0 = arith.constant 0 : i32
    %c0_i32_1 = arith.constant 0 : i32
    %c0_i32_2 = arith.constant 0 : i32
    return %c0_i32, %c0_i32_0, %c0_i32_1 : i32, i32, i32
  }
  func.func @transform_3(%arg0: i32) -> (i32, i32, i32) {
    %c0_i32 = arith.constant 0 : i32
    %c0_i32_0 = arith.constant 0 : i32
    %c0_i32_1 = arith.constant 0 : i32
    %c0_i32_2 = arith.constant 0 : i32
    return %c0_i32, %c0_i32_0, %c0_i32_1 : i32, i32, i32
  }
  func.func @transform_4(%arg0: i32) -> (i32, i32, i32) {
    %c0_i32 = arith.constant 0 : i32
    %c0_i32_0 = arith.constant 0 : i32
    %c0_i32_1 = arith.constant 0 : i32
    %c0_i32_2 = arith.constant 0 : i32
    return %c0_i32, %c0_i32_0, %c0_i32_1 : i32, i32, i32
  }
  func.func @transform_5(%arg0: i32) -> (i32, i32, i32) {
    %c0_i32 = arith.constant 0 : i32
    %c0_i32_0 = arith.constant 0 : i32
    %c0_i32_1 = arith.constant 0 : i32
    %c0_i32_2 = arith.constant 0 : i32
    return %c0_i32, %c0_i32_0, %c0_i32_1 : i32, i32, i32
  }
  func.func @transform_6(%arg0: i32) -> (i32, i32, i32) {
    %c0_i32 = arith.constant 0 : i32
    %c0_i32_0 = arith.constant 0 : i32
    %c0_i32_1 = arith.constant 0 : i32
    %c0_i32_2 = arith.constant 0 : i32
    return %c0_i32, %c0_i32_0, %c0_i32_1 : i32, i32, i32
  }
  func.func @transform_7(%arg0: i32) -> (i32, i32, i32) {
    %c0_i32 = arith.constant 0 : i32
    %c0_i32_0 = arith.constant 0 : i32
    %c0_i32_1 = arith.constant 0 : i32
    %c0_i32_2 = arith.constant 0 : i32
    return %c0_i32, %c0_i32_0, %c0_i32_1 : i32, i32, i32
  }
  func.func @transform_8(%arg0: i32) -> (i32, i32) {
    %c0_i32 = arith.constant 0 : i32
    %c0_i32_0 = arith.constant 0 : i32
    %c0_i32_1 = arith.constant 0 : i32
    return %c0_i32, %c0_i32_0 : i32, i32
  }
  func.func @transform_9(%arg0: i32) -> (i32, i32) {
    %c0_i32 = arith.constant 0 : i32
    %c0_i32_0 = arith.constant 0 : i32
    %c0_i32_1 = arith.constant 0 : i32
    return %c0_i32, %c0_i32_0 : i32, i32
  }
  func.func @transform_10(%arg0: i32) -> (i32, i32) {
    %c0_i32 = arith.constant 0 : i32
    %c0_i32_0 = arith.constant 0 : i32
    %c0_i32_1 = arith.constant 0 : i32
    return %c0_i32, %c0_i32_0 : i32, i32
  }
  func.func @transform_11(%arg0: i32) -> (i32, i32) {
    %c0_i32 = arith.constant 0 : i32
    %c0_i32_0 = arith.constant 0 : i32
    %c0_i32_1 = arith.constant 0 : i32
    return %c0_i32, %c0_i32_0 : i32, i32
  }
  func.func @transform_12(%arg0: i32) -> (i32, i32, i32) {
    %c0_i32 = arith.constant 0 : i32
    %c0_i32_0 = arith.constant 0 : i32
    %c0_i32_1 = arith.constant 0 : i32
    return %arg0, %c0_i32, %c0_i32_0 : i32, i32, i32
  }
}

</mosaic_0001>

<llo_original>
// kernel: xvec_forward.1
$region0: #{xvec_forward.1}
  #allocation0 [shape = 'u32[]', space=smem, size = 0x4, offset = 0x4, fixed_abs, tag = 'smem constant byte address 0x4 - core index']
  #allocation1 [shape = 'u32[72,128]{1,0:T(1,128)}', space=vmem, size = 0x9000, scoped, tag = 'internal scratch']
  %s0 = inlined_call_operand.vmem [shape: bf16[64,512], index: 0, kind: input, shape index: {}]
  %s1 = inlined_call_operand.vmem [shape: bf16[5,128,64], index: 1, kind: input, shape index: {}]
  %s2 = inlined_call_operand.vmem [shape: bf16[5,128,128], index: 2, kind: input, shape index: {}]
  %s3 = inlined_call_operand.vmem [shape: bf16[7,128,128], index: 3, kind: input, shape index: {}]
  %s4 = inlined_call_operand.vmem [shape: bf16[1,128,128], index: 4, kind: input, shape index: {}]
  %s5 = inlined_call_operand.vmem [shape: bf16[1,128,128], index: 5, kind: input, shape index: {}]
  %s6 = inlined_call_operand.vmem [shape: bf16[1,32,128], index: 6, kind: input, shape index: {}]
  %s7 = inlined_call_operand.vmem [shape: bf16[1,128,32], index: 7, kind: input, shape index: {}]
  %s8 = inlined_call_operand.vmem [shape: f32[10,256], index: 8, kind: input, shape index: {}]
  %s9 = inlined_call_operand.vmem [shape: f32[128,8], index: 9, kind: input, shape index: {}]
  %s10 = inlined_call_operand.vmem [shape: f32[512,8], index: 10, kind: input, shape index: {}]
  %s11 = inlined_call_operand.vmem [shape: f32[1,512], index: 11, kind: input, shape index: {}]
  %s12 = inlined_call_operand.vmem [shape: f32[1,10,8], index: 12, kind: output, shape index: {}]
  %s13 = sld [smem:[#allocation0]]
  $region58: #{xvec_forward.1} parent=0
    _
  %s15 = ssub.s32 1, %s13
  %s16 = scalar_select 0, %s15, %s13
  // Predicated region
  $region2: #{xvec_forward.1} parent=0 // pred_check
    _
  $region3: #{xvec_forward.1} parent=0 // pred_check_branch
    %18 = sbr.rel (0) target = $region5
  $region4: #{xvec_forward.1} parent=0 // pred_region
    _
  $region5: #{xvec_forward.1} parent=0 // pred_fallthru
    _
  // Predicated region
  $region6: #{xvec_forward.1} parent=0 // pred_check
    _
  $region7: #{xvec_forward.1} parent=0 // pred_check_branch
    %20 = sbr.rel (0) target = $region9
  $region8: #{xvec_forward.1} parent=0 // pred_region
    _
  $region9: #{xvec_forward.1} parent=0 // pred_fallthru
    _
  // Predicated region
  $region10: #{xvec_forward.1} parent=0 // pred_check
    _
  $region11: #{xvec_forward.1} parent=0 // pred_check_branch
    %22 = sbr.rel (0) target = $region13
  $region12: #{xvec_forward.1} parent=0 // pred_region
    _
  $region13: #{xvec_forward.1} parent=0 // pred_fallthru
    _
  // Predicated region
  $region14: #{xvec_forward.1} parent=0 // pred_check
    _
  $region15: #{xvec_forward.1} parent=0 // pred_check_branch
    %24 = sbr.rel (0) target = $region17
  $region16: #{xvec_forward.1} parent=0 // pred_region
    _
  $region17: #{xvec_forward.1} parent=0 // pred_fallthru
    _
  // Predicated region
  $region18: #{xvec_forward.1} parent=0 // pred_check
    _
  $region19: #{xvec_forward.1} parent=0 // pred_check_branch
    %26 = sbr.rel (0) target = $region21
  $region20: #{xvec_forward.1} parent=0 // pred_region
    _
  $region21: #{xvec_forward.1} parent=0 // pred_fallthru
    _
  // Predicated region
  $region22: #{xvec_forward.1} parent=0 // pred_check
    _
  $region23: #{xvec_forward.1} parent=0 // pred_check_branch
    %28 = sbr.rel (0) target = $region25
  $region24: #{xvec_forward.1} parent=0 // pred_region
    _
  $region25: #{xvec_forward.1} parent=0 // pred_fallthru
    _
  // Predicated region
  $region26: #{xvec_forward.1} parent=0 // pred_check
    _
  $region27: #{xvec_forward.1} parent=0 // pred_check_branch
    %30 = sbr.rel (0) target = $region29
  $region28: #{xvec_forward.1} parent=0 // pred_region
    _
  $region29: #{xvec_forward.1} parent=0 // pred_fallthru
    _
  // Predicated region
  $region30: #{xvec_forward.1} parent=0 // pred_check
    _
  $region31: #{xvec_forward.1} parent=0 // pred_check_branch
    %32 = sbr.rel (0) target = $region33
  $region32: #{xvec_forward.1} parent=0 // pred_region
    _
  $region33: #{xvec_forward.1} parent=0 // pred_fallthru
    _
  // Predicated region
  $region34: #{xvec_forward.1} parent=0 // pred_check
    _
  $region35: #{xvec_forward.1} parent=0 // pred_check_branch
    %34 = sbr.rel (0) target = $region37
  $region36: #{xvec_forward.1} parent=0 // pred_region
    _
  $region37: #{xvec_forward.1} parent=0 // pred_fallthru
    _
  // Predicated region
  $region38: #{xvec_forward.1} parent=0 // pred_check
    _
  $region39: #{xvec_forward.1} parent=0 // pred_check_branch
    %36 = sbr.rel (0) target = $region41
  $region40: #{xvec_forward.1} parent=0 // pred_region
    _
  $region41: #{xvec_forward.1} parent=0 // pred_fallthru
    _
  // Predicated region
  $region42: #{xvec_forward.1} parent=0 // pred_check
    _
  $region43: #{xvec_forward.1} parent=0 // pred_check_branch
    %38 = sbr.rel (0) target = $region45
  $region44: #{xvec_forward.1} parent=0 // pred_region
    _
  $region45: #{xvec_forward.1} parent=0 // pred_fallthru
    _
  // Predicated region
  $region46: #{xvec_forward.1} parent=0 // pred_check
    _
  $region47: #{xvec_forward.1} parent=0 // pred_check_branch
    %40 = sbr.rel (0) target = $region49
  $region48: #{xvec_forward.1} parent=0 // pred_region
    _
  $region49: #{xvec_forward.1} parent=0 // pred_fallthru
    _
  %v42 = vld [vmem:[%s9] sm:$0xff]
  %v43 = vld [vmem:[%s9 + $0x8] sm:$0xff]
  %v44 = vld [vmem:[%s9 + $0x10] sm:$0xff]
  %v45 = vld [vmem:[%s9 + $0x18] sm:$0xff]
  %v46 = vld [vmem:[%s9 + $0x20] sm:$0xff]
  %v47 = vld [vmem:[%s9 + $0x28] sm:$0xff]
  %v48 = vld [vmem:[%s9 + $0x30] sm:$0xff]
  %v49 = vld [vmem:[%s9 + $0x38] sm:$0xff]
  %v50 = vld [vmem:[%s9 + $0x40] sm:$0xff]
  %v51 = vld [vmem:[%s9 + $0x48] sm:$0xff]
  %v52 = vld [vmem:[%s9 + $0x50] sm:$0xff]
  %v53 = vld [vmem:[%s9 + $0x58] sm:$0xff]
  %v54 = vld [vmem:[%s9 + $0x60] sm:$0xff]
  %v55 = vld [vmem:[%s9 + $0x68] sm:$0xff]
  %v56 = vld [vmem:[%s9 + $0x70] sm:$0xff]
  %v57 = vld [vmem:[%s9 + $0x78] sm:$0xff]
  %v58 = vld [vmem:[%s0] sm:$0xff]
  %v59 = vld [vmem:[%s0 + $0x8] sm:$0xff]
  %v60 = vld [vmem:[%s0 + $0x10] sm:$0xff]
  %v61 = vld [vmem:[%s0 + $0x18] sm:$0xff]
  %v62 = vld [vmem:[%s0 + $0x20] sm:$0xff]
  %v63 = vld [vmem:[%s0 + $0x28] sm:$0xff]
  %v64 = vld [vmem:[%s0 + $0x30] sm:$0xff]
  %v65 = vld [vmem:[%s0 + $0x38] sm:$0xff]
  %v66 = vld [vmem:[%s0 + $0x40] sm:$0xff]
  %v67 = vld [vmem:[%s0 + $0x48] sm:$0xff]
  %v68 = vld [vmem:[%s0 + $0x50] sm:$0xff]
  %v69 = vld [vmem:[%s0 + $0x58] sm:$0xff]
  %v70 = vld [vmem:[%s0 + $0x60] sm:$0xff]
  %v71 = vld [vmem:[%s0 + $0x68] sm:$0xff]
  %v72 = vld [vmem:[%s0 + $0x70] sm:$0xff]
  %v73 = vld [vmem:[%s0 + $0x78] sm:$0xff]
  %v74 = vunpack.c.l.bf16 %v58
  %v75 = vunpack.c.h.bf16 %v58
  %v76 = vunpack.c.l.bf16 %v59
  %v77 = vunpack.c.h.bf16 %v59
  %v78 = vunpack.c.l.bf16 %v60
  %v79 = vunpack.c.h.bf16 %v60
  %v80 = vunpack.c.l.bf16 %v61
  %v81 = vunpack.c.h.bf16 %v61
  %v82 = vunpack.c.l.bf16 %v62
  %v83 = vunpack.c.h.bf16 %v62
  %v84 = vunpack.c.l.bf16 %v63
  %v85 = vunpack.c.h.bf16 %v63
  %v86 = vunpack.c.l.bf16 %v64
  %v87 = vunpack.c.h.bf16 %v64
  %v88 = vunpack.c.l.bf16 %v65
  %v89 = vunpack.c.h.bf16 %v65
  %v90 = vunpack.c.l.bf16 %v66
  %v91 = vunpack.c.h.bf16 %v66
  %v92 = vunpack.c.l.bf16 %v67
  %v93 = vunpack.c.h.bf16 %v67
  %v94 = vunpack.c.l.bf16 %v68
  %v95 = vunpack.c.h.bf16 %v68
  %v96 = vunpack.c.l.bf16 %v69
  %v97 = vunpack.c.h.bf16 %v69
  %v98 = vunpack.c.l.bf16 %v70
  %v99 = vunpack.c.h.bf16 %v70
  %v100 = vunpack.c.l.bf16 %v71
  %v101 = vunpack.c.h.bf16 %v71
  %v102 = vunpack.c.l.bf16 %v72
  %v103 = vunpack.c.h.bf16 %v72
  %v104 = vunpack.c.l.bf16 %v73
  %v105 = vunpack.c.h.bf16 %v73
  %v106 = vld [vmem:[%s1] sm:$0xf]
  %v107 = vld [vmem:[%s1 + $0x4] sm:$0xf]
  %v108 = vld [vmem:[%s1 + $0x8] sm:$0xf]
  %v109 = vld [vmem:[%s1 + $0xc] sm:$0xf]
  %v110 = vld [vmem:[%s1 + $0x10] sm:$0xf]
  %v111 = vld [vmem:[%s1 + $0x14] sm:$0xf]
  %v112 = vld [vmem:[%s1 + $0x18] sm:$0xf]
  %v113 = vld [vmem:[%s1 + $0x1c] sm:$0xf]
  %v114 = vld [vmem:[%s1 + $0x20] sm:$0xf]
  %v115 = vld [vmem:[%s1 + $0x24] sm:$0xf]
  %v116 = vld [vmem:[%s1 + $0x28] sm:$0xf]
  %v117 = vld [vmem:[%s1 + $0x2c] sm:$0xf]
  %v118 = vld [vmem:[%s1 + $0x30] sm:$0xf]
  %v119 = vld [vmem:[%s1 + $0x34] sm:$0xf]
  %v120 = vld [vmem:[%s1 + $0x38] sm:$0xf]
  %v121 = vld [vmem:[%s1 + $0x3c] sm:$0xf]
  %122 = vrot.lane.b32.xlu0 %v74, 127
  %v123 = vpop.permute.xlu0 %122
  %124 = vrot.lane.b32.xlu0 %v78, 127
  %v125 = vpop.permute.xlu0 %124
  %126 = vrot.lane.b32.xlu0 %v82, 127
  %v127 = vpop.permute.xlu0 %126
  %128 = vrot.lane.b32.xlu0 %v86, 127
  %v129 = vpop.permute.xlu0 %128
  %130 = vrot.lane.b32.xlu0 %v90, 127
  %v131 = vpop.permute.xlu0 %130
  %132 = vrot.lane.b32.xlu0 %v94, 127
  %v133 = vpop.permute.xlu0 %132
  %134 = vrot.lane.b32.xlu0 %v98, 127
  %v135 = vpop.permute.xlu0 %134
  %136 = vrot.lane.b32.xlu0 %v102, 127
  %v137 = vpop.permute.xlu0 %136
  %138 = vrot.lane.b32.xlu0 %v75, 127
  %v139 = vpop.permute.xlu0 %138
  %140 = vrot.lane.b32.xlu0 %v79, 127
  %v141 = vpop.permute.xlu0 %140
  %142 = vrot.lane.b32.xlu0 %v83, 127
  %v143 = vpop.permute.xlu0 %142
  %144 = vrot.lane.b32.xlu0 %v87, 127
  %v145 = vpop.permute.xlu0 %144
  %146 = vrot.lane.b32.xlu0 %v91, 127
  %v147 = vpop.permute.xlu0 %146
  %148 = vrot.lane.b32.xlu0 %v95, 127
  %v149 = vpop.permute.xlu0 %148
  %150 = vrot.lane.b32.xlu0 %v99, 127
  %v151 = vpop.permute.xlu0 %150
  %152 = vrot.lane.b32.xlu0 %v103, 127
  %v153 = vpop.permute.xlu0 %152
  %154 = vrot.lane.b32.xlu0 %v76, 127
  %v155 = vpop.permute.xlu0 %154
  %156 = vrot.lane.b32.xlu0 %v80, 127
  %v157 = vpop.permute.xlu0 %156
  %158 = vrot.lane.b32.xlu0 %v84, 127
  %v159 = vpop.permute.xlu0 %158
  %160 = vrot.lane.b32.xlu0 %v88, 127
  %v161 = vpop.permute.xlu0 %160
  %162 = vrot.lane.b32.xlu0 %v92, 127
  %v163 = vpop.permute.xlu0 %162
  %164 = vrot.lane.b32.xlu0 %v96, 127
  %v165 = vpop.permute.xlu0 %164
  %166 = vrot.lane.b32.xlu0 %v100, 127
  %v167 = vpop.permute.xlu0 %166
  %168 = vrot.lane.b32.xlu0 %v104, 127
  %v169 = vpop.permute.xlu0 %168
  %170 = vrot.lane.b32.xlu0 %v77, 127
  %v171 = vpop.permute.xlu0 %170
  %172 = vrot.lane.b32.xlu0 %v81, 127
  %v173 = vpop.permute.xlu0 %172
  %174 = vrot.lane.b32.xlu0 %v85, 127
  %v175 = vpop.permute.xlu0 %174
  %176 = vrot.lane.b32.xlu0 %v89, 127
  %v177 = vpop.permute.xlu0 %176
  %178 = vrot.lane.b32.xlu0 %v93, 127
  %v179 = vpop.permute.xlu0 %178
  %180 = vrot.lane.b32.xlu0 %v97, 127
  %v181 = vpop.permute.xlu0 %180
  %182 = vrot.lane.b32.xlu0 %v101, 127
  %v183 = vpop.permute.xlu0 %182
  %184 = vrot.lane.b32.xlu0 %v105, 127
  %v185 = vpop.permute.xlu0 %184
  %v186 = vlaneseq
  %v187 = vand.u32 %v186, 127
  %vm188 = vcmp.lt.s32.totalorder %v187, 127
  %v189 = vsel %vm188, %v155, %v171
  %v190 = vsel %vm188, %v157, %v173
  %v191 = vsel %vm188, %v159, %v175
  %v192 = vsel %vm188, %v161, %v177
  %v193 = vsel %vm188, %v163, %v179
  %v194 = vsel %vm188, %v165, %v181
  %v195 = vsel %vm188, %v167, %v183
  %v196 = vsel %vm188, %v169, %v185
  %v197 = vsel %vm188, %v139, %v155
  %v198 = vsel %vm188, %v141, %v157
  %v199 = vsel %vm188, %v143, %v159
  %v200 = vsel %vm188, %v145, %v161
  %v201 = vsel %vm188, %v147, %v163
  %v202 = vsel %vm188, %v149, %v165
  %v203 = vsel %vm188, %v151, %v167
  %v204 = vsel %vm188, %v153, %v169
  %v205 = vsel %vm188, %v123, %v139
  %v206 = vsel %vm188, %v125, %v141
  %v207 = vsel %vm188, %v127, %v143
  %v208 = vsel %vm188, %v129, %v145
  %v209 = vsel %vm188, %v131, %v147
  %v210 = vsel %vm188, %v133, %v149
  %v211 = vsel %vm188, %v135, %v151
  %v212 = vsel %vm188, %v137, %v153
  %v213 = vsel %vm188, %v171, %v123
  %v214 = vsel %vm188, %v173, %v125
  %v215 = vsel %vm188, %v175, %v127
  %v216 = vsel %vm188, %v177, %v129
  %v217 = vsel %vm188, %v179, %v131
  %v218 = vsel %vm188, %v181, %v133
  %v219 = vsel %vm188, %v183, %v135
  %v220 = vsel %vm188, %v185, %v137
  %s221 = scalar_lea.vmem %s1, 64
  %v222 = vld [vmem:[%s221] sm:$0xf]
  %v223 = vld [vmem:[%s221 + $0x4] sm:$0xf]
  %v224 = vld [vmem:[%s221 + $0x8] sm:$0xf]
  %v225 = vld [vmem:[%s221 + $0xc] sm:$0xf]
  %v226 = vld [vmem:[%s221 + $0x10] sm:$0xf]
  %v227 = vld [vmem:[%s221 + $0x14] sm:$0xf]
  %v228 = vld [vmem:[%s221 + $0x18] sm:$0xf]
  %v229 = vld [vmem:[%s221 + $0x1c] sm:$0xf]
  %v230 = vld [vmem:[%s221 + $0x20] sm:$0xf]
  %v231 = vld [vmem:[%s221 + $0x24] sm:$0xf]
  %v232 = vld [vmem:[%s221 + $0x28] sm:$0xf]
  %v233 = vld [vmem:[%s221 + $0x2c] sm:$0xf]
  %v234 = vld [vmem:[%s221 + $0x30] sm:$0xf]
  %v235 = vld [vmem:[%s221 + $0x34] sm:$0xf]
  %v236 = vld [vmem:[%s221 + $0x38] sm:$0xf]
  %v237 = vld [vmem:[%s221 + $0x3c] sm:$0xf]
  %v238 = vpack.c.bf16 %v206, %v205
  %v239 = vpack.c.bf16 %v198, %v197
  %v240 = vpack.c.bf16 %v190, %v189
  %v241 = vpack.c.bf16 %v214, %v213
  %v242 = vpack.c.bf16 %v208, %v207
  %v243 = vpack.c.bf16 %v200, %v199
  %v244 = vpack.c.bf16 %v192, %v191
  %v245 = vpack.c.bf16 %v216, %v215
  %v246 = vpack.c.bf16 %v210, %v209
  %v247 = vpack.c.bf16 %v202, %v201
  %v248 = vpack.c.bf16 %v194, %v193
  %v249 = vpack.c.bf16 %v218, %v217
  %v250 = vpack.c.bf16 %v212, %v211
  %v251 = vpack.c.bf16 %v204, %v203
  %v252 = vpack.c.bf16 %v196, %v195
  %v253 = vpack.c.bf16 %v220, %v219
  %v270 = vunpack.c.l.b16 %v222
  %v271 = vunpack.c.l.b16 %v223
  %v272 = vunpack.c.l.b16 %v224
  %v273 = vunpack.c.l.b16 %v225
  %v274 = vunpack.c.l.b16 %v226
  %v275 = vunpack.c.l.b16 %v227
  %v276 = vunpack.c.l.b16 %v228
  %v277 = vunpack.c.l.b16 %v229
  %v278 = vunpack.c.l.b16 %v230
  %v279 = vunpack.c.l.b16 %v231
  %v280 = vunpack.c.l.b16 %v232
  %v281 = vunpack.c.l.b16 %v233
  %v282 = vunpack.c.l.b16 %v234
  %v283 = vunpack.c.l.b16 %v235
  %v284 = vunpack.c.l.b16 %v236
  %v285 = vunpack.c.l.b16 %v237
  %v286 = vpack.c.b16 %v271, %v270
  %v287 = vpack.c.b16 %v273, %v272
  %v288 = vpack.c.b16 %v275, %v274
  %v289 = vpack.c.b16 %v277, %v276
  %v290 = vpack.c.b16 %v279, %v278
  %v291 = vpack.c.b16 %v281, %v280
  %v292 = vpack.c.b16 %v283, %v282
  %v293 = vpack.c.b16 %v285, %v284
  %vm294 = vcmask 523264
  %v296 = vsel %vm294, %v286, 0
  %v299 = vsel %vm294, %v287, 0
  %v302 = vsel %vm294, %v288, 0
  %v305 = vsel %vm294, %v289, 0
  %v308 = vsel %vm294, %v290, 0
  %v311 = vsel %vm294, %v291, 0
  %v314 = vsel %vm294, %v292, 0
  %v317 = vsel %vm294, %v293, 0
  %319 = vmatpush.bf16.msra.mxu0 0
  %320 = vmatpush.bf16.msra.mxu0 0
  %321 = vmatpush.bf16.msra.mxu0 0
  %322 = vmatpush.bf16.msra.mxu0 0
  %323 = vmatpush.bf16.msra.mxu0 %v250
  %324 = vmatpush.bf16.msra.mxu0 %v246
  %325 = vmatpush.bf16.msra.mxu0 %v242
  %326 = vmatpush.bf16.msra.mxu0 %v238
  %327 = vmatmul.bf16.gmra.mxu0 %v296
  %v328 = vpop.f32.mrf.mxu0
  %v329 = vadd.f32 0.0, %v328
  %v330 = vpop.f32.mrf.mxu0
  %v331 = vadd.f32 0.0, %v330
  %332 = vmatmul.bf16.gmra.mxu0 %v299
  %v333 = vpop.f32.mrf.mxu0
  %v334 = vadd.f32 0.0, %v333
  %v335 = vpop.f32.mrf.mxu0
  %v336 = vadd.f32 0.0, %v335
  %337 = vmatmul.bf16.gmra.mxu0 %v302
  %v338 = vpop.f32.mrf.mxu0
  %v339 = vadd.f32 0.0, %v338
  %v340 = vpop.f32.mrf.mxu0
  %v341 = vadd.f32 0.0, %v340
  %342 = vmatmul.bf16.gmra.mxu0 %v305
  %v343 = vpop.f32.mrf.mxu0
  %v344 = vadd.f32 0.0, %v343
  %v345 = vpop.f32.mrf.mxu0
  %v346 = vadd.f32 0.0, %v345
  %347 = vmatmul.bf16.gmra.mxu0 %v308
  %v348 = vpop.f32.mrf.mxu0
  %v349 = vadd.f32 0.0, %v348
  %v350 = vpop.f32.mrf.mxu0
  %v351 = vadd.f32 0.0, %v350
  %352 = vmatmul.bf16.gmra.mxu0 %v311
  %v353 = vpop.f32.mrf.mxu0
  %v354 = vadd.f32 0.0, %v353
  %v355 = vpop.f32.mrf.mxu0
  %v356 = vadd.f32 0.0, %v355
  %357 = vmatmul.bf16.gmra.mxu0 %v314
  %v358 = vpop.f32.mrf.mxu0
  %v359 = vadd.f32 0.0, %v358
  %v360 = vpop.f32.mrf.mxu0
  %v361 = vadd.f32 0.0, %v360
  %362 = vmatmul.bf16.gmra.mxu0 %v317
  %v363 = vpop.f32.mrf.mxu0
  %v364 = vadd.f32 0.0, %v363
  %v365 = vpop.f32.mrf.mxu0
  %v366 = vadd.f32 0.0, %v365
  %367 = vdwg.mxu0
  %368 = vmatpush.bf16.msra.mxu0 0
  %369 = vmatpush.bf16.msra.mxu0 0
  %370 = vmatpush.bf16.msra.mxu0 0
  %371 = vmatpush.bf16.msra.mxu0 0
  %372 = vmatpush.bf16.msra.mxu0 %v251
  %373 = vmatpush.bf16.msra.mxu0 %v247
  %374 = vmatpush.bf16.msra.mxu0 %v243
  %375 = vmatpush.bf16.msra.mxu0 %v239
  %376 = vmatmul.bf16.gmra.mxu0 %v296
  %v377 = vpop.f32.mrf.mxu0
  %v378 = vadd.f32 0.0, %v377
  %v379 = vpop.f32.mrf.mxu0
  %v380 = vadd.f32 0.0, %v379
  %381 = vmatmul.bf16.gmra.mxu0 %v299
  %v382 = vpop.f32.mrf.mxu0
  %v383 = vadd.f32 0.0, %v382
  %v384 = vpop.f32.mrf.mxu0
  %v385 = vadd.f32 0.0, %v384
  %386 = vmatmul.bf16.gmra.mxu0 %v302
  %v387 = vpop.f32.mrf.mxu0
  %v388 = vadd.f32 0.0, %v387
  %v389 = vpop.f32.mrf.mxu0
  %v390 = vadd.f32 0.0, %v389
  %391 = vmatmul.bf16.gmra.mxu0 %v305
  %v392 = vpop.f32.mrf.mxu0
  %v393 = vadd.f32 0.0, %v392
  %v394 = vpop.f32.mrf.mxu0
  %v395 = vadd.f32 0.0, %v394
  %396 = vmatmul.bf16.gmra.mxu0 %v308
  %v397 = vpop.f32.mrf.mxu0
  %v398 = vadd.f32 0.0, %v397
  %v399 = vpop.f32.mrf.mxu0
  %v400 = vadd.f32 0.0, %v399
  %401 = vmatmul.bf16.gmra.mxu0 %v311
  %v402 = vpop.f32.mrf.mxu0
  %v403 = vadd.f32 0.0, %v402
  %v404 = vpop.f32.mrf.mxu0
  %v405 = vadd.f32 0.0, %v404
  %406 = vmatmul.bf16.gmra.mxu0 %v314
  %v407 = vpop.f32.mrf.mxu0
  %v408 = vadd.f32 0.0, %v407
  %v409 = vpop.f32.mrf.mxu0
  %v410 = vadd.f32 0.0, %v409
  %411 = vmatmul.bf16.gmra.mxu0 %v317
  %v412 = vpop.f32.mrf.mxu0
  %v413 = vadd.f32 0.0, %v412
  %v414 = vpop.f32.mrf.mxu0
  %v415 = vadd.f32 0.0, %v414
  %416 = vdwg.mxu0
  %417 = vmatpush.bf16.msra.mxu0 0
  %418 = vmatpush.bf16.msra.mxu0 0
  %419 = vmatpush.bf16.msra.mxu0 0
  %420 = vmatpush.bf16.msra.mxu0 0
  %421 = vmatpush.bf16.msra.mxu0 %v252
  %422 = vmatpush.bf16.msra.mxu0 %v248
  %423 = vmatpush.bf16.msra.mxu0 %v244
  %424 = vmatpush.bf16.msra.mxu0 %v240
  %425 = vmatmul.bf16.gmra.mxu0 %v296
  %v426 = vpop.f32.mrf.mxu0
  %v427 = vadd.f32 0.0, %v426
  %v428 = vpop.f32.mrf.mxu0
  %v429 = vadd.f32 0.0, %v428
  %430 = vmatmul.bf16.gmra.mxu0 %v299
  %v431 = vpop.f32.mrf.mxu0
  %v432 = vadd.f32 0.0, %v431
  %v433 = vpop.f32.mrf.mxu0
  %v434 = vadd.f32 0.0, %v433
  %435 = vmatmul.bf16.gmra.mxu0 %v302
  %v436 = vpop.f32.mrf.mxu0
  %v437 = vadd.f32 0.0, %v436
  %v438 = vpop.f32.mrf.mxu0
  %v439 = vadd.f32 0.0, %v438
  %440 = vmatmul.bf16.gmra.mxu0 %v305
  %v441 = vpop.f32.mrf.mxu0
  %v442 = vadd.f32 0.0, %v441
  %v443 = vpop.f32.mrf.mxu0
  %v444 = vadd.f32 0.0, %v443
  %445 = vmatmul.bf16.gmra.mxu0 %v308
  %v446 = vpop.f32.mrf.mxu0
  %v447 = vadd.f32 0.0, %v446
  %v448 = vpop.f32.mrf.mxu0
  %v449 = vadd.f32 0.0, %v448
  %450 = vmatmul.bf16.gmra.mxu0 %v311
  %v451 = vpop.f32.mrf.mxu0
  %v452 = vadd.f32 0.0, %v451
  %v453 = vpop.f32.mrf.mxu0
  %v454 = vadd.f32 0.0, %v453
  %455 = vmatmul.bf16.gmra.mxu0 %v314
  %v456 = vpop.f32.mrf.mxu0
  %v457 = vadd.f32 0.0, %v456
  %v458 = vpop.f32.mrf.mxu0
  %v459 = vadd.f32 0.0, %v458
  %460 = vmatmul.bf16.gmra.mxu0 %v317
  %v461 = vpop.f32.mrf.mxu0
  %v462 = vadd.f32 0.0, %v461
  %v463 = vpop.f32.mrf.mxu0
  %v464 = vadd.f32 0.0, %v463
  %465 = vdwg.mxu0
  %466 = vmatpush.bf16.msra.mxu0 0
  %467 = vmatpush.bf16.msra.mxu0 0
  %468 = vmatpush.bf16.msra.mxu0 0
  %469 = vmatpush.bf16.msra.mxu0 0
  %470 = vmatpush.bf16.msra.mxu0 %v253
  %471 = vmatpush.bf16.msra.mxu0 %v249
  %472 = vmatpush.bf16.msra.mxu0 %v245
  %473 = vmatpush.bf16.msra.mxu0 %v241
  %474 = vmatmul.bf16.gmra.mxu0 %v296
  %v475 = vpop.f32.mrf.mxu0
  %v476 = vadd.f32 0.0, %v475
  %v477 = vpop.f32.mrf.mxu0
  %v478 = vadd.f32 0.0, %v477
  %479 = vmatmul.bf16.gmra.mxu0 %v299
  %v480 = vpop.f32.mrf.mxu0
  %v481 = vadd.f32 0.0, %v480
  %v482 = vpop.f32.mrf.mxu0
  %v483 = vadd.f32 0.0, %v482
  %484 = vmatmul.bf16.gmra.mxu0 %v302
  %v485 = vpop.f32.mrf.mxu0
  %v486 = vadd.f32 0.0, %v485
  %v487 = vpop.f32.mrf.mxu0
  %v488 = vadd.f32 0.0, %v487
  %489 = vmatmul.bf16.gmra.mxu0 %v305
  %v490 = vpop.f32.mrf.mxu0
  %v491 = vadd.f32 0.0, %v490
  %v492 = vpop.f32.mrf.mxu0
  %v493 = vadd.f32 0.0, %v492
  %494 = vmatmul.bf16.gmra.mxu0 %v308
  %v495 = vpop.f32.mrf.mxu0
  %v496 = vadd.f32 0.0, %v495
  %v497 = vpop.f32.mrf.mxu0
  %v498 = vadd.f32 0.0, %v497
  %499 = vmatmul.bf16.gmra.mxu0 %v311
  %v500 = vpop.f32.mrf.mxu0
  %v501 = vadd.f32 0.0, %v500
  %v502 = vpop.f32.mrf.mxu0
  %v503 = vadd.f32 0.0, %v502
  %504 = vmatmul.bf16.gmra.mxu0 %v314
  %v505 = vpop.f32.mrf.mxu0
  %v506 = vadd.f32 0.0, %v505
  %v507 = vpop.f32.mrf.mxu0
  %v508 = vadd.f32 0.0, %v507
  %509 = vmatmul.bf16.gmra.mxu0 %v317
  %v510 = vpop.f32.mrf.mxu0
  %v511 = vadd.f32 0.0, %v510
  %v512 = vpop.f32.mrf.mxu0
  %v513 = vadd.f32 0.0, %v512
  %514 = vdwg.mxu0
  %v531 = vunpack.c.l.b16 %v106
  %v532 = vunpack.c.l.b16 %v107
  %v533 = vunpack.c.l.b16 %v108
  %v534 = vunpack.c.l.b16 %v109
  %v535 = vunpack.c.l.b16 %v110
  %v536 = vunpack.c.l.b16 %v111
  %v537 = vunpack.c.l.b16 %v112
  %v538 = vunpack.c.l.b16 %v113
  %v539 = vunpack.c.l.b16 %v114
  %v540 = vunpack.c.l.b16 %v115
  %v541 = vunpack.c.l.b16 %v116
  %v542 = vunpack.c.l.b16 %v117
  %v543 = vunpack.c.l.b16 %v118
  %v544 = vunpack.c.l.b16 %v119
  %v545 = vunpack.c.l.b16 %v120
  %v546 = vunpack.c.l.b16 %v121
  %v547 = vpack.c.b16 %v532, %v531
  %v548 = vpack.c.b16 %v534, %v533
  %v549 = vpack.c.b16 %v536, %v535
  %v550 = vpack.c.b16 %v538, %v537
  %v551 = vpack.c.b16 %v540, %v539
  %v552 = vpack.c.b16 %v542, %v541
  %v553 = vpack.c.b16 %v544, %v543
  %v554 = vpack.c.b16 %v546, %v545
  %v571 = vunpack.c.l.b16 %v58
  %v572 = vunpack.c.h.b16 %v58
  %v573 = vunpack.c.l.b16 %v59
  %v574 = vunpack.c.h.b16 %v59
  %v575 = vunpack.c.l.b16 %v60
  %v576 = vunpack.c.h.b16 %v60
  %v577 = vunpack.c.l.b16 %v61
  %v578 = vunpack.c.h.b16 %v61
  %v579 = vunpack.c.l.b16 %v62
  %v580 = vunpack.c.h.b16 %v62
  %v581 = vunpack.c.l.b16 %v63
  %v582 = vunpack.c.h.b16 %v63
  %v583 = vunpack.c.l.b16 %v64
  %v584 = vunpack.c.h.b16 %v64
  %v585 = vunpack.c.l.b16 %v65
  %v586 = vunpack.c.h.b16 %v65
  %v587 = vunpack.c.l.b16 %v66
  %v588 = vunpack.c.h.b16 %v66
  %v589 = vunpack.c.l.b16 %v67
  %v590 = vunpack.c.h.b16 %v67
  %v591 = vunpack.c.l.b16 %v68
  %v592 = vunpack.c.h.b16 %v68
  %v593 = vunpack.c.l.b16 %v69
  %v594 = vunpack.c.h.b16 %v69
  %v595 = vunpack.c.l.b16 %v70
  %v596 = vunpack.c.h.b16 %v70
  %v597 = vunpack.c.l.b16 %v71
  %v598 = vunpack.c.h.b16 %v71
  %v599 = vunpack.c.l.b16 %v72
  %v600 = vunpack.c.h.b16 %v72
  %v601 = vunpack.c.l.b16 %v73
  %v602 = vunpack.c.h.b16 %v73
  %v603 = vpack.c.b16 %v575, %v571
  %v604 = vpack.c.b16 %v576, %v572
  %v605 = vpack.c.b16 %v577, %v573
  %v606 = vpack.c.b16 %v578, %v574
  %v607 = vpack.c.b16 %v583, %v579
  %v608 = vpack.c.b16 %v584, %v580
  %v609 = vpack.c.b16 %v585, %v581
  %v610 = vpack.c.b16 %v586, %v582
  %v611 = vpack.c.b16 %v591, %v587
  %v612 = vpack.c.b16 %v592, %v588
  %v613 = vpack.c.b16 %v593, %v589
  %v614 = vpack.c.b16 %v594, %v590
  %v615 = vpack.c.b16 %v599, %v595
  %v616 = vpack.c.b16 %v600, %v596
  %v617 = vpack.c.b16 %v601, %v597
  %v618 = vpack.c.b16 %v602, %v598
  %v636 = vsel %vm294, %v547, 0
  %v639 = vsel %vm294, %v548, 0
  %v642 = vsel %vm294, %v549, 0
  %v645 = vsel %vm294, %v550, 0
  %v648 = vsel %vm294, %v551, 0
  %v651 = vsel %vm294, %v552, 0
  %v654 = vsel %vm294, %v553, 0
  %v657 = vsel %vm294, %v554, 0
  %659 = vmatpush.bf16.msra.mxu0 0
  %660 = vmatpush.bf16.msra.mxu0 0
  %661 = vmatpush.bf16.msra.mxu0 0
  %662 = vmatpush.bf16.msra.mxu0 0
  %663 = vmatpush.bf16.msra.mxu0 %v615
  %664 = vmatpush.bf16.msra.mxu0 %v611
  %665 = vmatpush.bf16.msra.mxu0 %v607
  %666 = vmatpush.bf16.msra.mxu0 %v603
  %667 = vmatmul.bf16.gmra.mxu0 %v636
  %v668 = vpop.f32.mrf.mxu0
  %v669 = vadd.f32 %v329, %v668
  %v670 = vpop.f32.mrf.mxu0
  %v671 = vadd.f32 %v331, %v670
  %672 = vmatmul.bf16.gmra.mxu0 %v639
  %v673 = vpop.f32.mrf.mxu0
  %v674 = vadd.f32 %v334, %v673
  %v675 = vpop.f32.mrf.mxu0
  %v676 = vadd.f32 %v336, %v675
  %677 = vmatmul.bf16.gmra.mxu0 %v642
  %v678 = vpop.f32.mrf.mxu0
  %v679 = vadd.f32 %v339, %v678
  %v680 = vpop.f32.mrf.mxu0
  %v681 = vadd.f32 %v341, %v680
  %682 = vmatmul.bf16.gmra.mxu0 %v645
  %v683 = vpop.f32.mrf.mxu0
  %v684 = vadd.f32 %v344, %v683
  %v685 = vpop.f32.mrf.mxu0
  %v686 = vadd.f32 %v346, %v685
  %687 = vmatmul.bf16.gmra.mxu0 %v648
  %v688 = vpop.f32.mrf.mxu0
  %v689 = vadd.f32 %v349, %v688
  %v690 = vpop.f32.mrf.mxu0
  %v691 = vadd.f32 %v351, %v690
  %692 = vmatmul.bf16.gmra.mxu0 %v651
  %v693 = vpop.f32.mrf.mxu0
  %v694 = vadd.f32 %v354, %v693
  %v695 = vpop.f32.mrf.mxu0
  %v696 = vadd.f32 %v356, %v695
  %697 = vmatmul.bf16.gmra.mxu0 %v654
  %v698 = vpop.f32.mrf.mxu0
  %v699 = vadd.f32 %v359, %v698
  %v700 = vpop.f32.mrf.mxu0
  %v701 = vadd.f32 %v361, %v700
  %702 = vmatmul.bf16.gmra.mxu0 %v657
  %v703 = vpop.f32.mrf.mxu0
  %v704 = vadd.f32 %v364, %v703
  %v705 = vpop.f32.mrf.mxu0
  %v706 = vadd.f32 %v366, %v705
  %707 = vdwg.mxu0
  %708 = vmatpush.bf16.msra.mxu0 0
  %709 = vmatpush.bf16.msra.mxu0 0
  %710 = vmatpush.bf16.msra.mxu0 0
  %711 = vmatpush.bf16.msra.mxu0 0
  %712 = vmatpush.bf16.msra.mxu0 %v616
  %713 = vmatpush.bf16.msra.mxu0 %v612
  %714 = vmatpush.bf16.msra.mxu0 %v608
  %715 = vmatpush.bf16.msra.mxu0 %v604
  %716 = vmatmul.bf16.gmra.mxu0 %v636
  %v717 = vpop.f32.mrf.mxu0
  %v718 = vadd.f32 %v378, %v717
  %v719 = vpop.f32.mrf.mxu0
  %v720 = vadd.f32 %v380, %v719
  %721 = vmatmul.bf16.gmra.mxu0 %v639
  %v722 = vpop.f32.mrf.mxu0
  %v723 = vadd.f32 %v383, %v722
  %v724 = vpop.f32.mrf.mxu0
  %v725 = vadd.f32 %v385, %v724
  %726 = vmatmul.bf16.gmra.mxu0 %v642
  %v727 = vpop.f32.mrf.mxu0
  %v728 = vadd.f32 %v388, %v727
  %v729 = vpop.f32.mrf.mxu0
  %v730 = vadd.f32 %v390, %v729
  %731 = vmatmul.bf16.gmra.mxu0 %v645
  %v732 = vpop.f32.mrf.mxu0
  %v733 = vadd.f32 %v393, %v732
  %v734 = vpop.f32.mrf.mxu0
  %v735 = vadd.f32 %v395, %v734
  %736 = vmatmul.bf16.gmra.mxu0 %v648
  %v737 = vpop.f32.mrf.mxu0
  %v738 = vadd.f32 %v398, %v737
  %v739 = vpop.f32.mrf.mxu0
  %v740 = vadd.f32 %v400, %v739
  %741 = vmatmul.bf16.gmra.mxu0 %v651
  %v742 = vpop.f32.mrf.mxu0
  %v743 = vadd.f32 %v403, %v742
  %v744 = vpop.f32.mrf.mxu0
  %v745 = vadd.f32 %v405, %v744
  %746 = vmatmul.bf16.gmra.mxu0 %v654
  %v747 = vpop.f32.mrf.mxu0
  %v748 = vadd.f32 %v408, %v747
  %v749 = vpop.f32.mrf.mxu0
  %v750 = vadd.f32 %v410, %v749
  %751 = vmatmul.bf16.gmra.mxu0 %v657
  %v752 = vpop.f32.mrf.mxu0
  %v753 = vadd.f32 %v413, %v752
  %v754 = vpop.f32.mrf.mxu0
  %v755 = vadd.f32 %v415, %v754
  %756 = vdwg.mxu0
  %757 = vmatpush.bf16.msra.mxu0 0
  %758 = vmatpush.bf16.msra.mxu0 0
  %759 = vmatpush.bf16.msra.mxu0 0
  %760 = vmatpush.bf16.msra.mxu0 0
  %761 = vmatpush.bf16.msra.mxu0 %v617
  %762 = vmatpush.bf16.msra.mxu0 %v613
  %763 = vmatpush.bf16.msra.mxu0 %v609
  %764 = vmatpush.bf16.msra.mxu0 %v605
  %765 = vmatmul.bf16.gmra.mxu0 %v636
  %v766 = vpop.f32.mrf.mxu0
  %v767 = vadd.f32 %v427, %v766
  %v768 = vpop.f32.mrf.mxu0
  %v769 = vadd.f32 %v429, %v768
  %770 = vmatmul.bf16.gmra.mxu0 %v639
  %v771 = vpop.f32.mrf.mxu0
  %v772 = vadd.f32 %v432, %v771
  %v773 = vpop.f32.mrf.mxu0
  %v774 = vadd.f32 %v434, %v773
  %775 = vmatmul.bf16.gmra.mxu0 %v642
  %v776 = vpop.f32.mrf.mxu0
  %v777 = vadd.f32 %v437, %v776
  %v778 = vpop.f32.mrf.mxu0
  %v779 = vadd.f32 %v439, %v778
  %780 = vmatmul.bf16.gmra.mxu0 %v645
  %v781 = vpop.f32.mrf.mxu0
  %v782 = vadd.f32 %v442, %v781
  %v783 = vpop.f32.mrf.mxu0
  %v784 = vadd.f32 %v444, %v783
  %785 = vmatmul.bf16.gmra.mxu0 %v648
  %v786 = vpop.f32.mrf.mxu0
  %v787 = vadd.f32 %v447, %v786
  %v788 = vpop.f32.mrf.mxu0
  %v789 = vadd.f32 %v449, %v788
  %790 = vmatmul.bf16.gmra.mxu0 %v651
  %v791 = vpop.f32.mrf.mxu0
  %v792 = vadd.f32 %v452, %v791
  %v793 = vpop.f32.mrf.mxu0
  %v794 = vadd.f32 %v454, %v793
  %795 = vmatmul.bf16.gmra.mxu0 %v654
  %v796 = vpop.f32.mrf.mxu0
  %v797 = vadd.f32 %v457, %v796
  %v798 = vpop.f32.mrf.mxu0
  %v799 = vadd.f32 %v459, %v798
  %800 = vmatmul.bf16.gmra.mxu0 %v657
  %v801 = vpop.f32.mrf.mxu0
  %v802 = vadd.f32 %v462, %v801
  %v803 = vpop.f32.mrf.mxu0
  %v804 = vadd.f32 %v464, %v803
  %805 = vdwg.mxu0
  %806 = vmatpush.bf16.msra.mxu0 0
  %807 = vmatpush.bf16.msra.mxu0 0
  %808 = vmatpush.bf16.msra.mxu0 0
  %809 = vmatpush.bf16.msra.mxu0 0
  %810 = vmatpush.bf16.msra.mxu0 %v618
  %811 = vmatpush.bf16.msra.mxu0 %v614
  %812 = vmatpush.bf16.msra.mxu0 %v610
  %813 = vmatpush.bf16.msra.mxu0 %v606
  %814 = vmatmul.bf16.gmra.mxu0 %v636
  %v815 = vpop.f32.mrf.mxu0
  %v816 = vadd.f32 %v476, %v815
  %v817 = vpop.f32.mrf.mxu0
  %v818 = vadd.f32 %v478, %v817
  %819 = vmatmul.bf16.gmra.mxu0 %v639
  %v820 = vpop.f32.mrf.mxu0
  %v821 = vadd.f32 %v481, %v820
  %v822 = vpop.f32.mrf.mxu0
  %v823 = vadd.f32 %v483, %v822
  %824 = vmatmul.bf16.gmra.mxu0 %v642
  %v825 = vpop.f32.mrf.mxu0
  %v826 = vadd.f32 %v486, %v825
  %v827 = vpop.f32.mrf.mxu0
  %v828 = vadd.f32 %v488, %v827
  %829 = vmatmul.bf16.gmra.mxu0 %v645
  %v830 = vpop.f32.mrf.mxu0
  %v831 = vadd.f32 %v491, %v830
  %v832 = vpop.f32.mrf.mxu0
  %v833 = vadd.f32 %v493, %v832
  %834 = vmatmul.bf16.gmra.mxu0 %v648
  %v835 = vpop.f32.mrf.mxu0
  %v836 = vadd.f32 %v496, %v835
  %v837 = vpop.f32.mrf.mxu0
  %v838 = vadd.f32 %v498, %v837
  %839 = vmatmul.bf16.gmra.mxu0 %v651
  %v840 = vpop.f32.mrf.mxu0
  %v841 = vadd.f32 %v501, %v840
  %v842 = vpop.f32.mrf.mxu0
  %v843 = vadd.f32 %v503, %v842
  %844 = vmatmul.bf16.gmra.mxu0 %v654
  %v845 = vpop.f32.mrf.mxu0
  %v846 = vadd.f32 %v506, %v845
  %v847 = vpop.f32.mrf.mxu0
  %v848 = vadd.f32 %v508, %v847
  %849 = vmatmul.bf16.gmra.mxu0 %v657
  %v850 = vpop.f32.mrf.mxu0
  %v851 = vadd.f32 %v511, %v850
  %v852 = vpop.f32.mrf.mxu0
  %v853 = vadd.f32 %v513, %v852
  %854 = vdwg.mxu0
  %855 = vrot.lane.b32.xlu0 %v74, 126
  %v856 = vpop.permute.xlu0 %855
  %857 = vrot.lane.b32.xlu0 %v78, 126
  %v858 = vpop.permute.xlu0 %857
  %859 = vrot.lane.b32.xlu0 %v82, 126
  %v860 = vpop.permute.xlu0 %859
  %861 = vrot.lane.b32.xlu0 %v86, 126
  %v862 = vpop.permute.xlu0 %861
  %863 = vrot.lane.b32.xlu0 %v90, 126
  %v864 = vpop.permute.xlu0 %863
  %865 = vrot.lane.b32.xlu0 %v94, 126
  %v866 = vpop.permute.xlu0 %865
  %867 = vrot.lane.b32.xlu0 %v98, 126
  %v868 = vpop.permute.xlu0 %867
  %869 = vrot.lane.b32.xlu0 %v102, 126
  %v870 = vpop.permute.xlu0 %869
  %871 = vrot.lane.b32.xlu0 %v75, 126
  %v872 = vpop.permute.xlu0 %871
  %873 = vrot.lane.b32.xlu0 %v79, 126
  %v874 = vpop.permute.xlu0 %873
  %875 = vrot.lane.b32.xlu0 %v83, 126
  %v876 = vpop.permute.xlu0 %875
  %877 = vrot.lane.b32.xlu0 %v87, 126
  %v878 = vpop.permute.xlu0 %877
  %879 = vrot.lane.b32.xlu0 %v91, 126
  %v880 = vpop.permute.xlu0 %879
  %881 = vrot.lane.b32.xlu0 %v95, 126
  %v882 = vpop.permute.xlu0 %881
  %883 = vrot.lane.b32.xlu0 %v99, 126
  %v884 = vpop.permute.xlu0 %883
  %885 = vrot.lane.b32.xlu0 %v103, 126
  %v886 = vpop.permute.xlu0 %885
  %887 = vrot.lane.b32.xlu0 %v76, 126
  %v888 = vpop.permute.xlu0 %887
  %889 = vrot.lane.b32.xlu0 %v80, 126
  %v890 = vpop.permute.xlu0 %889
  %891 = vrot.lane.b32.xlu0 %v84, 126
  %v892 = vpop.permute.xlu0 %891
  %893 = vrot.lane.b32.xlu0 %v88, 126
  %v894 = vpop.permute.xlu0 %893
  %895 = vrot.lane.b32.xlu0 %v92, 126
  %v896 = vpop.permute.xlu0 %895
  %897 = vrot.lane.b32.xlu0 %v96, 126
  %v898 = vpop.permute.xlu0 %897
  %899 = vrot.lane.b32.xlu0 %v100, 126
  %v900 = vpop.permute.xlu0 %899
  %901 = vrot.lane.b32.xlu0 %v104, 126
  %v902 = vpop.permute.xlu0 %901
  %903 = vrot.lane.b32.xlu0 %v77, 126
  %v904 = vpop.permute.xlu0 %903
  %905 = vrot.lane.b32.xlu0 %v81, 126
  %v906 = vpop.permute.xlu0 %905
  %907 = vrot.lane.b32.xlu0 %v85, 126
  %v908 = vpop.permute.xlu0 %907
  %909 = vrot.lane.b32.xlu0 %v89, 126
  %v910 = vpop.permute.xlu0 %909
  %911 = vrot.lane.b32.xlu0 %v93, 126
  %v912 = vpop.permute.xlu0 %911
  %913 = vrot.lane.b32.xlu0 %v97, 126
  %v914 = vpop.permute.xlu0 %913
  %915 = vrot.lane.b32.xlu0 %v101, 126
  %v916 = vpop.permute.xlu0 %915
  %917 = vrot.lane.b32.xlu0 %v105, 126
  %v918 = vpop.permute.xlu0 %917
  %vm919 = vcmp.lt.s32.totalorder %v187, 126
  %v920 = vsel %vm919, %v888, %v904
  %v921 = vsel %vm919, %v890, %v906
  %v922 = vsel %vm919, %v892, %v908
  %v923 = vsel %vm919, %v894, %v910
  %v924 = vsel %vm919, %v896, %v912
  %v925 = vsel %vm919, %v898, %v914
  %v926 = vsel %vm919, %v900, %v916
  %v927 = vsel %vm919, %v902, %v918
  %v928 = vsel %vm919, %v872, %v888
  %v929 = vsel %vm919, %v874, %v890
  %v930 = vsel %vm919, %v876, %v892
  %v931 = vsel %vm919, %v878, %v894
  %v932 = vsel %vm919, %v880, %v896
  %v933 = vsel %vm919, %v882, %v898
  %v934 = vsel %vm919, %v884, %v900
  %v935 = vsel %vm919, %v886, %v902
  %v936 = vsel %vm919, %v856, %v872
  %v937 = vsel %vm919, %v858, %v874
  %v938 = vsel %vm919, %v860, %v876
  %v939 = vsel %vm919, %v862, %v878
  %v940 = vsel %vm919, %v864, %v880
  %v941 = vsel %vm919, %v866, %v882
  %v942 = vsel %vm919, %v868, %v884
  %v943 = vsel %vm919, %v870, %v886
  %v944 = vsel %vm919, %v904, %v856
  %v945 = vsel %vm919, %v906, %v858
  %v946 = vsel %vm919, %v908, %v860
  %v947 = vsel %vm919, %v910, %v862
  %v948 = vsel %vm919, %v912, %v864
  %v949 = vsel %vm919, %v914, %v866
  %v950 = vsel %vm919, %v916, %v868
  %v951 = vsel %vm919, %v918, %v870
  %s952 = scalar_lea.vmem %s1, 128
  %v953 = vld [vmem:[%s952] sm:$0xf]
  %v954 = vld [vmem:[%s952 + $0x4] sm:$0xf]
  %v955 = vld [vmem:[%s952 + $0x8] sm:$0xf]
  %v956 = vld [vmem:[%s952 + $0xc] sm:$0xf]
  %v957 = vld [vmem:[%s952 + $0x10] sm:$0xf]
  %v958 = vld [vmem:[%s952 + $0x14] sm:$0xf]
  %v959 = vld [vmem:[%s952 + $0x18] sm:$0xf]
  %v960 = vld [vmem:[%s952 + $0x1c] sm:$0xf]
  %v961 = vld [vmem:[%s952 + $0x20] sm:$0xf]
  %v962 = vld [vmem:[%s952 + $0x24] sm:$0xf]
  %v963 = vld [vmem:[%s952 + $0x28] sm:$0xf]
  %v964 = vld [vmem:[%s952 + $0x2c] sm:$0xf]
  %v965 = vld [vmem:[%s952 + $0x30] sm:$0xf]
  %v966 = vld [vmem:[%s952 + $0x34] sm:$0xf]
  %v967 = vld [vmem:[%s952 + $0x38] sm:$0xf]
  %v968 = vld [vmem:[%s952 + $0x3c] sm:$0xf]
  %v969 = vpack.c.bf16 %v937, %v936
  %v970 = vpack.c.bf16 %v929, %v928
  %v971 = vpack.c.bf16 %v921, %v920
  %v972 = vpack.c.bf16 %v945, %v944
  %v973 = vpack.c.bf16 %v939, %v938
  %v974 = vpack.c.bf16 %v931, %v930
  %v975 = vpack.c.bf16 %v923, %v922
  %v976 = vpack.c.bf16 %v947, %v946
  %v977 = vpack.c.bf16 %v941, %v940
  %v978 = vpack.c.bf16 %v933, %v932
  %v979 = vpack.c.bf16 %v925, %v924
  %v980 = vpack.c.bf16 %v949, %v948
  %v981 = vpack.c.bf16 %v943, %v942
  %v982 = vpack.c.bf16 %v935, %v934
  %v983 = vpack.c.bf16 %v927, %v926
  %v984 = vpack.c.bf16 %v951, %v950
  %v1001 = vunpack.c.l.b16 %v953
  %v1002 = vunpack.c.l.b16 %v954
  %v1003 = vunpack.c.l.b16 %v955
  %v1004 = vunpack.c.l.b16 %v956
  %v1005 = vunpack.c.l.b16 %v957
  %v1006 = vunpack.c.l.b16 %v958
  %v1007 = vunpack.c.l.b16 %v959
  %v1008 = vunpack.c.l.b16 %v960
  %v1009 = vunpack.c.l.b16 %v961
  %v1010 = vunpack.c.l.b16 %v962
  %v1011 = vunpack.c.l.b16 %v963
  %v1012 = vunpack.c.l.b16 %v964
  %v1013 = vunpack.c.l.b16 %v965
  %v1014 = vunpack.c.l.b16 %v966
  %v1015 = vunpack.c.l.b16 %v967
  %v1016 = vunpack.c.l.b16 %v968
  %v1017 = vpack.c.b16 %v1002, %v1001
  %v1018 = vpack.c.b16 %v1004, %v1003
  %v1019 = vpack.c.b16 %v1006, %v1005
  %v1020 = vpack.c.b16 %v1008, %v1007
  %v1021 = vpack.c.b16 %v1010, %v1009
  %v1022 = vpack.c.b16 %v1012, %v1011
  %v1023 = vpack.c.b16 %v1014, %v1013
  %v1024 = vpack.c.b16 %v1016, %v1015
  %v1026 = vsel %vm294, %v1017, 0
  %v1029 = vsel %vm294, %v1018, 0
  %v1032 = vsel %vm294, %v1019, 0
  %v1035 = vsel %vm294, %v1020, 0
  %v1038 = vsel %vm294, %v1021, 0
  %v1041 = vsel %vm294, %v1022, 0
  %v1044 = vsel %vm294, %v1023, 0
  %v1047 = vsel %vm294, %v1024, 0
  %1049 = vmatpush.bf16.msra.mxu0 0
  %1050 = vmatpush.bf16.msra.mxu0 0
  %1051 = vmatpush.bf16.msra.mxu0 0
  %1052 = vmatpush.bf16.msra.mxu0 0
  %1053 = vmatpush.bf16.msra.mxu0 %v981
  %1054 = vmatpush.bf16.msra.mxu0 %v977
  %1055 = vmatpush.bf16.msra.mxu0 %v973
  %1056 = vmatpush.bf16.msra.mxu0 %v969
  %1057 = vmatmul.bf16.gmra.mxu0 %v1026
  %v1058 = vpop.f32.mrf.mxu0
  %v1059 = vadd.f32 0.0, %v1058
  %v1060 = vpop.f32.mrf.mxu0
  %v1061 = vadd.f32 0.0, %v1060
  %1062 = vmatmul.bf16.gmra.mxu0 %v1029
  %v1063 = vpop.f32.mrf.mxu0
  %v1064 = vadd.f32 0.0, %v1063
  %v1065 = vpop.f32.mrf.mxu0
  %v1066 = vadd.f32 0.0, %v1065
  %1067 = vmatmul.bf16.gmra.mxu0 %v1032
  %v1068 = vpop.f32.mrf.mxu0
  %v1069 = vadd.f32 0.0, %v1068
  %v1070 = vpop.f32.mrf.mxu0
  %v1071 = vadd.f32 0.0, %v1070
  %1072 = vmatmul.bf16.gmra.mxu0 %v1035
  %v1073 = vpop.f32.mrf.mxu0
  %v1074 = vadd.f32 0.0, %v1073
  %v1075 = vpop.f32.mrf.mxu0
  %v1076 = vadd.f32 0.0, %v1075
  %1077 = vmatmul.bf16.gmra.mxu0 %v1038
  %v1078 = vpop.f32.mrf.mxu0
  %v1079 = vadd.f32 0.0, %v1078
  %v1080 = vpop.f32.mrf.mxu0
  %v1081 = vadd.f32 0.0, %v1080
  %1082 = vmatmul.bf16.gmra.mxu0 %v1041
  %v1083 = vpop.f32.mrf.mxu0
  %v1084 = vadd.f32 0.0, %v1083
  %v1085 = vpop.f32.mrf.mxu0
  %v1086 = vadd.f32 0.0, %v1085
  %1087 = vmatmul.bf16.gmra.mxu0 %v1044
  %v1088 = vpop.f32.mrf.mxu0
  %v1089 = vadd.f32 0.0, %v1088
  %v1090 = vpop.f32.mrf.mxu0
  %v1091 = vadd.f32 0.0, %v1090
  %1092 = vmatmul.bf16.gmra.mxu0 %v1047
  %v1093 = vpop.f32.mrf.mxu0
  %v1094 = vadd.f32 0.0, %v1093
  %v1095 = vpop.f32.mrf.mxu0
  %v1096 = vadd.f32 0.0, %v1095
  %1097 = vdwg.mxu0
  %1098 = vmatpush.bf16.msra.mxu0 0
  %1099 = vmatpush.bf16.msra.mxu0 0
  %1100 = vmatpush.bf16.msra.mxu0 0
  %1101 = vmatpush.bf16.msra.mxu0 0
  %1102 = vmatpush.bf16.msra.mxu0 %v982
  %1103 = vmatpush.bf16.msra.mxu0 %v978
  %1104 = vmatpush.bf16.msra.mxu0 %v974
  %1105 = vmatpush.bf16.msra.mxu0 %v970
  %1106 = vmatmul.bf16.gmra.mxu0 %v1026
  %v1107 = vpop.f32.mrf.mxu0
  %v1108 = vadd.f32 0.0, %v1107
  %v1109 = vpop.f32.mrf.mxu0
  %v1110 = vadd.f32 0.0, %v1109
  %1111 = vmatmul.bf16.gmra.mxu0 %v1029
  %v1112 = vpop.f32.mrf.mxu0
  %v1113 = vadd.f32 0.0, %v1112
  %v1114 = vpop.f32.mrf.mxu0
  %v1115 = vadd.f32 0.0, %v1114
  %1116 = vmatmul.bf16.gmra.mxu0 %v1032
  %v1117 = vpop.f32.mrf.mxu0
  %v1118 = vadd.f32 0.0, %v1117
  %v1119 = vpop.f32.mrf.mxu0
  %v1120 = vadd.f32 0.0, %v1119
  %1121 = vmatmul.bf16.gmra.mxu0 %v1035
  %v1122 = vpop.f32.mrf.mxu0
  %v1123 = vadd.f32 0.0, %v1122
  %v1124 = vpop.f32.mrf.mxu0
  %v1125 = vadd.f32 0.0, %v1124
  %1126 = vmatmul.bf16.gmra.mxu0 %v1038
  %v1127 = vpop.f32.mrf.mxu0
  %v1128 = vadd.f32 0.0, %v1127
  %v1129 = vpop.f32.mrf.mxu0
  %v1130 = vadd.f32 0.0, %v1129
  %1131 = vmatmul.bf16.gmra.mxu0 %v1041
  %v1132 = vpop.f32.mrf.mxu0
  %v1133 = vadd.f32 0.0, %v1132
  %v1134 = vpop.f32.mrf.mxu0
  %v1135 = vadd.f32 0.0, %v1134
  %1136 = vmatmul.bf16.gmra.mxu0 %v1044
  %v1137 = vpop.f32.mrf.mxu0
  %v1138 = vadd.f32 0.0, %v1137
  %v1139 = vpop.f32.mrf.mxu0
  %v1140 = vadd.f32 0.0, %v1139
  %1141 = vmatmul.bf16.gmra.mxu0 %v1047
  %v1142 = vpop.f32.mrf.mxu0
  %v1143 = vadd.f32 0.0, %v1142
  %v1144 = vpop.f32.mrf.mxu0
  %v1145 = vadd.f32 0.0, %v1144
  %1146 = vdwg.mxu0
  %1147 = vmatpush.bf16.msra.mxu0 0
  %1148 = vmatpush.bf16.msra.mxu0 0
  %1149 = vmatpush.bf16.msra.mxu0 0
  %1150 = vmatpush.bf16.msra.mxu0 0
  %1151 = vmatpush.bf16.msra.mxu0 %v983
  %1152 = vmatpush.bf16.msra.mxu0 %v979
  %1153 = vmatpush.bf16.msra.mxu0 %v975
  %1154 = vmatpush.bf16.msra.mxu0 %v971
  %1155 = vmatmul.bf16.gmra.mxu0 %v1026
  %v1156 = vpop.f32.mrf.mxu0
  %v1157 = vadd.f32 0.0, %v1156
  %v1158 = vpop.f32.mrf.mxu0
  %v1159 = vadd.f32 0.0, %v1158
  %1160 = vmatmul.bf16.gmra.mxu0 %v1029
  %v1161 = vpop.f32.mrf.mxu0
  %v1162 = vadd.f32 0.0, %v1161
  %v1163 = vpop.f32.mrf.mxu0
  %v1164 = vadd.f32 0.0, %v1163
  %1165 = vmatmul.bf16.gmra.mxu0 %v1032
  %v1166 = vpop.f32.mrf.mxu0
  %v1167 = vadd.f32 0.0, %v1166
  %v1168 = vpop.f32.mrf.mxu0
  %v1169 = vadd.f32 0.0, %v1168
  %1170 = vmatmul.bf16.gmra.mxu0 %v1035
  %v1171 = vpop.f32.mrf.mxu0
  %v1172 = vadd.f32 0.0, %v1171
  %v1173 = vpop.f32.mrf.mxu0
  %v1174 = vadd.f32 0.0, %v1173
  %1175 = vmatmul.bf16.gmra.mxu0 %v1038
  %v1176 = vpop.f32.mrf.mxu0
  %v1177 = vadd.f32 0.0, %v1176
  %v1178 = vpop.f32.mrf.mxu0
  %v1179 = vadd.f32 0.0, %v1178
  %1180 = vmatmul.bf16.gmra.mxu0 %v1041
  %v1181 = vpop.f32.mrf.mxu0
  %v1182 = vadd.f32 0.0, %v1181
  %v1183 = vpop.f32.mrf.mxu0
  %v1184 = vadd.f32 0.0, %v1183
  %1185 = vmatmul.bf16.gmra.mxu0 %v1044
  %v1186 = vpop.f32.mrf.mxu0
  %v1187 = vadd.f32 0.0, %v1186
  %v1188 = vpop.f32.mrf.mxu0
  %v1189 = vadd.f32 0.0, %v1188
  %1190 = vmatmul.bf16.gmra.mxu0 %v1047
  %v1191 = vpop.f32.mrf.mxu0
  %v1192 = vadd.f32 0.0, %v1191
  %v1193 = vpop.f32.mrf.mxu0
  %v1194 = vadd.f32 0.0, %v1193
  %1195 = vdwg.mxu0
  %1196 = vmatpush.bf16.msra.mxu0 0
  %1197 = vmatpush.bf16.msra.mxu0 0
  %1198 = vmatpush.bf16.msra.mxu0 0
  %1199 = vmatpush.bf16.msra.mxu0 0
  %1200 = vmatpush.bf16.msra.mxu0 %v984
  %1201 = vmatpush.bf16.msra.mxu0 %v980
  %1202 = vmatpush.bf16.msra.mxu0 %v976
  %1203 = vmatpush.bf16.msra.mxu0 %v972
  %1204 = vmatmul.bf16.gmra.mxu0 %v1026
  %v1205 = vpop.f32.mrf.mxu0
  %v1206 = vadd.f32 0.0, %v1205
  %v1207 = vpop.f32.mrf.mxu0
  %v1208 = vadd.f32 0.0, %v1207
  %1209 = vmatmul.bf16.gmra.mxu0 %v1029
  %v1210 = vpop.f32.mrf.mxu0
  %v1211 = vadd.f32 0.0, %v1210
  %v1212 = vpop.f32.mrf.mxu0
  %v1213 = vadd.f32 0.0, %v1212
  %1214 = vmatmul.bf16.gmra.mxu0 %v1032
  %v1215 = vpop.f32.mrf.mxu0
  %v1216 = vadd.f32 0.0, %v1215
  %v1217 = vpop.f32.mrf.mxu0
  %v1218 = vadd.f32 0.0, %v1217
  %1219 = vmatmul.bf16.gmra.mxu0 %v1035
  %v1220 = vpop.f32.mrf.mxu0
  %v1221 = vadd.f32 0.0, %v1220
  %v1222 = vpop.f32.mrf.mxu0
  %v1223 = vadd.f32 0.0, %v1222
  %1224 = vmatmul.bf16.gmra.mxu0 %v1038
  %v1225 = vpop.f32.mrf.mxu0
  %v1226 = vadd.f32 0.0, %v1225
  %v1227 = vpop.f32.mrf.mxu0
  %v1228 = vadd.f32 0.0, %v1227
  %1229 = vmatmul.bf16.gmra.mxu0 %v1041
  %v1230 = vpop.f32.mrf.mxu0
  %v1231 = vadd.f32 0.0, %v1230
  %v1232 = vpop.f32.mrf.mxu0
  %v1233 = vadd.f32 0.0, %v1232
  %1234 = vmatmul.bf16.gmra.mxu0 %v1044
  %v1235 = vpop.f32.mrf.mxu0
  %v1236 = vadd.f32 0.0, %v1235
  %v1237 = vpop.f32.mrf.mxu0
  %v1238 = vadd.f32 0.0, %v1237
  %1239 = vmatmul.bf16.gmra.mxu0 %v1047
  %v1240 = vpop.f32.mrf.mxu0
  %v1241 = vadd.f32 0.0, %v1240
  %v1242 = vpop.f32.mrf.mxu0
  %v1243 = vadd.f32 0.0, %v1242
  %1244 = vdwg.mxu0
  %v1245 = vadd.f32 %v669, %v1059
  %v1246 = vadd.f32 %v718, %v1108
  %v1247 = vadd.f32 %v767, %v1157
  %v1248 = vadd.f32 %v816, %v1206
  %v1249 = vadd.f32 %v671, %v1061
  %v1250 = vadd.f32 %v720, %v1110
  %v1251 = vadd.f32 %v769, %v1159
  %v1252 = vadd.f32 %v818, %v1208
  %v1253 = vadd.f32 %v674, %v1064
  %v1254 = vadd.f32 %v723, %v1113
  %v1255 = vadd.f32 %v772, %v1162
  %v1256 = vadd.f32 %v821, %v1211
  %v1257 = vadd.f32 %v676, %v1066
  %v1258 = vadd.f32 %v725, %v1115
  %v1259 = vadd.f32 %v774, %v1164
  %v1260 = vadd.f32 %v823, %v1213
  %v1261 = vadd.f32 %v679, %v1069
  %v1262 = vadd.f32 %v728, %v1118
  %v1263 = vadd.f32 %v777, %v1167
  %v1264 = vadd.f32 %v826, %v1216
  %v1265 = vadd.f32 %v681, %v1071
  %v1266 = vadd.f32 %v730, %v1120
  %v1267 = vadd.f32 %v779, %v1169
  %v1268 = vadd.f32 %v828, %v1218
  %v1269 = vadd.f32 %v684, %v1074
  %v1270 = vadd.f32 %v733, %v1123
  %v1271 = vadd.f32 %v782, %v1172
  %v1272 = vadd.f32 %v831, %v1221
  %v1273 = vadd.f32 %v686, %v1076
  %v1274 = vadd.f32 %v735, %v1125
  %v1275 = vadd.f32 %v784, %v1174
  %v1276 = vadd.f32 %v833, %v1223
  %v1277 = vadd.f32 %v689, %v1079
  %v1278 = vadd.f32 %v738, %v1128
  %v1279 = vadd.f32 %v787, %v1177
  %v1280 = vadd.f32 %v836, %v1226
  %v1281 = vadd.f32 %v691, %v1081
  %v1282 = vadd.f32 %v740, %v1130
  %v1283 = vadd.f32 %v789, %v1179
  %v1284 = vadd.f32 %v838, %v1228
  %v1285 = vadd.f32 %v694, %v1084
  %v1286 = vadd.f32 %v743, %v1133
  %v1287 = vadd.f32 %v792, %v1182
  %v1288 = vadd.f32 %v841, %v1231
  %v1289 = vadd.f32 %v696, %v1086
  %v1290 = vadd.f32 %v745, %v1135
  %v1291 = vadd.f32 %v794, %v1184
  %v1292 = vadd.f32 %v843, %v1233
  %v1293 = vadd.f32 %v699, %v1089
  %v1294 = vadd.f32 %v748, %v1138
  %v1295 = vadd.f32 %v797, %v1187
  %v1296 = vadd.f32 %v846, %v1236
  %v1297 = vadd.f32 %v701, %v1091
  %v1298 = vadd.f32 %v750, %v1140
  %v1299 = vadd.f32 %v799, %v1189
  %v1300 = vadd.f32 %v848, %v1238
  %v1301 = vadd.f32 %v704, %v1094
  %v1302 = vadd.f32 %v753, %v1143
  %v1303 = vadd.f32 %v802, %v1192
  %v1304 = vadd.f32 %v851, %v1241
  %v1305 = vadd.f32 %v706, %v1096
  %v1306 = vadd.f32 %v755, %v1145
  %v1307 = vadd.f32 %v804, %v1194
  %v1308 = vadd.f32 %v853, %v1243
  %1309 = vrot.lane.b32.xlu0 %v74, 125
  %v1310 = vpop.permute.xlu0 %1309
  %1311 = vrot.lane.b32.xlu0 %v78, 125
  %v1312 = vpop.permute.xlu0 %1311
  %1313 = vrot.lane.b32.xlu0 %v82, 125
  %v1314 = vpop.permute.xlu0 %1313
  %1315 = vrot.lane.b32.xlu0 %v86, 125
  %v1316 = vpop.permute.xlu0 %1315
  %1317 = vrot.lane.b32.xlu0 %v90, 125
  %v1318 = vpop.permute.xlu0 %1317
  %1319 = vrot.lane.b32.xlu0 %v94, 125
  %v1320 = vpop.permute.xlu0 %1319
  %1321 = vrot.lane.b32.xlu0 %v98, 125
  %v1322 = vpop.permute.xlu0 %1321
  %1323 = vrot.lane.b32.xlu0 %v102, 125
  %v1324 = vpop.permute.xlu0 %1323
  %1325 = vrot.lane.b32.xlu0 %v75, 125
  %v1326 = vpop.permute.xlu0 %1325
  %1327 = vrot.lane.b32.xlu0 %v79, 125
  %v1328 = vpop.permute.xlu0 %1327
  %1329 = vrot.lane.b32.xlu0 %v83, 125
  %v1330 = vpop.permute.xlu0 %1329
  %1331 = vrot.lane.b32.xlu0 %v87, 125
  %v1332 = vpop.permute.xlu0 %1331
  %1333 = vrot.lane.b32.xlu0 %v91, 125
  %v1334 = vpop.permute.xlu0 %1333
  %1335 = vrot.lane.b32.xlu0 %v95, 125
  %v1336 = vpop.permute.xlu0 %1335
  %1337 = vrot.lane.b32.xlu0 %v99, 125
  %v1338 = vpop.permute.xlu0 %1337
  %1339 = vrot.lane.b32.xlu0 %v103, 125
  %v1340 = vpop.permute.xlu0 %1339
  %1341 = vrot.lane.b32.xlu0 %v76, 125
  %v1342 = vpop.permute.xlu0 %1341
  %1343 = vrot.lane.b32.xlu0 %v80, 125
  %v1344 = vpop.permute.xlu0 %1343
  %1345 = vrot.lane.b32.xlu0 %v84, 125
  %v1346 = vpop.permute.xlu0 %1345
  %1347 = vrot.lane.b32.xlu0 %v88, 125
  %v1348 = vpop.permute.xlu0 %1347
  %1349 = vrot.lane.b32.xlu0 %v92, 125
  %v1350 = vpop.permute.xlu0 %1349
  %1351 = vrot.lane.b32.xlu0 %v96, 125
  %v1352 = vpop.permute.xlu0 %1351
  %1353 = vrot.lane.b32.xlu0 %v100, 125
  %v1354 = vpop.permute.xlu0 %1353
  %1355 = vrot.lane.b32.xlu0 %v104, 125
  %v1356 = vpop.permute.xlu0 %1355
  %1357 = vrot.lane.b32.xlu0 %v77, 125
  %v1358 = vpop.permute.xlu0 %1357
  %1359 = vrot.lane.b32.xlu0 %v81, 125
  %v1360 = vpop.permute.xlu0 %1359
  %1361 = vrot.lane.b32.xlu0 %v85, 125
  %v1362 = vpop.permute.xlu0 %1361
  %1363 = vrot.lane.b32.xlu0 %v89, 125
  %v1364 = vpop.permute.xlu0 %1363
  %1365 = vrot.lane.b32.xlu0 %v93, 125
  %v1366 = vpop.permute.xlu0 %1365
  %1367 = vrot.lane.b32.xlu0 %v97, 125
  %v1368 = vpop.permute.xlu0 %1367
  %1369 = vrot.lane.b32.xlu0 %v101, 125
  %v1370 = vpop.permute.xlu0 %1369
  %1371 = vrot.lane.b32.xlu0 %v105, 125
  %v1372 = vpop.permute.xlu0 %1371
  %vm1373 = vcmp.lt.s32.totalorder %v187, 125
  %v1374 = vsel %vm1373, %v1342, %v1358
  %v1375 = vsel %vm1373, %v1344, %v1360
  %v1376 = vsel %vm1373, %v1346, %v1362
  %v1377 = vsel %vm1373, %v1348, %v1364
  %v1378 = vsel %vm1373, %v1350, %v1366
  %v1379 = vsel %vm1373, %v1352, %v1368
  %v1380 = vsel %vm1373, %v1354, %v1370
  %v1381 = vsel %vm1373, %v1356, %v1372
  %v1382 = vsel %vm1373, %v1326, %v1342
  %v1383 = vsel %vm1373, %v1328, %v1344
  %v1384 = vsel %vm1373, %v1330, %v1346
  %v1385 = vsel %vm1373, %v1332, %v1348
  %v1386 = vsel %vm1373, %v1334, %v1350
  %v1387 = vsel %vm1373, %v1336, %v1352
  %v1388 = vsel %vm1373, %v1338, %v1354
  %v1389 = vsel %vm1373, %v1340, %v1356
  %v1390 = vsel %vm1373, %v1310, %v1326
  %v1391 = vsel %vm1373, %v1312, %v1328
  %v1392 = vsel %vm1373, %v1314, %v1330
  %v1393 = vsel %vm1373, %v1316, %v1332
  %v1394 = vsel %vm1373, %v1318, %v1334
  %v1395 = vsel %vm1373, %v1320, %v1336
  %v1396 = vsel %vm1373, %v1322, %v1338
  %v1397 = vsel %vm1373, %v1324, %v1340
  %v1398 = vsel %vm1373, %v1358, %v1310
  %v1399 = vsel %vm1373, %v1360, %v1312
  %v1400 = vsel %vm1373, %v1362, %v1314
  %v1401 = vsel %vm1373, %v1364, %v1316
  %v1402 = vsel %vm1373, %v1366, %v1318
  %v1403 = vsel %vm1373, %v1368, %v1320
  %v1404 = vsel %vm1373, %v1370, %v1322
  %v1405 = vsel %vm1373, %v1372, %v1324
  %s1406 = scalar_lea.vmem %s1, 192
  %v1407 = vld [vmem:[%s1406] sm:$0xf]
  %v1408 = vld [vmem:[%s1406 + $0x4] sm:$0xf]
  %v1409 = vld [vmem:[%s1406 + $0x8] sm:$0xf]
  %v1410 = vld [vmem:[%s1406 + $0xc] sm:$0xf]
  %v1411 = vld [vmem:[%s1406 + $0x10] sm:$0xf]
  %v1412 = vld [vmem:[%s1406 + $0x14] sm:$0xf]
  %v1413 = vld [vmem:[%s1406 + $0x18] sm:$0xf]
  %v1414 = vld [vmem:[%s1406 + $0x1c] sm:$0xf]
  %v1415 = vld [vmem:[%s1406 + $0x20] sm:$0xf]
  %v1416 = vld [vmem:[%s1406 + $0x24] sm:$0xf]
  %v1417 = vld [vmem:[%s1406 + $0x28] sm:$0xf]
  %v1418 = vld [vmem:[%s1406 + $0x2c] sm:$0xf]
  %v1419 = vld [vmem:[%s1406 + $0x30] sm:$0xf]
  %v1420 = vld [vmem:[%s1406 + $0x34] sm:$0xf]
  %v1421 = vld [vmem:[%s1406 + $0x38] sm:$0xf]
  %v1422 = vld [vmem:[%s1406 + $0x3c] sm:$0xf]
  %v1423 = vpack.c.bf16 %v1391, %v1390
  %v1424 = vpack.c.bf16 %v1383, %v1382
  %v1425 = vpack.c.bf16 %v1375, %v1374
  %v1426 = vpack.c.bf16 %v1399, %v1398
  %v1427 = vpack.c.bf16 %v1393, %v1392
  %v1428 = vpack.c.bf16 %v1385, %v1384
  %v1429 = vpack.c.bf16 %v1377, %v1376
  %v1430 = vpack.c.bf16 %v1401, %v1400
  %v1431 = vpack.c.bf16 %v1395, %v1394
  %v1432 = vpack.c.bf16 %v1387, %v1386
  %v1433 = vpack.c.bf16 %v1379, %v1378
  %v1434 = vpack.c.bf16 %v1403, %v1402
  %v1435 = vpack.c.bf16 %v1397, %v1396
  %v1436 = vpack.c.bf16 %v1389, %v1388
  %v1437 = vpack.c.bf16 %v1381, %v1380
  %v1438 = vpack.c.bf16 %v1405, %v1404
  %v1455 = vunpack.c.l.b16 %v1407
  %v1456 = vunpack.c.l.b16 %v1408
  %v1457 = vunpack.c.l.b16 %v1409
  %v1458 = vunpack.c.l.b16 %v1410
  %v1459 = vunpack.c.l.b16 %v1411
  %v1460 = vunpack.c.l.b16 %v1412
  %v1461 = vunpack.c.l.b16 %v1413
  %v1462 = vunpack.c.l.b16 %v1414
  %v1463 = vunpack.c.l.b16 %v1415
  %v1464 = vunpack.c.l.b16 %v1416
  %v1465 = vunpack.c.l.b16 %v1417
  %v1466 = vunpack.c.l.b16 %v1418
  %v1467 = vunpack.c.l.b16 %v1419
  %v1468 = vunpack.c.l.b16 %v1420
  %v1469 = vunpack.c.l.b16 %v1421
  %v1470 = vunpack.c.l.b16 %v1422
  %v1471 = vpack.c.b16 %v1456, %v1455
  %v1472 = vpack.c.b16 %v1458, %v1457
  %v1473 = vpack.c.b16 %v1460, %v1459
  %v1474 = vpack.c.b16 %v1462, %v1461
  %v1475 = vpack.c.b16 %v1464, %v1463
  %v1476 = vpack.c.b16 %v1466, %v1465
  %v1477 = vpack.c.b16 %v1468, %v1467
  %v1478 = vpack.c.b16 %v1470, %v1469
  %v1480 = vsel %vm294, %v1471, 0
  %v1483 = vsel %vm294, %v1472, 0
  %v1486 = vsel %vm294, %v1473, 0
  %v1489 = vsel %vm294, %v1474, 0
  %v1492 = vsel %vm294, %v1475, 0
  %v1495 = vsel %vm294, %v1476, 0
  %v1498 = vsel %vm294, %v1477, 0
  %v1501 = vsel %vm294, %v1478, 0
  %1503 = vmatpush.bf16.msra.mxu0 0
  %1504 = vmatpush.bf16.msra.mxu0 0
  %1505 = vmatpush.bf16.msra.mxu0 0
  %1506 = vmatpush.bf16.msra.mxu0 0
  %1507 = vmatpush.bf16.msra.mxu0 %v1435
  %1508 = vmatpush.bf16.msra.mxu0 %v1431
  %1509 = vmatpush.bf16.msra.mxu0 %v1427
  %1510 = vmatpush.bf16.msra.mxu0 %v1423
  %1511 = vmatmul.bf16.gmra.mxu0 %v1480
  %v1512 = vpop.f32.mrf.mxu0
  %v1513 = vadd.f32 0.0, %v1512
  %v1514 = vpop.f32.mrf.mxu0
  %v1515 = vadd.f32 0.0, %v1514
  %1516 = vmatmul.bf16.gmra.mxu0 %v1483
  %v1517 = vpop.f32.mrf.mxu0
  %v1518 = vadd.f32 0.0, %v1517
  %v1519 = vpop.f32.mrf.mxu0
  %v1520 = vadd.f32 0.0, %v1519
  %1521 = vmatmul.bf16.gmra.mxu0 %v1486
  %v1522 = vpop.f32.mrf.mxu0
  %v1523 = vadd.f32 0.0, %v1522
  %v1524 = vpop.f32.mrf.mxu0
  %v1525 = vadd.f32 0.0, %v1524
  %1526 = vmatmul.bf16.gmra.mxu0 %v1489
  %v1527 = vpop.f32.mrf.mxu0
  %v1528 = vadd.f32 0.0, %v1527
  %v1529 = vpop.f32.mrf.mxu0
  %v1530 = vadd.f32 0.0, %v1529
  %1531 = vmatmul.bf16.gmra.mxu0 %v1492
  %v1532 = vpop.f32.mrf.mxu0
  %v1533 = vadd.f32 0.0, %v1532
  %v1534 = vpop.f32.mrf.mxu0
  %v1535 = vadd.f32 0.0, %v1534
  %1536 = vmatmul.bf16.gmra.mxu0 %v1495
  %v1537 = vpop.f32.mrf.mxu0
  %v1538 = vadd.f32 0.0, %v1537
  %v1539 = vpop.f32.mrf.mxu0
  %v1540 = vadd.f32 0.0, %v1539
  %1541 = vmatmul.bf16.gmra.mxu0 %v1498
  %v1542 = vpop.f32.mrf.mxu0
  %v1543 = vadd.f32 0.0, %v1542
  %v1544 = vpop.f32.mrf.mxu0
  %v1545 = vadd.f32 0.0, %v1544
  %1546 = vmatmul.bf16.gmra.mxu0 %v1501
  %v1547 = vpop.f32.mrf.mxu0
  %v1548 = vadd.f32 0.0, %v1547
  %v1549 = vpop.f32.mrf.mxu0
  %v1550 = vadd.f32 0.0, %v1549
  %1551 = vdwg.mxu0
  %1552 = vmatpush.bf16.msra.mxu0 0
  %1553 = vmatpush.bf16.msra.mxu0 0
  %1554 = vmatpush.bf16.msra.mxu0 0
  %1555 = vmatpush.bf16.msra.mxu0 0
  %1556 = vmatpush.bf16.msra.mxu0 %v1436
  %1557 = vmatpush.bf16.msra.mxu0 %v1432
  %1558 = vmatpush.bf16.msra.mxu0 %v1428
  %1559 = vmatpush.bf16.msra.mxu0 %v1424
  %1560 = vmatmul.bf16.gmra.mxu0 %v1480
  %v1561 = vpop.f32.mrf.mxu0
  %v1562 = vadd.f32 0.0, %v1561
  %v1563 = vpop.f32.mrf.mxu0
  %v1564 = vadd.f32 0.0, %v1563
  %1565 = vmatmul.bf16.gmra.mxu0 %v1483
  %v1566 = vpop.f32.mrf.mxu0
  %v1567 = vadd.f32 0.0, %v1566
  %v1568 = vpop.f32.mrf.mxu0
  %v1569 = vadd.f32 0.0, %v1568
  %1570 = vmatmul.bf16.gmra.mxu0 %v1486
  %v1571 = vpop.f32.mrf.mxu0
  %v1572 = vadd.f32 0.0, %v1571
  %v1573 = vpop.f32.mrf.mxu0
  %v1574 = vadd.f32 0.0, %v1573
  %1575 = vmatmul.bf16.gmra.mxu0 %v1489
  %v1576 = vpop.f32.mrf.mxu0
  %v1577 = vadd.f32 0.0, %v1576
  %v1578 = vpop.f32.mrf.mxu0
  %v1579 = vadd.f32 0.0, %v1578
  %1580 = vmatmul.bf16.gmra.mxu0 %v1492
  %v1581 = vpop.f32.mrf.mxu0
  %v1582 = vadd.f32 0.0, %v1581
  %v1583 = vpop.f32.mrf.mxu0
  %v1584 = vadd.f32 0.0, %v1583
  %1585 = vmatmul.bf16.gmra.mxu0 %v1495
  %v1586 = vpop.f32.mrf.mxu0
  %v1587 = vadd.f32 0.0, %v1586
  %v1588 = vpop.f32.mrf.mxu0
  %v1589 = vadd.f32 0.0, %v1588
  %1590 = vmatmul.bf16.gmra.mxu0 %v1498
  %v1591 = vpop.f32.mrf.mxu0
  %v1592 = vadd.f32 0.0, %v1591
  %v1593 = vpop.f32.mrf.mxu0
  %v1594 = vadd.f32 0.0, %v1593
  %1595 = vmatmul.bf16.gmra.mxu0 %v1501
  %v1596 = vpop.f32.mrf.mxu0
  %v1597 = vadd.f32 0.0, %v1596
  %v1598 = vpop.f32.mrf.mxu0
  %v1599 = vadd.f32 0.0, %v1598
  %1600 = vdwg.mxu0
  %1601 = vmatpush.bf16.msra.mxu0 0
  %1602 = vmatpush.bf16.msra.mxu0 0
  %1603 = vmatpush.bf16.msra.mxu0 0
  %1604 = vmatpush.bf16.msra.mxu0 0
  %1605 = vmatpush.bf16.msra.mxu0 %v1437
  %1606 = vmatpush.bf16.msra.mxu0 %v1433
  %1607 = vmatpush.bf16.msra.mxu0 %v1429
  %1608 = vmatpush.bf16.msra.mxu0 %v1425
  %1609 = vmatmul.bf16.gmra.mxu0 %v1480
  %v1610 = vpop.f32.mrf.mxu0
  %v1611 = vadd.f32 0.0, %v1610
  %v1612 = vpop.f32.mrf.mxu0
  %v1613 = vadd.f32 0.0, %v1612
  %1614 = vmatmul.bf16.gmra.mxu0 %v1483
  %v1615 = vpop.f32.mrf.mxu0
  %v1616 = vadd.f32 0.0, %v1615
  %v1617 = vpop.f32.mrf.mxu0
  %v1618 = vadd.f32 0.0, %v1617
  %1619 = vmatmul.bf16.gmra.mxu0 %v1486
  %v1620 = vpop.f32.mrf.mxu0
  %v1621 = vadd.f32 0.0, %v1620
  %v1622 = vpop.f32.mrf.mxu0
  %v1623 = vadd.f32 0.0, %v1622
  %1624 = vmatmul.bf16.gmra.mxu0 %v1489
  %v1625 = vpop.f32.mrf.mxu0
  %v1626 = vadd.f32 0.0, %v1625
  %v1627 = vpop.f32.mrf.mxu0
  %v1628 = vadd.f32 0.0, %v1627
  %1629 = vmatmul.bf16.gmra.mxu0 %v1492
  %v1630 = vpop.f32.mrf.mxu0
  %v1631 = vadd.f32 0.0, %v1630
  %v1632 = vpop.f32.mrf.mxu0
  %v1633 = vadd.f32 0.0, %v1632
  %1634 = vmatmul.bf16.gmra.mxu0 %v1495
  %v1635 = vpop.f32.mrf.mxu0
  %v1636 = vadd.f32 0.0, %v1635
  %v1637 = vpop.f32.mrf.mxu0
  %v1638 = vadd.f32 0.0, %v1637
  %1639 = vmatmul.bf16.gmra.mxu0 %v1498
  %v1640 = vpop.f32.mrf.mxu0
  %v1641 = vadd.f32 0.0, %v1640
  %v1642 = vpop.f32.mrf.mxu0
  %v1643 = vadd.f32 0.0, %v1642
  %1644 = vmatmul.bf16.gmra.mxu0 %v1501
  %v1645 = vpop.f32.mrf.mxu0
  %v1646 = vadd.f32 0.0, %v1645
  %v1647 = vpop.f32.mrf.mxu0
  %v1648 = vadd.f32 0.0, %v1647
  %1649 = vdwg.mxu0
  %1650 = vmatpush.bf16.msra.mxu0 0
  %1651 = vmatpush.bf16.msra.mxu0 0
  %1652 = vmatpush.bf16.msra.mxu0 0
  %1653 = vmatpush.bf16.msra.mxu0 0
  %1654 = vmatpush.bf16.msra.mxu0 %v1438
  %1655 = vmatpush.bf16.msra.mxu0 %v1434
  %1656 = vmatpush.bf16.msra.mxu0 %v1430
  %1657 = vmatpush.bf16.msra.mxu0 %v1426
  %1658 = vmatmul.bf16.gmra.mxu0 %v1480
  %v1659 = vpop.f32.mrf.mxu0
  %v1660 = vadd.f32 0.0, %v1659
  %v1661 = vpop.f32.mrf.mxu0
  %v1662 = vadd.f32 0.0, %v1661
  %1663 = vmatmul.bf16.gmra.mxu0 %v1483
  %v1664 = vpop.f32.mrf.mxu0
  %v1665 = vadd.f32 0.0, %v1664
  %v1666 = vpop.f32.mrf.mxu0
  %v1667 = vadd.f32 0.0, %v1666
  %1668 = vmatmul.bf16.gmra.mxu0 %v1486
  %v1669 = vpop.f32.mrf.mxu0
  %v1670 = vadd.f32 0.0, %v1669
  %v1671 = vpop.f32.mrf.mxu0
  %v1672 = vadd.f32 0.0, %v1671
  %1673 = vmatmul.bf16.gmra.mxu0 %v1489
  %v1674 = vpop.f32.mrf.mxu0
  %v1675 = vadd.f32 0.0, %v1674
  %v1676 = vpop.f32.mrf.mxu0
  %v1677 = vadd.f32 0.0, %v1676
  %1678 = vmatmul.bf16.gmra.mxu0 %v1492
  %v1679 = vpop.f32.mrf.mxu0
  %v1680 = vadd.f32 0.0, %v1679
  %v1681 = vpop.f32.mrf.mxu0
  %v1682 = vadd.f32 0.0, %v1681
  %1683 = vmatmul.bf16.gmra.mxu0 %v1495
  %v1684 = vpop.f32.mrf.mxu0
  %v1685 = vadd.f32 0.0, %v1684
  %v1686 = vpop.f32.mrf.mxu0
  %v1687 = vadd.f32 0.0, %v1686
  %1688 = vmatmul.bf16.gmra.mxu0 %v1498
  %v1689 = vpop.f32.mrf.mxu0
  %v1690 = vadd.f32 0.0, %v1689
  %v1691 = vpop.f32.mrf.mxu0
  %v1692 = vadd.f32 0.0, %v1691
  %1693 = vmatmul.bf16.gmra.mxu0 %v1501
  %v1694 = vpop.f32.mrf.mxu0
  %v1695 = vadd.f32 0.0, %v1694
  %v1696 = vpop.f32.mrf.mxu0
  %v1697 = vadd.f32 0.0, %v1696
  %1698 = vdwg.mxu0
  %v1699 = vadd.f32 %v1245, %v1513
  %v1700 = vadd.f32 %v1246, %v1562
  %v1701 = vadd.f32 %v1247, %v1611
  %v1702 = vadd.f32 %v1248, %v1660
  %v1703 = vadd.f32 %v1249, %v1515
  %v1704 = vadd.f32 %v1250, %v1564
  %v1705 = vadd.f32 %v1251, %v1613
  %v1706 = vadd.f32 %v1252, %v1662
  %v1707 = vadd.f32 %v1253, %v1518
  %v1708 = vadd.f32 %v1254, %v1567
  %v1709 = vadd.f32 %v1255, %v1616
  %v1710 = vadd.f32 %v1256, %v1665
  %v1711 = vadd.f32 %v1257, %v1520
  %v1712 = vadd.f32 %v1258, %v1569
  %v1713 = vadd.f32 %v1259, %v1618
  %v1714 = vadd.f32 %v1260, %v1667
  %v1715 = vadd.f32 %v1261, %v1523
  %v1716 = vadd.f32 %v1262, %v1572
  %v1717 = vadd.f32 %v1263, %v1621
  %v1718 = vadd.f32 %v1264, %v1670
  %v1719 = vadd.f32 %v1265, %v1525
  %v1720 = vadd.f32 %v1266, %v1574
  %v1721 = vadd.f32 %v1267, %v1623
  %v1722 = vadd.f32 %v1268, %v1672
  %v1723 = vadd.f32 %v1269, %v1528
  %v1724 = vadd.f32 %v1270, %v1577
  %v1725 = vadd.f32 %v1271, %v1626
  %v1726 = vadd.f32 %v1272, %v1675
  %v1727 = vadd.f32 %v1273, %v1530
  %v1728 = vadd.f32 %v1274, %v1579
  %v1729 = vadd.f32 %v1275, %v1628
  %v1730 = vadd.f32 %v1276, %v1677
  %v1731 = vadd.f32 %v1277, %v1533
  %v1732 = vadd.f32 %v1278, %v1582
  %v1733 = vadd.f32 %v1279, %v1631
  %v1734 = vadd.f32 %v1280, %v1680
  %v1735 = vadd.f32 %v1281, %v1535
  %v1736 = vadd.f32 %v1282, %v1584
  %v1737 = vadd.f32 %v1283, %v1633
  %v1738 = vadd.f32 %v1284, %v1682
  %v1739 = vadd.f32 %v1285, %v1538
  %v1740 = vadd.f32 %v1286, %v1587
  %v1741 = vadd.f32 %v1287, %v1636
  %v1742 = vadd.f32 %v1288, %v1685
  %v1743 = vadd.f32 %v1289, %v1540
  %v1744 = vadd.f32 %v1290, %v1589
  %v1745 = vadd.f32 %v1291, %v1638
  %v1746 = vadd.f32 %v1292, %v1687
  %v1747 = vadd.f32 %v1293, %v1543
  %v1748 = vadd.f32 %v1294, %v1592
  %v1749 = vadd.f32 %v1295, %v1641
  %v1750 = vadd.f32 %v1296, %v1690
  %v1751 = vadd.f32 %v1297, %v1545
  %v1752 = vadd.f32 %v1298, %v1594
  %v1753 = vadd.f32 %v1299, %v1643
  %v1754 = vadd.f32 %v1300, %v1692
  %v1755 = vadd.f32 %v1301, %v1548
  %v1756 = vadd.f32 %v1302, %v1597
  %v1757 = vadd.f32 %v1303, %v1646
  %v1758 = vadd.f32 %v1304, %v1695
  %v1759 = vadd.f32 %v1305, %v1550
  %v1760 = vadd.f32 %v1306, %v1599
  %v1761 = vadd.f32 %v1307, %v1648
  %v1762 = vadd.f32 %v1308, %v1697
  %1763 = vrot.lane.b32.xlu0 %v74, 124
  %v1764 = vpop.permute.xlu0 %1763
  %1765 = vrot.lane.b32.xlu0 %v78, 124
  %v1766 = vpop.permute.xlu0 %1765
  %1767 = vrot.lane.b32.xlu0 %v82, 124
  %v1768 = vpop.permute.xlu0 %1767
  %1769 = vrot.lane.b32.xlu0 %v86, 124
  %v1770 = vpop.permute.xlu0 %1769
  %1771 = vrot.lane.b32.xlu0 %v90, 124
  %v1772 = vpop.permute.xlu0 %1771
  %1773 = vrot.lane.b32.xlu0 %v94, 124
  %v1774 = vpop.permute.xlu0 %1773
  %1775 = vrot.lane.b32.xlu0 %v98, 124
  %v1776 = vpop.permute.xlu0 %1775
  %1777 = vrot.lane.b32.xlu0 %v102, 124
  %v1778 = vpop.permute.xlu0 %1777
  %1779 = vrot.lane.b32.xlu0 %v75, 124
  %v1780 = vpop.permute.xlu0 %1779
  %1781 = vrot.lane.b32.xlu0 %v79, 124
  %v1782 = vpop.permute.xlu0 %1781
  %1783 = vrot.lane.b32.xlu0 %v83, 124
  %v1784 = vpop.permute.xlu0 %1783
  %1785 = vrot.lane.b32.xlu0 %v87, 124
  %v1786 = vpop.permute.xlu0 %1785
  %1787 = vrot.lane.b32.xlu0 %v91, 124
  %v1788 = vpop.permute.xlu0 %1787
  %1789 = vrot.lane.b32.xlu0 %v95, 124
  %v1790 = vpop.permute.xlu0 %1789
  %1791 = vrot.lane.b32.xlu0 %v99, 124
  %v1792 = vpop.permute.xlu0 %1791
  %1793 = vrot.lane.b32.xlu0 %v103, 124
  %v1794 = vpop.permute.xlu0 %1793
  %1795 = vrot.lane.b32.xlu0 %v76, 124
  %v1796 = vpop.permute.xlu0 %1795
  %1797 = vrot.lane.b32.xlu0 %v80, 124
  %v1798 = vpop.permute.xlu0 %1797
  %1799 = vrot.lane.b32.xlu0 %v84, 124
  %v1800 = vpop.permute.xlu0 %1799
  %1801 = vrot.lane.b32.xlu0 %v88, 124
  %v1802 = vpop.permute.xlu0 %1801
  %1803 = vrot.lane.b32.xlu0 %v92, 124
  %v1804 = vpop.permute.xlu0 %1803
  %1805 = vrot.lane.b32.xlu0 %v96, 124
  %v1806 = vpop.permute.xlu0 %1805
  %1807 = vrot.lane.b32.xlu0 %v100, 124
  %v1808 = vpop.permute.xlu0 %1807
  %1809 = vrot.lane.b32.xlu0 %v104, 124
  %v1810 = vpop.permute.xlu0 %1809
  %1811 = vrot.lane.b32.xlu0 %v77, 124
  %v1812 = vpop.permute.xlu0 %1811
  %1813 = vrot.lane.b32.xlu0 %v81, 124
  %v1814 = vpop.permute.xlu0 %1813
  %1815 = vrot.lane.b32.xlu0 %v85, 124
  %v1816 = vpop.permute.xlu0 %1815
  %1817 = vrot.lane.b32.xlu0 %v89, 124
  %v1818 = vpop.permute.xlu0 %1817
  %1819 = vrot.lane.b32.xlu0 %v93, 124
  %v1820 = vpop.permute.xlu0 %1819
  %1821 = vrot.lane.b32.xlu0 %v97, 124
  %v1822 = vpop.permute.xlu0 %1821
  %1823 = vrot.lane.b32.xlu0 %v101, 124
  %v1824 = vpop.permute.xlu0 %1823
  %1825 = vrot.lane.b32.xlu0 %v105, 124
  %v1826 = vpop.permute.xlu0 %1825
  %vm1827 = vcmp.lt.s32.totalorder %v187, 124
  %v1828 = vsel %vm1827, %v1796, %v1812
  %v1829 = vsel %vm1827, %v1798, %v1814
  %v1830 = vsel %vm1827, %v1800, %v1816
  %v1831 = vsel %vm1827, %v1802, %v1818
  %v1832 = vsel %vm1827, %v1804, %v1820
  %v1833 = vsel %vm1827, %v1806, %v1822
  %v1834 = vsel %vm1827, %v1808, %v1824
  %v1835 = vsel %vm1827, %v1810, %v1826
  %v1836 = vsel %vm1827, %v1780, %v1796
  %v1837 = vsel %vm1827, %v1782, %v1798
  %v1838 = vsel %vm1827, %v1784, %v1800
  %v1839 = vsel %vm1827, %v1786, %v1802
  %v1840 = vsel %vm1827, %v1788, %v1804
  %v1841 = vsel %vm1827, %v1790, %v1806
  %v1842 = vsel %vm1827, %v1792, %v1808
  %v1843 = vsel %vm1827, %v1794, %v1810
  %v1844 = vsel %vm1827, %v1764, %v1780
  %v1845 = vsel %vm1827, %v1766, %v1782
  %v1846 = vsel %vm1827, %v1768, %v1784
  %v1847 = vsel %vm1827, %v1770, %v1786
  %v1848 = vsel %vm1827, %v1772, %v1788
  %v1849 = vsel %vm1827, %v1774, %v1790
  %v1850 = vsel %vm1827, %v1776, %v1792
  %v1851 = vsel %vm1827, %v1778, %v1794
  %v1852 = vsel %vm1827, %v1812, %v1764
  %v1853 = vsel %vm1827, %v1814, %v1766
  %v1854 = vsel %vm1827, %v1816, %v1768
  %v1855 = vsel %vm1827, %v1818, %v1770
  %v1856 = vsel %vm1827, %v1820, %v1772
  %v1857 = vsel %vm1827, %v1822, %v1774
  %v1858 = vsel %vm1827, %v1824, %v1776
  %v1859 = vsel %vm1827, %v1826, %v1778
  %s1860 = scalar_lea.vmem %s1, 256
  %v1861 = vld [vmem:[%s1860] sm:$0xf]
  %v1862 = vld [vmem:[%s1860 + $0x4] sm:$0xf]
  %v1863 = vld [vmem:[%s1860 + $0x8] sm:$0xf]
  %v1864 = vld [vmem:[%s1860 + $0xc] sm:$0xf]
  %v1865 = vld [vmem:[%s1860 + $0x10] sm:$0xf]
  %v1866 = vld [vmem:[%s1860 + $0x14] sm:$0xf]
  %v1867 = vld [vmem:[%s1860 + $0x18] sm:$0xf]
  %v1868 = vld [vmem:[%s1860 + $0x1c] sm:$0xf]
  %v1869 = vld [vmem:[%s1860 + $0x20] sm:$0xf]
  %v1870 = vld [vmem:[%s1860 + $0x24] sm:$0xf]
  %v1871 = vld [vmem:[%s1860 + $0x28] sm:$0xf]
  %v1872 = vld [vmem:[%s1860 + $0x2c] sm:$0xf]
  %v1873 = vld [vmem:[%s1860 + $0x30] sm:$0xf]
  %v1874 = vld [vmem:[%s1860 + $0x34] sm:$0xf]
  %v1875 = vld [vmem:[%s1860 + $0x38] sm:$0xf]
  %v1876 = vld [vmem:[%s1860 + $0x3c] sm:$0xf]
  %v1877 = vpack.c.bf16 %v1845, %v1844
  %v1878 = vpack.c.bf16 %v1837, %v1836
  %v1879 = vpack.c.bf16 %v1829, %v1828
  %v1880 = vpack.c.bf16 %v1853, %v1852
  %v1881 = vpack.c.bf16 %v1847, %v1846
  %v1882 = vpack.c.bf16 %v1839, %v1838
  %v1883 = vpack.c.bf16 %v1831, %v1830
  %v1884 = vpack.c.bf16 %v1855, %v1854
  %v1885 = vpack.c.bf16 %v1849, %v1848
  %v1886 = vpack.c.bf16 %v1841, %v1840
  %v1887 = vpack.c.bf16 %v1833, %v1832
  %v1888 = vpack.c.bf16 %v1857, %v1856
  %v1889 = vpack.c.bf16 %v1851, %v1850
  %v1890 = vpack.c.bf16 %v1843, %v1842
  %v1891 = vpack.c.bf16 %v1835, %v1834
  %v1892 = vpack.c.bf16 %v1859, %v1858
  %v1909 = vunpack.c.l.b16 %v1861
  %v1910 = vunpack.c.l.b16 %v1862
  %v1911 = vunpack.c.l.b16 %v1863
  %v1912 = vunpack.c.l.b16 %v1864
  %v1913 = vunpack.c.l.b16 %v1865
  %v1914 = vunpack.c.l.b16 %v1866
  %v1915 = vunpack.c.l.b16 %v1867
  %v1916 = vunpack.c.l.b16 %v1868
  %v1917 = vunpack.c.l.b16 %v1869
  %v1918 = vunpack.c.l.b16 %v1870
  %v1919 = vunpack.c.l.b16 %v1871
  %v1920 = vunpack.c.l.b16 %v1872
  %v1921 = vunpack.c.l.b16 %v1873
  %v1922 = vunpack.c.l.b16 %v1874
  %v1923 = vunpack.c.l.b16 %v1875
  %v1924 = vunpack.c.l.b16 %v1876
  %v1925 = vpack.c.b16 %v1910, %v1909
  %v1926 = vpack.c.b16 %v1912, %v1911
  %v1927 = vpack.c.b16 %v1914, %v1913
  %v1928 = vpack.c.b16 %v1916, %v1915
  %v1929 = vpack.c.b16 %v1918, %v1917
  %v1930 = vpack.c.b16 %v1920, %v1919
  %v1931 = vpack.c.b16 %v1922, %v1921
  %v1932 = vpack.c.b16 %v1924, %v1923
  %v1934 = vsel %vm294, %v1925, 0
  %v1937 = vsel %vm294, %v1926, 0
  %v1940 = vsel %vm294, %v1927, 0
  %v1943 = vsel %vm294, %v1928, 0
  %v1946 = vsel %vm294, %v1929, 0
  %v1949 = vsel %vm294, %v1930, 0
  %v1952 = vsel %vm294, %v1931, 0
  %v1955 = vsel %vm294, %v1932, 0
  %1957 = vmatpush.bf16.msra.mxu0 0
  %1958 = vmatpush.bf16.msra.mxu0 0
  %1959 = vmatpush.bf16.msra.mxu0 0
  %1960 = vmatpush.bf16.msra.mxu0 0
  %1961 = vmatpush.bf16.msra.mxu0 %v1889
  %1962 = vmatpush.bf16.msra.mxu0 %v1885
  %1963 = vmatpush.bf16.msra.mxu0 %v1881
  %1964 = vmatpush.bf16.msra.mxu0 %v1877
  %1965 = vmatmul.bf16.gmra.mxu0 %v1934
  %v1966 = vpop.f32.mrf.mxu0
  %v1967 = vadd.f32 0.0, %v1966
  %v1968 = vpop.f32.mrf.mxu0
  %v1969 = vadd.f32 0.0, %v1968
  %1970 = vmatmul.bf16.gmra.mxu0 %v1937
  %v1971 = vpop.f32.mrf.mxu0
  %v1972 = vadd.f32 0.0, %v1971
  %v1973 = vpop.f32.mrf.mxu0
  %v1974 = vadd.f32 0.0, %v1973
  %1975 = vmatmul.bf16.gmra.mxu0 %v1940
  %v1976 = vpop.f32.mrf.mxu0
  %v1977 = vadd.f32 0.0, %v1976
  %v1978 = vpop.f32.mrf.mxu0
  %v1979 = vadd.f32 0.0, %v1978
  %1980 = vmatmul.bf16.gmra.mxu0 %v1943
  %v1981 = vpop.f32.mrf.mxu0
  %v1982 = vadd.f32 0.0, %v1981
  %v1983 = vpop.f32.mrf.mxu0
  %v1984 = vadd.f32 0.0, %v1983
  %1985 = vmatmul.bf16.gmra.mxu0 %v1946
  %v1986 = vpop.f32.mrf.mxu0
  %v1987 = vadd.f32 0.0, %v1986
  %v1988 = vpop.f32.mrf.mxu0
  %v1989 = vadd.f32 0.0, %v1988
  %1990 = vmatmul.bf16.gmra.mxu0 %v1949
  %v1991 = vpop.f32.mrf.mxu0
  %v1992 = vadd.f32 0.0, %v1991
  %v1993 = vpop.f32.mrf.mxu0
  %v1994 = vadd.f32 0.0, %v1993
  %1995 = vmatmul.bf16.gmra.mxu0 %v1952
  %v1996 = vpop.f32.mrf.mxu0
  %v1997 = vadd.f32 0.0, %v1996
  %v1998 = vpop.f32.mrf.mxu0
  %v1999 = vadd.f32 0.0, %v1998
  %2000 = vmatmul.bf16.gmra.mxu0 %v1955
  %v2001 = vpop.f32.mrf.mxu0
  %v2002 = vadd.f32 0.0, %v2001
  %v2003 = vpop.f32.mrf.mxu0
  %v2004 = vadd.f32 0.0, %v2003
  %2005 = vdwg.mxu0
  %2006 = vmatpush.bf16.msra.mxu0 0
  %2007 = vmatpush.bf16.msra.mxu0 0
  %2008 = vmatpush.bf16.msra.mxu0 0
  %2009 = vmatpush.bf16.msra.mxu0 0
  %2010 = vmatpush.bf16.msra.mxu0 %v1890
  %2011 = vmatpush.bf16.msra.mxu0 %v1886
  %2012 = vmatpush.bf16.msra.mxu0 %v1882
  %2013 = vmatpush.bf16.msra.mxu0 %v1878
  %2014 = vmatmul.bf16.gmra.mxu0 %v1934
  %v2015 = vpop.f32.mrf.mxu0
  %v2016 = vadd.f32 0.0, %v2015
  %v2017 = vpop.f32.mrf.mxu0
  %v2018 = vadd.f32 0.0, %v2017
  %2019 = vmatmul.bf16.gmra.mxu0 %v1937
  %v2020 = vpop.f32.mrf.mxu0
  %v2021 = vadd.f32 0.0, %v2020
  %v2022 = vpop.f32.mrf.mxu0
  %v2023 = vadd.f32 0.0, %v2022
  %2024 = vmatmul.bf16.gmra.mxu0 %v1940
  %v2025 = vpop.f32.mrf.mxu0
  %v2026 = vadd.f32 0.0, %v2025
  %v2027 = vpop.f32.mrf.mxu0
  %v2028 = vadd.f32 0.0, %v2027
  %2029 = vmatmul.bf16.gmra.mxu0 %v1943
  %v2030 = vpop.f32.mrf.mxu0
  %v2031 = vadd.f32 0.0, %v2030
  %v2032 = vpop.f32.mrf.mxu0
  %v2033 = vadd.f32 0.0, %v2032
  %2034 = vmatmul.bf16.gmra.mxu0 %v1946
  %v2035 = vpop.f32.mrf.mxu0
  %v2036 = vadd.f32 0.0, %v2035
  %v2037 = vpop.f32.mrf.mxu0
  %v2038 = vadd.f32 0.0, %v2037
  %2039 = vmatmul.bf16.gmra.mxu0 %v1949
  %v2040 = vpop.f32.mrf.mxu0
  %v2041 = vadd.f32 0.0, %v2040
  %v2042 = vpop.f32.mrf.mxu0
  %v2043 = vadd.f32 0.0, %v2042
  %2044 = vmatmul.bf16.gmra.mxu0 %v1952
  %v2045 = vpop.f32.mrf.mxu0
  %v2046 = vadd.f32 0.0, %v2045
  %v2047 = vpop.f32.mrf.mxu0
  %v2048 = vadd.f32 0.0, %v2047
  %2049 = vmatmul.bf16.gmra.mxu0 %v1955
  %v2050 = vpop.f32.mrf.mxu0
  %v2051 = vadd.f32 0.0, %v2050
  %v2052 = vpop.f32.mrf.mxu0
  %v2053 = vadd.f32 0.0, %v2052
  %2054 = vdwg.mxu0
  %2055 = vmatpush.bf16.msra.mxu0 0
  %2056 = vmatpush.bf16.msra.mxu0 0
  %2057 = vmatpush.bf16.msra.mxu0 0
  %2058 = vmatpush.bf16.msra.mxu0 0
  %2059 = vmatpush.bf16.msra.mxu0 %v1891
  %2060 = vmatpush.bf16.msra.mxu0 %v1887
  %2061 = vmatpush.bf16.msra.mxu0 %v1883
  %2062 = vmatpush.bf16.msra.mxu0 %v1879
  %2063 = vmatmul.bf16.gmra.mxu0 %v1934
  %v2064 = vpop.f32.mrf.mxu0
  %v2065 = vadd.f32 0.0, %v2064
  %v2066 = vpop.f32.mrf.mxu0
  %v2067 = vadd.f32 0.0, %v2066
  %2068 = vmatmul.bf16.gmra.mxu0 %v1937
  %v2069 = vpop.f32.mrf.mxu0
  %v2070 = vadd.f32 0.0, %v2069
  %v2071 = vpop.f32.mrf.mxu0
  %v2072 = vadd.f32 0.0, %v2071
  %2073 = vmatmul.bf16.gmra.mxu0 %v1940
  %v2074 = vpop.f32.mrf.mxu0
  %v2075 = vadd.f32 0.0, %v2074
  %v2076 = vpop.f32.mrf.mxu0
  %v2077 = vadd.f32 0.0, %v2076
  %2078 = vmatmul.bf16.gmra.mxu0 %v1943
  %v2079 = vpop.f32.mrf.mxu0
  %v2080 = vadd.f32 0.0, %v2079
  %v2081 = vpop.f32.mrf.mxu0
  %v2082 = vadd.f32 0.0, %v2081
  %2083 = vmatmul.bf16.gmra.mxu0 %v1946
  %v2084 = vpop.f32.mrf.mxu0
  %v2085 = vadd.f32 0.0, %v2084
  %v2086 = vpop.f32.mrf.mxu0
  %v2087 = vadd.f32 0.0, %v2086
  %2088 = vmatmul.bf16.gmra.mxu0 %v1949
  %v2089 = vpop.f32.mrf.mxu0
  %v2090 = vadd.f32 0.0, %v2089
  %v2091 = vpop.f32.mrf.mxu0
  %v2092 = vadd.f32 0.0, %v2091
  %2093 = vmatmul.bf16.gmra.mxu0 %v1952
  %v2094 = vpop.f32.mrf.mxu0
  %v2095 = vadd.f32 0.0, %v2094
  %v2096 = vpop.f32.mrf.mxu0
  %v2097 = vadd.f32 0.0, %v2096
  %2098 = vmatmul.bf16.gmra.mxu0 %v1955
  %v2099 = vpop.f32.mrf.mxu0
  %v2100 = vadd.f32 0.0, %v2099
  %v2101 = vpop.f32.mrf.mxu0
  %v2102 = vadd.f32 0.0, %v2101
  %2103 = vdwg.mxu0
  %2104 = vmatpush.bf16.msra.mxu0 0
  %2105 = vmatpush.bf16.msra.mxu0 0
  %2106 = vmatpush.bf16.msra.mxu0 0
  %2107 = vmatpush.bf16.msra.mxu0 0
  %2108 = vmatpush.bf16.msra.mxu0 %v1892
  %2109 = vmatpush.bf16.msra.mxu0 %v1888
  %2110 = vmatpush.bf16.msra.mxu0 %v1884
  %2111 = vmatpush.bf16.msra.mxu0 %v1880
  %2112 = vmatmul.bf16.gmra.mxu0 %v1934
  %v2113 = vpop.f32.mrf.mxu0
  %v2114 = vadd.f32 0.0, %v2113
  %v2115 = vpop.f32.mrf.mxu0
  %v2116 = vadd.f32 0.0, %v2115
  %2117 = vmatmul.bf16.gmra.mxu0 %v1937
  %v2118 = vpop.f32.mrf.mxu0
  %v2119 = vadd.f32 0.0, %v2118
  %v2120 = vpop.f32.mrf.mxu0
  %v2121 = vadd.f32 0.0, %v2120
  %2122 = vmatmul.bf16.gmra.mxu0 %v1940
  %v2123 = vpop.f32.mrf.mxu0
  %v2124 = vadd.f32 0.0, %v2123
  %v2125 = vpop.f32.mrf.mxu0
  %v2126 = vadd.f32 0.0, %v2125
  %2127 = vmatmul.bf16.gmra.mxu0 %v1943
  %v2128 = vpop.f32.mrf.mxu0
  %v2129 = vadd.f32 0.0, %v2128
  %v2130 = vpop.f32.mrf.mxu0
  %v2131 = vadd.f32 0.0, %v2130
  %2132 = vmatmul.bf16.gmra.mxu0 %v1946
  %v2133 = vpop.f32.mrf.mxu0
  %v2134 = vadd.f32 0.0, %v2133
  %v2135 = vpop.f32.mrf.mxu0
  %v2136 = vadd.f32 0.0, %v2135
  %2137 = vmatmul.bf16.gmra.mxu0 %v1949
  %v2138 = vpop.f32.mrf.mxu0
  %v2139 = vadd.f32 0.0, %v2138
  %v2140 = vpop.f32.mrf.mxu0
  %v2141 = vadd.f32 0.0, %v2140
  %2142 = vmatmul.bf16.gmra.mxu0 %v1952
  %v2143 = vpop.f32.mrf.mxu0
  %v2144 = vadd.f32 0.0, %v2143
  %v2145 = vpop.f32.mrf.mxu0
  %v2146 = vadd.f32 0.0, %v2145
  %2147 = vmatmul.bf16.gmra.mxu0 %v1955
  %v2148 = vpop.f32.mrf.mxu0
  %v2149 = vadd.f32 0.0, %v2148
  %v2150 = vpop.f32.mrf.mxu0
  %v2151 = vadd.f32 0.0, %v2150
  %2152 = vdwg.mxu0
  %v2153 = vadd.f32 %v1699, %v1967
  %v2154 = vadd.f32 %v1700, %v2016
  %v2155 = vadd.f32 %v1701, %v2065
  %v2156 = vadd.f32 %v1702, %v2114
  %v2157 = vadd.f32 %v1703, %v1969
  %v2158 = vadd.f32 %v1704, %v2018
  %v2159 = vadd.f32 %v1705, %v2067
  %v2160 = vadd.f32 %v1706, %v2116
  %v2161 = vadd.f32 %v1707, %v1972
  %v2162 = vadd.f32 %v1708, %v2021
  %v2163 = vadd.f32 %v1709, %v2070
  %v2164 = vadd.f32 %v1710, %v2119
  %v2165 = vadd.f32 %v1711, %v1974
  %v2166 = vadd.f32 %v1712, %v2023
  %v2167 = vadd.f32 %v1713, %v2072
  %v2168 = vadd.f32 %v1714, %v2121
  %v2169 = vadd.f32 %v1715, %v1977
  %v2170 = vadd.f32 %v1716, %v2026
  %v2171 = vadd.f32 %v1717, %v2075
  %v2172 = vadd.f32 %v1718, %v2124
  %v2173 = vadd.f32 %v1719, %v1979
  %v2174 = vadd.f32 %v1720, %v2028
  %v2175 = vadd.f32 %v1721, %v2077
  %v2176 = vadd.f32 %v1722, %v2126
  %v2177 = vadd.f32 %v1723, %v1982
  %v2178 = vadd.f32 %v1724, %v2031
  %v2179 = vadd.f32 %v1725, %v2080
  %v2180 = vadd.f32 %v1726, %v2129
  %v2181 = vadd.f32 %v1727, %v1984
  %v2182 = vadd.f32 %v1728, %v2033
  %v2183 = vadd.f32 %v1729, %v2082
  %v2184 = vadd.f32 %v1730, %v2131
  %v2185 = vadd.f32 %v1731, %v1987
  %v2186 = vadd.f32 %v1732, %v2036
  %v2187 = vadd.f32 %v1733, %v2085
  %v2188 = vadd.f32 %v1734, %v2134
  %v2189 = vadd.f32 %v1735, %v1989
  %v2190 = vadd.f32 %v1736, %v2038
  %v2191 = vadd.f32 %v1737, %v2087
  %v2192 = vadd.f32 %v1738, %v2136
  %v2193 = vadd.f32 %v1739, %v1992
  %v2194 = vadd.f32 %v1740, %v2041
  %v2195 = vadd.f32 %v1741, %v2090
  %v2196 = vadd.f32 %v1742, %v2139
  %v2197 = vadd.f32 %v1743, %v1994
  %v2198 = vadd.f32 %v1744, %v2043
  %v2199 = vadd.f32 %v1745, %v2092
  %v2200 = vadd.f32 %v1746, %v2141
  %v2201 = vadd.f32 %v1747, %v1997
  %v2202 = vadd.f32 %v1748, %v2046
  %v2203 = vadd.f32 %v1749, %v2095
  %v2204 = vadd.f32 %v1750, %v2144
  %v2205 = vadd.f32 %v1751, %v1999
  %v2206 = vadd.f32 %v1752, %v2048
  %v2207 = vadd.f32 %v1753, %v2097
  %v2208 = vadd.f32 %v1754, %v2146
  %v2209 = vadd.f32 %v1755, %v2002
  %v2210 = vadd.f32 %v1756, %v2051
  %v2211 = vadd.f32 %v1757, %v2100
  %v2212 = vadd.f32 %v1758, %v2149
  %v2213 = vadd.f32 %v1759, %v2004
  %v2214 = vadd.f32 %v1760, %v2053
  %v2215 = vadd.f32 %v1761, %v2102
  %v2216 = vadd.f32 %v1762, %v2151
  %2218 = vset.pattern.permute.xlu0 0
  %2219 = vperm.xlu0 %2218, %v42
  %v2220 = vpop.permute.xlu0 %2219
  %2223 = vset.pattern.permute.xlu0 0
  %2224 = vperm.xlu0 %2223, %v43
  %v2225 = vpop.permute.xlu0 %2224
  %2228 = vset.pattern.permute.xlu0 0
  %2229 = vperm.xlu0 %2228, %v44
  %v2230 = vpop.permute.xlu0 %2229
  %2233 = vset.pattern.permute.xlu0 0
  %2234 = vperm.xlu0 %2233, %v45
  %v2235 = vpop.permute.xlu0 %2234
  %2238 = vset.pattern.permute.xlu0 0
  %2239 = vperm.xlu0 %2238, %v46
  %v2240 = vpop.permute.xlu0 %2239
  %2243 = vset.pattern.permute.xlu0 0
  %2244 = vperm.xlu0 %2243, %v47
  %v2245 = vpop.permute.xlu0 %2244
  %2248 = vset.pattern.permute.xlu0 0
  %2249 = vperm.xlu0 %2248, %v48
  %v2250 = vpop.permute.xlu0 %2249
  %2253 = vset.pattern.permute.xlu0 0
  %2254 = vperm.xlu0 %2253, %v49
  %v2255 = vpop.permute.xlu0 %2254
  %2258 = vset.pattern.permute.xlu0 0
  %2259 = vperm.xlu0 %2258, %v50
  %v2260 = vpop.permute.xlu0 %2259
  %2263 = vset.pattern.permute.xlu0 0
  %2264 = vperm.xlu0 %2263, %v51
  %v2265 = vpop.permute.xlu0 %2264
  %2268 = vset.pattern.permute.xlu0 0
  %2269 = vperm.xlu0 %2268, %v52
  %v2270 = vpop.permute.xlu0 %2269
  %2273 = vset.pattern.permute.xlu0 0
  %2274 = vperm.xlu0 %2273, %v53
  %v2275 = vpop.permute.xlu0 %2274
  %2278 = vset.pattern.permute.xlu0 0
  %2279 = vperm.xlu0 %2278, %v54
  %v2280 = vpop.permute.xlu0 %2279
  %2283 = vset.pattern.permute.xlu0 0
  %2284 = vperm.xlu0 %2283, %v55
  %v2285 = vpop.permute.xlu0 %2284
  %2288 = vset.pattern.permute.xlu0 0
  %2289 = vperm.xlu0 %2288, %v56
  %v2290 = vpop.permute.xlu0 %2289
  %2293 = vset.pattern.permute.xlu0 0
  %2294 = vperm.xlu0 %2293, %v57
  %v2295 = vpop.permute.xlu0 %2294
  %v2297 = vadd.f32 %v2153, %v2220
  %v2298 = vadd.f32 %v2154, %v2220
  %v2299 = vadd.f32 %v2155, %v2220
  %v2300 = vadd.f32 %v2156, %v2220
  %v2301 = vadd.f32 %v2157, %v2225
  %v2302 = vadd.f32 %v2158, %v2225
  %v2303 = vadd.f32 %v2159, %v2225
  %v2304 = vadd.f32 %v2160, %v2225
  %v2305 = vadd.f32 %v2161, %v2230
  %v2306 = vadd.f32 %v2162, %v2230
  %v2307 = vadd.f32 %v2163, %v2230
  %v2308 = vadd.f32 %v2164, %v2230
  %v2309 = vadd.f32 %v2165, %v2235
  %v2310 = vadd.f32 %v2166, %v2235
  %v2311 = vadd.f32 %v2167, %v2235
  %v2312 = vadd.f32 %v2168, %v2235
  %v2313 = vadd.f32 %v2169, %v2240
  %v2314 = vadd.f32 %v2170, %v2240
  %v2315 = vadd.f32 %v2171, %v2240
  %v2316 = vadd.f32 %v2172, %v2240
  %v2317 = vadd.f32 %v2173, %v2245
  %v2318 = vadd.f32 %v2174, %v2245
  %v2319 = vadd.f32 %v2175, %v2245
  %v2320 = vadd.f32 %v2176, %v2245
  %v2321 = vadd.f32 %v2177, %v2250
  %v2322 = vadd.f32 %v2178, %v2250
  %v2323 = vadd.f32 %v2179, %v2250
  %v2324 = vadd.f32 %v2180, %v2250
  %v2325 = vadd.f32 %v2181, %v2255
  %v2326 = vadd.f32 %v2182, %v2255
  %v2327 = vadd.f32 %v2183, %v2255
  %v2328 = vadd.f32 %v2184, %v2255
  %v2329 = vadd.f32 %v2185, %v2260
  %v2330 = vadd.f32 %v2186, %v2260
  %v2331 = vadd.f32 %v2187, %v2260
  %v2332 = vadd.f32 %v2188, %v2260
  %v2333 = vadd.f32 %v2189, %v2265
  %v2334 = vadd.f32 %v2190, %v2265
  %v2335 = vadd.f32 %v2191, %v2265
  %v2336 = vadd.f32 %v2192, %v2265
  %v2337 = vadd.f32 %v2193, %v2270
  %v2338 = vadd.f32 %v2194, %v2270
  %v2339 = vadd.f32 %v2195, %v2270
  %v2340 = vadd.f32 %v2196, %v2270
  %v2341 = vadd.f32 %v2197, %v2275
  %v2342 = vadd.f32 %v2198, %v2275
  %v2343 = vadd.f32 %v2199, %v2275
  %v2344 = vadd.f32 %v2200, %v2275
  %v2345 = vadd.f32 %v2201, %v2280
  %v2346 = vadd.f32 %v2202, %v2280
  %v2347 = vadd.f32 %v2203, %v2280
  %v2348 = vadd.f32 %v2204, %v2280
  %v2349 = vadd.f32 %v2205, %v2285
  %v2350 = vadd.f32 %v2206, %v2285
  %v2351 = vadd.f32 %v2207, %v2285
  %v2352 = vadd.f32 %v2208, %v2285
  %v2353 = vadd.f32 %v2209, %v2290
  %v2354 = vadd.f32 %v2210, %v2290
  %v2355 = vadd.f32 %v2211, %v2290
  %v2356 = vadd.f32 %v2212, %v2290
  %v2357 = vadd.f32 %v2213, %v2295
  %v2358 = vadd.f32 %v2214, %v2295
  %v2359 = vadd.f32 %v2215, %v2295
  %v2360 = vadd.f32 %v2216, %v2295
  %v2361 = vmax.f32 %v2297, 0.0
  %v2362 = vmax.f32 %v2298, 0.0
  %v2363 = vmax.f32 %v2299, 0.0
  %v2364 = vmax.f32 %v2300, 0.0
  %v2365 = vmax.f32 %v2301, 0.0
  %v2366 = vmax.f32 %v2302, 0.0
  %v2367 = vmax.f32 %v2303, 0.0
  %v2368 = vmax.f32 %v2304, 0.0
  %v2369 = vmax.f32 %v2305, 0.0
  %v2370 = vmax.f32 %v2306, 0.0
  %v2371 = vmax.f32 %v2307, 0.0
  %v2372 = vmax.f32 %v2308, 0.0
  %v2373 = vmax.f32 %v2309, 0.0
  %v2374 = vmax.f32 %v2310, 0.0
  %v2375 = vmax.f32 %v2311, 0.0
  %v2376 = vmax.f32 %v2312, 0.0
  %v2377 = vmax.f32 %v2313, 0.0
  %v2378 = vmax.f32 %v2314, 0.0
  %v2379 = vmax.f32 %v2315, 0.0
  %v2380 = vmax.f32 %v2316, 0.0
  %v2381 = vmax.f32 %v2317, 0.0
  %v2382 = vmax.f32 %v2318, 0.0
  %v2383 = vmax.f32 %v2319, 0.0
  %v2384 = vmax.f32 %v2320, 0.0
  %v2385 = vmax.f32 %v2321, 0.0
  %v2386 = vmax.f32 %v2322, 0.0
  %v2387 = vmax.f32 %v2323, 0.0
  %v2388 = vmax.f32 %v2324, 0.0
  %v2389 = vmax.f32 %v2325, 0.0
  %v2390 = vmax.f32 %v2326, 0.0
  %v2391 = vmax.f32 %v2327, 0.0
  %v2392 = vmax.f32 %v2328, 0.0
  %v2393 = vmax.f32 %v2329, 0.0
  %v2394 = vmax.f32 %v2330, 0.0
  %v2395 = vmax.f32 %v2331, 0.0
  %v2396 = vmax.f32 %v2332, 0.0
  %v2397 = vmax.f32 %v2333, 0.0
  %v2398 = vmax.f32 %v2334, 0.0
  %v2399 = vmax.f32 %v2335, 0.0
  %v2400 = vmax.f32 %v2336, 0.0
  %v2401 = vmax.f32 %v2337, 0.0
  %v2402 = vmax.f32 %v2338, 0.0
  %v2403 = vmax.f32 %v2339, 0.0
  %v2404 = vmax.f32 %v2340, 0.0
  %v2405 = vmax.f32 %v2341, 0.0
  %v2406 = vmax.f32 %v2342, 0.0
  %v2407 = vmax.f32 %v2343, 0.0
  %v2408 = vmax.f32 %v2344, 0.0
  %v2409 = vmax.f32 %v2345, 0.0
  %v2410 = vmax.f32 %v2346, 0.0
  %v2411 = vmax.f32 %v2347, 0.0
  %v2412 = vmax.f32 %v2348, 0.0
  %v2413 = vmax.f32 %v2349, 0.0
  %v2414 = vmax.f32 %v2350, 0.0
  %v2415 = vmax.f32 %v2351, 0.0
  %v2416 = vmax.f32 %v2352, 0.0
  %v2417 = vmax.f32 %v2353, 0.0
  %v2418 = vmax.f32 %v2354, 0.0
  %v2419 = vmax.f32 %v2355, 0.0
  %v2420 = vmax.f32 %v2356, 0.0
  %v2421 = vmax.f32 %v2357, 0.0
  %v2422 = vmax.f32 %v2358, 0.0
  %v2423 = vmax.f32 %v2359, 0.0
  %v2424 = vmax.f32 %v2360, 0.0
  %v2425 = vld [vmem:[%s2] sm:$0xf]
  %v2426 = vld [vmem:[%s2 + $0x4] sm:$0xf]
  %v2427 = vld [vmem:[%s2 + $0x8] sm:$0xf]
  %v2428 = vld [vmem:[%s2 + $0xc] sm:$0xf]
  %v2429 = vld [vmem:[%s2 + $0x10] sm:$0xf]
  %v2430 = vld [vmem:[%s2 + $0x14] sm:$0xf]
  %v2431 = vld [vmem:[%s2 + $0x18] sm:$0xf]
  %v2432 = vld [vmem:[%s2 + $0x1c] sm:$0xf]
  %v2433 = vld [vmem:[%s2 + $0x20] sm:$0xf]
  %v2434 = vld [vmem:[%s2 + $0x24] sm:$0xf]
  %v2435 = vld [vmem:[%s2 + $0x28] sm:$0xf]
  %v2436 = vld [vmem:[%s2 + $0x2c] sm:$0xf]
  %v2437 = vld [vmem:[%s2 + $0x30] sm:$0xf]
  %v2438 = vld [vmem:[%s2 + $0x34] sm:$0xf]
  %v2439 = vld [vmem:[%s2 + $0x38] sm:$0xf]
  %v2440 = vld [vmem:[%s2 + $0x3c] sm:$0xf]
  %v2441 = vpack.c.bf16 %v2365, %v2361
  %v2442 = vpack.c.bf16 %v2366, %v2362
  %v2443 = vpack.c.bf16 %v2367, %v2363
  %v2444 = vpack.c.bf16 %v2368, %v2364
  %v2445 = vpack.c.bf16 %v2373, %v2369
  %v2446 = vpack.c.bf16 %v2374, %v2370
  %v2447 = vpack.c.bf16 %v2375, %v2371
  %v2448 = vpack.c.bf16 %v2376, %v2372
  %v2449 = vpack.c.bf16 %v2381, %v2377
  %v2450 = vpack.c.bf16 %v2382, %v2378
  %v2451 = vpack.c.bf16 %v2383, %v2379
  %v2452 = vpack.c.bf16 %v2384, %v2380
  %v2453 = vpack.c.bf16 %v2389, %v2385
  %v2454 = vpack.c.bf16 %v2390, %v2386
  %v2455 = vpack.c.bf16 %v2391, %v2387
  %v2456 = vpack.c.bf16 %v2392, %v2388
  %v2457 = vpack.c.bf16 %v2397, %v2393
  %v2458 = vpack.c.bf16 %v2398, %v2394
  %v2459 = vpack.c.bf16 %v2399, %v2395
  %v2460 = vpack.c.bf16 %v2400, %v2396
  %v2461 = vpack.c.bf16 %v2405, %v2401
  %v2462 = vpack.c.bf16 %v2406, %v2402
  %v2463 = vpack.c.bf16 %v2407, %v2403
  %v2464 = vpack.c.bf16 %v2408, %v2404
  %v2465 = vpack.c.bf16 %v2413, %v2409
  %v2466 = vpack.c.bf16 %v2414, %v2410
  %v2467 = vpack.c.bf16 %v2415, %v2411
  %v2468 = vpack.c.bf16 %v2416, %v2412
  %v2469 = vpack.c.bf16 %v2421, %v2417
  %v2470 = vpack.c.bf16 %v2422, %v2418
  %v2471 = vpack.c.bf16 %v2423, %v2419
  %v2472 = vpack.c.bf16 %v2424, %v2420
  %2473 = vrot.lane.b32.xlu0 %v2361, 126
  %v2474 = vpop.permute.xlu0 %2473
  %2475 = vrot.lane.b32.xlu0 %v2365, 126
  %v2476 = vpop.permute.xlu0 %2475
  %2477 = vrot.lane.b32.xlu0 %v2369, 126
  %v2478 = vpop.permute.xlu0 %2477
  %2479 = vrot.lane.b32.xlu0 %v2373, 126
  %v2480 = vpop.permute.xlu0 %2479
  %2481 = vrot.lane.b32.xlu0 %v2377, 126
  %v2482 = vpop.permute.xlu0 %2481
  %2483 = vrot.lane.b32.xlu0 %v2381, 126
  %v2484 = vpop.permute.xlu0 %2483
  %2485 = vrot.lane.b32.xlu0 %v2385, 126
  %v2486 = vpop.permute.xlu0 %2485
  %2487 = vrot.lane.b32.xlu0 %v2389, 126
  %v2488 = vpop.permute.xlu0 %2487
  %2489 = vrot.lane.b32.xlu0 %v2393, 126
  %v2490 = vpop.permute.xlu0 %2489
  %2491 = vrot.lane.b32.xlu0 %v2397, 126
  %v2492 = vpop.permute.xlu0 %2491
  %2493 = vrot.lane.b32.xlu0 %v2401, 126
  %v2494 = vpop.permute.xlu0 %2493
  %2495 = vrot.lane.b32.xlu0 %v2405, 126
  %v2496 = vpop.permute.xlu0 %2495
  %2497 = vrot.lane.b32.xlu0 %v2409, 126
  %v2498 = vpop.permute.xlu0 %2497
  %2499 = vrot.lane.b32.xlu0 %v2413, 126
  %v2500 = vpop.permute.xlu0 %2499
  %2501 = vrot.lane.b32.xlu0 %v2417, 126
  %v2502 = vpop.permute.xlu0 %2501
  %2503 = vrot.lane.b32.xlu0 %v2421, 126
  %v2504 = vpop.permute.xlu0 %2503
  %2505 = vrot.lane.b32.xlu0 %v2362, 126
  %v2506 = vpop.permute.xlu0 %2505
  %2507 = vrot.lane.b32.xlu0 %v2366, 126
  %v2508 = vpop.permute.xlu0 %2507
  %2509 = vrot.lane.b32.xlu0 %v2370, 126
  %v2510 = vpop.permute.xlu0 %2509
  %2511 = vrot.lane.b32.xlu0 %v2374, 126
  %v2512 = vpop.permute.xlu0 %2511
  %2513 = vrot.lane.b32.xlu0 %v2378, 126
  %v2514 = vpop.permute.xlu0 %2513
  %2515 = vrot.lane.b32.xlu0 %v2382, 126
  %v2516 = vpop.permute.xlu0 %2515
  %2517 = vrot.lane.b32.xlu0 %v2386, 126
  %v2518 = vpop.permute.xlu0 %2517
  %2519 = vrot.lane.b32.xlu0 %v2390, 126
  %v2520 = vpop.permute.xlu0 %2519
  %2521 = vrot.lane.b32.xlu0 %v2394, 126
  %v2522 = vpop.permute.xlu0 %2521
  %2523 = vrot.lane.b32.xlu0 %v2398, 126
  %v2524 = vpop.permute.xlu0 %2523
  %2525 = vrot.lane.b32.xlu0 %v2402, 126
  %v2526 = vpop.permute.xlu0 %2525
  %2527 = vrot.lane.b32.xlu0 %v2406, 126
  %v2528 = vpop.permute.xlu0 %2527
  %2529 = vrot.lane.b32.xlu0 %v2410, 126
  %v2530 = vpop.permute.xlu0 %2529
  %2531 = vrot.lane.b32.xlu0 %v2414, 126
  %v2532 = vpop.permute.xlu0 %2531
  %2533 = vrot.lane.b32.xlu0 %v2418, 126
  %v2534 = vpop.permute.xlu0 %2533
  %2535 = vrot.lane.b32.xlu0 %v2422, 126
  %v2536 = vpop.permute.xlu0 %2535
  %2537 = vrot.lane.b32.xlu0 %v2363, 126
  %v2538 = vpop.permute.xlu0 %2537
  %2539 = vrot.lane.b32.xlu0 %v2367, 126
  %v2540 = vpop.permute.xlu0 %2539
  %2541 = vrot.lane.b32.xlu0 %v2371, 126
  %v2542 = vpop.permute.xlu0 %2541
  %2543 = vrot.lane.b32.xlu0 %v2375, 126
  %v2544 = vpop.permute.xlu0 %2543
  %2545 = vrot.lane.b32.xlu0 %v2379, 126
  %v2546 = vpop.permute.xlu0 %2545
  %2547 = vrot.lane.b32.xlu0 %v2383, 126
  %v2548 = vpop.permute.xlu0 %2547
  %2549 = vrot.lane.b32.xlu0 %v2387, 126
  %v2550 = vpop.permute.xlu0 %2549
  %2551 = vrot.lane.b32.xlu0 %v2391, 126
  %v2552 = vpop.permute.xlu0 %2551
  %2553 = vrot.lane.b32.xlu0 %v2395, 126
  %v2554 = vpop.permute.xlu0 %2553
  %2555 = vrot.lane.b32.xlu0 %v2399, 126
  %v2556 = vpop.permute.xlu0 %2555
  %2557 = vrot.lane.b32.xlu0 %v2403, 126
  %v2558 = vpop.permute.xlu0 %2557
  %2559 = vrot.lane.b32.xlu0 %v2407, 126
  %v2560 = vpop.permute.xlu0 %2559
  %2561 = vrot.lane.b32.xlu0 %v2411, 126
  %v2562 = vpop.permute.xlu0 %2561
  %2563 = vrot.lane.b32.xlu0 %v2415, 126
  %v2564 = vpop.permute.xlu0 %2563
  %2565 = vrot.lane.b32.xlu0 %v2419, 126
  %v2566 = vpop.permute.xlu0 %2565
  %2567 = vrot.lane.b32.xlu0 %v2423, 126
  %v2568 = vpop.permute.xlu0 %2567
  %2569 = vrot.lane.b32.xlu0 %v2364, 126
  %v2570 = vpop.permute.xlu0 %2569
  %2571 = vrot.lane.b32.xlu0 %v2368, 126
  %v2572 = vpop.permute.xlu0 %2571
  %2573 = vrot.lane.b32.xlu0 %v2372, 126
  %v2574 = vpop.permute.xlu0 %2573
  %2575 = vrot.lane.b32.xlu0 %v2376, 126
  %v2576 = vpop.permute.xlu0 %2575
  %2577 = vrot.lane.b32.xlu0 %v2380, 126
  %v2578 = vpop.permute.xlu0 %2577
  %2579 = vrot.lane.b32.xlu0 %v2384, 126
  %v2580 = vpop.permute.xlu0 %2579
  %2581 = vrot.lane.b32.xlu0 %v2388, 126
  %v2582 = vpop.permute.xlu0 %2581
  %2583 = vrot.lane.b32.xlu0 %v2392, 126
  %v2584 = vpop.permute.xlu0 %2583
  %2585 = vrot.lane.b32.xlu0 %v2396, 126
  %v2586 = vpop.permute.xlu0 %2585
  %2587 = vrot.lane.b32.xlu0 %v2400, 126
  %v2588 = vpop.permute.xlu0 %2587
  %2589 = vrot.lane.b32.xlu0 %v2404, 126
  %v2590 = vpop.permute.xlu0 %2589
  %2591 = vrot.lane.b32.xlu0 %v2408, 126
  %v2592 = vpop.permute.xlu0 %2591
  %2593 = vrot.lane.b32.xlu0 %v2412, 126
  %v2594 = vpop.permute.xlu0 %2593
  %2595 = vrot.lane.b32.xlu0 %v2416, 126
  %v2596 = vpop.permute.xlu0 %2595
  %2597 = vrot.lane.b32.xlu0 %v2420, 126
  %v2598 = vpop.permute.xlu0 %2597
  %2599 = vrot.lane.b32.xlu0 %v2424, 126
  %v2600 = vpop.permute.xlu0 %2599
  %v2601 = vsel %vm919, %v2538, %v2570
  %v2602 = vsel %vm919, %v2540, %v2572
  %v2603 = vsel %vm919, %v2542, %v2574
  %v2604 = vsel %vm919, %v2544, %v2576
  %v2605 = vsel %vm919, %v2546, %v2578
  %v2606 = vsel %vm919, %v2548, %v2580
  %v2607 = vsel %vm919, %v2550, %v2582
  %v2608 = vsel %vm919, %v2552, %v2584
  %v2609 = vsel %vm919, %v2554, %v2586
  %v2610 = vsel %vm919, %v2556, %v2588
  %v2611 = vsel %vm919, %v2558, %v2590
  %v2612 = vsel %vm919, %v2560, %v2592
  %v2613 = vsel %vm919, %v2562, %v2594
  %v2614 = vsel %vm919, %v2564, %v2596
  %v2615 = vsel %vm919, %v2566, %v2598
  %v2616 = vsel %vm919, %v2568, %v2600
  %v2617 = vsel %vm919, %v2506, %v2538
  %v2618 = vsel %vm919, %v2508, %v2540
  %v2619 = vsel %vm919, %v2510, %v2542
  %v2620 = vsel %vm919, %v2512, %v2544
  %v2621 = vsel %vm919, %v2514, %v2546
  %v2622 = vsel %vm919, %v2516, %v2548
  %v2623 = vsel %vm919, %v2518, %v2550
  %v2624 = vsel %vm919, %v2520, %v2552
  %v2625 = vsel %vm919, %v2522, %v2554
  %v2626 = vsel %vm919, %v2524, %v2556
  %v2627 = vsel %vm919, %v2526, %v2558
  %v2628 = vsel %vm919, %v2528, %v2560
  %v2629 = vsel %vm919, %v2530, %v2562
  %v2630 = vsel %vm919, %v2532, %v2564
  %v2631 = vsel %vm919, %v2534, %v2566
  %v2632 = vsel %vm919, %v2536, %v2568
  %v2633 = vsel %vm919, %v2474, %v2506
  %v2634 = vsel %vm919, %v2476, %v2508
  %v2635 = vsel %vm919, %v2478, %v2510
  %v2636 = vsel %vm919, %v2480, %v2512
  %v2637 = vsel %vm919, %v2482, %v2514
  %v2638 = vsel %vm919, %v2484, %v2516
  %v2639 = vsel %vm919, %v2486, %v2518
  %v2640 = vsel %vm919, %v2488, %v2520
  %v2641 = vsel %vm919, %v2490, %v2522
  %v2642 = vsel %vm919, %v2492, %v2524
  %v2643 = vsel %vm919, %v2494, %v2526
  %v2644 = vsel %vm919, %v2496, %v2528
  %v2645 = vsel %vm919, %v2498, %v2530
  %v2646 = vsel %vm919, %v2500, %v2532
  %v2647 = vsel %vm919, %v2502, %v2534
  %v2648 = vsel %vm919, %v2504, %v2536
  %v2649 = vsel %vm919, %v2570, %v2474
  %v2650 = vsel %vm919, %v2572, %v2476
  %v2651 = vsel %vm919, %v2574, %v2478
  %v2652 = vsel %vm919, %v2576, %v2480
  %v2653 = vsel %vm919, %v2578, %v2482
  %v2654 = vsel %vm919, %v2580, %v2484
  %v2655 = vsel %vm919, %v2582, %v2486
  %v2656 = vsel %vm919, %v2584, %v2488
  %v2657 = vsel %vm919, %v2586, %v2490
  %v2658 = vsel %vm919, %v2588, %v2492
  %v2659 = vsel %vm919, %v2590, %v2494
  %v2660 = vsel %vm919, %v2592, %v2496
  %v2661 = vsel %vm919, %v2594, %v2498
  %v2662 = vsel %vm919, %v2596, %v2500
  %v2663 = vsel %vm919, %v2598, %v2502
  %v2664 = vsel %vm919, %v2600, %v2504
  %s2665 = scalar_lea.vmem %s2, 64
  %v2666 = vld [vmem:[%s2665] sm:$0xf]
  %v2667 = vld [vmem:[%s2665 + $0x4] sm:$0xf]
  %v2668 = vld [vmem:[%s2665 + $0x8] sm:$0xf]
  %v2669 = vld [vmem:[%s2665 + $0xc] sm:$0xf]
  %v2670 = vld [vmem:[%s2665 + $0x10] sm:$0xf]
  %v2671 = vld [vmem:[%s2665 + $0x14] sm:$0xf]
  %v2672 = vld [vmem:[%s2665 + $0x18] sm:$0xf]
  %v2673 = vld [vmem:[%s2665 + $0x1c] sm:$0xf]
  %v2674 = vld [vmem:[%s2665 + $0x20] sm:$0xf]
  %v2675 = vld [vmem:[%s2665 + $0x24] sm:$0xf]
  %v2676 = vld [vmem:[%s2665 + $0x28] sm:$0xf]
  %v2677 = vld [vmem:[%s2665 + $0x2c] sm:$0xf]
  %v2678 = vld [vmem:[%s2665 + $0x30] sm:$0xf]
  %v2679 = vld [vmem:[%s2665 + $0x34] sm:$0xf]
  %v2680 = vld [vmem:[%s2665 + $0x38] sm:$0xf]
  %v2681 = vld [vmem:[%s2665 + $0x3c] sm:$0xf]
  %v2682 = vpack.c.bf16 %v2634, %v2633
  %v2683 = vpack.c.bf16 %v2618, %v2617
  %v2684 = vpack.c.bf16 %v2602, %v2601
  %v2685 = vpack.c.bf16 %v2650, %v2649
  %v2686 = vpack.c.bf16 %v2636, %v2635
  %v2687 = vpack.c.bf16 %v2620, %v2619
  %v2688 = vpack.c.bf16 %v2604, %v2603
  %v2689 = vpack.c.bf16 %v2652, %v2651
  %v2690 = vpack.c.bf16 %v2638, %v2637
  %v2691 = vpack.c.bf16 %v2622, %v2621
  %v2692 = vpack.c.bf16 %v2606, %v2605
  %v2693 = vpack.c.bf16 %v2654, %v2653
  %v2694 = vpack.c.bf16 %v2640, %v2639
  %v2695 = vpack.c.bf16 %v2624, %v2623
  %v2696 = vpack.c.bf16 %v2608, %v2607
  %v2697 = vpack.c.bf16 %v2656, %v2655
  %v2698 = vpack.c.bf16 %v2642, %v2641
  %v2699 = vpack.c.bf16 %v2626, %v2625
  %v2700 = vpack.c.bf16 %v2610, %v2609
  %v2701 = vpack.c.bf16 %v2658, %v2657
  %v2702 = vpack.c.bf16 %v2644, %v2643
  %v2703 = vpack.c.bf16 %v2628, %v2627
  %v2704 = vpack.c.bf16 %v2612, %v2611
  %v2705 = vpack.c.bf16 %v2660, %v2659
  %v2706 = vpack.c.bf16 %v2646, %v2645
  %v2707 = vpack.c.bf16 %v2630, %v2629
  %v2708 = vpack.c.bf16 %v2614, %v2613
  %v2709 = vpack.c.bf16 %v2662, %v2661
  %v2710 = vpack.c.bf16 %v2648, %v2647
  %v2711 = vpack.c.bf16 %v2632, %v2631
  %v2712 = vpack.c.bf16 %v2616, %v2615
  %v2713 = vpack.c.bf16 %v2664, %v2663
  %v2730 = vunpack.c.l.b16 %v2666
  %v2731 = vunpack.c.l.b16 %v2667
  %v2732 = vunpack.c.l.b16 %v2668
  %v2733 = vunpack.c.l.b16 %v2669
  %v2734 = vunpack.c.l.b16 %v2670
  %v2735 = vunpack.c.l.b16 %v2671
  %v2736 = vunpack.c.l.b16 %v2672
  %v2737 = vunpack.c.l.b16 %v2673
  %v2738 = vunpack.c.l.b16 %v2674
  %v2739 = vunpack.c.l.b16 %v2675
  %v2740 = vunpack.c.l.b16 %v2676
  %v2741 = vunpack.c.l.b16 %v2677
  %v2742 = vunpack.c.l.b16 %v2678
  %v2743 = vunpack.c.l.b16 %v2679
  %v2744 = vunpack.c.l.b16 %v2680
  %v2745 = vunpack.c.l.b16 %v2681
  %v2746 = vpack.c.b16 %v2731, %v2730
  %v2747 = vpack.c.b16 %v2733, %v2732
  %v2748 = vpack.c.b16 %v2735, %v2734
  %v2749 = vpack.c.b16 %v2737, %v2736
  %v2750 = vpack.c.b16 %v2739, %v2738
  %v2751 = vpack.c.b16 %v2741, %v2740
  %v2752 = vpack.c.b16 %v2743, %v2742
  %v2753 = vpack.c.b16 %v2745, %v2744
  %2762 = vmatpush.bf16.msra.mxu0 %v2710
  %2763 = vmatpush.bf16.msra.mxu0 %v2706
  %2764 = vmatpush.bf16.msra.mxu0 %v2702
  %2765 = vmatpush.bf16.msra.mxu0 %v2698
  %2766 = vmatpush.bf16.msra.mxu0 %v2694
  %2767 = vmatpush.bf16.msra.mxu0 %v2690
  %2768 = vmatpush.bf16.msra.mxu0 %v2686
  %2769 = vmatpush.bf16.msra.mxu0 %v2682
  %2770 = vmatmul.bf16.gmra.mxu0 %v2746
  %v2771 = vpop.f32.mrf.mxu0
  %v2772 = vadd.f32 0.0, %v2771
  %v2773 = vpop.f32.mrf.mxu0
  %v2774 = vadd.f32 0.0, %v2773
  %2775 = vmatmul.bf16.gmra.mxu0 %v2747
  %v2776 = vpop.f32.mrf.mxu0
  %v2777 = vadd.f32 0.0, %v2776
  %v2778 = vpop.f32.mrf.mxu0
  %v2779 = vadd.f32 0.0, %v2778
  %2780 = vmatmul.bf16.gmra.mxu0 %v2748
  %v2781 = vpop.f32.mrf.mxu0
  %v2782 = vadd.f32 0.0, %v2781
  %v2783 = vpop.f32.mrf.mxu0
  %v2784 = vadd.f32 0.0, %v2783
  %2785 = vmatmul.bf16.gmra.mxu0 %v2749
  %v2786 = vpop.f32.mrf.mxu0
  %v2787 = vadd.f32 0.0, %v2786
  %v2788 = vpop.f32.mrf.mxu0
  %v2789 = vadd.f32 0.0, %v2788
  %2790 = vmatmul.bf16.gmra.mxu0 %v2750
  %v2791 = vpop.f32.mrf.mxu0
  %v2792 = vadd.f32 0.0, %v2791
  %v2793 = vpop.f32.mrf.mxu0
  %v2794 = vadd.f32 0.0, %v2793
  %2795 = vmatmul.bf16.gmra.mxu0 %v2751
  %v2796 = vpop.f32.mrf.mxu0
  %v2797 = vadd.f32 0.0, %v2796
  %v2798 = vpop.f32.mrf.mxu0
  %v2799 = vadd.f32 0.0, %v2798
  %2800 = vmatmul.bf16.gmra.mxu0 %v2752
  %v2801 = vpop.f32.mrf.mxu0
  %v2802 = vadd.f32 0.0, %v2801
  %v2803 = vpop.f32.mrf.mxu0
  %v2804 = vadd.f32 0.0, %v2803
  %2805 = vmatmul.bf16.gmra.mxu0 %v2753
  %v2806 = vpop.f32.mrf.mxu0
  %v2807 = vadd.f32 0.0, %v2806
  %v2808 = vpop.f32.mrf.mxu0
  %v2809 = vadd.f32 0.0, %v2808
  %2810 = vdwg.mxu0
  %2811 = vmatpush.bf16.msra.mxu0 %v2711
  %2812 = vmatpush.bf16.msra.mxu0 %v2707
  %2813 = vmatpush.bf16.msra.mxu0 %v2703
  %2814 = vmatpush.bf16.msra.mxu0 %v2699
  %2815 = vmatpush.bf16.msra.mxu0 %v2695
  %2816 = vmatpush.bf16.msra.mxu0 %v2691
  %2817 = vmatpush.bf16.msra.mxu0 %v2687
  %2818 = vmatpush.bf16.msra.mxu0 %v2683
  %2819 = vmatmul.bf16.gmra.mxu0 %v2746
  %v2820 = vpop.f32.mrf.mxu0
  %v2821 = vadd.f32 0.0, %v2820
  %v2822 = vpop.f32.mrf.mxu0
  %v2823 = vadd.f32 0.0, %v2822
  %2824 = vmatmul.bf16.gmra.mxu0 %v2747
  %v2825 = vpop.f32.mrf.mxu0
  %v2826 = vadd.f32 0.0, %v2825
  %v2827 = vpop.f32.mrf.mxu0
  %v2828 = vadd.f32 0.0, %v2827
  %2829 = vmatmul.bf16.gmra.mxu0 %v2748
  %v2830 = vpop.f32.mrf.mxu0
  %v2831 = vadd.f32 0.0, %v2830
  %v2832 = vpop.f32.mrf.mxu0
  %v2833 = vadd.f32 0.0, %v2832
  %2834 = vmatmul.bf16.gmra.mxu0 %v2749
  %v2835 = vpop.f32.mrf.mxu0
  %v2836 = vadd.f32 0.0, %v2835
  %v2837 = vpop.f32.mrf.mxu0
  %v2838 = vadd.f32 0.0, %v2837
  %2839 = vmatmul.bf16.gmra.mxu0 %v2750
  %v2840 = vpop.f32.mrf.mxu0
  %v2841 = vadd.f32 0.0, %v2840
  %v2842 = vpop.f32.mrf.mxu0
  %v2843 = vadd.f32 0.0, %v2842
  %2844 = vmatmul.bf16.gmra.mxu0 %v2751
  %v2845 = vpop.f32.mrf.mxu0
  %v2846 = vadd.f32 0.0, %v2845
  %v2847 = vpop.f32.mrf.mxu0
  %v2848 = vadd.f32 0.0, %v2847
  %2849 = vmatmul.bf16.gmra.mxu0 %v2752
  %v2850 = vpop.f32.mrf.mxu0
  %v2851 = vadd.f32 0.0, %v2850
  %v2852 = vpop.f32.mrf.mxu0
  %v2853 = vadd.f32 0.0, %v2852
  %2854 = vmatmul.bf16.gmra.mxu0 %v2753
  %v2855 = vpop.f32.mrf.mxu0
  %v2856 = vadd.f32 0.0, %v2855
  %v2857 = vpop.f32.mrf.mxu0
  %v2858 = vadd.f32 0.0, %v2857
  %2859 = vdwg.mxu0
  %2860 = vmatpush.bf16.msra.mxu0 %v2712
  %2861 = vmatpush.bf16.msra.mxu0 %v2708
  %2862 = vmatpush.bf16.msra.mxu0 %v2704
  %2863 = vmatpush.bf16.msra.mxu0 %v2700
  %2864 = vmatpush.bf16.msra.mxu0 %v2696
  %2865 = vmatpush.bf16.msra.mxu0 %v2692
  %2866 = vmatpush.bf16.msra.mxu0 %v2688
  %2867 = vmatpush.bf16.msra.mxu0 %v2684
  %2868 = vmatmul.bf16.gmra.mxu0 %v2746
  %v2869 = vpop.f32.mrf.mxu0
  %v2870 = vadd.f32 0.0, %v2869
  %v2871 = vpop.f32.mrf.mxu0
  %v2872 = vadd.f32 0.0, %v2871
  %2873 = vmatmul.bf16.gmra.mxu0 %v2747
  %v2874 = vpop.f32.mrf.mxu0
  %v2875 = vadd.f32 0.0, %v2874
  %v2876 = vpop.f32.mrf.mxu0
  %v2877 = vadd.f32 0.0, %v2876
  %2878 = vmatmul.bf16.gmra.mxu0 %v2748
  %v2879 = vpop.f32.mrf.mxu0
  %v2880 = vadd.f32 0.0, %v2879
  %v2881 = vpop.f32.mrf.mxu0
  %v2882 = vadd.f32 0.0, %v2881
  %2883 = vmatmul.bf16.gmra.mxu0 %v2749
  %v2884 = vpop.f32.mrf.mxu0
  %v2885 = vadd.f32 0.0, %v2884
  %v2886 = vpop.f32.mrf.mxu0
  %v2887 = vadd.f32 0.0, %v2886
  %2888 = vmatmul.bf16.gmra.mxu0 %v2750
  %v2889 = vpop.f32.mrf.mxu0
  %v2890 = vadd.f32 0.0, %v2889
  %v2891 = vpop.f32.mrf.mxu0
  %v2892 = vadd.f32 0.0, %v2891
  %2893 = vmatmul.bf16.gmra.mxu0 %v2751
  %v2894 = vpop.f32.mrf.mxu0
  %v2895 = vadd.f32 0.0, %v2894
  %v2896 = vpop.f32.mrf.mxu0
  %v2897 = vadd.f32 0.0, %v2896
  %2898 = vmatmul.bf16.gmra.mxu0 %v2752
  %v2899 = vpop.f32.mrf.mxu0
  %v2900 = vadd.f32 0.0, %v2899
  %v2901 = vpop.f32.mrf.mxu0
  %v2902 = vadd.f32 0.0, %v2901
  %2903 = vmatmul.bf16.gmra.mxu0 %v2753
  %v2904 = vpop.f32.mrf.mxu0
  %v2905 = vadd.f32 0.0, %v2904
  %v2906 = vpop.f32.mrf.mxu0
  %v2907 = vadd.f32 0.0, %v2906
  %2908 = vdwg.mxu0
  %2909 = vmatpush.bf16.msra.mxu0 %v2713
  %2910 = vmatpush.bf16.msra.mxu0 %v2709
  %2911 = vmatpush.bf16.msra.mxu0 %v2705
  %2912 = vmatpush.bf16.msra.mxu0 %v2701
  %2913 = vmatpush.bf16.msra.mxu0 %v2697
  %2914 = vmatpush.bf16.msra.mxu0 %v2693
  %2915 = vmatpush.bf16.msra.mxu0 %v2689
  %2916 = vmatpush.bf16.msra.mxu0 %v2685
  %2917 = vmatmul.bf16.gmra.mxu0 %v2746
  %v2918 = vpop.f32.mrf.mxu0
  %v2919 = vadd.f32 0.0, %v2918
  %v2920 = vpop.f32.mrf.mxu0
  %v2921 = vadd.f32 0.0, %v2920
  %2922 = vmatmul.bf16.gmra.mxu0 %v2747
  %v2923 = vpop.f32.mrf.mxu0
  %v2924 = vadd.f32 0.0, %v2923
  %v2925 = vpop.f32.mrf.mxu0
  %v2926 = vadd.f32 0.0, %v2925
  %2927 = vmatmul.bf16.gmra.mxu0 %v2748
  %v2928 = vpop.f32.mrf.mxu0
  %v2929 = vadd.f32 0.0, %v2928
  %v2930 = vpop.f32.mrf.mxu0
  %v2931 = vadd.f32 0.0, %v2930
  %2932 = vmatmul.bf16.gmra.mxu0 %v2749
  %v2933 = vpop.f32.mrf.mxu0
  %v2934 = vadd.f32 0.0, %v2933
  %v2935 = vpop.f32.mrf.mxu0
  %v2936 = vadd.f32 0.0, %v2935
  %2937 = vmatmul.bf16.gmra.mxu0 %v2750
  %v2938 = vpop.f32.mrf.mxu0
  %v2939 = vadd.f32 0.0, %v2938
  %v2940 = vpop.f32.mrf.mxu0
  %v2941 = vadd.f32 0.0, %v2940
  %2942 = vmatmul.bf16.gmra.mxu0 %v2751
  %v2943 = vpop.f32.mrf.mxu0
  %v2944 = vadd.f32 0.0, %v2943
  %v2945 = vpop.f32.mrf.mxu0
  %v2946 = vadd.f32 0.0, %v2945
  %2947 = vmatmul.bf16.gmra.mxu0 %v2752
  %v2948 = vpop.f32.mrf.mxu0
  %v2949 = vadd.f32 0.0, %v2948
  %v2950 = vpop.f32.mrf.mxu0
  %v2951 = vadd.f32 0.0, %v2950
  %2952 = vmatmul.bf16.gmra.mxu0 %v2753
  %v2953 = vpop.f32.mrf.mxu0
  %v2954 = vadd.f32 0.0, %v2953
  %v2955 = vpop.f32.mrf.mxu0
  %v2956 = vadd.f32 0.0, %v2955
  %2957 = vdwg.mxu0
  %v2974 = vunpack.c.l.b16 %v2425
  %v2975 = vunpack.c.l.b16 %v2426
  %v2976 = vunpack.c.l.b16 %v2427
  %v2977 = vunpack.c.l.b16 %v2428
  %v2978 = vunpack.c.l.b16 %v2429
  %v2979 = vunpack.c.l.b16 %v2430
  %v2980 = vunpack.c.l.b16 %v2431
  %v2981 = vunpack.c.l.b16 %v2432
  %v2982 = vunpack.c.l.b16 %v2433
  %v2983 = vunpack.c.l.b16 %v2434
  %v2984 = vunpack.c.l.b16 %v2435
  %v2985 = vunpack.c.l.b16 %v2436
  %v2986 = vunpack.c.l.b16 %v2437
  %v2987 = vunpack.c.l.b16 %v2438
  %v2988 = vunpack.c.l.b16 %v2439
  %v2989 = vunpack.c.l.b16 %v2440
  %v2990 = vpack.c.b16 %v2975, %v2974
  %v2991 = vpack.c.b16 %v2977, %v2976
  %v2992 = vpack.c.b16 %v2979, %v2978
  %v2993 = vpack.c.b16 %v2981, %v2980
  %v2994 = vpack.c.b16 %v2983, %v2982
  %v2995 = vpack.c.b16 %v2985, %v2984
  %v2996 = vpack.c.b16 %v2987, %v2986
  %v2997 = vpack.c.b16 %v2989, %v2988
  %3006 = vmatpush.bf16.msra.mxu0 %v2469
  %3007 = vmatpush.bf16.msra.mxu0 %v2465
  %3008 = vmatpush.bf16.msra.mxu0 %v2461
  %3009 = vmatpush.bf16.msra.mxu0 %v2457
  %3010 = vmatpush.bf16.msra.mxu0 %v2453
  %3011 = vmatpush.bf16.msra.mxu0 %v2449
  %3012 = vmatpush.bf16.msra.mxu0 %v2445
  %3013 = vmatpush.bf16.msra.mxu0 %v2441
  %3014 = vmatmul.bf16.gmra.mxu0 %v2990
  %v3015 = vpop.f32.mrf.mxu0
  %v3016 = vadd.f32 %v2772, %v3015
  %v3017 = vpop.f32.mrf.mxu0
  %v3018 = vadd.f32 %v2774, %v3017
  %3019 = vmatmul.bf16.gmra.mxu0 %v2991
  %v3020 = vpop.f32.mrf.mxu0
  %v3021 = vadd.f32 %v2777, %v3020
  %v3022 = vpop.f32.mrf.mxu0
  %v3023 = vadd.f32 %v2779, %v3022
  %3024 = vmatmul.bf16.gmra.mxu0 %v2992
  %v3025 = vpop.f32.mrf.mxu0
  %v3026 = vadd.f32 %v2782, %v3025
  %v3027 = vpop.f32.mrf.mxu0
  %v3028 = vadd.f32 %v2784, %v3027
  %3029 = vmatmul.bf16.gmra.mxu0 %v2993
  %v3030 = vpop.f32.mrf.mxu0
  %v3031 = vadd.f32 %v2787, %v3030
  %v3032 = vpop.f32.mrf.mxu0
  %v3033 = vadd.f32 %v2789, %v3032
  %3034 = vmatmul.bf16.gmra.mxu0 %v2994
  %v3035 = vpop.f32.mrf.mxu0
  %v3036 = vadd.f32 %v2792, %v3035
  %v3037 = vpop.f32.mrf.mxu0
  %v3038 = vadd.f32 %v2794, %v3037
  %3039 = vmatmul.bf16.gmra.mxu0 %v2995
  %v3040 = vpop.f32.mrf.mxu0
  %v3041 = vadd.f32 %v2797, %v3040
  %v3042 = vpop.f32.mrf.mxu0
  %v3043 = vadd.f32 %v2799, %v3042
  %3044 = vmatmul.bf16.gmra.mxu0 %v2996
  %v3045 = vpop.f32.mrf.mxu0
  %v3046 = vadd.f32 %v2802, %v3045
  %v3047 = vpop.f32.mrf.mxu0
  %v3048 = vadd.f32 %v2804, %v3047
  %3049 = vmatmul.bf16.gmra.mxu0 %v2997
  %v3050 = vpop.f32.mrf.mxu0
  %v3051 = vadd.f32 %v2807, %v3050
  %v3052 = vpop.f32.mrf.mxu0
  %v3053 = vadd.f32 %v2809, %v3052
  %3054 = vdwg.mxu0
  %3055 = vmatpush.bf16.msra.mxu0 %v2470
  %3056 = vmatpush.bf16.msra.mxu0 %v2466
  %3057 = vmatpush.bf16.msra.mxu0 %v2462
  %3058 = vmatpush.bf16.msra.mxu0 %v2458
  %3059 = vmatpush.bf16.msra.mxu0 %v2454
  %3060 = vmatpush.bf16.msra.mxu0 %v2450
  %3061 = vmatpush.bf16.msra.mxu0 %v2446
  %3062 = vmatpush.bf16.msra.mxu0 %v2442
  %3063 = vmatmul.bf16.gmra.mxu0 %v2990
  %v3064 = vpop.f32.mrf.mxu0
  %v3065 = vadd.f32 %v2821, %v3064
  %v3066 = vpop.f32.mrf.mxu0
  %v3067 = vadd.f32 %v2823, %v3066
  %3068 = vmatmul.bf16.gmra.mxu0 %v2991
  %v3069 = vpop.f32.mrf.mxu0
  %v3070 = vadd.f32 %v2826, %v3069
  %v3071 = vpop.f32.mrf.mxu0
  %v3072 = vadd.f32 %v2828, %v3071
  %3073 = vmatmul.bf16.gmra.mxu0 %v2992
  %v3074 = vpop.f32.mrf.mxu0
  %v3075 = vadd.f32 %v2831, %v3074
  %v3076 = vpop.f32.mrf.mxu0
  %v3077 = vadd.f32 %v2833, %v3076
  %3078 = vmatmul.bf16.gmra.mxu0 %v2993
  %v3079 = vpop.f32.mrf.mxu0
  %v3080 = vadd.f32 %v2836, %v3079
  %v3081 = vpop.f32.mrf.mxu0
  %v3082 = vadd.f32 %v2838, %v3081
  %3083 = vmatmul.bf16.gmra.mxu0 %v2994
  %v3084 = vpop.f32.mrf.mxu0
  %v3085 = vadd.f32 %v2841, %v3084
  %v3086 = vpop.f32.mrf.mxu0
  %v3087 = vadd.f32 %v2843, %v3086
  %3088 = vmatmul.bf16.gmra.mxu0 %v2995
  %v3089 = vpop.f32.mrf.mxu0
  %v3090 = vadd.f32 %v2846, %v3089
  %v3091 = vpop.f32.mrf.mxu0
  %v3092 = vadd.f32 %v2848, %v3091
  %3093 = vmatmul.bf16.gmra.mxu0 %v2996
  %v3094 = vpop.f32.mrf.mxu0
  %v3095 = vadd.f32 %v2851, %v3094
  %v3096 = vpop.f32.mrf.mxu0
  %v3097 = vadd.f32 %v2853, %v3096
  %3098 = vmatmul.bf16.gmra.mxu0 %v2997
  %v3099 = vpop.f32.mrf.mxu0
  %v3100 = vadd.f32 %v2856, %v3099
  %v3101 = vpop.f32.mrf.mxu0
  %v3102 = vadd.f32 %v2858, %v3101
  %3103 = vdwg.mxu0
  %3104 = vmatpush.bf16.msra.mxu0 %v2471
  %3105 = vmatpush.bf16.msra.mxu0 %v2467
  %3106 = vmatpush.bf16.msra.mxu0 %v2463
  %3107 = vmatpush.bf16.msra.mxu0 %v2459
  %3108 = vmatpush.bf16.msra.mxu0 %v2455
  %3109 = vmatpush.bf16.msra.mxu0 %v2451
  %3110 = vmatpush.bf16.msra.mxu0 %v2447
  %3111 = vmatpush.bf16.msra.mxu0 %v2443
  %3112 = vmatmul.bf16.gmra.mxu0 %v2990
  %v3113 = vpop.f32.mrf.mxu0
  %v3114 = vadd.f32 %v2870, %v3113
  %v3115 = vpop.f32.mrf.mxu0
  %v3116 = vadd.f32 %v2872, %v3115
  %3117 = vmatmul.bf16.gmra.mxu0 %v2991
  %v3118 = vpop.f32.mrf.mxu0
  %v3119 = vadd.f32 %v2875, %v3118
  %v3120 = vpop.f32.mrf.mxu0
  %v3121 = vadd.f32 %v2877, %v3120
  %3122 = vmatmul.bf16.gmra.mxu0 %v2992
  %v3123 = vpop.f32.mrf.mxu0
  %v3124 = vadd.f32 %v2880, %v3123
  %v3125 = vpop.f32.mrf.mxu0
  %v3126 = vadd.f32 %v2882, %v3125
  %3127 = vmatmul.bf16.gmra.mxu0 %v2993
  %v3128 = vpop.f32.mrf.mxu0
  %v3129 = vadd.f32 %v2885, %v3128
  %v3130 = vpop.f32.mrf.mxu0
  %v3131 = vadd.f32 %v2887, %v3130
  %3132 = vmatmul.bf16.gmra.mxu0 %v2994
  %v3133 = vpop.f32.mrf.mxu0
  %v3134 = vadd.f32 %v2890, %v3133
  %v3135 = vpop.f32.mrf.mxu0
  %v3136 = vadd.f32 %v2892, %v3135
  %3137 = vmatmul.bf16.gmra.mxu0 %v2995
  %v3138 = vpop.f32.mrf.mxu0
  %v3139 = vadd.f32 %v2895, %v3138
  %v3140 = vpop.f32.mrf.mxu0
  %v3141 = vadd.f32 %v2897, %v3140
  %3142 = vmatmul.bf16.gmra.mxu0 %v2996
  %v3143 = vpop.f32.mrf.mxu0
  %v3144 = vadd.f32 %v2900, %v3143
  %v3145 = vpop.f32.mrf.mxu0
  %v3146 = vadd.f32 %v2902, %v3145
  %3147 = vmatmul.bf16.gmra.mxu0 %v2997
  %v3148 = vpop.f32.mrf.mxu0
  %v3149 = vadd.f32 %v2905, %v3148
  %v3150 = vpop.f32.mrf.mxu0
  %v3151 = vadd.f32 %v2907, %v3150
  %3152 = vdwg.mxu0
  %3153 = vmatpush.bf16.msra.mxu0 %v2472
  %3154 = vmatpush.bf16.msra.mxu0 %v2468
  %3155 = vmatpush.bf16.msra.mxu0 %v2464
  %3156 = vmatpush.bf16.msra.mxu0 %v2460
  %3157 = vmatpush.bf16.msra.mxu0 %v2456
  %3158 = vmatpush.bf16.msra.mxu0 %v2452
  %3159 = vmatpush.bf16.msra.mxu0 %v2448
  %3160 = vmatpush.bf16.msra.mxu0 %v2444
  %3161 = vmatmul.bf16.gmra.mxu0 %v2990
  %v3162 = vpop.f32.mrf.mxu0
  %v3163 = vadd.f32 %v2919, %v3162
  %v3164 = vpop.f32.mrf.mxu0
  %v3165 = vadd.f32 %v2921, %v3164
  %3166 = vmatmul.bf16.gmra.mxu0 %v2991
  %v3167 = vpop.f32.mrf.mxu0
  %v3168 = vadd.f32 %v2924, %v3167
  %v3169 = vpop.f32.mrf.mxu0
  %v3170 = vadd.f32 %v2926, %v3169
  %3171 = vmatmul.bf16.gmra.mxu0 %v2992
  %v3172 = vpop.f32.mrf.mxu0
  %v3173 = vadd.f32 %v2929, %v3172
  %v3174 = vpop.f32.mrf.mxu0
  %v3175 = vadd.f32 %v2931, %v3174
  %3176 = vmatmul.bf16.gmra.mxu0 %v2993
  %v3177 = vpop.f32.mrf.mxu0
  %v3178 = vadd.f32 %v2934, %v3177
  %v3179 = vpop.f32.mrf.mxu0
  %v3180 = vadd.f32 %v2936, %v3179
  %3181 = vmatmul.bf16.gmra.mxu0 %v2994
  %v3182 = vpop.f32.mrf.mxu0
  %v3183 = vadd.f32 %v2939, %v3182
  %v3184 = vpop.f32.mrf.mxu0
  %v3185 = vadd.f32 %v2941, %v3184
  %3186 = vmatmul.bf16.gmra.mxu0 %v2995
  %v3187 = vpop.f32.mrf.mxu0
  %v3188 = vadd.f32 %v2944, %v3187
  %v3189 = vpop.f32.mrf.mxu0
  %v3190 = vadd.f32 %v2946, %v3189
  %3191 = vmatmul.bf16.gmra.mxu0 %v2996
  %v3192 = vpop.f32.mrf.mxu0
  %v3193 = vadd.f32 %v2949, %v3192
  %v3194 = vpop.f32.mrf.mxu0
  %v3195 = vadd.f32 %v2951, %v3194
  %3196 = vmatmul.bf16.gmra.mxu0 %v2997
  %v3197 = vpop.f32.mrf.mxu0
  %v3198 = vadd.f32 %v2954, %v3197
  %v3199 = vpop.f32.mrf.mxu0
  %v3200 = vadd.f32 %v2956, %v3199
  %3201 = vdwg.mxu0
  %3202 = vrot.lane.b32.xlu0 %v2361, 124
  %v3203 = vpop.permute.xlu0 %3202
  %3204 = vrot.lane.b32.xlu0 %v2365, 124
  %v3205 = vpop.permute.xlu0 %3204
  %3206 = vrot.lane.b32.xlu0 %v2369, 124
  %v3207 = vpop.permute.xlu0 %3206
  %3208 = vrot.lane.b32.xlu0 %v2373, 124
  %v3209 = vpop.permute.xlu0 %3208
  %3210 = vrot.lane.b32.xlu0 %v2377, 124
  %v3211 = vpop.permute.xlu0 %3210
  %3212 = vrot.lane.b32.xlu0 %v2381, 124
  %v3213 = vpop.permute.xlu0 %3212
  %3214 = vrot.lane.b32.xlu0 %v2385, 124
  %v3215 = vpop.permute.xlu0 %3214
  %3216 = vrot.lane.b32.xlu0 %v2389, 124
  %v3217 = vpop.permute.xlu0 %3216
  %3218 = vrot.lane.b32.xlu0 %v2393, 124
  %v3219 = vpop.permute.xlu0 %3218
  %3220 = vrot.lane.b32.xlu0 %v2397, 124
  %v3221 = vpop.permute.xlu0 %3220
  %3222 = vrot.lane.b32.xlu0 %v2401, 124
  %v3223 = vpop.permute.xlu0 %3222
  %3224 = vrot.lane.b32.xlu0 %v2405, 124
  %v3225 = vpop.permute.xlu0 %3224
  %3226 = vrot.lane.b32.xlu0 %v2409, 124
  %v3227 = vpop.permute.xlu0 %3226
  %3228 = vrot.lane.b32.xlu0 %v2413, 124
  %v3229 = vpop.permute.xlu0 %3228
  %3230 = vrot.lane.b32.xlu0 %v2417, 124
  %v3231 = vpop.permute.xlu0 %3230
  %3232 = vrot.lane.b32.xlu0 %v2421, 124
  %v3233 = vpop.permute.xlu0 %3232
  %3234 = vrot.lane.b32.xlu0 %v2362, 124
  %v3235 = vpop.permute.xlu0 %3234
  %3236 = vrot.lane.b32.xlu0 %v2366, 124
  %v3237 = vpop.permute.xlu0 %3236
  %3238 = vrot.lane.b32.xlu0 %v2370, 124
  %v3239 = vpop.permute.xlu0 %3238
  %3240 = vrot.lane.b32.xlu0 %v2374, 124
  %v3241 = vpop.permute.xlu0 %3240
  %3242 = vrot.lane.b32.xlu0 %v2378, 124
  %v3243 = vpop.permute.xlu0 %3242
  %3244 = vrot.lane.b32.xlu0 %v2382, 124
  %v3245 = vpop.permute.xlu0 %3244
  %3246 = vrot.lane.b32.xlu0 %v2386, 124
  %v3247 = vpop.permute.xlu0 %3246
  %3248 = vrot.lane.b32.xlu0 %v2390, 124
  %v3249 = vpop.permute.xlu0 %3248
  %3250 = vrot.lane.b32.xlu0 %v2394, 124
  %v3251 = vpop.permute.xlu0 %3250
  %3252 = vrot.lane.b32.xlu0 %v2398, 124
  %v3253 = vpop.permute.xlu0 %3252
  %3254 = vrot.lane.b32.xlu0 %v2402, 124
  %v3255 = vpop.permute.xlu0 %3254
  %3256 = vrot.lane.b32.xlu0 %v2406, 124
  %v3257 = vpop.permute.xlu0 %3256
  %3258 = vrot.lane.b32.xlu0 %v2410, 124
  %v3259 = vpop.permute.xlu0 %3258
  %3260 = vrot.lane.b32.xlu0 %v2414, 124
  %v3261 = vpop.permute.xlu0 %3260
  %3262 = vrot.lane.b32.xlu0 %v2418, 124
  %v3263 = vpop.permute.xlu0 %3262
  %3264 = vrot.lane.b32.xlu0 %v2422, 124
  %v3265 = vpop.permute.xlu0 %3264
  %3266 = vrot.lane.b32.xlu0 %v2363, 124
  %v3267 = vpop.permute.xlu0 %3266
  %3268 = vrot.lane.b32.xlu0 %v2367, 124
  %v3269 = vpop.permute.xlu0 %3268
  %3270 = vrot.lane.b32.xlu0 %v2371, 124
  %v3271 = vpop.permute.xlu0 %3270
  %3272 = vrot.lane.b32.xlu0 %v2375, 124
  %v3273 = vpop.permute.xlu0 %3272
  %3274 = vrot.lane.b32.xlu0 %v2379, 124
  %v3275 = vpop.permute.xlu0 %3274
  %3276 = vrot.lane.b32.xlu0 %v2383, 124
  %v3277 = vpop.permute.xlu0 %3276
  %3278 = vrot.lane.b32.xlu0 %v2387, 124
  %v3279 = vpop.permute.xlu0 %3278
  %3280 = vrot.lane.b32.xlu0 %v2391, 124
  %v3281 = vpop.permute.xlu0 %3280
  %3282 = vrot.lane.b32.xlu0 %v2395, 124
  %v3283 = vpop.permute.xlu0 %3282
  %3284 = vrot.lane.b32.xlu0 %v2399, 124
  %v3285 = vpop.permute.xlu0 %3284
  %3286 = vrot.lane.b32.xlu0 %v2403, 124
  %v3287 = vpop.permute.xlu0 %3286
  %3288 = vrot.lane.b32.xlu0 %v2407, 124
  %v3289 = vpop.permute.xlu0 %3288
  %3290 = vrot.lane.b32.xlu0 %v2411, 124
  %v3291 = vpop.permute.xlu0 %3290
  %3292 = vrot.lane.b32.xlu0 %v2415, 124
  %v3293 = vpop.permute.xlu0 %3292
  %3294 = vrot.lane.b32.xlu0 %v2419, 124
  %v3295 = vpop.permute.xlu0 %3294
  %3296 = vrot.lane.b32.xlu0 %v2423, 124
  %v3297 = vpop.permute.xlu0 %3296
  %3298 = vrot.lane.b32.xlu0 %v2364, 124
  %v3299 = vpop.permute.xlu0 %3298
  %3300 = vrot.lane.b32.xlu0 %v2368, 124
  %v3301 = vpop.permute.xlu0 %3300
  %3302 = vrot.lane.b32.xlu0 %v2372, 124
  %v3303 = vpop.permute.xlu0 %3302
  %3304 = vrot.lane.b32.xlu0 %v2376, 124
  %v3305 = vpop.permute.xlu0 %3304
  %3306 = vrot.lane.b32.xlu0 %v2380, 124
  %v3307 = vpop.permute.xlu0 %3306
  %3308 = vrot.lane.b32.xlu0 %v2384, 124
  %v3309 = vpop.permute.xlu0 %3308
  %3310 = vrot.lane.b32.xlu0 %v2388, 124
  %v3311 = vpop.permute.xlu0 %3310
  %3312 = vrot.lane.b32.xlu0 %v2392, 124
  %v3313 = vpop.permute.xlu0 %3312
  %3314 = vrot.lane.b32.xlu0 %v2396, 124
  %v3315 = vpop.permute.xlu0 %3314
  %3316 = vrot.lane.b32.xlu0 %v2400, 124
  %v3317 = vpop.permute.xlu0 %3316
  %3318 = vrot.lane.b32.xlu0 %v2404, 124
  %v3319 = vpop.permute.xlu0 %3318
  %3320 = vrot.lane.b32.xlu0 %v2408, 124
  %v3321 = vpop.permute.xlu0 %3320
  %3322 = vrot.lane.b32.xlu0 %v2412, 124
  %v3323 = vpop.permute.xlu0 %3322
  %3324 = vrot.lane.b32.xlu0 %v2416, 124
  %v3325 = vpop.permute.xlu0 %3324
  %3326 = vrot.lane.b32.xlu0 %v2420, 124
  %v3327 = vpop.permute.xlu0 %3326
  %3328 = vrot.lane.b32.xlu0 %v2424, 124
  %v3329 = vpop.permute.xlu0 %3328
  %v3330 = vsel %vm1827, %v3267, %v3299
  %v3331 = vsel %vm1827, %v3269, %v3301
  %v3332 = vsel %vm1827, %v3271, %v3303
  %v3333 = vsel %vm1827, %v3273, %v3305
  %v3334 = vsel %vm1827, %v3275, %v3307
  %v3335 = vsel %vm1827, %v3277, %v3309
  %v3336 = vsel %vm1827, %v3279, %v3311
  %v3337 = vsel %vm1827, %v3281, %v3313
  %v3338 = vsel %vm1827, %v3283, %v3315
  %v3339 = vsel %vm1827, %v3285, %v3317
  %v3340 = vsel %vm1827, %v3287, %v3319
  %v3341 = vsel %vm1827, %v3289, %v3321
  %v3342 = vsel %vm1827, %v3291, %v3323
  %v3343 = vsel %vm1827, %v3293, %v3325
  %v3344 = vsel %vm1827, %v3295, %v3327
  %v3345 = vsel %vm1827, %v3297, %v3329
  %v3346 = vsel %vm1827, %v3235, %v3267
  %v3347 = vsel %vm1827, %v3237, %v3269
  %v3348 = vsel %vm1827, %v3239, %v3271
  %v3349 = vsel %vm1827, %v3241, %v3273
  %v3350 = vsel %vm1827, %v3243, %v3275
  %v3351 = vsel %vm1827, %v3245, %v3277
  %v3352 = vsel %vm1827, %v3247, %v3279
  %v3353 = vsel %vm1827, %v3249, %v3281
  %v3354 = vsel %vm1827, %v3251, %v3283
  %v3355 = vsel %vm1827, %v3253, %v3285
  %v3356 = vsel %vm1827, %v3255, %v3287
  %v3357 = vsel %vm1827, %v3257, %v3289
  %v3358 = vsel %vm1827, %v3259, %v3291
  %v3359 = vsel %vm1827, %v3261, %v3293
  %v3360 = vsel %vm1827, %v3263, %v3295
  %v3361 = vsel %vm1827, %v3265, %v3297
  %v3362 = vsel %vm1827, %v3203, %v3235
  %v3363 = vsel %vm1827, %v3205, %v3237
  %v3364 = vsel %vm1827, %v3207, %v3239
  %v3365 = vsel %vm1827, %v3209, %v3241
  %v3366 = vsel %vm1827, %v3211, %v3243
  %v3367 = vsel %vm1827, %v3213, %v3245
  %v3368 = vsel %vm1827, %v3215, %v3247
  %v3369 = vsel %vm1827, %v3217, %v3249
  %v3370 = vsel %vm1827, %v3219, %v3251
  %v3371 = vsel %vm1827, %v3221, %v3253
  %v3372 = vsel %vm1827, %v3223, %v3255
  %v3373 = vsel %vm1827, %v3225, %v3257
  %v3374 = vsel %vm1827, %v3227, %v3259
  %v3375 = vsel %vm1827, %v3229, %v3261
  %v3376 = vsel %vm1827, %v3231, %v3263
  %v3377 = vsel %vm1827, %v3233, %v3265
  %v3378 = vsel %vm1827, %v3299, %v3203
  %v3379 = vsel %vm1827, %v3301, %v3205
  %v3380 = vsel %vm1827, %v3303, %v3207
  %v3381 = vsel %vm1827, %v3305, %v3209
  %v3382 = vsel %vm1827, %v3307, %v3211
  %v3383 = vsel %vm1827, %v3309, %v3213
  %v3384 = vsel %vm1827, %v3311, %v3215
  %v3385 = vsel %vm1827, %v3313, %v3217
  %v3386 = vsel %vm1827, %v3315, %v3219
  %v3387 = vsel %vm1827, %v3317, %v3221
  %v3388 = vsel %vm1827, %v3319, %v3223
  %v3389 = vsel %vm1827, %v3321, %v3225
  %v3390 = vsel %vm1827, %v3323, %v3227
  %v3391 = vsel %vm1827, %v3325, %v3229
  %v3392 = vsel %vm1827, %v3327, %v3231
  %v3393 = vsel %vm1827, %v3329, %v3233
  %s3394 = scalar_lea.vmem %s2, 128
  %v3395 = vld [vmem:[%s3394] sm:$0xf]
  %v3396 = vld [vmem:[%s3394 + $0x4] sm:$0xf]
  %v3397 = vld [vmem:[%s3394 + $0x8] sm:$0xf]
  %v3398 = vld [vmem:[%s3394 + $0xc] sm:$0xf]
  %v3399 = vld [vmem:[%s3394 + $0x10] sm:$0xf]
  %v3400 = vld [vmem:[%s3394 + $0x14] sm:$0xf]
  %v3401 = vld [vmem:[%s3394 + $0x18] sm:$0xf]
  %v3402 = vld [vmem:[%s3394 + $0x1c] sm:$0xf]
  %v3403 = vld [vmem:[%s3394 + $0x20] sm:$0xf]
  %v3404 = vld [vmem:[%s3394 + $0x24] sm:$0xf]
  %v3405 = vld [vmem:[%s3394 + $0x28] sm:$0xf]
  %v3406 = vld [vmem:[%s3394 + $0x2c] sm:$0xf]
  %v3407 = vld [vmem:[%s3394 + $0x30] sm:$0xf]
  %v3408 = vld [vmem:[%s3394 + $0x34] sm:$0xf]
  %v3409 = vld [vmem:[%s3394 + $0x38] sm:$0xf]
  %v3410 = vld [vmem:[%s3394 + $0x3c] sm:$0xf]
  %v3411 = vpack.c.bf16 %v3363, %v3362
  %v3412 = vpack.c.bf16 %v3347, %v3346
  %v3413 = vpack.c.bf16 %v3331, %v3330
  %v3414 = vpack.c.bf16 %v3379, %v3378
  %v3415 = vpack.c.bf16 %v3365, %v3364
  %v3416 = vpack.c.bf16 %v3349, %v3348
  %v3417 = vpack.c.bf16 %v3333, %v3332
  %v3418 = vpack.c.bf16 %v3381, %v3380
  %v3419 = vpack.c.bf16 %v3367, %v3366
  %v3420 = vpack.c.bf16 %v3351, %v3350
  %v3421 = vpack.c.bf16 %v3335, %v3334
  %v3422 = vpack.c.bf16 %v3383, %v3382
  %v3423 = vpack.c.bf16 %v3369, %v3368
  %v3424 = vpack.c.bf16 %v3353, %v3352
  %v3425 = vpack.c.bf16 %v3337, %v3336
  %v3426 = vpack.c.bf16 %v3385, %v3384
  %v3427 = vpack.c.bf16 %v3371, %v3370
  %v3428 = vpack.c.bf16 %v3355, %v3354
  %v3429 = vpack.c.bf16 %v3339, %v3338
  %v3430 = vpack.c.bf16 %v3387, %v3386
  %v3431 = vpack.c.bf16 %v3373, %v3372
  %v3432 = vpack.c.bf16 %v3357, %v3356
  %v3433 = vpack.c.bf16 %v3341, %v3340
  %v3434 = vpack.c.bf16 %v3389, %v3388
  %v3435 = vpack.c.bf16 %v3375, %v3374
  %v3436 = vpack.c.bf16 %v3359, %v3358
  %v3437 = vpack.c.bf16 %v3343, %v3342
  %v3438 = vpack.c.bf16 %v3391, %v3390
  %v3439 = vpack.c.bf16 %v3377, %v3376
  %v3440 = vpack.c.bf16 %v3361, %v3360
  %v3441 = vpack.c.bf16 %v3345, %v3344
  %v3442 = vpack.c.bf16 %v3393, %v3392
  %v3459 = vunpack.c.l.b16 %v3395
  %v3460 = vunpack.c.l.b16 %v3396
  %v3461 = vunpack.c.l.b16 %v3397
  %v3462 = vunpack.c.l.b16 %v3398
  %v3463 = vunpack.c.l.b16 %v3399
  %v3464 = vunpack.c.l.b16 %v3400
  %v3465 = vunpack.c.l.b16 %v3401
  %v3466 = vunpack.c.l.b16 %v3402
  %v3467 = vunpack.c.l.b16 %v3403
  %v3468 = vunpack.c.l.b16 %v3404
  %v3469 = vunpack.c.l.b16 %v3405
  %v3470 = vunpack.c.l.b16 %v3406
  %v3471 = vunpack.c.l.b16 %v3407
  %v3472 = vunpack.c.l.b16 %v3408
  %v3473 = vunpack.c.l.b16 %v3409
  %v3474 = vunpack.c.l.b16 %v3410
  %v3475 = vpack.c.b16 %v3460, %v3459
  %v3476 = vpack.c.b16 %v3462, %v3461
  %v3477 = vpack.c.b16 %v3464, %v3463
  %v3478 = vpack.c.b16 %v3466, %v3465
  %v3479 = vpack.c.b16 %v3468, %v3467
  %v3480 = vpack.c.b16 %v3470, %v3469
  %v3481 = vpack.c.b16 %v3472, %v3471
  %v3482 = vpack.c.b16 %v3474, %v3473
  %3491 = vmatpush.bf16.msra.mxu0 %v3439
  %3492 = vmatpush.bf16.msra.mxu0 %v3435
  %3493 = vmatpush.bf16.msra.mxu0 %v3431
  %3494 = vmatpush.bf16.msra.mxu0 %v3427
  %3495 = vmatpush.bf16.msra.mxu0 %v3423
  %3496 = vmatpush.bf16.msra.mxu0 %v3419
  %3497 = vmatpush.bf16.msra.mxu0 %v3415
  %3498 = vmatpush.bf16.msra.mxu0 %v3411
  %3499 = vmatmul.bf16.gmra.mxu0 %v3475
  %v3500 = vpop.f32.mrf.mxu0
  %v3501 = vadd.f32 0.0, %v3500
  %v3502 = vpop.f32.mrf.mxu0
  %v3503 = vadd.f32 0.0, %v3502
  %3504 = vmatmul.bf16.gmra.mxu0 %v3476
  %v3505 = vpop.f32.mrf.mxu0
  %v3506 = vadd.f32 0.0, %v3505
  %v3507 = vpop.f32.mrf.mxu0
  %v3508 = vadd.f32 0.0, %v3507
  %3509 = vmatmul.bf16.gmra.mxu0 %v3477
  %v3510 = vpop.f32.mrf.mxu0
  %v3511 = vadd.f32 0.0, %v3510
  %v3512 = vpop.f32.mrf.mxu0
  %v3513 = vadd.f32 0.0, %v3512
  %3514 = vmatmul.bf16.gmra.mxu0 %v3478
  %v3515 = vpop.f32.mrf.mxu0
  %v3516 = vadd.f32 0.0, %v3515
  %v3517 = vpop.f32.mrf.mxu0
  %v3518 = vadd.f32 0.0, %v3517
  %3519 = vmatmul.bf16.gmra.mxu0 %v3479
  %v3520 = vpop.f32.mrf.mxu0
  %v3521 = vadd.f32 0.0, %v3520
  %v3522 = vpop.f32.mrf.mxu0
  %v3523 = vadd.f32 0.0, %v3522
  %3524 = vmatmul.bf16.gmra.mxu0 %v3480
  %v3525 = vpop.f32.mrf.mxu0
  %v3526 = vadd.f32 0.0, %v3525
  %v3527 = vpop.f32.mrf.mxu0
  %v3528 = vadd.f32 0.0, %v3527
  %3529 = vmatmul.bf16.gmra.mxu0 %v3481
  %v3530 = vpop.f32.mrf.mxu0
  %v3531 = vadd.f32 0.0, %v3530
  %v3532 = vpop.f32.mrf.mxu0
  %v3533 = vadd.f32 0.0, %v3532
  %3534 = vmatmul.bf16.gmra.mxu0 %v3482
  %v3535 = vpop.f32.mrf.mxu0
  %v3536 = vadd.f32 0.0, %v3535
  %v3537 = vpop.f32.mrf.mxu0
  %v3538 = vadd.f32 0.0, %v3537
  %3539 = vdwg.mxu0
  %3540 = vmatpush.bf16.msra.mxu0 %v3440
  %3541 = vmatpush.bf16.msra.mxu0 %v3436
  %3542 = vmatpush.bf16.msra.mxu0 %v3432
  %3543 = vmatpush.bf16.msra.mxu0 %v3428
  %3544 = vmatpush.bf16.msra.mxu0 %v3424
  %3545 = vmatpush.bf16.msra.mxu0 %v3420
  %3546 = vmatpush.bf16.msra.mxu0 %v3416
  %3547 = vmatpush.bf16.msra.mxu0 %v3412
  %3548 = vmatmul.bf16.gmra.mxu0 %v3475
  %v3549 = vpop.f32.mrf.mxu0
  %v3550 = vadd.f32 0.0, %v3549
  %v3551 = vpop.f32.mrf.mxu0
  %v3552 = vadd.f32 0.0, %v3551
  %3553 = vmatmul.bf16.gmra.mxu0 %v3476
  %v3554 = vpop.f32.mrf.mxu0
  %v3555 = vadd.f32 0.0, %v3554
  %v3556 = vpop.f32.mrf.mxu0
  %v3557 = vadd.f32 0.0, %v3556
  %3558 = vmatmul.bf16.gmra.mxu0 %v3477
  %v3559 = vpop.f32.mrf.mxu0
  %v3560 = vadd.f32 0.0, %v3559
  %v3561 = vpop.f32.mrf.mxu0
  %v3562 = vadd.f32 0.0, %v3561
  %3563 = vmatmul.bf16.gmra.mxu0 %v3478
  %v3564 = vpop.f32.mrf.mxu0
  %v3565 = vadd.f32 0.0, %v3564
  %v3566 = vpop.f32.mrf.mxu0
  %v3567 = vadd.f32 0.0, %v3566
  %3568 = vmatmul.bf16.gmra.mxu0 %v3479
  %v3569 = vpop.f32.mrf.mxu0
  %v3570 = vadd.f32 0.0, %v3569
  %v3571 = vpop.f32.mrf.mxu0
  %v3572 = vadd.f32 0.0, %v3571
  %3573 = vmatmul.bf16.gmra.mxu0 %v3480
  %v3574 = vpop.f32.mrf.mxu0
  %v3575 = vadd.f32 0.0, %v3574
  %v3576 = vpop.f32.mrf.mxu0
  %v3577 = vadd.f32 0.0, %v3576
  %3578 = vmatmul.bf16.gmra.mxu0 %v3481
  %v3579 = vpop.f32.mrf.mxu0
  %v3580 = vadd.f32 0.0, %v3579
  %v3581 = vpop.f32.mrf.mxu0
  %v3582 = vadd.f32 0.0, %v3581
  %3583 = vmatmul.bf16.gmra.mxu0 %v3482
  %v3584 = vpop.f32.mrf.mxu0
  %v3585 = vadd.f32 0.0, %v3584
  %v3586 = vpop.f32.mrf.mxu0
  %v3587 = vadd.f32 0.0, %v3586
  %3588 = vdwg.mxu0
  %3589 = vmatpush.bf16.msra.mxu0 %v3441
  %3590 = vmatpush.bf16.msra.mxu0 %v3437
  %3591 = vmatpush.bf16.msra.mxu0 %v3433
  %3592 = vmatpush.bf16.msra.mxu0 %v3429
  %3593 = vmatpush.bf16.msra.mxu0 %v3425
  %3594 = vmatpush.bf16.msra.mxu0 %v3421
  %3595 = vmatpush.bf16.msra.mxu0 %v3417
  %3596 = vmatpush.bf16.msra.mxu0 %v3413
  %3597 = vmatmul.bf16.gmra.mxu0 %v3475
  %v3598 = vpop.f32.mrf.mxu0
  %v3599 = vadd.f32 0.0, %v3598
  %v3600 = vpop.f32.mrf.mxu0
  %v3601 = vadd.f32 0.0, %v3600
  %3602 = vmatmul.bf16.gmra.mxu0 %v3476
  %v3603 = vpop.f32.mrf.mxu0
  %v3604 = vadd.f32 0.0, %v3603
  %v3605 = vpop.f32.mrf.mxu0
  %v3606 = vadd.f32 0.0, %v3605
  %3607 = vmatmul.bf16.gmra.mxu0 %v3477
  %v3608 = vpop.f32.mrf.mxu0
  %v3609 = vadd.f32 0.0, %v3608
  %v3610 = vpop.f32.mrf.mxu0
  %v3611 = vadd.f32 0.0, %v3610
  %3612 = vmatmul.bf16.gmra.mxu0 %v3478
  %v3613 = vpop.f32.mrf.mxu0
  %v3614 = vadd.f32 0.0, %v3613
  %v3615 = vpop.f32.mrf.mxu0
  %v3616 = vadd.f32 0.0, %v3615
  %3617 = vmatmul.bf16.gmra.mxu0 %v3479
  %v3618 = vpop.f32.mrf.mxu0
  %v3619 = vadd.f32 0.0, %v3618
  %v3620 = vpop.f32.mrf.mxu0
  %v3621 = vadd.f32 0.0, %v3620
  %3622 = vmatmul.bf16.gmra.mxu0 %v3480
  %v3623 = vpop.f32.mrf.mxu0
  %v3624 = vadd.f32 0.0, %v3623
  %v3625 = vpop.f32.mrf.mxu0
  %v3626 = vadd.f32 0.0, %v3625
  %3627 = vmatmul.bf16.gmra.mxu0 %v3481
  %v3628 = vpop.f32.mrf.mxu0
  %v3629 = vadd.f32 0.0, %v3628
  %v3630 = vpop.f32.mrf.mxu0
  %v3631 = vadd.f32 0.0, %v3630
  %3632 = vmatmul.bf16.gmra.mxu0 %v3482
  %v3633 = vpop.f32.mrf.mxu0
  %v3634 = vadd.f32 0.0, %v3633
  %v3635 = vpop.f32.mrf.mxu0
  %v3636 = vadd.f32 0.0, %v3635
  %3637 = vdwg.mxu0
  %3638 = vmatpush.bf16.msra.mxu0 %v3442
  %3639 = vmatpush.bf16.msra.mxu0 %v3438
  %3640 = vmatpush.bf16.msra.mxu0 %v3434
  %3641 = vmatpush.bf16.msra.mxu0 %v3430
  %3642 = vmatpush.bf16.msra.mxu0 %v3426
  %3643 = vmatpush.bf16.msra.mxu0 %v3422
  %3644 = vmatpush.bf16.msra.mxu0 %v3418
  %3645 = vmatpush.bf16.msra.mxu0 %v3414
  %3646 = vmatmul.bf16.gmra.mxu0 %v3475
  %v3647 = vpop.f32.mrf.mxu0
  %v3648 = vadd.f32 0.0, %v3647
  %v3649 = vpop.f32.mrf.mxu0
  %v3650 = vadd.f32 0.0, %v3649
  %3651 = vmatmul.bf16.gmra.mxu0 %v3476
  %v3652 = vpop.f32.mrf.mxu0
  %v3653 = vadd.f32 0.0, %v3652
  %v3654 = vpop.f32.mrf.mxu0
  %v3655 = vadd.f32 0.0, %v3654
  %3656 = vmatmul.bf16.gmra.mxu0 %v3477
  %v3657 = vpop.f32.mrf.mxu0
  %v3658 = vadd.f32 0.0, %v3657
  %v3659 = vpop.f32.mrf.mxu0
  %v3660 = vadd.f32 0.0, %v3659
  %3661 = vmatmul.bf16.gmra.mxu0 %v3478
  %v3662 = vpop.f32.mrf.mxu0
  %v3663 = vadd.f32 0.0, %v3662
  %v3664 = vpop.f32.mrf.mxu0
  %v3665 = vadd.f32 0.0, %v3664
  %3666 = vmatmul.bf16.gmra.mxu0 %v3479
  %v3667 = vpop.f32.mrf.mxu0
  %v3668 = vadd.f32 0.0, %v3667
  %v3669 = vpop.f32.mrf.mxu0
  %v3670 = vadd.f32 0.0, %v3669
  %3671 = vmatmul.bf16.gmra.mxu0 %v3480
  %v3672 = vpop.f32.mrf.mxu0
  %v3673 = vadd.f32 0.0, %v3672
  %v3674 = vpop.f32.mrf.mxu0
  %v3675 = vadd.f32 0.0, %v3674
  %3676 = vmatmul.bf16.gmra.mxu0 %v3481
  %v3677 = vpop.f32.mrf.mxu0
  %v3678 = vadd.f32 0.0, %v3677
  %v3679 = vpop.f32.mrf.mxu0
  %v3680 = vadd.f32 0.0, %v3679
  %3681 = vmatmul.bf16.gmra.mxu0 %v3482
  %v3682 = vpop.f32.mrf.mxu0
  %v3683 = vadd.f32 0.0, %v3682
  %v3684 = vpop.f32.mrf.mxu0
  %v3685 = vadd.f32 0.0, %v3684
  %3686 = vdwg.mxu0
  %v3687 = vadd.f32 %v3016, %v3501
  %v3688 = vadd.f32 %v3065, %v3550
  %v3689 = vadd.f32 %v3114, %v3599
  %v3690 = vadd.f32 %v3163, %v3648
  %v3691 = vadd.f32 %v3018, %v3503
  %v3692 = vadd.f32 %v3067, %v3552
  %v3693 = vadd.f32 %v3116, %v3601
  %v3694 = vadd.f32 %v3165, %v3650
  %v3695 = vadd.f32 %v3021, %v3506
  %v3696 = vadd.f32 %v3070, %v3555
  %v3697 = vadd.f32 %v3119, %v3604
  %v3698 = vadd.f32 %v3168, %v3653
  %v3699 = vadd.f32 %v3023, %v3508
  %v3700 = vadd.f32 %v3072, %v3557
  %v3701 = vadd.f32 %v3121, %v3606
  %v3702 = vadd.f32 %v3170, %v3655
  %v3703 = vadd.f32 %v3026, %v3511
  %v3704 = vadd.f32 %v3075, %v3560
  %v3705 = vadd.f32 %v3124, %v3609
  %v3706 = vadd.f32 %v3173, %v3658
  %v3707 = vadd.f32 %v3028, %v3513
  %v3708 = vadd.f32 %v3077, %v3562
  %v3709 = vadd.f32 %v3126, %v3611
  %v3710 = vadd.f32 %v3175, %v3660
  %v3711 = vadd.f32 %v3031, %v3516
  %v3712 = vadd.f32 %v3080, %v3565
  %v3713 = vadd.f32 %v3129, %v3614
  %v3714 = vadd.f32 %v3178, %v3663
  %v3715 = vadd.f32 %v3033, %v3518
  %v3716 = vadd.f32 %v3082, %v3567
  %v3717 = vadd.f32 %v3131, %v3616
  %v3718 = vadd.f32 %v3180, %v3665
  %v3719 = vadd.f32 %v3036, %v3521
  %v3720 = vadd.f32 %v3085, %v3570
  %v3721 = vadd.f32 %v3134, %v3619
  %v3722 = vadd.f32 %v3183, %v3668
  %v3723 = vadd.f32 %v3038, %v3523
  %v3724 = vadd.f32 %v3087, %v3572
  %v3725 = vadd.f32 %v3136, %v3621
  %v3726 = vadd.f32 %v3185, %v3670
  %v3727 = vadd.f32 %v3041, %v3526
  %v3728 = vadd.f32 %v3090, %v3575
  %v3729 = vadd.f32 %v3139, %v3624
  %v3730 = vadd.f32 %v3188, %v3673
  %v3731 = vadd.f32 %v3043, %v3528
  %v3732 = vadd.f32 %v3092, %v3577
  %v3733 = vadd.f32 %v3141, %v3626
  %v3734 = vadd.f32 %v3190, %v3675
  %v3735 = vadd.f32 %v3046, %v3531
  %v3736 = vadd.f32 %v3095, %v3580
  %v3737 = vadd.f32 %v3144, %v3629
  %v3738 = vadd.f32 %v3193, %v3678
  %v3739 = vadd.f32 %v3048, %v3533
  %v3740 = vadd.f32 %v3097, %v3582
  %v3741 = vadd.f32 %v3146, %v3631
  %v3742 = vadd.f32 %v3195, %v3680
  %v3743 = vadd.f32 %v3051, %v3536
  %v3744 = vadd.f32 %v3100, %v3585
  %v3745 = vadd.f32 %v3149, %v3634
  %v3746 = vadd.f32 %v3198, %v3683
  %v3747 = vadd.f32 %v3053, %v3538
  %v3748 = vadd.f32 %v3102, %v3587
  %v3749 = vadd.f32 %v3151, %v3636
  %v3750 = vadd.f32 %v3200, %v3685
  %3751 = vrot.lane.b32.xlu0 %v2361, 122
  %v3752 = vpop.permute.xlu0 %3751
  %3753 = vrot.lane.b32.xlu0 %v2365, 122
  %v3754 = vpop.permute.xlu0 %3753
  %3755 = vrot.lane.b32.xlu0 %v2369, 122
  %v3756 = vpop.permute.xlu0 %3755
  %3757 = vrot.lane.b32.xlu0 %v2373, 122
  %v3758 = vpop.permute.xlu0 %3757
  %3759 = vrot.lane.b32.xlu0 %v2377, 122
  %v3760 = vpop.permute.xlu0 %3759
  %3761 = vrot.lane.b32.xlu0 %v2381, 122
  %v3762 = vpop.permute.xlu0 %3761
  %3763 = vrot.lane.b32.xlu0 %v2385, 122
  %v3764 = vpop.permute.xlu0 %3763
  %3765 = vrot.lane.b32.xlu0 %v2389, 122
  %v3766 = vpop.permute.xlu0 %3765
  %3767 = vrot.lane.b32.xlu0 %v2393, 122
  %v3768 = vpop.permute.xlu0 %3767
  %3769 = vrot.lane.b32.xlu0 %v2397, 122
  %v3770 = vpop.permute.xlu0 %3769
  %3771 = vrot.lane.b32.xlu0 %v2401, 122
  %v3772 = vpop.permute.xlu0 %3771
  %3773 = vrot.lane.b32.xlu0 %v2405, 122
  %v3774 = vpop.permute.xlu0 %3773
  %3775 = vrot.lane.b32.xlu0 %v2409, 122
  %v3776 = vpop.permute.xlu0 %3775
  %3777 = vrot.lane.b32.xlu0 %v2413, 122
  %v3778 = vpop.permute.xlu0 %3777
  %3779 = vrot.lane.b32.xlu0 %v2417, 122
  %v3780 = vpop.permute.xlu0 %3779
  %3781 = vrot.lane.b32.xlu0 %v2421, 122
  %v3782 = vpop.permute.xlu0 %3781
  %3783 = vrot.lane.b32.xlu0 %v2362, 122
  %v3784 = vpop.permute.xlu0 %3783
  %3785 = vrot.lane.b32.xlu0 %v2366, 122
  %v3786 = vpop.permute.xlu0 %3785
  %3787 = vrot.lane.b32.xlu0 %v2370, 122
  %v3788 = vpop.permute.xlu0 %3787
  %3789 = vrot.lane.b32.xlu0 %v2374, 122
  %v3790 = vpop.permute.xlu0 %3789
  %3791 = vrot.lane.b32.xlu0 %v2378, 122
  %v3792 = vpop.permute.xlu0 %3791
  %3793 = vrot.lane.b32.xlu0 %v2382, 122
  %v3794 = vpop.permute.xlu0 %3793
  %3795 = vrot.lane.b32.xlu0 %v2386, 122
  %v3796 = vpop.permute.xlu0 %3795
  %3797 = vrot.lane.b32.xlu0 %v2390, 122
  %v3798 = vpop.permute.xlu0 %3797
  %3799 = vrot.lane.b32.xlu0 %v2394, 122
  %v3800 = vpop.permute.xlu0 %3799
  %3801 = vrot.lane.b32.xlu0 %v2398, 122
  %v3802 = vpop.permute.xlu0 %3801
  %3803 = vrot.lane.b32.xlu0 %v2402, 122
  %v3804 = vpop.permute.xlu0 %3803
  %3805 = vrot.lane.b32.xlu0 %v2406, 122
  %v3806 = vpop.permute.xlu0 %3805
  %3807 = vrot.lane.b32.xlu0 %v2410, 122
  %v3808 = vpop.permute.xlu0 %3807
  %3809 = vrot.lane.b32.xlu0 %v2414, 122
  %v3810 = vpop.permute.xlu0 %3809
  %3811 = vrot.lane.b32.xlu0 %v2418, 122
  %v3812 = vpop.permute.xlu0 %3811
  %3813 = vrot.lane.b32.xlu0 %v2422, 122
  %v3814 = vpop.permute.xlu0 %3813
  %3815 = vrot.lane.b32.xlu0 %v2363, 122
  %v3816 = vpop.permute.xlu0 %3815
  %3817 = vrot.lane.b32.xlu0 %v2367, 122
  %v3818 = vpop.permute.xlu0 %3817
  %3819 = vrot.lane.b32.xlu0 %v2371, 122
  %v3820 = vpop.permute.xlu0 %3819
  %3821 = vrot.lane.b32.xlu0 %v2375, 122
  %v3822 = vpop.permute.xlu0 %3821
  %3823 = vrot.lane.b32.xlu0 %v2379, 122
  %v3824 = vpop.permute.xlu0 %3823
  %3825 = vrot.lane.b32.xlu0 %v2383, 122
  %v3826 = vpop.permute.xlu0 %3825
  %3827 = vrot.lane.b32.xlu0 %v2387, 122
  %v3828 = vpop.permute.xlu0 %3827
  %3829 = vrot.lane.b32.xlu0 %v2391, 122
  %v3830 = vpop.permute.xlu0 %3829
  %3831 = vrot.lane.b32.xlu0 %v2395, 122
  %v3832 = vpop.permute.xlu0 %3831
  %3833 = vrot.lane.b32.xlu0 %v2399, 122
  %v3834 = vpop.permute.xlu0 %3833
  %3835 = vrot.lane.b32.xlu0 %v2403, 122
  %v3836 = vpop.permute.xlu0 %3835
  %3837 = vrot.lane.b32.xlu0 %v2407, 122
  %v3838 = vpop.permute.xlu0 %3837
  %3839 = vrot.lane.b32.xlu0 %v2411, 122
  %v3840 = vpop.permute.xlu0 %3839
  %3841 = vrot.lane.b32.xlu0 %v2415, 122
  %v3842 = vpop.permute.xlu0 %3841
  %3843 = vrot.lane.b32.xlu0 %v2419, 122
  %v3844 = vpop.permute.xlu0 %3843
  %3845 = vrot.lane.b32.xlu0 %v2423, 122
  %v3846 = vpop.permute.xlu0 %3845
  %3847 = vrot.lane.b32.xlu0 %v2364, 122
  %v3848 = vpop.permute.xlu0 %3847
  %3849 = vrot.lane.b32.xlu0 %v2368, 122
  %v3850 = vpop.permute.xlu0 %3849
  %3851 = vrot.lane.b32.xlu0 %v2372, 122
  %v3852 = vpop.permute.xlu0 %3851
  %3853 = vrot.lane.b32.xlu0 %v2376, 122
  %v3854 = vpop.permute.xlu0 %3853
  %3855 = vrot.lane.b32.xlu0 %v2380, 122
  %v3856 = vpop.permute.xlu0 %3855
  %3857 = vrot.lane.b32.xlu0 %v2384, 122
  %v3858 = vpop.permute.xlu0 %3857
  %3859 = vrot.lane.b32.xlu0 %v2388, 122
  %v3860 = vpop.permute.xlu0 %3859
  %3861 = vrot.lane.b32.xlu0 %v2392, 122
  %v3862 = vpop.permute.xlu0 %3861
  %3863 = vrot.lane.b32.xlu0 %v2396, 122
  %v3864 = vpop.permute.xlu0 %3863
  %3865 = vrot.lane.b32.xlu0 %v2400, 122
  %v3866 = vpop.permute.xlu0 %3865
  %3867 = vrot.lane.b32.xlu0 %v2404, 122
  %v3868 = vpop.permute.xlu0 %3867
  %3869 = vrot.lane.b32.xlu0 %v2408, 122
  %v3870 = vpop.permute.xlu0 %3869
  %3871 = vrot.lane.b32.xlu0 %v2412, 122
  %v3872 = vpop.permute.xlu0 %3871
  %3873 = vrot.lane.b32.xlu0 %v2416, 122
  %v3874 = vpop.permute.xlu0 %3873
  %3875 = vrot.lane.b32.xlu0 %v2420, 122
  %v3876 = vpop.permute.xlu0 %3875
  %3877 = vrot.lane.b32.xlu0 %v2424, 122
  %v3878 = vpop.permute.xlu0 %3877
  %vm3879 = vcmp.lt.s32.totalorder %v187, 122
  %v3880 = vsel %vm3879, %v3816, %v3848
  %v3881 = vsel %vm3879, %v3818, %v3850
  %v3882 = vsel %vm3879, %v3820, %v3852
  %v3883 = vsel %vm3879, %v3822, %v3854
  %v3884 = vsel %vm3879, %v3824, %v3856
  %v3885 = vsel %vm3879, %v3826, %v3858
  %v3886 = vsel %vm3879, %v3828, %v3860
  %v3887 = vsel %vm3879, %v3830, %v3862
  %v3888 = vsel %vm3879, %v3832, %v3864
  %v3889 = vsel %vm3879, %v3834, %v3866
  %v3890 = vsel %vm3879, %v3836, %v3868
  %v3891 = vsel %vm3879, %v3838, %v3870
  %v3892 = vsel %vm3879, %v3840, %v3872
  %v3893 = vsel %vm3879, %v3842, %v3874
  %v3894 = vsel %vm3879, %v3844, %v3876
  %v3895 = vsel %vm3879, %v3846, %v3878
  %v3896 = vsel %vm3879, %v3784, %v3816
  %v3897 = vsel %vm3879, %v3786, %v3818
  %v3898 = vsel %vm3879, %v3788, %v3820
  %v3899 = vsel %vm3879, %v3790, %v3822
  %v3900 = vsel %vm3879, %v3792, %v3824
  %v3901 = vsel %vm3879, %v3794, %v3826
  %v3902 = vsel %vm3879, %v3796, %v3828
  %v3903 = vsel %vm3879, %v3798, %v3830
  %v3904 = vsel %vm3879, %v3800, %v3832
  %v3905 = vsel %vm3879, %v3802, %v3834
  %v3906 = vsel %vm3879, %v3804, %v3836
  %v3907 = vsel %vm3879, %v3806, %v3838
  %v3908 = vsel %vm3879, %v3808, %v3840
  %v3909 = vsel %vm3879, %v3810, %v3842
  %v3910 = vsel %vm3879, %v3812, %v3844
  %v3911 = vsel %vm3879, %v3814, %v3846
  %v3912 = vsel %vm3879, %v3752, %v3784
  %v3913 = vsel %vm3879, %v3754, %v3786
  %v3914 = vsel %vm3879, %v3756, %v3788
  %v3915 = vsel %vm3879, %v3758, %v3790
  %v3916 = vsel %vm3879, %v3760, %v3792
  %v3917 = vsel %vm3879, %v3762, %v3794
  %v3918 = vsel %vm3879, %v3764, %v3796
  %v3919 = vsel %vm3879, %v3766, %v3798
  %v3920 = vsel %vm3879, %v3768, %v3800
  %v3921 = vsel %vm3879, %v3770, %v3802
  %v3922 = vsel %vm3879, %v3772, %v3804
  %v3923 = vsel %vm3879, %v3774, %v3806
  %v3924 = vsel %vm3879, %v3776, %v3808
  %v3925 = vsel %vm3879, %v3778, %v3810
  %v3926 = vsel %vm3879, %v3780, %v3812
  %v3927 = vsel %vm3879, %v3782, %v3814
  %v3928 = vsel %vm3879, %v3848, %v3752
  %v3929 = vsel %vm3879, %v3850, %v3754
  %v3930 = vsel %vm3879, %v3852, %v3756
  %v3931 = vsel %vm3879, %v3854, %v3758
  %v3932 = vsel %vm3879, %v3856, %v3760
  %v3933 = vsel %vm3879, %v3858, %v3762
  %v3934 = vsel %vm3879, %v3860, %v3764
  %v3935 = vsel %vm3879, %v3862, %v3766
  %v3936 = vsel %vm3879, %v3864, %v3768
  %v3937 = vsel %vm3879, %v3866, %v3770
  %v3938 = vsel %vm3879, %v3868, %v3772
  %v3939 = vsel %vm3879, %v3870, %v3774
  %v3940 = vsel %vm3879, %v3872, %v3776
  %v3941 = vsel %vm3879, %v3874, %v3778
  %v3942 = vsel %vm3879, %v3876, %v3780
  %v3943 = vsel %vm3879, %v3878, %v3782
  %s3944 = scalar_lea.vmem %s2, 192
  %v3945 = vld [vmem:[%s3944] sm:$0xf]
  %v3946 = vld [vmem:[%s3944 + $0x4] sm:$0xf]
  %v3947 = vld [vmem:[%s3944 + $0x8] sm:$0xf]
  %v3948 = vld [vmem:[%s3944 + $0xc] sm:$0xf]
  %v3949 = vld [vmem:[%s3944 + $0x10] sm:$0xf]
  %v3950 = vld [vmem:[%s3944 + $0x14] sm:$0xf]
  %v3951 = vld [vmem:[%s3944 + $0x18] sm:$0xf]
  %v3952 = vld [vmem:[%s3944 + $0x1c] sm:$0xf]
  %v3953 = vld [vmem:[%s3944 + $0x20] sm:$0xf]
  %v3954 = vld [vmem:[%s3944 + $0x24] sm:$0xf]
  %v3955 = vld [vmem:[%s3944 + $0x28] sm:$0xf]
  %v3956 = vld [vmem:[%s3944 + $0x2c] sm:$0xf]
  %v3957 = vld [vmem:[%s3944 + $0x30] sm:$0xf]
  %v3958 = vld [vmem:[%s3944 + $0x34] sm:$0xf]
  %v3959 = vld [vmem:[%s3944 + $0x38] sm:$0xf]
  %v3960 = vld [vmem:[%s3944 + $0x3c] sm:$0xf]
  %v3961 = vpack.c.bf16 %v3913, %v3912
  %v3962 = vpack.c.bf16 %v3897, %v3896
  %v3963 = vpack.c.bf16 %v3881, %v3880
  %v3964 = vpack.c.bf16 %v3929, %v3928
  %v3965 = vpack.c.bf16 %v3915, %v3914
  %v3966 = vpack.c.bf16 %v3899, %v3898
  %v3967 = vpack.c.bf16 %v3883, %v3882
  %v3968 = vpack.c.bf16 %v3931, %v3930
  %v3969 = vpack.c.bf16 %v3917, %v3916
  %v3970 = vpack.c.bf16 %v3901, %v3900
  %v3971 = vpack.c.bf16 %v3885, %v3884
  %v3972 = vpack.c.bf16 %v3933, %v3932
  %v3973 = vpack.c.bf16 %v3919, %v3918
  %v3974 = vpack.c.bf16 %v3903, %v3902
  %v3975 = vpack.c.bf16 %v3887, %v3886
  %v3976 = vpack.c.bf16 %v3935, %v3934
  %v3977 = vpack.c.bf16 %v3921, %v3920
  %v3978 = vpack.c.bf16 %v3905, %v3904
  %v3979 = vpack.c.bf16 %v3889, %v3888
  %v3980 = vpack.c.bf16 %v3937, %v3936
  %v3981 = vpack.c.bf16 %v3923, %v3922
  %v3982 = vpack.c.bf16 %v3907, %v3906
  %v3983 = vpack.c.bf16 %v3891, %v3890
  %v3984 = vpack.c.bf16 %v3939, %v3938
  %v3985 = vpack.c.bf16 %v3925, %v3924
  %v3986 = vpack.c.bf16 %v3909, %v3908
  %v3987 = vpack.c.bf16 %v3893, %v3892
  %v3988 = vpack.c.bf16 %v3941, %v3940
  %v3989 = vpack.c.bf16 %v3927, %v3926
  %v3990 = vpack.c.bf16 %v3911, %v3910
  %v3991 = vpack.c.bf16 %v3895, %v3894
  %v3992 = vpack.c.bf16 %v3943, %v3942
  %v4009 = vunpack.c.l.b16 %v3945
  %v4010 = vunpack.c.l.b16 %v3946
  %v4011 = vunpack.c.l.b16 %v3947
  %v4012 = vunpack.c.l.b16 %v3948
  %v4013 = vunpack.c.l.b16 %v3949
  %v4014 = vunpack.c.l.b16 %v3950
  %v4015 = vunpack.c.l.b16 %v3951
  %v4016 = vunpack.c.l.b16 %v3952
  %v4017 = vunpack.c.l.b16 %v3953
  %v4018 = vunpack.c.l.b16 %v3954
  %v4019 = vunpack.c.l.b16 %v3955
  %v4020 = vunpack.c.l.b16 %v3956
  %v4021 = vunpack.c.l.b16 %v3957
  %v4022 = vunpack.c.l.b16 %v3958
  %v4023 = vunpack.c.l.b16 %v3959
  %v4024 = vunpack.c.l.b16 %v3960
  %v4025 = vpack.c.b16 %v4010, %v4009
  %v4026 = vpack.c.b16 %v4012, %v4011
  %v4027 = vpack.c.b16 %v4014, %v4013
  %v4028 = vpack.c.b16 %v4016, %v4015
  %v4029 = vpack.c.b16 %v4018, %v4017
  %v4030 = vpack.c.b16 %v4020, %v4019
  %v4031 = vpack.c.b16 %v4022, %v4021
  %v4032 = vpack.c.b16 %v4024, %v4023
  %4041 = vmatpush.bf16.msra.mxu0 %v3989
  %4042 = vmatpush.bf16.msra.mxu0 %v3985
  %4043 = vmatpush.bf16.msra.mxu0 %v3981
  %4044 = vmatpush.bf16.msra.mxu0 %v3977
  %4045 = vmatpush.bf16.msra.mxu0 %v3973
  %4046 = vmatpush.bf16.msra.mxu0 %v3969
  %4047 = vmatpush.bf16.msra.mxu0 %v3965
  %4048 = vmatpush.bf16.msra.mxu0 %v3961
  %4049 = vmatmul.bf16.gmra.mxu0 %v4025
  %v4050 = vpop.f32.mrf.mxu0
  %v4051 = vadd.f32 0.0, %v4050
  %v4052 = vpop.f32.mrf.mxu0
  %v4053 = vadd.f32 0.0, %v4052
  %4054 = vmatmul.bf16.gmra.mxu0 %v4026
  %v4055 = vpop.f32.mrf.mxu0
  %v4056 = vadd.f32 0.0, %v4055
  %v4057 = vpop.f32.mrf.mxu0
  %v4058 = vadd.f32 0.0, %v4057
  %4059 = vmatmul.bf16.gmra.mxu0 %v4027
  %v4060 = vpop.f32.mrf.mxu0
  %v4061 = vadd.f32 0.0, %v4060
  %v4062 = vpop.f32.mrf.mxu0
  %v4063 = vadd.f32 0.0, %v4062
  %4064 = vmatmul.bf16.gmra.mxu0 %v4028
  %v4065 = vpop.f32.mrf.mxu0
  %v4066 = vadd.f32 0.0, %v4065
  %v4067 = vpop.f32.mrf.mxu0
  %v4068 = vadd.f32 0.0, %v4067
  %4069 = vmatmul.bf16.gmra.mxu0 %v4029
  %v4070 = vpop.f32.mrf.mxu0
  %v4071 = vadd.f32 0.0, %v4070
  %v4072 = vpop.f32.mrf.mxu0
  %v4073 = vadd.f32 0.0, %v4072
  %4074 = vmatmul.bf16.gmra.mxu0 %v4030
  %v4075 = vpop.f32.mrf.mxu0
  %v4076 = vadd.f32 0.0, %v4075
  %v4077 = vpop.f32.mrf.mxu0
  %v4078 = vadd.f32 0.0, %v4077
  %4079 = vmatmul.bf16.gmra.mxu0 %v4031
  %v4080 = vpop.f32.mrf.mxu0
  %v4081 = vadd.f32 0.0, %v4080
  %v4082 = vpop.f32.mrf.mxu0
  %v4083 = vadd.f32 0.0, %v4082
  %4084 = vmatmul.bf16.gmra.mxu0 %v4032
  %v4085 = vpop.f32.mrf.mxu0
  %v4086 = vadd.f32 0.0, %v4085
  %v4087 = vpop.f32.mrf.mxu0
  %v4088 = vadd.f32 0.0, %v4087
  %4089 = vdwg.mxu0
  %4090 = vmatpush.bf16.msra.mxu0 %v3990
  %4091 = vmatpush.bf16.msra.mxu0 %v3986
  %4092 = vmatpush.bf16.msra.mxu0 %v3982
  %4093 = vmatpush.bf16.msra.mxu0 %v3978
  %4094 = vmatpush.bf16.msra.mxu0 %v3974
  %4095 = vmatpush.bf16.msra.mxu0 %v3970
  %4096 = vmatpush.bf16.msra.mxu0 %v3966
  %4097 = vmatpush.bf16.msra.mxu0 %v3962
  %4098 = vmatmul.bf16.gmra.mxu0 %v4025
  %v4099 = vpop.f32.mrf.mxu0
  %v4100 = vadd.f32 0.0, %v4099
  %v4101 = vpop.f32.mrf.mxu0
  %v4102 = vadd.f32 0.0, %v4101
  %4103 = vmatmul.bf16.gmra.mxu0 %v4026
  %v4104 = vpop.f32.mrf.mxu0
  %v4105 = vadd.f32 0.0, %v4104
  %v4106 = vpop.f32.mrf.mxu0
  %v4107 = vadd.f32 0.0, %v4106
  %4108 = vmatmul.bf16.gmra.mxu0 %v4027
  %v4109 = vpop.f32.mrf.mxu0
  %v4110 = vadd.f32 0.0, %v4109
  %v4111 = vpop.f32.mrf.mxu0
  %v4112 = vadd.f32 0.0, %v4111
  %4113 = vmatmul.bf16.gmra.mxu0 %v4028
  %v4114 = vpop.f32.mrf.mxu0
  %v4115 = vadd.f32 0.0, %v4114
  %v4116 = vpop.f32.mrf.mxu0
  %v4117 = vadd.f32 0.0, %v4116
  %4118 = vmatmul.bf16.gmra.mxu0 %v4029
  %v4119 = vpop.f32.mrf.mxu0
  %v4120 = vadd.f32 0.0, %v4119
  %v4121 = vpop.f32.mrf.mxu0
  %v4122 = vadd.f32 0.0, %v4121
  %4123 = vmatmul.bf16.gmra.mxu0 %v4030
  %v4124 = vpop.f32.mrf.mxu0
  %v4125 = vadd.f32 0.0, %v4124
  %v4126 = vpop.f32.mrf.mxu0
  %v4127 = vadd.f32 0.0, %v4126
  %4128 = vmatmul.bf16.gmra.mxu0 %v4031
  %v4129 = vpop.f32.mrf.mxu0
  %v4130 = vadd.f32 0.0, %v4129
  %v4131 = vpop.f32.mrf.mxu0
  %v4132 = vadd.f32 0.0, %v4131
  %4133 = vmatmul.bf16.gmra.mxu0 %v4032
  %v4134 = vpop.f32.mrf.mxu0
  %v4135 = vadd.f32 0.0, %v4134
  %v4136 = vpop.f32.mrf.mxu0
  %v4137 = vadd.f32 0.0, %v4136
  %4138 = vdwg.mxu0
  %4139 = vmatpush.bf16.msra.mxu0 %v3991
  %4140 = vmatpush.bf16.msra.mxu0 %v3987
  %4141 = vmatpush.bf16.msra.mxu0 %v3983
  %4142 = vmatpush.bf16.msra.mxu0 %v3979
  %4143 = vmatpush.bf16.msra.mxu0 %v3975
  %4144 = vmatpush.bf16.msra.mxu0 %v3971
  %4145 = vmatpush.bf16.msra.mxu0 %v3967
  %4146 = vmatpush.bf16.msra.mxu0 %v3963
  %4147 = vmatmul.bf16.gmra.mxu0 %v4025
  %v4148 = vpop.f32.mrf.mxu0
  %v4149 = vadd.f32 0.0, %v4148
  %v4150 = vpop.f32.mrf.mxu0
  %v4151 = vadd.f32 0.0, %v4150
  %4152 = vmatmul.bf16.gmra.mxu0 %v4026
  %v4153 = vpop.f32.mrf.mxu0
  %v4154 = vadd.f32 0.0, %v4153
  %v4155 = vpop.f32.mrf.mxu0
  %v4156 = vadd.f32 0.0, %v4155
  %4157 = vmatmul.bf16.gmra.mxu0 %v4027
  %v4158 = vpop.f32.mrf.mxu0
  %v4159 = vadd.f32 0.0, %v4158
  %v4160 = vpop.f32.mrf.mxu0
  %v4161 = vadd.f32 0.0, %v4160
  %4162 = vmatmul.bf16.gmra.mxu0 %v4028
  %v4163 = vpop.f32.mrf.mxu0
  %v4164 = vadd.f32 0.0, %v4163
  %v4165 = vpop.f32.mrf.mxu0
  %v4166 = vadd.f32 0.0, %v4165
  %4167 = vmatmul.bf16.gmra.mxu0 %v4029
  %v4168 = vpop.f32.mrf.mxu0
  %v4169 = vadd.f32 0.0, %v4168
  %v4170 = vpop.f32.mrf.mxu0
  %v4171 = vadd.f32 0.0, %v4170
  %4172 = vmatmul.bf16.gmra.mxu0 %v4030
  %v4173 = vpop.f32.mrf.mxu0
  %v4174 = vadd.f32 0.0, %v4173
  %v4175 = vpop.f32.mrf.mxu0
  %v4176 = vadd.f32 0.0, %v4175
  %4177 = vmatmul.bf16.gmra.mxu0 %v4031
  %v4178 = vpop.f32.mrf.mxu0
  %v4179 = vadd.f32 0.0, %v4178
  %v4180 = vpop.f32.mrf.mxu0
  %v4181 = vadd.f32 0.0, %v4180
  %4182 = vmatmul.bf16.gmra.mxu0 %v4032
  %v4183 = vpop.f32.mrf.mxu0
  %v4184 = vadd.f32 0.0, %v4183
  %v4185 = vpop.f32.mrf.mxu0
  %v4186 = vadd.f32 0.0, %v4185
  %4187 = vdwg.mxu0
  %4188 = vmatpush.bf16.msra.mxu0 %v3992
  %4189 = vmatpush.bf16.msra.mxu0 %v3988
  %4190 = vmatpush.bf16.msra.mxu0 %v3984
  %4191 = vmatpush.bf16.msra.mxu0 %v3980
  %4192 = vmatpush.bf16.msra.mxu0 %v3976
  %4193 = vmatpush.bf16.msra.mxu0 %v3972
  %4194 = vmatpush.bf16.msra.mxu0 %v3968
  %4195 = vmatpush.bf16.msra.mxu0 %v3964
  %4196 = vmatmul.bf16.gmra.mxu0 %v4025
  %v4197 = vpop.f32.mrf.mxu0
  %v4198 = vadd.f32 0.0, %v4197
  %v4199 = vpop.f32.mrf.mxu0
  %v4200 = vadd.f32 0.0, %v4199
  %4201 = vmatmul.bf16.gmra.mxu0 %v4026
  %v4202 = vpop.f32.mrf.mxu0
  %v4203 = vadd.f32 0.0, %v4202
  %v4204 = vpop.f32.mrf.mxu0
  %v4205 = vadd.f32 0.0, %v4204
  %4206 = vmatmul.bf16.gmra.mxu0 %v4027
  %v4207 = vpop.f32.mrf.mxu0
  %v4208 = vadd.f32 0.0, %v4207
  %v4209 = vpop.f32.mrf.mxu0
  %v4210 = vadd.f32 0.0, %v4209
  %4211 = vmatmul.bf16.gmra.mxu0 %v4028
  %v4212 = vpop.f32.mrf.mxu0
  %v4213 = vadd.f32 0.0, %v4212
  %v4214 = vpop.f32.mrf.mxu0
  %v4215 = vadd.f32 0.0, %v4214
  %4216 = vmatmul.bf16.gmra.mxu0 %v4029
  %v4217 = vpop.f32.mrf.mxu0
  %v4218 = vadd.f32 0.0, %v4217
  %v4219 = vpop.f32.mrf.mxu0
  %v4220 = vadd.f32 0.0, %v4219
  %4221 = vmatmul.bf16.gmra.mxu0 %v4030
  %v4222 = vpop.f32.mrf.mxu0
  %v4223 = vadd.f32 0.0, %v4222
  %v4224 = vpop.f32.mrf.mxu0
  %v4225 = vadd.f32 0.0, %v4224
  %4226 = vmatmul.bf16.gmra.mxu0 %v4031
  %v4227 = vpop.f32.mrf.mxu0
  %v4228 = vadd.f32 0.0, %v4227
  %v4229 = vpop.f32.mrf.mxu0
  %v4230 = vadd.f32 0.0, %v4229
  %4231 = vmatmul.bf16.gmra.mxu0 %v4032
  %v4232 = vpop.f32.mrf.mxu0
  %v4233 = vadd.f32 0.0, %v4232
  %v4234 = vpop.f32.mrf.mxu0
  %v4235 = vadd.f32 0.0, %v4234
  %4236 = vdwg.mxu0
  %v4237 = vadd.f32 %v3687, %v4051
  %v4238 = vadd.f32 %v3688, %v4100
  %v4239 = vadd.f32 %v3689, %v4149
  %v4240 = vadd.f32 %v3690, %v4198
  %v4241 = vadd.f32 %v3691, %v4053
  %v4242 = vadd.f32 %v3692, %v4102
  %v4243 = vadd.f32 %v3693, %v4151
  %v4244 = vadd.f32 %v3694, %v4200
  %v4245 = vadd.f32 %v3695, %v4056
  %v4246 = vadd.f32 %v3696, %v4105
  %v4247 = vadd.f32 %v3697, %v4154
  %v4248 = vadd.f32 %v3698, %v4203
  %v4249 = vadd.f32 %v3699, %v4058
  %v4250 = vadd.f32 %v3700, %v4107
  %v4251 = vadd.f32 %v3701, %v4156
  %v4252 = vadd.f32 %v3702, %v4205
  %v4253 = vadd.f32 %v3703, %v4061
  %v4254 = vadd.f32 %v3704, %v4110
  %v4255 = vadd.f32 %v3705, %v4159
  %v4256 = vadd.f32 %v3706, %v4208
  %v4257 = vadd.f32 %v3707, %v4063
  %v4258 = vadd.f32 %v3708, %v4112
  %v4259 = vadd.f32 %v3709, %v4161
  %v4260 = vadd.f32 %v3710, %v4210
  %v4261 = vadd.f32 %v3711, %v4066
  %v4262 = vadd.f32 %v3712, %v4115
  %v4263 = vadd.f32 %v3713, %v4164
  %v4264 = vadd.f32 %v3714, %v4213
  %v4265 = vadd.f32 %v3715, %v4068
  %v4266 = vadd.f32 %v3716, %v4117
  %v4267 = vadd.f32 %v3717, %v4166
  %v4268 = vadd.f32 %v3718, %v4215
  %v4269 = vadd.f32 %v3719, %v4071
  %v4270 = vadd.f32 %v3720, %v4120
  %v4271 = vadd.f32 %v3721, %v4169
  %v4272 = vadd.f32 %v3722, %v4218
  %v4273 = vadd.f32 %v3723, %v4073
  %v4274 = vadd.f32 %v3724, %v4122
  %v4275 = vadd.f32 %v3725, %v4171
  %v4276 = vadd.f32 %v3726, %v4220
  %v4277 = vadd.f32 %v3727, %v4076
  %v4278 = vadd.f32 %v3728, %v4125
  %v4279 = vadd.f32 %v3729, %v4174
  %v4280 = vadd.f32 %v3730, %v4223
  %v4281 = vadd.f32 %v3731, %v4078
  %v4282 = vadd.f32 %v3732, %v4127
  %v4283 = vadd.f32 %v3733, %v4176
  %v4284 = vadd.f32 %v3734, %v4225
  %v4285 = vadd.f32 %v3735, %v4081
  %v4286 = vadd.f32 %v3736, %v4130
  %v4287 = vadd.f32 %v3737, %v4179
  %v4288 = vadd.f32 %v3738, %v4228
  %v4289 = vadd.f32 %v3739, %v4083
  %v4290 = vadd.f32 %v3740, %v4132
  %v4291 = vadd.f32 %v3741, %v4181
  %v4292 = vadd.f32 %v3742, %v4230
  %v4293 = vadd.f32 %v3743, %v4086
  %v4294 = vadd.f32 %v3744, %v4135
  %v4295 = vadd.f32 %v3745, %v4184
  %v4296 = vadd.f32 %v3746, %v4233
  %v4297 = vadd.f32 %v3747, %v4088
  %v4298 = vadd.f32 %v3748, %v4137
  %v4299 = vadd.f32 %v3749, %v4186
  %v4300 = vadd.f32 %v3750, %v4235
  %4301 = vrot.lane.b32.xlu0 %v2361, 120
  %v4302 = vpop.permute.xlu0 %4301
  %4303 = vrot.lane.b32.xlu0 %v2365, 120
  %v4304 = vpop.permute.xlu0 %4303
  %4305 = vrot.lane.b32.xlu0 %v2369, 120
  %v4306 = vpop.permute.xlu0 %4305
  %4307 = vrot.lane.b32.xlu0 %v2373, 120
  %v4308 = vpop.permute.xlu0 %4307
  %4309 = vrot.lane.b32.xlu0 %v2377, 120
  %v4310 = vpop.permute.xlu0 %4309
  %4311 = vrot.lane.b32.xlu0 %v2381, 120
  %v4312 = vpop.permute.xlu0 %4311
  %4313 = vrot.lane.b32.xlu0 %v2385, 120
  %v4314 = vpop.permute.xlu0 %4313
  %4315 = vrot.lane.b32.xlu0 %v2389, 120
  %v4316 = vpop.permute.xlu0 %4315
  %4317 = vrot.lane.b32.xlu0 %v2393, 120
  %v4318 = vpop.permute.xlu0 %4317
  %4319 = vrot.lane.b32.xlu0 %v2397, 120
  %v4320 = vpop.permute.xlu0 %4319
  %4321 = vrot.lane.b32.xlu0 %v2401, 120
  %v4322 = vpop.permute.xlu0 %4321
  %4323 = vrot.lane.b32.xlu0 %v2405, 120
  %v4324 = vpop.permute.xlu0 %4323
  %4325 = vrot.lane.b32.xlu0 %v2409, 120
  %v4326 = vpop.permute.xlu0 %4325
  %4327 = vrot.lane.b32.xlu0 %v2413, 120
  %v4328 = vpop.permute.xlu0 %4327
  %4329 = vrot.lane.b32.xlu0 %v2417, 120
  %v4330 = vpop.permute.xlu0 %4329
  %4331 = vrot.lane.b32.xlu0 %v2421, 120
  %v4332 = vpop.permute.xlu0 %4331
  %4333 = vrot.lane.b32.xlu0 %v2362, 120
  %v4334 = vpop.permute.xlu0 %4333
  %4335 = vrot.lane.b32.xlu0 %v2366, 120
  %v4336 = vpop.permute.xlu0 %4335
  %4337 = vrot.lane.b32.xlu0 %v2370, 120
  %v4338 = vpop.permute.xlu0 %4337
  %4339 = vrot.lane.b32.xlu0 %v2374, 120
  %v4340 = vpop.permute.xlu0 %4339
  %4341 = vrot.lane.b32.xlu0 %v2378, 120
  %v4342 = vpop.permute.xlu0 %4341
  %4343 = vrot.lane.b32.xlu0 %v2382, 120
  %v4344 = vpop.permute.xlu0 %4343
  %4345 = vrot.lane.b32.xlu0 %v2386, 120
  %v4346 = vpop.permute.xlu0 %4345
  %4347 = vrot.lane.b32.xlu0 %v2390, 120
  %v4348 = vpop.permute.xlu0 %4347
  %4349 = vrot.lane.b32.xlu0 %v2394, 120
  %v4350 = vpop.permute.xlu0 %4349
  %4351 = vrot.lane.b32.xlu0 %v2398, 120
  %v4352 = vpop.permute.xlu0 %4351
  %4353 = vrot.lane.b32.xlu0 %v2402, 120
  %v4354 = vpop.permute.xlu0 %4353
  %4355 = vrot.lane.b32.xlu0 %v2406, 120
  %v4356 = vpop.permute.xlu0 %4355
  %4357 = vrot.lane.b32.xlu0 %v2410, 120
  %v4358 = vpop.permute.xlu0 %4357
  %4359 = vrot.lane.b32.xlu0 %v2414, 120
  %v4360 = vpop.permute.xlu0 %4359
  %4361 = vrot.lane.b32.xlu0 %v2418, 120
  %v4362 = vpop.permute.xlu0 %4361
  %4363 = vrot.lane.b32.xlu0 %v2422, 120
  %v4364 = vpop.permute.xlu0 %4363
  %4365 = vrot.lane.b32.xlu0 %v2363, 120
  %v4366 = vpop.permute.xlu0 %4365
  %4367 = vrot.lane.b32.xlu0 %v2367, 120
  %v4368 = vpop.permute.xlu0 %4367
  %4369 = vrot.lane.b32.xlu0 %v2371, 120
  %v4370 = vpop.permute.xlu0 %4369
  %4371 = vrot.lane.b32.xlu0 %v2375, 120
  %v4372 = vpop.permute.xlu0 %4371
  %4373 = vrot.lane.b32.xlu0 %v2379, 120
  %v4374 = vpop.permute.xlu0 %4373
  %4375 = vrot.lane.b32.xlu0 %v2383, 120
  %v4376 = vpop.permute.xlu0 %4375
  %4377 = vrot.lane.b32.xlu0 %v2387, 120
  %v4378 = vpop.permute.xlu0 %4377
  %4379 = vrot.lane.b32.xlu0 %v2391, 120
  %v4380 = vpop.permute.xlu0 %4379
  %4381 = vrot.lane.b32.xlu0 %v2395, 120
  %v4382 = vpop.permute.xlu0 %4381
  %4383 = vrot.lane.b32.xlu0 %v2399, 120
  %v4384 = vpop.permute.xlu0 %4383
  %4385 = vrot.lane.b32.xlu0 %v2403, 120
  %v4386 = vpop.permute.xlu0 %4385
  %4387 = vrot.lane.b32.xlu0 %v2407, 120
  %v4388 = vpop.permute.xlu0 %4387
  %4389 = vrot.lane.b32.xlu0 %v2411, 120
  %v4390 = vpop.permute.xlu0 %4389
  %4391 = vrot.lane.b32.xlu0 %v2415, 120
  %v4392 = vpop.permute.xlu0 %4391
  %4393 = vrot.lane.b32.xlu0 %v2419, 120
  %v4394 = vpop.permute.xlu0 %4393
  %4395 = vrot.lane.b32.xlu0 %v2423, 120
  %v4396 = vpop.permute.xlu0 %4395
  %4397 = vrot.lane.b32.xlu0 %v2364, 120
  %v4398 = vpop.permute.xlu0 %4397
  %4399 = vrot.lane.b32.xlu0 %v2368, 120
  %v4400 = vpop.permute.xlu0 %4399
  %4401 = vrot.lane.b32.xlu0 %v2372, 120
  %v4402 = vpop.permute.xlu0 %4401
  %4403 = vrot.lane.b32.xlu0 %v2376, 120
  %v4404 = vpop.permute.xlu0 %4403
  %4405 = vrot.lane.b32.xlu0 %v2380, 120
  %v4406 = vpop.permute.xlu0 %4405
  %4407 = vrot.lane.b32.xlu0 %v2384, 120
  %v4408 = vpop.permute.xlu0 %4407
  %4409 = vrot.lane.b32.xlu0 %v2388, 120
  %v4410 = vpop.permute.xlu0 %4409
  %4411 = vrot.lane.b32.xlu0 %v2392, 120
  %v4412 = vpop.permute.xlu0 %4411
  %4413 = vrot.lane.b32.xlu0 %v2396, 120
  %v4414 = vpop.permute.xlu0 %4413
  %4415 = vrot.lane.b32.xlu0 %v2400, 120
  %v4416 = vpop.permute.xlu0 %4415
  %4417 = vrot.lane.b32.xlu0 %v2404, 120
  %v4418 = vpop.permute.xlu0 %4417
  %4419 = vrot.lane.b32.xlu0 %v2408, 120
  %v4420 = vpop.permute.xlu0 %4419
  %4421 = vrot.lane.b32.xlu0 %v2412, 120
  %v4422 = vpop.permute.xlu0 %4421
  %4423 = vrot.lane.b32.xlu0 %v2416, 120
  %v4424 = vpop.permute.xlu0 %4423
  %4425 = vrot.lane.b32.xlu0 %v2420, 120
  %v4426 = vpop.permute.xlu0 %4425
  %4427 = vrot.lane.b32.xlu0 %v2424, 120
  %v4428 = vpop.permute.xlu0 %4427
  %vm4429 = vcmp.lt.s32.totalorder %v187, 120
  %v4430 = vsel %vm4429, %v4366, %v4398
  %v4431 = vsel %vm4429, %v4368, %v4400
  %v4432 = vsel %vm4429, %v4370, %v4402
  %v4433 = vsel %vm4429, %v4372, %v4404
  %v4434 = vsel %vm4429, %v4374, %v4406
  %v4435 = vsel %vm4429, %v4376, %v4408
  %v4436 = vsel %vm4429, %v4378, %v4410
  %v4437 = vsel %vm4429, %v4380, %v4412
  %v4438 = vsel %vm4429, %v4382, %v4414
  %v4439 = vsel %vm4429, %v4384, %v4416
  %v4440 = vsel %vm4429, %v4386, %v4418
  %v4441 = vsel %vm4429, %v4388, %v4420
  %v4442 = vsel %vm4429, %v4390, %v4422
  %v4443 = vsel %vm4429, %v4392, %v4424
  %v4444 = vsel %vm4429, %v4394, %v4426
  %v4445 = vsel %vm4429, %v4396, %v4428
  %v4446 = vsel %vm4429, %v4334, %v4366
  %v4447 = vsel %vm4429, %v4336, %v4368
  %v4448 = vsel %vm4429, %v4338, %v4370
  %v4449 = vsel %vm4429, %v4340, %v4372
  %v4450 = vsel %vm4429, %v4342, %v4374
  %v4451 = vsel %vm4429, %v4344, %v4376
  %v4452 = vsel %vm4429, %v4346, %v4378
  %v4453 = vsel %vm4429, %v4348, %v4380
  %v4454 = vsel %vm4429, %v4350, %v4382
  %v4455 = vsel %vm4429, %v4352, %v4384
  %v4456 = vsel %vm4429, %v4354, %v4386
  %v4457 = vsel %vm4429, %v4356, %v4388
  %v4458 = vsel %vm4429, %v4358, %v4390
  %v4459 = vsel %vm4429, %v4360, %v4392
  %v4460 = vsel %vm4429, %v4362, %v4394
  %v4461 = vsel %vm4429, %v4364, %v4396
  %v4462 = vsel %vm4429, %v4302, %v4334
  %v4463 = vsel %vm4429, %v4304, %v4336
  %v4464 = vsel %vm4429, %v4306, %v4338
  %v4465 = vsel %vm4429, %v4308, %v4340
  %v4466 = vsel %vm4429, %v4310, %v4342
  %v4467 = vsel %vm4429, %v4312, %v4344
  %v4468 = vsel %vm4429, %v4314, %v4346
  %v4469 = vsel %vm4429, %v4316, %v4348
  %v4470 = vsel %vm4429, %v4318, %v4350
  %v4471 = vsel %vm4429, %v4320, %v4352
  %v4472 = vsel %vm4429, %v4322, %v4354
  %v4473 = vsel %vm4429, %v4324, %v4356
  %v4474 = vsel %vm4429, %v4326, %v4358
  %v4475 = vsel %vm4429, %v4328, %v4360
  %v4476 = vsel %vm4429, %v4330, %v4362
  %v4477 = vsel %vm4429, %v4332, %v4364
  %v4478 = vsel %vm4429, %v4398, %v4302
  %v4479 = vsel %vm4429, %v4400, %v4304
  %v4480 = vsel %vm4429, %v4402, %v4306
  %v4481 = vsel %vm4429, %v4404, %v4308
  %v4482 = vsel %vm4429, %v4406, %v4310
  %v4483 = vsel %vm4429, %v4408, %v4312
  %v4484 = vsel %vm4429, %v4410, %v4314
  %v4485 = vsel %vm4429, %v4412, %v4316
  %v4486 = vsel %vm4429, %v4414, %v4318
  %v4487 = vsel %vm4429, %v4416, %v4320
  %v4488 = vsel %vm4429, %v4418, %v4322
  %v4489 = vsel %vm4429, %v4420, %v4324
  %v4490 = vsel %vm4429, %v4422, %v4326
  %v4491 = vsel %vm4429, %v4424, %v4328
  %v4492 = vsel %vm4429, %v4426, %v4330
  %v4493 = vsel %vm4429, %v4428, %v4332
  %s4494 = scalar_lea.vmem %s2, 256
  %v4495 = vld [vmem:[%s4494] sm:$0xf]
  %v4496 = vld [vmem:[%s4494 + $0x4] sm:$0xf]
  %v4497 = vld [vmem:[%s4494 + $0x8] sm:$0xf]
  %v4498 = vld [vmem:[%s4494 + $0xc] sm:$0xf]
  %v4499 = vld [vmem:[%s4494 + $0x10] sm:$0xf]
  %v4500 = vld [vmem:[%s4494 + $0x14] sm:$0xf]
  %v4501 = vld [vmem:[%s4494 + $0x18] sm:$0xf]
  %v4502 = vld [vmem:[%s4494 + $0x1c] sm:$0xf]
  %v4503 = vld [vmem:[%s4494 + $0x20] sm:$0xf]
  %v4504 = vld [vmem:[%s4494 + $0x24] sm:$0xf]
  %v4505 = vld [vmem:[%s4494 + $0x28] sm:$0xf]
  %v4506 = vld [vmem:[%s4494 + $0x2c] sm:$0xf]
  %v4507 = vld [vmem:[%s4494 + $0x30] sm:$0xf]
  %v4508 = vld [vmem:[%s4494 + $0x34] sm:$0xf]
  %v4509 = vld [vmem:[%s4494 + $0x38] sm:$0xf]
  %v4510 = vld [vmem:[%s4494 + $0x3c] sm:$0xf]
  %v4511 = vpack.c.bf16 %v4463, %v4462
  %v4512 = vpack.c.bf16 %v4447, %v4446
  %v4513 = vpack.c.bf16 %v4431, %v4430
  %v4514 = vpack.c.bf16 %v4479, %v4478
  %v4515 = vpack.c.bf16 %v4465, %v4464
  %v4516 = vpack.c.bf16 %v4449, %v4448
  %v4517 = vpack.c.bf16 %v4433, %v4432
  %v4518 = vpack.c.bf16 %v4481, %v4480
  %v4519 = vpack.c.bf16 %v4467, %v4466
  %v4520 = vpack.c.bf16 %v4451, %v4450
  %v4521 = vpack.c.bf16 %v4435, %v4434
  %v4522 = vpack.c.bf16 %v4483, %v4482
  %v4523 = vpack.c.bf16 %v4469, %v4468
  %v4524 = vpack.c.bf16 %v4453, %v4452
  %v4525 = vpack.c.bf16 %v4437, %v4436
  %v4526 = vpack.c.bf16 %v4485, %v4484
  %v4527 = vpack.c.bf16 %v4471, %v4470
  %v4528 = vpack.c.bf16 %v4455, %v4454
  %v4529 = vpack.c.bf16 %v4439, %v4438
  %v4530 = vpack.c.bf16 %v4487, %v4486
  %v4531 = vpack.c.bf16 %v4473, %v4472
  %v4532 = vpack.c.bf16 %v4457, %v4456
  %v4533 = vpack.c.bf16 %v4441, %v4440
  %v4534 = vpack.c.bf16 %v4489, %v4488
  %v4535 = vpack.c.bf16 %v4475, %v4474
  %v4536 = vpack.c.bf16 %v4459, %v4458
  %v4537 = vpack.c.bf16 %v4443, %v4442
  %v4538 = vpack.c.bf16 %v4491, %v4490
  %v4539 = vpack.c.bf16 %v4477, %v4476
  %v4540 = vpack.c.bf16 %v4461, %v4460
  %v4541 = vpack.c.bf16 %v4445, %v4444
  %v4542 = vpack.c.bf16 %v4493, %v4492
  %v4559 = vunpack.c.l.b16 %v4495
  %v4560 = vunpack.c.l.b16 %v4496
  %v4561 = vunpack.c.l.b16 %v4497
  %v4562 = vunpack.c.l.b16 %v4498
  %v4563 = vunpack.c.l.b16 %v4499
  %v4564 = vunpack.c.l.b16 %v4500
  %v4565 = vunpack.c.l.b16 %v4501
  %v4566 = vunpack.c.l.b16 %v4502
  %v4567 = vunpack.c.l.b16 %v4503
  %v4568 = vunpack.c.l.b16 %v4504
  %v4569 = vunpack.c.l.b16 %v4505
  %v4570 = vunpack.c.l.b16 %v4506
  %v4571 = vunpack.c.l.b16 %v4507
  %v4572 = vunpack.c.l.b16 %v4508
  %v4573 = vunpack.c.l.b16 %v4509
  %v4574 = vunpack.c.l.b16 %v4510
  %v4575 = vpack.c.b16 %v4560, %v4559
  %v4576 = vpack.c.b16 %v4562, %v4561
  %v4577 = vpack.c.b16 %v4564, %v4563
  %v4578 = vpack.c.b16 %v4566, %v4565
  %v4579 = vpack.c.b16 %v4568, %v4567
  %v4580 = vpack.c.b16 %v4570, %v4569
  %v4581 = vpack.c.b16 %v4572, %v4571
  %v4582 = vpack.c.b16 %v4574, %v4573
  %4591 = vmatpush.bf16.msra.mxu0 %v4539
  %4592 = vmatpush.bf16.msra.mxu0 %v4535
  %4593 = vmatpush.bf16.msra.mxu0 %v4531
  %4594 = vmatpush.bf16.msra.mxu0 %v4527
  %4595 = vmatpush.bf16.msra.mxu0 %v4523
  %4596 = vmatpush.bf16.msra.mxu0 %v4519
  %4597 = vmatpush.bf16.msra.mxu0 %v4515
  %4598 = vmatpush.bf16.msra.mxu0 %v4511
  %4599 = vmatmul.bf16.gmra.mxu0 %v4575
  %v4600 = vpop.f32.mrf.mxu0
  %v4601 = vadd.f32 0.0, %v4600
  %v4602 = vpop.f32.mrf.mxu0
  %v4603 = vadd.f32 0.0, %v4602
  %4604 = vmatmul.bf16.gmra.mxu0 %v4576
  %v4605 = vpop.f32.mrf.mxu0
  %v4606 = vadd.f32 0.0, %v4605
  %v4607 = vpop.f32.mrf.mxu0
  %v4608 = vadd.f32 0.0, %v4607
  %4609 = vmatmul.bf16.gmra.mxu0 %v4577
  %v4610 = vpop.f32.mrf.mxu0
  %v4611 = vadd.f32 0.0, %v4610
  %v4612 = vpop.f32.mrf.mxu0
  %v4613 = vadd.f32 0.0, %v4612
  %4614 = vmatmul.bf16.gmra.mxu0 %v4578
  %v4615 = vpop.f32.mrf.mxu0
  %v4616 = vadd.f32 0.0, %v4615
  %v4617 = vpop.f32.mrf.mxu0
  %v4618 = vadd.f32 0.0, %v4617
  %4619 = vmatmul.bf16.gmra.mxu0 %v4579
  %v4620 = vpop.f32.mrf.mxu0
  %v4621 = vadd.f32 0.0, %v4620
  %v4622 = vpop.f32.mrf.mxu0
  %v4623 = vadd.f32 0.0, %v4622
  %4624 = vmatmul.bf16.gmra.mxu0 %v4580
  %v4625 = vpop.f32.mrf.mxu0
  %v4626 = vadd.f32 0.0, %v4625
  %v4627 = vpop.f32.mrf.mxu0
  %v4628 = vadd.f32 0.0, %v4627
  %4629 = vmatmul.bf16.gmra.mxu0 %v4581
  %v4630 = vpop.f32.mrf.mxu0
  %v4631 = vadd.f32 0.0, %v4630
  %v4632 = vpop.f32.mrf.mxu0
  %v4633 = vadd.f32 0.0, %v4632
  %4634 = vmatmul.bf16.gmra.mxu0 %v4582
  %v4635 = vpop.f32.mrf.mxu0
  %v4636 = vadd.f32 0.0, %v4635
  %v4637 = vpop.f32.mrf.mxu0
  %v4638 = vadd.f32 0.0, %v4637
  %4639 = vdwg.mxu0
  %4640 = vmatpush.bf16.msra.mxu0 %v4540
  %4641 = vmatpush.bf16.msra.mxu0 %v4536
  %4642 = vmatpush.bf16.msra.mxu0 %v4532
  %4643 = vmatpush.bf16.msra.mxu0 %v4528
  %4644 = vmatpush.bf16.msra.mxu0 %v4524
  %4645 = vmatpush.bf16.msra.mxu0 %v4520
  %4646 = vmatpush.bf16.msra.mxu0 %v4516
  %4647 = vmatpush.bf16.msra.mxu0 %v4512
  %4648 = vmatmul.bf16.gmra.mxu0 %v4575
  %v4649 = vpop.f32.mrf.mxu0
  %v4650 = vadd.f32 0.0, %v4649
  %v4651 = vpop.f32.mrf.mxu0
  %v4652 = vadd.f32 0.0, %v4651
  %4653 = vmatmul.bf16.gmra.mxu0 %v4576
  %v4654 = vpop.f32.mrf.mxu0
  %v4655 = vadd.f32 0.0, %v4654
  %v4656 = vpop.f32.mrf.mxu0
  %v4657 = vadd.f32 0.0, %v4656
  %4658 = vmatmul.bf16.gmra.mxu0 %v4577
  %v4659 = vpop.f32.mrf.mxu0
  %v4660 = vadd.f32 0.0, %v4659
  %v4661 = vpop.f32.mrf.mxu0
  %v4662 = vadd.f32 0.0, %v4661
  %4663 = vmatmul.bf16.gmra.mxu0 %v4578
  %v4664 = vpop.f32.mrf.mxu0
  %v4665 = vadd.f32 0.0, %v4664
  %v4666 = vpop.f32.mrf.mxu0
  %v4667 = vadd.f32 0.0, %v4666
  %4668 = vmatmul.bf16.gmra.mxu0 %v4579
  %v4669 = vpop.f32.mrf.mxu0
  %v4670 = vadd.f32 0.0, %v4669
  %v4671 = vpop.f32.mrf.mxu0
  %v4672 = vadd.f32 0.0, %v4671
  %4673 = vmatmul.bf16.gmra.mxu0 %v4580
  %v4674 = vpop.f32.mrf.mxu0
  %v4675 = vadd.f32 0.0, %v4674
  %v4676 = vpop.f32.mrf.mxu0
  %v4677 = vadd.f32 0.0, %v4676
  %4678 = vmatmul.bf16.gmra.mxu0 %v4581
  %v4679 = vpop.f32.mrf.mxu0
  %v4680 = vadd.f32 0.0, %v4679
  %v4681 = vpop.f32.mrf.mxu0
  %v4682 = vadd.f32 0.0, %v4681
  %4683 = vmatmul.bf16.gmra.mxu0 %v4582
  %v4684 = vpop.f32.mrf.mxu0
  %v4685 = vadd.f32 0.0, %v4684
  %v4686 = vpop.f32.mrf.mxu0
  %v4687 = vadd.f32 0.0, %v4686
  %4688 = vdwg.mxu0
  %4689 = vmatpush.bf16.msra.mxu0 %v4541
  %4690 = vmatpush.bf16.msra.mxu0 %v4537
  %4691 = vmatpush.bf16.msra.mxu0 %v4533
  %4692 = vmatpush.bf16.msra.mxu0 %v4529
  %4693 = vmatpush.bf16.msra.mxu0 %v4525
  %4694 = vmatpush.bf16.msra.mxu0 %v4521
  %4695 = vmatpush.bf16.msra.mxu0 %v4517
  %4696 = vmatpush.bf16.msra.mxu0 %v4513
  %4697 = vmatmul.bf16.gmra.mxu0 %v4575
  %v4698 = vpop.f32.mrf.mxu0
  %v4699 = vadd.f32 0.0, %v4698
  %v4700 = vpop.f32.mrf.mxu0
  %v4701 = vadd.f32 0.0, %v4700
  %4702 = vmatmul.bf16.gmra.mxu0 %v4576
  %v4703 = vpop.f32.mrf.mxu0
  %v4704 = vadd.f32 0.0, %v4703
  %v4705 = vpop.f32.mrf.mxu0
  %v4706 = vadd.f32 0.0, %v4705
  %4707 = vmatmul.bf16.gmra.mxu0 %v4577
  %v4708 = vpop.f32.mrf.mxu0
  %v4709 = vadd.f32 0.0, %v4708
  %v4710 = vpop.f32.mrf.mxu0
  %v4711 = vadd.f32 0.0, %v4710
  %4712 = vmatmul.bf16.gmra.mxu0 %v4578
  %v4713 = vpop.f32.mrf.mxu0
  %v4714 = vadd.f32 0.0, %v4713
  %v4715 = vpop.f32.mrf.mxu0
  %v4716 = vadd.f32 0.0, %v4715
  %4717 = vmatmul.bf16.gmra.mxu0 %v4579
  %v4718 = vpop.f32.mrf.mxu0
  %v4719 = vadd.f32 0.0, %v4718
  %v4720 = vpop.f32.mrf.mxu0
  %v4721 = vadd.f32 0.0, %v4720
  %4722 = vmatmul.bf16.gmra.mxu0 %v4580
  %v4723 = vpop.f32.mrf.mxu0
  %v4724 = vadd.f32 0.0, %v4723
  %v4725 = vpop.f32.mrf.mxu0
  %v4726 = vadd.f32 0.0, %v4725
  %4727 = vmatmul.bf16.gmra.mxu0 %v4581
  %v4728 = vpop.f32.mrf.mxu0
  %v4729 = vadd.f32 0.0, %v4728
  %v4730 = vpop.f32.mrf.mxu0
  %v4731 = vadd.f32 0.0, %v4730
  %4732 = vmatmul.bf16.gmra.mxu0 %v4582
  %v4733 = vpop.f32.mrf.mxu0
  %v4734 = vadd.f32 0.0, %v4733
  %v4735 = vpop.f32.mrf.mxu0
  %v4736 = vadd.f32 0.0, %v4735
  %4737 = vdwg.mxu0
  %4738 = vmatpush.bf16.msra.mxu0 %v4542
  %4739 = vmatpush.bf16.msra.mxu0 %v4538
  %4740 = vmatpush.bf16.msra.mxu0 %v4534
  %4741 = vmatpush.bf16.msra.mxu0 %v4530
  %4742 = vmatpush.bf16.msra.mxu0 %v4526
  %4743 = vmatpush.bf16.msra.mxu0 %v4522
  %4744 = vmatpush.bf16.msra.mxu0 %v4518
  %4745 = vmatpush.bf16.msra.mxu0 %v4514
  %4746 = vmatmul.bf16.gmra.mxu0 %v4575
  %v4747 = vpop.f32.mrf.mxu0
  %v4748 = vadd.f32 0.0, %v4747
  %v4749 = vpop.f32.mrf.mxu0
  %v4750 = vadd.f32 0.0, %v4749
  %4751 = vmatmul.bf16.gmra.mxu0 %v4576
  %v4752 = vpop.f32.mrf.mxu0
  %v4753 = vadd.f32 0.0, %v4752
  %v4754 = vpop.f32.mrf.mxu0
  %v4755 = vadd.f32 0.0, %v4754
  %4756 = vmatmul.bf16.gmra.mxu0 %v4577
  %v4757 = vpop.f32.mrf.mxu0
  %v4758 = vadd.f32 0.0, %v4757
  %v4759 = vpop.f32.mrf.mxu0
  %v4760 = vadd.f32 0.0, %v4759
  %4761 = vmatmul.bf16.gmra.mxu0 %v4578
  %v4762 = vpop.f32.mrf.mxu0
  %v4763 = vadd.f32 0.0, %v4762
  %v4764 = vpop.f32.mrf.mxu0
  %v4765 = vadd.f32 0.0, %v4764
  %4766 = vmatmul.bf16.gmra.mxu0 %v4579
  %v4767 = vpop.f32.mrf.mxu0
  %v4768 = vadd.f32 0.0, %v4767
  %v4769 = vpop.f32.mrf.mxu0
  %v4770 = vadd.f32 0.0, %v4769
  %4771 = vmatmul.bf16.gmra.mxu0 %v4580
  %v4772 = vpop.f32.mrf.mxu0
  %v4773 = vadd.f32 0.0, %v4772
  %v4774 = vpop.f32.mrf.mxu0
  %v4775 = vadd.f32 0.0, %v4774
  %4776 = vmatmul.bf16.gmra.mxu0 %v4581
  %v4777 = vpop.f32.mrf.mxu0
  %v4778 = vadd.f32 0.0, %v4777
  %v4779 = vpop.f32.mrf.mxu0
  %v4780 = vadd.f32 0.0, %v4779
  %4781 = vmatmul.bf16.gmra.mxu0 %v4582
  %v4782 = vpop.f32.mrf.mxu0
  %v4783 = vadd.f32 0.0, %v4782
  %v4784 = vpop.f32.mrf.mxu0
  %v4785 = vadd.f32 0.0, %v4784
  %4786 = vdwg.mxu0
  %v4787 = vadd.f32 %v4237, %v4601
  %v4788 = vadd.f32 %v4238, %v4650
  %v4789 = vadd.f32 %v4239, %v4699
  %v4790 = vadd.f32 %v4240, %v4748
  %v4791 = vadd.f32 %v4241, %v4603
  %v4792 = vadd.f32 %v4242, %v4652
  %v4793 = vadd.f32 %v4243, %v4701
  %v4794 = vadd.f32 %v4244, %v4750
  %v4795 = vadd.f32 %v4245, %v4606
  %v4796 = vadd.f32 %v4246, %v4655
  %v4797 = vadd.f32 %v4247, %v4704
  %v4798 = vadd.f32 %v4248, %v4753
  %v4799 = vadd.f32 %v4249, %v4608
  %v4800 = vadd.f32 %v4250, %v4657
  %v4801 = vadd.f32 %v4251, %v4706
  %v4802 = vadd.f32 %v4252, %v4755
  %v4803 = vadd.f32 %v4253, %v4611
  %v4804 = vadd.f32 %v4254, %v4660
  %v4805 = vadd.f32 %v4255, %v4709
  %v4806 = vadd.f32 %v4256, %v4758
  %v4807 = vadd.f32 %v4257, %v4613
  %v4808 = vadd.f32 %v4258, %v4662
  %v4809 = vadd.f32 %v4259, %v4711
  %v4810 = vadd.f32 %v4260, %v4760
  %v4811 = vadd.f32 %v4261, %v4616
  %v4812 = vadd.f32 %v4262, %v4665
  %v4813 = vadd.f32 %v4263, %v4714
  %v4814 = vadd.f32 %v4264, %v4763
  %v4815 = vadd.f32 %v4265, %v4618
  %v4816 = vadd.f32 %v4266, %v4667
  %v4817 = vadd.f32 %v4267, %v4716
  %v4818 = vadd.f32 %v4268, %v4765
  %v4819 = vadd.f32 %v4269, %v4621
  %v4820 = vadd.f32 %v4270, %v4670
  %v4821 = vadd.f32 %v4271, %v4719
  %v4822 = vadd.f32 %v4272, %v4768
  %v4823 = vadd.f32 %v4273, %v4623
  %v4824 = vadd.f32 %v4274, %v4672
  %v4825 = vadd.f32 %v4275, %v4721
  %v4826 = vadd.f32 %v4276, %v4770
  %v4827 = vadd.f32 %v4277, %v4626
  %v4828 = vadd.f32 %v4278, %v4675
  %v4829 = vadd.f32 %v4279, %v4724
  %v4830 = vadd.f32 %v4280, %v4773
  %v4831 = vadd.f32 %v4281, %v4628
  %v4832 = vadd.f32 %v4282, %v4677
  %v4833 = vadd.f32 %v4283, %v4726
  %v4834 = vadd.f32 %v4284, %v4775
  %v4835 = vadd.f32 %v4285, %v4631
  %v4836 = vadd.f32 %v4286, %v4680
  %v4837 = vadd.f32 %v4287, %v4729
  %v4838 = vadd.f32 %v4288, %v4778
  %v4839 = vadd.f32 %v4289, %v4633
  %v4840 = vadd.f32 %v4290, %v4682
  %v4841 = vadd.f32 %v4291, %v4731
  %v4842 = vadd.f32 %v4292, %v4780
  %v4843 = vadd.f32 %v4293, %v4636
  %v4844 = vadd.f32 %v4294, %v4685
  %v4845 = vadd.f32 %v4295, %v4734
  %v4846 = vadd.f32 %v4296, %v4783
  %v4847 = vadd.f32 %v4297, %v4638
  %v4848 = vadd.f32 %v4298, %v4687
  %v4849 = vadd.f32 %v4299, %v4736
  %v4850 = vadd.f32 %v4300, %v4785
  %4851 = vset.pattern.permute.xlu0 1
  %4852 = vperm.xlu0 %4851, %v42
  %v4853 = vpop.permute.xlu0 %4852
  %4855 = vset.pattern.permute.xlu0 1
  %4856 = vperm.xlu0 %4855, %v43
  %v4857 = vpop.permute.xlu0 %4856
  %4859 = vset.pattern.permute.xlu0 1
  %4860 = vperm.xlu0 %4859, %v44
  %v4861 = vpop.permute.xlu0 %4860
  %4863 = vset.pattern.permute.xlu0 1
  %4864 = vperm.xlu0 %4863, %v45
  %v4865 = vpop.permute.xlu0 %4864
  %4867 = vset.pattern.permute.xlu0 1
  %4868 = vperm.xlu0 %4867, %v46
  %v4869 = vpop.permute.xlu0 %4868
  %4871 = vset.pattern.permute.xlu0 1
  %4872 = vperm.xlu0 %4871, %v47
  %v4873 = vpop.permute.xlu0 %4872
  %4875 = vset.pattern.permute.xlu0 1
  %4876 = vperm.xlu0 %4875, %v48
  %v4877 = vpop.permute.xlu0 %4876
  %4879 = vset.pattern.permute.xlu0 1
  %4880 = vperm.xlu0 %4879, %v49
  %v4881 = vpop.permute.xlu0 %4880
  %4883 = vset.pattern.permute.xlu0 1
  %4884 = vperm.xlu0 %4883, %v50
  %v4885 = vpop.permute.xlu0 %4884
  %4887 = vset.pattern.permute.xlu0 1
  %4888 = vperm.xlu0 %4887, %v51
  %v4889 = vpop.permute.xlu0 %4888
  %4891 = vset.pattern.permute.xlu0 1
  %4892 = vperm.xlu0 %4891, %v52
  %v4893 = vpop.permute.xlu0 %4892
  %4895 = vset.pattern.permute.xlu0 1
  %4896 = vperm.xlu0 %4895, %v53
  %v4897 = vpop.permute.xlu0 %4896
  %4899 = vset.pattern.permute.xlu0 1
  %4900 = vperm.xlu0 %4899, %v54
  %v4901 = vpop.permute.xlu0 %4900
  %4903 = vset.pattern.permute.xlu0 1
  %4904 = vperm.xlu0 %4903, %v55
  %v4905 = vpop.permute.xlu0 %4904
  %4907 = vset.pattern.permute.xlu0 1
  %4908 = vperm.xlu0 %4907, %v56
  %v4909 = vpop.permute.xlu0 %4908
  %4911 = vset.pattern.permute.xlu0 1
  %4912 = vperm.xlu0 %4911, %v57
  %v4913 = vpop.permute.xlu0 %4912
  %v4915 = vadd.f32 %v4787, %v4853
  %v4916 = vadd.f32 %v4788, %v4853
  %v4917 = vadd.f32 %v4789, %v4853
  %v4918 = vadd.f32 %v4790, %v4853
  %v4919 = vadd.f32 %v4791, %v4857
  %v4920 = vadd.f32 %v4792, %v4857
  %v4921 = vadd.f32 %v4793, %v4857
  %v4922 = vadd.f32 %v4794, %v4857
  %v4923 = vadd.f32 %v4795, %v4861
  %v4924 = vadd.f32 %v4796, %v4861
  %v4925 = vadd.f32 %v4797, %v4861
  %v4926 = vadd.f32 %v4798, %v4861
  %v4927 = vadd.f32 %v4799, %v4865
  %v4928 = vadd.f32 %v4800, %v4865
  %v4929 = vadd.f32 %v4801, %v4865
  %v4930 = vadd.f32 %v4802, %v4865
  %v4931 = vadd.f32 %v4803, %v4869
  %v4932 = vadd.f32 %v4804, %v4869
  %v4933 = vadd.f32 %v4805, %v4869
  %v4934 = vadd.f32 %v4806, %v4869
  %v4935 = vadd.f32 %v4807, %v4873
  %v4936 = vadd.f32 %v4808, %v4873
  %v4937 = vadd.f32 %v4809, %v4873
  %v4938 = vadd.f32 %v4810, %v4873
  %v4939 = vadd.f32 %v4811, %v4877
  %v4940 = vadd.f32 %v4812, %v4877
  %v4941 = vadd.f32 %v4813, %v4877
  %v4942 = vadd.f32 %v4814, %v4877
  %v4943 = vadd.f32 %v4815, %v4881
  %v4944 = vadd.f32 %v4816, %v4881
  %v4945 = vadd.f32 %v4817, %v4881
  %v4946 = vadd.f32 %v4818, %v4881
  %v4947 = vadd.f32 %v4819, %v4885
  %v4948 = vadd.f32 %v4820, %v4885
  %v4949 = vadd.f32 %v4821, %v4885
  %v4950 = vadd.f32 %v4822, %v4885
  %v4951 = vadd.f32 %v4823, %v4889
  %v4952 = vadd.f32 %v4824, %v4889
  %v4953 = vadd.f32 %v4825, %v4889
  %v4954 = vadd.f32 %v4826, %v4889
  %v4955 = vadd.f32 %v4827, %v4893
  %v4956 = vadd.f32 %v4828, %v4893
  %v4957 = vadd.f32 %v4829, %v4893
  %v4958 = vadd.f32 %v4830, %v4893
  %v4959 = vadd.f32 %v4831, %v4897
  %v4960 = vadd.f32 %v4832, %v4897
  %v4961 = vadd.f32 %v4833, %v4897
  %v4962 = vadd.f32 %v4834, %v4897
  %v4963 = vadd.f32 %v4835, %v4901
  %v4964 = vadd.f32 %v4836, %v4901
  %v4965 = vadd.f32 %v4837, %v4901
  %v4966 = vadd.f32 %v4838, %v4901
  %v4967 = vadd.f32 %v4839, %v4905
  %v4968 = vadd.f32 %v4840, %v4905
  %v4969 = vadd.f32 %v4841, %v4905
  %v4970 = vadd.f32 %v4842, %v4905
  %v4971 = vadd.f32 %v4843, %v4909
  %v4972 = vadd.f32 %v4844, %v4909
  %v4973 = vadd.f32 %v4845, %v4909
  %v4974 = vadd.f32 %v4846, %v4909
  %v4975 = vadd.f32 %v4847, %v4913
  %v4976 = vadd.f32 %v4848, %v4913
  %v4977 = vadd.f32 %v4849, %v4913
  %v4978 = vadd.f32 %v4850, %v4913
  %v4979 = vmax.f32 %v4915, 0.0
  %v4980 = vmax.f32 %v4916, 0.0
  %v4981 = vmax.f32 %v4917, 0.0
  %v4982 = vmax.f32 %v4918, 0.0
  %v4983 = vmax.f32 %v4919, 0.0
  %v4984 = vmax.f32 %v4920, 0.0
  %v4985 = vmax.f32 %v4921, 0.0
  %v4986 = vmax.f32 %v4922, 0.0
  %v4987 = vmax.f32 %v4923, 0.0
  %v4988 = vmax.f32 %v4924, 0.0
  %v4989 = vmax.f32 %v4925, 0.0
  %v4990 = vmax.f32 %v4926, 0.0
  %v4991 = vmax.f32 %v4927, 0.0
  %v4992 = vmax.f32 %v4928, 0.0
  %v4993 = vmax.f32 %v4929, 0.0
  %v4994 = vmax.f32 %v4930, 0.0
  %v4995 = vmax.f32 %v4931, 0.0
  %v4996 = vmax.f32 %v4932, 0.0
  %v4997 = vmax.f32 %v4933, 0.0
  %v4998 = vmax.f32 %v4934, 0.0
  %v4999 = vmax.f32 %v4935, 0.0
  %v5000 = vmax.f32 %v4936, 0.0
  %v5001 = vmax.f32 %v4937, 0.0
  %v5002 = vmax.f32 %v4938, 0.0
  %v5003 = vmax.f32 %v4939, 0.0
  %v5004 = vmax.f32 %v4940, 0.0
  %v5005 = vmax.f32 %v4941, 0.0
  %v5006 = vmax.f32 %v4942, 0.0
  %v5007 = vmax.f32 %v4943, 0.0
  %v5008 = vmax.f32 %v4944, 0.0
  %v5009 = vmax.f32 %v4945, 0.0
  %v5010 = vmax.f32 %v4946, 0.0
  %v5011 = vmax.f32 %v4947, 0.0
  %v5012 = vmax.f32 %v4948, 0.0
  %v5013 = vmax.f32 %v4949, 0.0
  %v5014 = vmax.f32 %v4950, 0.0
  %v5015 = vmax.f32 %v4951, 0.0
  %v5016 = vmax.f32 %v4952, 0.0
  %v5017 = vmax.f32 %v4953, 0.0
  %v5018 = vmax.f32 %v4954, 0.0
  %v5019 = vmax.f32 %v4955, 0.0
  %v5020 = vmax.f32 %v4956, 0.0
  %v5021 = vmax.f32 %v4957, 0.0
  %v5022 = vmax.f32 %v4958, 0.0
  %v5023 = vmax.f32 %v4959, 0.0
  %v5024 = vmax.f32 %v4960, 0.0
  %v5025 = vmax.f32 %v4961, 0.0
  %v5026 = vmax.f32 %v4962, 0.0
  %v5027 = vmax.f32 %v4963, 0.0
  %v5028 = vmax.f32 %v4964, 0.0
  %v5029 = vmax.f32 %v4965, 0.0
  %v5030 = vmax.f32 %v4966, 0.0
  %v5031 = vmax.f32 %v4967, 0.0
  %v5032 = vmax.f32 %v4968, 0.0
  %v5033 = vmax.f32 %v4969, 0.0
  %v5034 = vmax.f32 %v4970, 0.0
  %v5035 = vmax.f32 %v4971, 0.0
  %v5036 = vmax.f32 %v4972, 0.0
  %v5037 = vmax.f32 %v4973, 0.0
  %v5038 = vmax.f32 %v4974, 0.0
  %v5039 = vmax.f32 %v4975, 0.0
  %v5040 = vmax.f32 %v4976, 0.0
  %v5041 = vmax.f32 %v4977, 0.0
  %v5042 = vmax.f32 %v4978, 0.0
  %v5043 = vld [vmem:[%s3] sm:$0xf]
  %v5044 = vld [vmem:[%s3 + $0x4] sm:$0xf]
  %v5045 = vld [vmem:[%s3 + $0x8] sm:$0xf]
  %v5046 = vld [vmem:[%s3 + $0xc] sm:$0xf]
  %v5047 = vld [vmem:[%s3 + $0x10] sm:$0xf]
  %v5048 = vld [vmem:[%s3 + $0x14] sm:$0xf]
  %v5049 = vld [vmem:[%s3 + $0x18] sm:$0xf]
  %v5050 = vld [vmem:[%s3 + $0x1c] sm:$0xf]
  %v5051 = vld [vmem:[%s3 + $0x20] sm:$0xf]
  %v5052 = vld [vmem:[%s3 + $0x24] sm:$0xf]
  %v5053 = vld [vmem:[%s3 + $0x28] sm:$0xf]
  %v5054 = vld [vmem:[%s3 + $0x2c] sm:$0xf]
  %v5055 = vld [vmem:[%s3 + $0x30] sm:$0xf]
  %v5056 = vld [vmem:[%s3 + $0x34] sm:$0xf]
  %v5057 = vld [vmem:[%s3 + $0x38] sm:$0xf]
  %v5058 = vld [vmem:[%s3 + $0x3c] sm:$0xf]
  %v5059 = vpack.c.bf16 %v4983, %v4979
  %v5060 = vpack.c.bf16 %v4984, %v4980
  %v5061 = vpack.c.bf16 %v4985, %v4981
  %v5062 = vpack.c.bf16 %v4986, %v4982
  %v5063 = vpack.c.bf16 %v4991, %v4987
  %v5064 = vpack.c.bf16 %v4992, %v4988
  %v5065 = vpack.c.bf16 %v4993, %v4989
  %v5066 = vpack.c.bf16 %v4994, %v4990
  %v5067 = vpack.c.bf16 %v4999, %v4995
  %v5068 = vpack.c.bf16 %v5000, %v4996
  %v5069 = vpack.c.bf16 %v5001, %v4997
  %v5070 = vpack.c.bf16 %v5002, %v4998
  %v5071 = vpack.c.bf16 %v5007, %v5003
  %v5072 = vpack.c.bf16 %v5008, %v5004
  %v5073 = vpack.c.bf16 %v5009, %v5005
  %v5074 = vpack.c.bf16 %v5010, %v5006
  %v5075 = vpack.c.bf16 %v5015, %v5011
  %v5076 = vpack.c.bf16 %v5016, %v5012
  %v5077 = vpack.c.bf16 %v5017, %v5013
  %v5078 = vpack.c.bf16 %v5018, %v5014
  %v5079 = vpack.c.bf16 %v5023, %v5019
  %v5080 = vpack.c.bf16 %v5024, %v5020
  %v5081 = vpack.c.bf16 %v5025, %v5021
  %v5082 = vpack.c.bf16 %v5026, %v5022
  %v5083 = vpack.c.bf16 %v5031, %v5027
  %v5084 = vpack.c.bf16 %v5032, %v5028
  %v5085 = vpack.c.bf16 %v5033, %v5029
  %v5086 = vpack.c.bf16 %v5034, %v5030
  %v5087 = vpack.c.bf16 %v5039, %v5035
  %v5088 = vpack.c.bf16 %v5040, %v5036
  %v5089 = vpack.c.bf16 %v5041, %v5037
  %v5090 = vpack.c.bf16 %v5042, %v5038
  %5091 = vrot.lane.b32.xlu0 %v4979, 125
  %v5092 = vpop.permute.xlu0 %5091
  %5093 = vrot.lane.b32.xlu0 %v4983, 125
  %v5094 = vpop.permute.xlu0 %5093
  %5095 = vrot.lane.b32.xlu0 %v4987, 125
  %v5096 = vpop.permute.xlu0 %5095
  %5097 = vrot.lane.b32.xlu0 %v4991, 125
  %v5098 = vpop.permute.xlu0 %5097
  %5099 = vrot.lane.b32.xlu0 %v4995, 125
  %v5100 = vpop.permute.xlu0 %5099
  %5101 = vrot.lane.b32.xlu0 %v4999, 125
  %v5102 = vpop.permute.xlu0 %5101
  %5103 = vrot.lane.b32.xlu0 %v5003, 125
  %v5104 = vpop.permute.xlu0 %5103
  %5105 = vrot.lane.b32.xlu0 %v5007, 125
  %v5106 = vpop.permute.xlu0 %5105
  %5107 = vrot.lane.b32.xlu0 %v5011, 125
  %v5108 = vpop.permute.xlu0 %5107
  %5109 = vrot.lane.b32.xlu0 %v5015, 125
  %v5110 = vpop.permute.xlu0 %5109
  %5111 = vrot.lane.b32.xlu0 %v5019, 125
  %v5112 = vpop.permute.xlu0 %5111
  %5113 = vrot.lane.b32.xlu0 %v5023, 125
  %v5114 = vpop.permute.xlu0 %5113
  %5115 = vrot.lane.b32.xlu0 %v5027, 125
  %v5116 = vpop.permute.xlu0 %5115
  %5117 = vrot.lane.b32.xlu0 %v5031, 125
  %v5118 = vpop.permute.xlu0 %5117
  %5119 = vrot.lane.b32.xlu0 %v5035, 125
  %v5120 = vpop.permute.xlu0 %5119
  %5121 = vrot.lane.b32.xlu0 %v5039, 125
  %v5122 = vpop.permute.xlu0 %5121
  %5123 = vrot.lane.b32.xlu0 %v4980, 125
  %v5124 = vpop.permute.xlu0 %5123
  %5125 = vrot.lane.b32.xlu0 %v4984, 125
  %v5126 = vpop.permute.xlu0 %5125
  %5127 = vrot.lane.b32.xlu0 %v4988, 125
  %v5128 = vpop.permute.xlu0 %5127
  %5129 = vrot.lane.b32.xlu0 %v4992, 125
  %v5130 = vpop.permute.xlu0 %5129
  %5131 = vrot.lane.b32.xlu0 %v4996, 125
  %v5132 = vpop.permute.xlu0 %5131
  %5133 = vrot.lane.b32.xlu0 %v5000, 125
  %v5134 = vpop.permute.xlu0 %5133
  %5135 = vrot.lane.b32.xlu0 %v5004, 125
  %v5136 = vpop.permute.xlu0 %5135
  %5137 = vrot.lane.b32.xlu0 %v5008, 125
  %v5138 = vpop.permute.xlu0 %5137
  %5139 = vrot.lane.b32.xlu0 %v5012, 125
  %v5140 = vpop.permute.xlu0 %5139
  %5141 = vrot.lane.b32.xlu0 %v5016, 125
  %v5142 = vpop.permute.xlu0 %5141
  %5143 = vrot.lane.b32.xlu0 %v5020, 125
  %v5144 = vpop.permute.xlu0 %5143
  %5145 = vrot.lane.b32.xlu0 %v5024, 125
  %v5146 = vpop.permute.xlu0 %5145
  %5147 = vrot.lane.b32.xlu0 %v5028, 125
  %v5148 = vpop.permute.xlu0 %5147
  %5149 = vrot.lane.b32.xlu0 %v5032, 125
  %v5150 = vpop.permute.xlu0 %5149
  %5151 = vrot.lane.b32.xlu0 %v5036, 125
  %v5152 = vpop.permute.xlu0 %5151
  %5153 = vrot.lane.b32.xlu0 %v5040, 125
  %v5154 = vpop.permute.xlu0 %5153
  %5155 = vrot.lane.b32.xlu0 %v4981, 125
  %v5156 = vpop.permute.xlu0 %5155
  %5157 = vrot.lane.b32.xlu0 %v4985, 125
  %v5158 = vpop.permute.xlu0 %5157
  %5159 = vrot.lane.b32.xlu0 %v4989, 125
  %v5160 = vpop.permute.xlu0 %5159
  %5161 = vrot.lane.b32.xlu0 %v4993, 125
  %v5162 = vpop.permute.xlu0 %5161
  %5163 = vrot.lane.b32.xlu0 %v4997, 125
  %v5164 = vpop.permute.xlu0 %5163
  %5165 = vrot.lane.b32.xlu0 %v5001, 125
  %v5166 = vpop.permute.xlu0 %5165
  %5167 = vrot.lane.b32.xlu0 %v5005, 125
  %v5168 = vpop.permute.xlu0 %5167
  %5169 = vrot.lane.b32.xlu0 %v5009, 125
  %v5170 = vpop.permute.xlu0 %5169
  %5171 = vrot.lane.b32.xlu0 %v5013, 125
  %v5172 = vpop.permute.xlu0 %5171
  %5173 = vrot.lane.b32.xlu0 %v5017, 125
  %v5174 = vpop.permute.xlu0 %5173
  %5175 = vrot.lane.b32.xlu0 %v5021, 125
  %v5176 = vpop.permute.xlu0 %5175
  %5177 = vrot.lane.b32.xlu0 %v5025, 125
  %v5178 = vpop.permute.xlu0 %5177
  %5179 = vrot.lane.b32.xlu0 %v5029, 125
  %v5180 = vpop.permute.xlu0 %5179
  %5181 = vrot.lane.b32.xlu0 %v5033, 125
  %v5182 = vpop.permute.xlu0 %5181
  %5183 = vrot.lane.b32.xlu0 %v5037, 125
  %v5184 = vpop.permute.xlu0 %5183
  %5185 = vrot.lane.b32.xlu0 %v5041, 125
  %v5186 = vpop.permute.xlu0 %5185
  %5187 = vrot.lane.b32.xlu0 %v4982, 125
  %v5188 = vpop.permute.xlu0 %5187
  %5189 = vrot.lane.b32.xlu0 %v4986, 125
  %v5190 = vpop.permute.xlu0 %5189
  %5191 = vrot.lane.b32.xlu0 %v4990, 125
  %v5192 = vpop.permute.xlu0 %5191
  %5193 = vrot.lane.b32.xlu0 %v4994, 125
  %v5194 = vpop.permute.xlu0 %5193
  %5195 = vrot.lane.b32.xlu0 %v4998, 125
  %v5196 = vpop.permute.xlu0 %5195
  %5197 = vrot.lane.b32.xlu0 %v5002, 125
  %v5198 = vpop.permute.xlu0 %5197
  %5199 = vrot.lane.b32.xlu0 %v5006, 125
  %v5200 = vpop.permute.xlu0 %5199
  %5201 = vrot.lane.b32.xlu0 %v5010, 125
  %v5202 = vpop.permute.xlu0 %5201
  %5203 = vrot.lane.b32.xlu0 %v5014, 125
  %v5204 = vpop.permute.xlu0 %5203
  %5205 = vrot.lane.b32.xlu0 %v5018, 125
  %v5206 = vpop.permute.xlu0 %5205
  %5207 = vrot.lane.b32.xlu0 %v5022, 125
  %v5208 = vpop.permute.xlu0 %5207
  %5209 = vrot.lane.b32.xlu0 %v5026, 125
  %v5210 = vpop.permute.xlu0 %5209
  %5211 = vrot.lane.b32.xlu0 %v5030, 125
  %v5212 = vpop.permute.xlu0 %5211
  %5213 = vrot.lane.b32.xlu0 %v5034, 125
  %v5214 = vpop.permute.xlu0 %5213
  %5215 = vrot.lane.b32.xlu0 %v5038, 125
  %v5216 = vpop.permute.xlu0 %5215
  %5217 = vrot.lane.b32.xlu0 %v5042, 125
  %v5218 = vpop.permute.xlu0 %5217
  %v5219 = vsel %vm1373, %v5156, %v5188
  %v5220 = vsel %vm1373, %v5158, %v5190
  %v5221 = vsel %vm1373, %v5160, %v5192
  %v5222 = vsel %vm1373, %v5162, %v5194
  %v5223 = vsel %vm1373, %v5164, %v5196
  %v5224 = vsel %vm1373, %v5166, %v5198
  %v5225 = vsel %vm1373, %v5168, %v5200
  %v5226 = vsel %vm1373, %v5170, %v5202
  %v5227 = vsel %vm1373, %v5172, %v5204
  %v5228 = vsel %vm1373, %v5174, %v5206
  %v5229 = vsel %vm1373, %v5176, %v5208
  %v5230 = vsel %vm1373, %v5178, %v5210
  %v5231 = vsel %vm1373, %v5180, %v5212
  %v5232 = vsel %vm1373, %v5182, %v5214
  %v5233 = vsel %vm1373, %v5184, %v5216
  %v5234 = vsel %vm1373, %v5186, %v5218
  %v5235 = vsel %vm1373, %v5124, %v5156
  %v5236 = vsel %vm1373, %v5126, %v5158
  %v5237 = vsel %vm1373, %v5128, %v5160
  %v5238 = vsel %vm1373, %v5130, %v5162
  %v5239 = vsel %vm1373, %v5132, %v5164
  %v5240 = vsel %vm1373, %v5134, %v5166
  %v5241 = vsel %vm1373, %v5136, %v5168
  %v5242 = vsel %vm1373, %v5138, %v5170
  %v5243 = vsel %vm1373, %v5140, %v5172
  %v5244 = vsel %vm1373, %v5142, %v5174
  %v5245 = vsel %vm1373, %v5144, %v5176
  %v5246 = vsel %vm1373, %v5146, %v5178
  %v5247 = vsel %vm1373, %v5148, %v5180
  %v5248 = vsel %vm1373, %v5150, %v5182
  %v5249 = vsel %vm1373, %v5152, %v5184
  %v5250 = vsel %vm1373, %v5154, %v5186
  %v5251 = vsel %vm1373, %v5092, %v5124
  %v5252 = vsel %vm1373, %v5094, %v5126
  %v5253 = vsel %vm1373, %v5096, %v5128
  %v5254 = vsel %vm1373, %v5098, %v5130
  %v5255 = vsel %vm1373, %v5100, %v5132
  %v5256 = vsel %vm1373, %v5102, %v5134
  %v5257 = vsel %vm1373, %v5104, %v5136
  %v5258 = vsel %vm1373, %v5106, %v5138
  %v5259 = vsel %vm1373, %v5108, %v5140
  %v5260 = vsel %vm1373, %v5110, %v5142
  %v5261 = vsel %vm1373, %v5112, %v5144
  %v5262 = vsel %vm1373, %v5114, %v5146
  %v5263 = vsel %vm1373, %v5116, %v5148
  %v5264 = vsel %vm1373, %v5118, %v5150
  %v5265 = vsel %vm1373, %v5120, %v5152
  %v5266 = vsel %vm1373, %v5122, %v5154
  %v5267 = vsel %vm1373, %v5188, %v5092
  %v5268 = vsel %vm1373, %v5190, %v5094
  %v5269 = vsel %vm1373, %v5192, %v5096
  %v5270 = vsel %vm1373, %v5194, %v5098
  %v5271 = vsel %vm1373, %v5196, %v5100
  %v5272 = vsel %vm1373, %v5198, %v5102
  %v5273 = vsel %vm1373, %v5200, %v5104
  %v5274 = vsel %vm1373, %v5202, %v5106
  %v5275 = vsel %vm1373, %v5204, %v5108
  %v5276 = vsel %vm1373, %v5206, %v5110
  %v5277 = vsel %vm1373, %v5208, %v5112
  %v5278 = vsel %vm1373, %v5210, %v5114
  %v5279 = vsel %vm1373, %v5212, %v5116
  %v5280 = vsel %vm1373, %v5214, %v5118
  %v5281 = vsel %vm1373, %v5216, %v5120
  %v5282 = vsel %vm1373, %v5218, %v5122
  %s5283 = scalar_lea.vmem %s3, 64
  %v5284 = vld [vmem:[%s5283] sm:$0xf]
  %v5285 = vld [vmem:[%s5283 + $0x4] sm:$0xf]
  %v5286 = vld [vmem:[%s5283 + $0x8] sm:$0xf]
  %v5287 = vld [vmem:[%s5283 + $0xc] sm:$0xf]
  %v5288 = vld [vmem:[%s5283 + $0x10] sm:$0xf]
  %v5289 = vld [vmem:[%s5283 + $0x14] sm:$0xf]
  %v5290 = vld [vmem:[%s5283 + $0x18] sm:$0xf]
  %v5291 = vld [vmem:[%s5283 + $0x1c] sm:$0xf]
  %v5292 = vld [vmem:[%s5283 + $0x20] sm:$0xf]
  %v5293 = vld [vmem:[%s5283 + $0x24] sm:$0xf]
  %v5294 = vld [vmem:[%s5283 + $0x28] sm:$0xf]
  %v5295 = vld [vmem:[%s5283 + $0x2c] sm:$0xf]
  %v5296 = vld [vmem:[%s5283 + $0x30] sm:$0xf]
  %v5297 = vld [vmem:[%s5283 + $0x34] sm:$0xf]
  %v5298 = vld [vmem:[%s5283 + $0x38] sm:$0xf]
  %v5299 = vld [vmem:[%s5283 + $0x3c] sm:$0xf]
  %v5300 = vpack.c.bf16 %v5252, %v5251
  %v5301 = vpack.c.bf16 %v5236, %v5235
  %v5302 = vpack.c.bf16 %v5220, %v5219
  %v5303 = vpack.c.bf16 %v5268, %v5267
  %v5304 = vpack.c.bf16 %v5254, %v5253
  %v5305 = vpack.c.bf16 %v5238, %v5237
  %v5306 = vpack.c.bf16 %v5222, %v5221
  %v5307 = vpack.c.bf16 %v5270, %v5269
  %v5308 = vpack.c.bf16 %v5256, %v5255
  %v5309 = vpack.c.bf16 %v5240, %v5239
  %v5310 = vpack.c.bf16 %v5224, %v5223
  %v5311 = vpack.c.bf16 %v5272, %v5271
  %v5312 = vpack.c.bf16 %v5258, %v5257
  %v5313 = vpack.c.bf16 %v5242, %v5241
  %v5314 = vpack.c.bf16 %v5226, %v5225
  %v5315 = vpack.c.bf16 %v5274, %v5273
  %v5316 = vpack.c.bf16 %v5260, %v5259
  %v5317 = vpack.c.bf16 %v5244, %v5243
  %v5318 = vpack.c.bf16 %v5228, %v5227
  %v5319 = vpack.c.bf16 %v5276, %v5275
  %v5320 = vpack.c.bf16 %v5262, %v5261
  %v5321 = vpack.c.bf16 %v5246, %v5245
  %v5322 = vpack.c.bf16 %v5230, %v5229
  %v5323 = vpack.c.bf16 %v5278, %v5277
  %v5324 = vpack.c.bf16 %v5264, %v5263
  %v5325 = vpack.c.bf16 %v5248, %v5247
  %v5326 = vpack.c.bf16 %v5232, %v5231
  %v5327 = vpack.c.bf16 %v5280, %v5279
  %v5328 = vpack.c.bf16 %v5266, %v5265
  %v5329 = vpack.c.bf16 %v5250, %v5249
  %v5330 = vpack.c.bf16 %v5234, %v5233
  %v5331 = vpack.c.bf16 %v5282, %v5281
  %v5348 = vunpack.c.l.b16 %v5284
  %v5349 = vunpack.c.l.b16 %v5285
  %v5350 = vunpack.c.l.b16 %v5286
  %v5351 = vunpack.c.l.b16 %v5287
  %v5352 = vunpack.c.l.b16 %v5288
  %v5353 = vunpack.c.l.b16 %v5289
  %v5354 = vunpack.c.l.b16 %v5290
  %v5355 = vunpack.c.l.b16 %v5291
  %v5356 = vunpack.c.l.b16 %v5292
  %v5357 = vunpack.c.l.b16 %v5293
  %v5358 = vunpack.c.l.b16 %v5294
  %v5359 = vunpack.c.l.b16 %v5295
  %v5360 = vunpack.c.l.b16 %v5296
  %v5361 = vunpack.c.l.b16 %v5297
  %v5362 = vunpack.c.l.b16 %v5298
  %v5363 = vunpack.c.l.b16 %v5299
  %v5364 = vpack.c.b16 %v5349, %v5348
  %v5365 = vpack.c.b16 %v5351, %v5350
  %v5366 = vpack.c.b16 %v5353, %v5352
  %v5367 = vpack.c.b16 %v5355, %v5354
  %v5368 = vpack.c.b16 %v5357, %v5356
  %v5369 = vpack.c.b16 %v5359, %v5358
  %v5370 = vpack.c.b16 %v5361, %v5360
  %v5371 = vpack.c.b16 %v5363, %v5362
  %5380 = vmatpush.bf16.msra.mxu0 %v5328
  %5381 = vmatpush.bf16.msra.mxu0 %v5324
  %5382 = vmatpush.bf16.msra.mxu0 %v5320
  %5383 = vmatpush.bf16.msra.mxu0 %v5316
  %5384 = vmatpush.bf16.msra.mxu0 %v5312
  %5385 = vmatpush.bf16.msra.mxu0 %v5308
  %5386 = vmatpush.bf16.msra.mxu0 %v5304
  %5387 = vmatpush.bf16.msra.mxu0 %v5300
  %5388 = vmatmul.bf16.gmra.mxu0 %v5364
  %v5389 = vpop.f32.mrf.mxu0
  %v5390 = vadd.f32 0.0, %v5389
  %v5391 = vpop.f32.mrf.mxu0
  %v5392 = vadd.f32 0.0, %v5391
  %5393 = vmatmul.bf16.gmra.mxu0 %v5365
  %v5394 = vpop.f32.mrf.mxu0
  %v5395 = vadd.f32 0.0, %v5394
  %v5396 = vpop.f32.mrf.mxu0
  %v5397 = vadd.f32 0.0, %v5396
  %5398 = vmatmul.bf16.gmra.mxu0 %v5366
  %v5399 = vpop.f32.mrf.mxu0
  %v5400 = vadd.f32 0.0, %v5399
  %v5401 = vpop.f32.mrf.mxu0
  %v5402 = vadd.f32 0.0, %v5401
  %5403 = vmatmul.bf16.gmra.mxu0 %v5367
  %v5404 = vpop.f32.mrf.mxu0
  %v5405 = vadd.f32 0.0, %v5404
  %v5406 = vpop.f32.mrf.mxu0
  %v5407 = vadd.f32 0.0, %v5406
  %5408 = vmatmul.bf16.gmra.mxu0 %v5368
  %v5409 = vpop.f32.mrf.mxu0
  %v5410 = vadd.f32 0.0, %v5409
  %v5411 = vpop.f32.mrf.mxu0
  %v5412 = vadd.f32 0.0, %v5411
  %5413 = vmatmul.bf16.gmra.mxu0 %v5369
  %v5414 = vpop.f32.mrf.mxu0
  %v5415 = vadd.f32 0.0, %v5414
  %v5416 = vpop.f32.mrf.mxu0
  %v5417 = vadd.f32 0.0, %v5416
  %5418 = vmatmul.bf16.gmra.mxu0 %v5370
  %v5419 = vpop.f32.mrf.mxu0
  %v5420 = vadd.f32 0.0, %v5419
  %v5421 = vpop.f32.mrf.mxu0
  %v5422 = vadd.f32 0.0, %v5421
  %5423 = vmatmul.bf16.gmra.mxu0 %v5371
  %v5424 = vpop.f32.mrf.mxu0
  %v5425 = vadd.f32 0.0, %v5424
  %v5426 = vpop.f32.mrf.mxu0
  %v5427 = vadd.f32 0.0, %v5426
  %5428 = vdwg.mxu0
  %5429 = vmatpush.bf16.msra.mxu0 %v5329
  %5430 = vmatpush.bf16.msra.mxu0 %v5325
  %5431 = vmatpush.bf16.msra.mxu0 %v5321
  %5432 = vmatpush.bf16.msra.mxu0 %v5317
  %5433 = vmatpush.bf16.msra.mxu0 %v5313
  %5434 = vmatpush.bf16.msra.mxu0 %v5309
  %5435 = vmatpush.bf16.msra.mxu0 %v5305
  %5436 = vmatpush.bf16.msra.mxu0 %v5301
  %5437 = vmatmul.bf16.gmra.mxu0 %v5364
  %v5438 = vpop.f32.mrf.mxu0
  %v5439 = vadd.f32 0.0, %v5438
  %v5440 = vpop.f32.mrf.mxu0
  %v5441 = vadd.f32 0.0, %v5440
  %5442 = vmatmul.bf16.gmra.mxu0 %v5365
  %v5443 = vpop.f32.mrf.mxu0
  %v5444 = vadd.f32 0.0, %v5443
  %v5445 = vpop.f32.mrf.mxu0
  %v5446 = vadd.f32 0.0, %v5445
  %5447 = vmatmul.bf16.gmra.mxu0 %v5366
  %v5448 = vpop.f32.mrf.mxu0
  %v5449 = vadd.f32 0.0, %v5448
  %v5450 = vpop.f32.mrf.mxu0
  %v5451 = vadd.f32 0.0, %v5450
  %5452 = vmatmul.bf16.gmra.mxu0 %v5367
  %v5453 = vpop.f32.mrf.mxu0
  %v5454 = vadd.f32 0.0, %v5453
  %v5455 = vpop.f32.mrf.mxu0
  %v5456 = vadd.f32 0.0, %v5455
  %5457 = vmatmul.bf16.gmra.mxu0 %v5368
  %v5458 = vpop.f32.mrf.mxu0
  %v5459 = vadd.f32 0.0, %v5458
  %v5460 = vpop.f32.mrf.mxu0
  %v5461 = vadd.f32 0.0, %v5460
  %5462 = vmatmul.bf16.gmra.mxu0 %v5369
  %v5463 = vpop.f32.mrf.mxu0
  %v5464 = vadd.f32 0.0, %v5463
  %v5465 = vpop.f32.mrf.mxu0
  %v5466 = vadd.f32 0.0, %v5465
  %5467 = vmatmul.bf16.gmra.mxu0 %v5370
  %v5468 = vpop.f32.mrf.mxu0
  %v5469 = vadd.f32 0.0, %v5468
  %v5470 = vpop.f32.mrf.mxu0
  %v5471 = vadd.f32 0.0, %v5470
  %5472 = vmatmul.bf16.gmra.mxu0 %v5371
  %v5473 = vpop.f32.mrf.mxu0
  %v5474 = vadd.f32 0.0, %v5473
  %v5475 = vpop.f32.mrf.mxu0
  %v5476 = vadd.f32 0.0, %v5475
  %5477 = vdwg.mxu0
  %5478 = vmatpush.bf16.msra.mxu0 %v5330
  %5479 = vmatpush.bf16.msra.mxu0 %v5326
  %5480 = vmatpush.bf16.msra.mxu0 %v5322
  %5481 = vmatpush.bf16.msra.mxu0 %v5318
  %5482 = vmatpush.bf16.msra.mxu0 %v5314
  %5483 = vmatpush.bf16.msra.mxu0 %v5310
  %5484 = vmatpush.bf16.msra.mxu0 %v5306
  %5485 = vmatpush.bf16.msra.mxu0 %v5302
  %5486 = vmatmul.bf16.gmra.mxu0 %v5364
  %v5487 = vpop.f32.mrf.mxu0
  %v5488 = vadd.f32 0.0, %v5487
  %v5489 = vpop.f32.mrf.mxu0
  %v5490 = vadd.f32 0.0, %v5489
  %5491 = vmatmul.bf16.gmra.mxu0 %v5365
  %v5492 = vpop.f32.mrf.mxu0
  %v5493 = vadd.f32 0.0, %v5492
  %v5494 = vpop.f32.mrf.mxu0
  %v5495 = vadd.f32 0.0, %v5494
  %5496 = vmatmul.bf16.gmra.mxu0 %v5366
  %v5497 = vpop.f32.mrf.mxu0
  %v5498 = vadd.f32 0.0, %v5497
  %v5499 = vpop.f32.mrf.mxu0
  %v5500 = vadd.f32 0.0, %v5499
  %5501 = vmatmul.bf16.gmra.mxu0 %v5367
  %v5502 = vpop.f32.mrf.mxu0
  %v5503 = vadd.f32 0.0, %v5502
  %v5504 = vpop.f32.mrf.mxu0
  %v5505 = vadd.f32 0.0, %v5504
  %5506 = vmatmul.bf16.gmra.mxu0 %v5368
  %v5507 = vpop.f32.mrf.mxu0
  %v5508 = vadd.f32 0.0, %v5507
  %v5509 = vpop.f32.mrf.mxu0
  %v5510 = vadd.f32 0.0, %v5509
  %5511 = vmatmul.bf16.gmra.mxu0 %v5369
  %v5512 = vpop.f32.mrf.mxu0
  %v5513 = vadd.f32 0.0, %v5512
  %v5514 = vpop.f32.mrf.mxu0
  %v5515 = vadd.f32 0.0, %v5514
  %5516 = vmatmul.bf16.gmra.mxu0 %v5370
  %v5517 = vpop.f32.mrf.mxu0
  %v5518 = vadd.f32 0.0, %v5517
  %v5519 = vpop.f32.mrf.mxu0
  %v5520 = vadd.f32 0.0, %v5519
  %5521 = vmatmul.bf16.gmra.mxu0 %v5371
  %v5522 = vpop.f32.mrf.mxu0
  %v5523 = vadd.f32 0.0, %v5522
  %v5524 = vpop.f32.mrf.mxu0
  %v5525 = vadd.f32 0.0, %v5524
  %5526 = vdwg.mxu0
  %5527 = vmatpush.bf16.msra.mxu0 %v5331
  %5528 = vmatpush.bf16.msra.mxu0 %v5327
  %5529 = vmatpush.bf16.msra.mxu0 %v5323
  %5530 = vmatpush.bf16.msra.mxu0 %v5319
  %5531 = vmatpush.bf16.msra.mxu0 %v5315
  %5532 = vmatpush.bf16.msra.mxu0 %v5311
  %5533 = vmatpush.bf16.msra.mxu0 %v5307
  %5534 = vmatpush.bf16.msra.mxu0 %v5303
  %5535 = vmatmul.bf16.gmra.mxu0 %v5364
  %v5536 = vpop.f32.mrf.mxu0
  %v5537 = vadd.f32 0.0, %v5536
  %v5538 = vpop.f32.mrf.mxu0
  %v5539 = vadd.f32 0.0, %v5538
  %5540 = vmatmul.bf16.gmra.mxu0 %v5365
  %v5541 = vpop.f32.mrf.mxu0
  %v5542 = vadd.f32 0.0, %v5541
  %v5543 = vpop.f32.mrf.mxu0
  %v5544 = vadd.f32 0.0, %v5543
  %5545 = vmatmul.bf16.gmra.mxu0 %v5366
  %v5546 = vpop.f32.mrf.mxu0
  %v5547 = vadd.f32 0.0, %v5546
  %v5548 = vpop.f32.mrf.mxu0
  %v5549 = vadd.f32 0.0, %v5548
  %5550 = vmatmul.bf16.gmra.mxu0 %v5367
  %v5551 = vpop.f32.mrf.mxu0
  %v5552 = vadd.f32 0.0, %v5551
  %v5553 = vpop.f32.mrf.mxu0
  %v5554 = vadd.f32 0.0, %v5553
  %5555 = vmatmul.bf16.gmra.mxu0 %v5368
  %v5556 = vpop.f32.mrf.mxu0
  %v5557 = vadd.f32 0.0, %v5556
  %v5558 = vpop.f32.mrf.mxu0
  %v5559 = vadd.f32 0.0, %v5558
  %5560 = vmatmul.bf16.gmra.mxu0 %v5369
  %v5561 = vpop.f32.mrf.mxu0
  %v5562 = vadd.f32 0.0, %v5561
  %v5563 = vpop.f32.mrf.mxu0
  %v5564 = vadd.f32 0.0, %v5563
  %5565 = vmatmul.bf16.gmra.mxu0 %v5370
  %v5566 = vpop.f32.mrf.mxu0
  %v5567 = vadd.f32 0.0, %v5566
  %v5568 = vpop.f32.mrf.mxu0
  %v5569 = vadd.f32 0.0, %v5568
  %5570 = vmatmul.bf16.gmra.mxu0 %v5371
  %v5571 = vpop.f32.mrf.mxu0
  %v5572 = vadd.f32 0.0, %v5571
  %v5573 = vpop.f32.mrf.mxu0
  %v5574 = vadd.f32 0.0, %v5573
  %5575 = vdwg.mxu0
  %v5592 = vunpack.c.l.b16 %v5043
  %v5593 = vunpack.c.l.b16 %v5044
  %v5594 = vunpack.c.l.b16 %v5045
  %v5595 = vunpack.c.l.b16 %v5046
  %v5596 = vunpack.c.l.b16 %v5047
  %v5597 = vunpack.c.l.b16 %v5048
  %v5598 = vunpack.c.l.b16 %v5049
  %v5599 = vunpack.c.l.b16 %v5050
  %v5600 = vunpack.c.l.b16 %v5051
  %v5601 = vunpack.c.l.b16 %v5052
  %v5602 = vunpack.c.l.b16 %v5053
  %v5603 = vunpack.c.l.b16 %v5054
  %v5604 = vunpack.c.l.b16 %v5055
  %v5605 = vunpack.c.l.b16 %v5056
  %v5606 = vunpack.c.l.b16 %v5057
  %v5607 = vunpack.c.l.b16 %v5058
  %v5608 = vpack.c.b16 %v5593, %v5592
  %v5609 = vpack.c.b16 %v5595, %v5594
  %v5610 = vpack.c.b16 %v5597, %v5596
  %v5611 = vpack.c.b16 %v5599, %v5598
  %v5612 = vpack.c.b16 %v5601, %v5600
  %v5613 = vpack.c.b16 %v5603, %v5602
  %v5614 = vpack.c.b16 %v5605, %v5604
  %v5615 = vpack.c.b16 %v5607, %v5606
  %5624 = vmatpush.bf16.msra.mxu0 %v5087
  %5625 = vmatpush.bf16.msra.mxu0 %v5083
  %5626 = vmatpush.bf16.msra.mxu0 %v5079
  %5627 = vmatpush.bf16.msra.mxu0 %v5075
  %5628 = vmatpush.bf16.msra.mxu0 %v5071
  %5629 = vmatpush.bf16.msra.mxu0 %v5067
  %5630 = vmatpush.bf16.msra.mxu0 %v5063
  %5631 = vmatpush.bf16.msra.mxu0 %v5059
  %5632 = vmatmul.bf16.gmra.mxu0 %v5608
  %v5633 = vpop.f32.mrf.mxu0
  %v5634 = vadd.f32 %v5390, %v5633
  %v5635 = vpop.f32.mrf.mxu0
  %v5636 = vadd.f32 %v5392, %v5635
  %5637 = vmatmul.bf16.gmra.mxu0 %v5609
  %v5638 = vpop.f32.mrf.mxu0
  %v5639 = vadd.f32 %v5395, %v5638
  %v5640 = vpop.f32.mrf.mxu0
  %v5641 = vadd.f32 %v5397, %v5640
  %5642 = vmatmul.bf16.gmra.mxu0 %v5610
  %v5643 = vpop.f32.mrf.mxu0
  %v5644 = vadd.f32 %v5400, %v5643
  %v5645 = vpop.f32.mrf.mxu0
  %v5646 = vadd.f32 %v5402, %v5645
  %5647 = vmatmul.bf16.gmra.mxu0 %v5611
  %v5648 = vpop.f32.mrf.mxu0
  %v5649 = vadd.f32 %v5405, %v5648
  %v5650 = vpop.f32.mrf.mxu0
  %v5651 = vadd.f32 %v5407, %v5650
  %5652 = vmatmul.bf16.gmra.mxu0 %v5612
  %v5653 = vpop.f32.mrf.mxu0
  %v5654 = vadd.f32 %v5410, %v5653
  %v5655 = vpop.f32.mrf.mxu0
  %v5656 = vadd.f32 %v5412, %v5655
  %5657 = vmatmul.bf16.gmra.mxu0 %v5613
  %v5658 = vpop.f32.mrf.mxu0
  %v5659 = vadd.f32 %v5415, %v5658
  %v5660 = vpop.f32.mrf.mxu0
  %v5661 = vadd.f32 %v5417, %v5660
  %5662 = vmatmul.bf16.gmra.mxu0 %v5614
  %v5663 = vpop.f32.mrf.mxu0
  %v5664 = vadd.f32 %v5420, %v5663
  %v5665 = vpop.f32.mrf.mxu0
  %v5666 = vadd.f32 %v5422, %v5665
  %5667 = vmatmul.bf16.gmra.mxu0 %v5615
  %v5668 = vpop.f32.mrf.mxu0
  %v5669 = vadd.f32 %v5425, %v5668
  %v5670 = vpop.f32.mrf.mxu0
  %v5671 = vadd.f32 %v5427, %v5670
  %5672 = vdwg.mxu0
  %5673 = vmatpush.bf16.msra.mxu0 %v5088
  %5674 = vmatpush.bf16.msra.mxu0 %v5084
  %5675 = vmatpush.bf16.msra.mxu0 %v5080
  %5676 = vmatpush.bf16.msra.mxu0 %v5076
  %5677 = vmatpush.bf16.msra.mxu0 %v5072
  %5678 = vmatpush.bf16.msra.mxu0 %v5068
  %5679 = vmatpush.bf16.msra.mxu0 %v5064
  %5680 = vmatpush.bf16.msra.mxu0 %v5060
  %5681 = vmatmul.bf16.gmra.mxu0 %v5608
  %v5682 = vpop.f32.mrf.mxu0
  %v5683 = vadd.f32 %v5439, %v5682
  %v5684 = vpop.f32.mrf.mxu0
  %v5685 = vadd.f32 %v5441, %v5684
  %5686 = vmatmul.bf16.gmra.mxu0 %v5609
  %v5687 = vpop.f32.mrf.mxu0
  %v5688 = vadd.f32 %v5444, %v5687
  %v5689 = vpop.f32.mrf.mxu0
  %v5690 = vadd.f32 %v5446, %v5689
  %5691 = vmatmul.bf16.gmra.mxu0 %v5610
  %v5692 = vpop.f32.mrf.mxu0
  %v5693 = vadd.f32 %v5449, %v5692
  %v5694 = vpop.f32.mrf.mxu0
  %v5695 = vadd.f32 %v5451, %v5694
  %5696 = vmatmul.bf16.gmra.mxu0 %v5611
  %v5697 = vpop.f32.mrf.mxu0
  %v5698 = vadd.f32 %v5454, %v5697
  %v5699 = vpop.f32.mrf.mxu0
  %v5700 = vadd.f32 %v5456, %v5699
  %5701 = vmatmul.bf16.gmra.mxu0 %v5612
  %v5702 = vpop.f32.mrf.mxu0
  %v5703 = vadd.f32 %v5459, %v5702
  %v5704 = vpop.f32.mrf.mxu0
  %v5705 = vadd.f32 %v5461, %v5704
  %5706 = vmatmul.bf16.gmra.mxu0 %v5613
  %v5707 = vpop.f32.mrf.mxu0
  %v5708 = vadd.f32 %v5464, %v5707
  %v5709 = vpop.f32.mrf.mxu0
  %v5710 = vadd.f32 %v5466, %v5709
  %5711 = vmatmul.bf16.gmra.mxu0 %v5614
  %v5712 = vpop.f32.mrf.mxu0
  %v5713 = vadd.f32 %v5469, %v5712
  %v5714 = vpop.f32.mrf.mxu0
  %v5715 = vadd.f32 %v5471, %v5714
  %5716 = vmatmul.bf16.gmra.mxu0 %v5615
  %v5717 = vpop.f32.mrf.mxu0
  %v5718 = vadd.f32 %v5474, %v5717
  %v5719 = vpop.f32.mrf.mxu0
  %v5720 = vadd.f32 %v5476, %v5719
  %5721 = vdwg.mxu0
  %5722 = vmatpush.bf16.msra.mxu0 %v5089
  %5723 = vmatpush.bf16.msra.mxu0 %v5085
  %5724 = vmatpush.bf16.msra.mxu0 %v5081
  %5725 = vmatpush.bf16.msra.mxu0 %v5077
  %5726 = vmatpush.bf16.msra.mxu0 %v5073
  %5727 = vmatpush.bf16.msra.mxu0 %v5069
  %5728 = vmatpush.bf16.msra.mxu0 %v5065
  %5729 = vmatpush.bf16.msra.mxu0 %v5061
  %5730 = vmatmul.bf16.gmra.mxu0 %v5608
  %v5731 = vpop.f32.mrf.mxu0
  %v5732 = vadd.f32 %v5488, %v5731
  %v5733 = vpop.f32.mrf.mxu0
  %v5734 = vadd.f32 %v5490, %v5733
  %5735 = vmatmul.bf16.gmra.mxu0 %v5609
  %v5736 = vpop.f32.mrf.mxu0
  %v5737 = vadd.f32 %v5493, %v5736
  %v5738 = vpop.f32.mrf.mxu0
  %v5739 = vadd.f32 %v5495, %v5738
  %5740 = vmatmul.bf16.gmra.mxu0 %v5610
  %v5741 = vpop.f32.mrf.mxu0
  %v5742 = vadd.f32 %v5498, %v5741
  %v5743 = vpop.f32.mrf.mxu0
  %v5744 = vadd.f32 %v5500, %v5743
  %5745 = vmatmul.bf16.gmra.mxu0 %v5611
  %v5746 = vpop.f32.mrf.mxu0
  %v5747 = vadd.f32 %v5503, %v5746
  %v5748 = vpop.f32.mrf.mxu0
  %v5749 = vadd.f32 %v5505, %v5748
  %5750 = vmatmul.bf16.gmra.mxu0 %v5612
  %v5751 = vpop.f32.mrf.mxu0
  %v5752 = vadd.f32 %v5508, %v5751
  %v5753 = vpop.f32.mrf.mxu0
  %v5754 = vadd.f32 %v5510, %v5753
  %5755 = vmatmul.bf16.gmra.mxu0 %v5613
  %v5756 = vpop.f32.mrf.mxu0
  %v5757 = vadd.f32 %v5513, %v5756
  %v5758 = vpop.f32.mrf.mxu0
  %v5759 = vadd.f32 %v5515, %v5758
  %5760 = vmatmul.bf16.gmra.mxu0 %v5614
  %v5761 = vpop.f32.mrf.mxu0
  %v5762 = vadd.f32 %v5518, %v5761
  %v5763 = vpop.f32.mrf.mxu0
  %v5764 = vadd.f32 %v5520, %v5763
  %5765 = vmatmul.bf16.gmra.mxu0 %v5615
  %v5766 = vpop.f32.mrf.mxu0
  %v5767 = vadd.f32 %v5523, %v5766
  %v5768 = vpop.f32.mrf.mxu0
  %v5769 = vadd.f32 %v5525, %v5768
  %5770 = vdwg.mxu0
  %5771 = vmatpush.bf16.msra.mxu0 %v5090
  %5772 = vmatpush.bf16.msra.mxu0 %v5086
  %5773 = vmatpush.bf16.msra.mxu0 %v5082
  %5774 = vmatpush.bf16.msra.mxu0 %v5078
  %5775 = vmatpush.bf16.msra.mxu0 %v5074
  %5776 = vmatpush.bf16.msra.mxu0 %v5070
  %5777 = vmatpush.bf16.msra.mxu0 %v5066
  %5778 = vmatpush.bf16.msra.mxu0 %v5062
  %5779 = vmatmul.bf16.gmra.mxu0 %v5608
  %v5780 = vpop.f32.mrf.mxu0
  %v5781 = vadd.f32 %v5537, %v5780
  %v5782 = vpop.f32.mrf.mxu0
  %v5783 = vadd.f32 %v5539, %v5782
  %5784 = vmatmul.bf16.gmra.mxu0 %v5609
  %v5785 = vpop.f32.mrf.mxu0
  %v5786 = vadd.f32 %v5542, %v5785
  %v5787 = vpop.f32.mrf.mxu0
  %v5788 = vadd.f32 %v5544, %v5787
  %5789 = vmatmul.bf16.gmra.mxu0 %v5610
  %v5790 = vpop.f32.mrf.mxu0
  %v5791 = vadd.f32 %v5547, %v5790
  %v5792 = vpop.f32.mrf.mxu0
  %v5793 = vadd.f32 %v5549, %v5792
  %5794 = vmatmul.bf16.gmra.mxu0 %v5611
  %v5795 = vpop.f32.mrf.mxu0
  %v5796 = vadd.f32 %v5552, %v5795
  %v5797 = vpop.f32.mrf.mxu0
  %v5798 = vadd.f32 %v5554, %v5797
  %5799 = vmatmul.bf16.gmra.mxu0 %v5612
  %v5800 = vpop.f32.mrf.mxu0
  %v5801 = vadd.f32 %v5557, %v5800
  %v5802 = vpop.f32.mrf.mxu0
  %v5803 = vadd.f32 %v5559, %v5802
  %5804 = vmatmul.bf16.gmra.mxu0 %v5613
  %v5805 = vpop.f32.mrf.mxu0
  %v5806 = vadd.f32 %v5562, %v5805
  %v5807 = vpop.f32.mrf.mxu0
  %v5808 = vadd.f32 %v5564, %v5807
  %5809 = vmatmul.bf16.gmra.mxu0 %v5614
  %v5810 = vpop.f32.mrf.mxu0
  %v5811 = vadd.f32 %v5567, %v5810
  %v5812 = vpop.f32.mrf.mxu0
  %v5813 = vadd.f32 %v5569, %v5812
  %5814 = vmatmul.bf16.gmra.mxu0 %v5615
  %v5815 = vpop.f32.mrf.mxu0
  %v5816 = vadd.f32 %v5572, %v5815
  %v5817 = vpop.f32.mrf.mxu0
  %v5818 = vadd.f32 %v5574, %v5817
  %5819 = vdwg.mxu0
  %5820 = vrot.lane.b32.xlu0 %v4979, 122
  %v5821 = vpop.permute.xlu0 %5820
  %5822 = vrot.lane.b32.xlu0 %v4983, 122
  %v5823 = vpop.permute.xlu0 %5822
  %5824 = vrot.lane.b32.xlu0 %v4987, 122
  %v5825 = vpop.permute.xlu0 %5824
  %5826 = vrot.lane.b32.xlu0 %v4991, 122
  %v5827 = vpop.permute.xlu0 %5826
  %5828 = vrot.lane.b32.xlu0 %v4995, 122
  %v5829 = vpop.permute.xlu0 %5828
  %5830 = vrot.lane.b32.xlu0 %v4999, 122
  %v5831 = vpop.permute.xlu0 %5830
  %5832 = vrot.lane.b32.xlu0 %v5003, 122
  %v5833 = vpop.permute.xlu0 %5832
  %5834 = vrot.lane.b32.xlu0 %v5007, 122
  %v5835 = vpop.permute.xlu0 %5834
  %5836 = vrot.lane.b32.xlu0 %v5011, 122
  %v5837 = vpop.permute.xlu0 %5836
  %5838 = vrot.lane.b32.xlu0 %v5015, 122
  %v5839 = vpop.permute.xlu0 %5838
  %5840 = vrot.lane.b32.xlu0 %v5019, 122
  %v5841 = vpop.permute.xlu0 %5840
  %5842 = vrot.lane.b32.xlu0 %v5023, 122
  %v5843 = vpop.permute.xlu0 %5842
  %5844 = vrot.lane.b32.xlu0 %v5027, 122
  %v5845 = vpop.permute.xlu0 %5844
  %5846 = vrot.lane.b32.xlu0 %v5031, 122
  %v5847 = vpop.permute.xlu0 %5846
  %5848 = vrot.lane.b32.xlu0 %v5035, 122
  %v5849 = vpop.permute.xlu0 %5848
  %5850 = vrot.lane.b32.xlu0 %v5039, 122
  %v5851 = vpop.permute.xlu0 %5850
  %5852 = vrot.lane.b32.xlu0 %v4980, 122
  %v5853 = vpop.permute.xlu0 %5852
  %5854 = vrot.lane.b32.xlu0 %v4984, 122
  %v5855 = vpop.permute.xlu0 %5854
  %5856 = vrot.lane.b32.xlu0 %v4988, 122
  %v5857 = vpop.permute.xlu0 %5856
  %5858 = vrot.lane.b32.xlu0 %v4992, 122
  %v5859 = vpop.permute.xlu0 %5858
  %5860 = vrot.lane.b32.xlu0 %v4996, 122
  %v5861 = vpop.permute.xlu0 %5860
  %5862 = vrot.lane.b32.xlu0 %v5000, 122
  %v5863 = vpop.permute.xlu0 %5862
  %5864 = vrot.lane.b32.xlu0 %v5004, 122
  %v5865 = vpop.permute.xlu0 %5864
  %5866 = vrot.lane.b32.xlu0 %v5008, 122
  %v5867 = vpop.permute.xlu0 %5866
  %5868 = vrot.lane.b32.xlu0 %v5012, 122
  %v5869 = vpop.permute.xlu0 %5868
  %5870 = vrot.lane.b32.xlu0 %v5016, 122
  %v5871 = vpop.permute.xlu0 %5870
  %5872 = vrot.lane.b32.xlu0 %v5020, 122
  %v5873 = vpop.permute.xlu0 %5872
  %5874 = vrot.lane.b32.xlu0 %v5024, 122
  %v5875 = vpop.permute.xlu0 %5874
  %5876 = vrot.lane.b32.xlu0 %v5028, 122
  %v5877 = vpop.permute.xlu0 %5876
  %5878 = vrot.lane.b32.xlu0 %v5032, 122
  %v5879 = vpop.permute.xlu0 %5878
  %5880 = vrot.lane.b32.xlu0 %v5036, 122
  %v5881 = vpop.permute.xlu0 %5880
  %5882 = vrot.lane.b32.xlu0 %v5040, 122
  %v5883 = vpop.permute.xlu0 %5882
  %5884 = vrot.lane.b32.xlu0 %v4981, 122
  %v5885 = vpop.permute.xlu0 %5884
  %5886 = vrot.lane.b32.xlu0 %v4985, 122
  %v5887 = vpop.permute.xlu0 %5886
  %5888 = vrot.lane.b32.xlu0 %v4989, 122
  %v5889 = vpop.permute.xlu0 %5888
  %5890 = vrot.lane.b32.xlu0 %v4993, 122
  %v5891 = vpop.permute.xlu0 %5890
  %5892 = vrot.lane.b32.xlu0 %v4997, 122
  %v5893 = vpop.permute.xlu0 %5892
  %5894 = vrot.lane.b32.xlu0 %v5001, 122
  %v5895 = vpop.permute.xlu0 %5894
  %5896 = vrot.lane.b32.xlu0 %v5005, 122
  %v5897 = vpop.permute.xlu0 %5896
  %5898 = vrot.lane.b32.xlu0 %v5009, 122
  %v5899 = vpop.permute.xlu0 %5898
  %5900 = vrot.lane.b32.xlu0 %v5013, 122
  %v5901 = vpop.permute.xlu0 %5900
  %5902 = vrot.lane.b32.xlu0 %v5017, 122
  %v5903 = vpop.permute.xlu0 %5902
  %5904 = vrot.lane.b32.xlu0 %v5021, 122
  %v5905 = vpop.permute.xlu0 %5904
  %5906 = vrot.lane.b32.xlu0 %v5025, 122
  %v5907 = vpop.permute.xlu0 %5906
  %5908 = vrot.lane.b32.xlu0 %v5029, 122
  %v5909 = vpop.permute.xlu0 %5908
  %5910 = vrot.lane.b32.xlu0 %v5033, 122
  %v5911 = vpop.permute.xlu0 %5910
  %5912 = vrot.lane.b32.xlu0 %v5037, 122
  %v5913 = vpop.permute.xlu0 %5912
  %5914 = vrot.lane.b32.xlu0 %v5041, 122
  %v5915 = vpop.permute.xlu0 %5914
  %5916 = vrot.lane.b32.xlu0 %v4982, 122
  %v5917 = vpop.permute.xlu0 %5916
  %5918 = vrot.lane.b32.xlu0 %v4986, 122
  %v5919 = vpop.permute.xlu0 %5918
  %5920 = vrot.lane.b32.xlu0 %v4990, 122
  %v5921 = vpop.permute.xlu0 %5920
  %5922 = vrot.lane.b32.xlu0 %v4994, 122
  %v5923 = vpop.permute.xlu0 %5922
  %5924 = vrot.lane.b32.xlu0 %v4998, 122
  %v5925 = vpop.permute.xlu0 %5924
  %5926 = vrot.lane.b32.xlu0 %v5002, 122
  %v5927 = vpop.permute.xlu0 %5926
  %5928 = vrot.lane.b32.xlu0 %v5006, 122
  %v5929 = vpop.permute.xlu0 %5928
  %5930 = vrot.lane.b32.xlu0 %v5010, 122
  %v5931 = vpop.permute.xlu0 %5930
  %5932 = vrot.lane.b32.xlu0 %v5014, 122
  %v5933 = vpop.permute.xlu0 %5932
  %5934 = vrot.lane.b32.xlu0 %v5018, 122
  %v5935 = vpop.permute.xlu0 %5934
  %5936 = vrot.lane.b32.xlu0 %v5022, 122
  %v5937 = vpop.permute.xlu0 %5936
  %5938 = vrot.lane.b32.xlu0 %v5026, 122
  %v5939 = vpop.permute.xlu0 %5938
  %5940 = vrot.lane.b32.xlu0 %v5030, 122
  %v5941 = vpop.permute.xlu0 %5940
  %5942 = vrot.lane.b32.xlu0 %v5034, 122
  %v5943 = vpop.permute.xlu0 %5942
  %5944 = vrot.lane.b32.xlu0 %v5038, 122
  %v5945 = vpop.permute.xlu0 %5944
  %5946 = vrot.lane.b32.xlu0 %v5042, 122
  %v5947 = vpop.permute.xlu0 %5946
  %v5948 = vsel %vm3879, %v5885, %v5917
  %v5949 = vsel %vm3879, %v5887, %v5919
  %v5950 = vsel %vm3879, %v5889, %v5921
  %v5951 = vsel %vm3879, %v5891, %v5923
  %v5952 = vsel %vm3879, %v5893, %v5925
  %v5953 = vsel %vm3879, %v5895, %v5927
  %v5954 = vsel %vm3879, %v5897, %v5929
  %v5955 = vsel %vm3879, %v5899, %v5931
  %v5956 = vsel %vm3879, %v5901, %v5933
  %v5957 = vsel %vm3879, %v5903, %v5935
  %v5958 = vsel %vm3879, %v5905, %v5937
  %v5959 = vsel %vm3879, %v5907, %v5939
  %v5960 = vsel %vm3879, %v5909, %v5941
  %v5961 = vsel %vm3879, %v5911, %v5943
  %v5962 = vsel %vm3879, %v5913, %v5945
  %v5963 = vsel %vm3879, %v5915, %v5947
  %v5964 = vsel %vm3879, %v5853, %v5885
  %v5965 = vsel %vm3879, %v5855, %v5887
  %v5966 = vsel %vm3879, %v5857, %v5889
  %v5967 = vsel %vm3879, %v5859, %v5891
  %v5968 = vsel %vm3879, %v5861, %v5893
  %v5969 = vsel %vm3879, %v5863, %v5895
  %v5970 = vsel %vm3879, %v5865, %v5897
  %v5971 = vsel %vm3879, %v5867, %v5899
  %v5972 = vsel %vm3879, %v5869, %v5901
  %v5973 = vsel %vm3879, %v5871, %v5903
  %v5974 = vsel %vm3879, %v5873, %v5905
  %v5975 = vsel %vm3879, %v5875, %v5907
  %v5976 = vsel %vm3879, %v5877, %v5909
  %v5977 = vsel %vm3879, %v5879, %v5911
  %v5978 = vsel %vm3879, %v5881, %v5913
  %v5979 = vsel %vm3879, %v5883, %v5915
  %v5980 = vsel %vm3879, %v5821, %v5853
  %v5981 = vsel %vm3879, %v5823, %v5855
  %v5982 = vsel %vm3879, %v5825, %v5857
  %v5983 = vsel %vm3879, %v5827, %v5859
  %v5984 = vsel %vm3879, %v5829, %v5861
  %v5985 = vsel %vm3879, %v5831, %v5863
  %v5986 = vsel %vm3879, %v5833, %v5865
  %v5987 = vsel %vm3879, %v5835, %v5867
  %v5988 = vsel %vm3879, %v5837, %v5869
  %v5989 = vsel %vm3879, %v5839, %v5871
  %v5990 = vsel %vm3879, %v5841, %v5873
  %v5991 = vsel %vm3879, %v5843, %v5875
  %v5992 = vsel %vm3879, %v5845, %v5877
  %v5993 = vsel %vm3879, %v5847, %v5879
  %v5994 = vsel %vm3879, %v5849, %v5881
  %v5995 = vsel %vm3879, %v5851, %v5883
  %v5996 = vsel %vm3879, %v5917, %v5821
  %v5997 = vsel %vm3879, %v5919, %v5823
  %v5998 = vsel %vm3879, %v5921, %v5825
  %v5999 = vsel %vm3879, %v5923, %v5827
  %v6000 = vsel %vm3879, %v5925, %v5829
  %v6001 = vsel %vm3879, %v5927, %v5831
  %v6002 = vsel %vm3879, %v5929, %v5833
  %v6003 = vsel %vm3879, %v5931, %v5835
  %v6004 = vsel %vm3879, %v5933, %v5837
  %v6005 = vsel %vm3879, %v5935, %v5839
  %v6006 = vsel %vm3879, %v5937, %v5841
  %v6007 = vsel %vm3879, %v5939, %v5843
  %v6008 = vsel %vm3879, %v5941, %v5845
  %v6009 = vsel %vm3879, %v5943, %v5847
  %v6010 = vsel %vm3879, %v5945, %v5849
  %v6011 = vsel %vm3879, %v5947, %v5851
  %s6012 = scalar_lea.vmem %s3, 128
  %v6013 = vld [vmem:[%s6012] sm:$0xf]
  %v6014 = vld [vmem:[%s6012 + $0x4] sm:$0xf]
  %v6015 = vld [vmem:[%s6012 + $0x8] sm:$0xf]
  %v6016 = vld [vmem:[%s6012 + $0xc] sm:$0xf]
  %v6017 = vld [vmem:[%s6012 + $0x10] sm:$0xf]
  %v6018 = vld [vmem:[%s6012 + $0x14] sm:$0xf]
  %v6019 = vld [vmem:[%s6012 + $0x18] sm:$0xf]
  %v6020 = vld [vmem:[%s6012 + $0x1c] sm:$0xf]
  %v6021 = vld [vmem:[%s6012 + $0x20] sm:$0xf]
  %v6022 = vld [vmem:[%s6012 + $0x24] sm:$0xf]
  %v6023 = vld [vmem:[%s6012 + $0x28] sm:$0xf]
  %v6024 = vld [vmem:[%s6012 + $0x2c] sm:$0xf]
  %v6025 = vld [vmem:[%s6012 + $0x30] sm:$0xf]
  %v6026 = vld [vmem:[%s6012 + $0x34] sm:$0xf]
  %v6027 = vld [vmem:[%s6012 + $0x38] sm:$0xf]
  %v6028 = vld [vmem:[%s6012 + $0x3c] sm:$0xf]
  %v6029 = vpack.c.bf16 %v5981, %v5980
  %v6030 = vpack.c.bf16 %v5965, %v5964
  %v6031 = vpack.c.bf16 %v5949, %v5948
  %v6032 = vpack.c.bf16 %v5997, %v5996
  %v6033 = vpack.c.bf16 %v5983, %v5982
  %v6034 = vpack.c.bf16 %v5967, %v5966
  %v6035 = vpack.c.bf16 %v5951, %v5950
  %v6036 = vpack.c.bf16 %v5999, %v5998
  %v6037 = vpack.c.bf16 %v5985, %v5984
  %v6038 = vpack.c.bf16 %v5969, %v5968
  %v6039 = vpack.c.bf16 %v5953, %v5952
  %v6040 = vpack.c.bf16 %v6001, %v6000
  %v6041 = vpack.c.bf16 %v5987, %v5986
  %v6042 = vpack.c.bf16 %v5971, %v5970
  %v6043 = vpack.c.bf16 %v5955, %v5954
  %v6044 = vpack.c.bf16 %v6003, %v6002
  %v6045 = vpack.c.bf16 %v5989, %v5988
  %v6046 = vpack.c.bf16 %v5973, %v5972
  %v6047 = vpack.c.bf16 %v5957, %v5956
  %v6048 = vpack.c.bf16 %v6005, %v6004
  %v6049 = vpack.c.bf16 %v5991, %v5990
  %v6050 = vpack.c.bf16 %v5975, %v5974
  %v6051 = vpack.c.bf16 %v5959, %v5958
  %v6052 = vpack.c.bf16 %v6007, %v6006
  %v6053 = vpack.c.bf16 %v5993, %v5992
  %v6054 = vpack.c.bf16 %v5977, %v5976
  %v6055 = vpack.c.bf16 %v5961, %v5960
  %v6056 = vpack.c.bf16 %v6009, %v6008
  %v6057 = vpack.c.bf16 %v5995, %v5994
  %v6058 = vpack.c.bf16 %v5979, %v5978
  %v6059 = vpack.c.bf16 %v5963, %v5962
  %v6060 = vpack.c.bf16 %v6011, %v6010
  %v6077 = vunpack.c.l.b16 %v6013
  %v6078 = vunpack.c.l.b16 %v6014
  %v6079 = vunpack.c.l.b16 %v6015
  %v6080 = vunpack.c.l.b16 %v6016
  %v6081 = vunpack.c.l.b16 %v6017
  %v6082 = vunpack.c.l.b16 %v6018
  %v6083 = vunpack.c.l.b16 %v6019
  %v6084 = vunpack.c.l.b16 %v6020
  %v6085 = vunpack.c.l.b16 %v6021
  %v6086 = vunpack.c.l.b16 %v6022
  %v6087 = vunpack.c.l.b16 %v6023
  %v6088 = vunpack.c.l.b16 %v6024
  %v6089 = vunpack.c.l.b16 %v6025
  %v6090 = vunpack.c.l.b16 %v6026
  %v6091 = vunpack.c.l.b16 %v6027
  %v6092 = vunpack.c.l.b16 %v6028
  %v6093 = vpack.c.b16 %v6078, %v6077
  %v6094 = vpack.c.b16 %v6080, %v6079
  %v6095 = vpack.c.b16 %v6082, %v6081
  %v6096 = vpack.c.b16 %v6084, %v6083
  %v6097 = vpack.c.b16 %v6086, %v6085
  %v6098 = vpack.c.b16 %v6088, %v6087
  %v6099 = vpack.c.b16 %v6090, %v6089
  %v6100 = vpack.c.b16 %v6092, %v6091
  %6109 = vmatpush.bf16.msra.mxu0 %v6057
  %6110 = vmatpush.bf16.msra.mxu0 %v6053
  %6111 = vmatpush.bf16.msra.mxu0 %v6049
  %6112 = vmatpush.bf16.msra.mxu0 %v6045
  %6113 = vmatpush.bf16.msra.mxu0 %v6041
  %6114 = vmatpush.bf16.msra.mxu0 %v6037
  %6115 = vmatpush.bf16.msra.mxu0 %v6033
  %6116 = vmatpush.bf16.msra.mxu0 %v6029
  %6117 = vmatmul.bf16.gmra.mxu0 %v6093
  %v6118 = vpop.f32.mrf.mxu0
  %v6119 = vadd.f32 0.0, %v6118
  %v6120 = vpop.f32.mrf.mxu0
  %v6121 = vadd.f32 0.0, %v6120
  %6122 = vmatmul.bf16.gmra.mxu0 %v6094
  %v6123 = vpop.f32.mrf.mxu0
  %v6124 = vadd.f32 0.0, %v6123
  %v6125 = vpop.f32.mrf.mxu0
  %v6126 = vadd.f32 0.0, %v6125
  %6127 = vmatmul.bf16.gmra.mxu0 %v6095
  %v6128 = vpop.f32.mrf.mxu0
  %v6129 = vadd.f32 0.0, %v6128
  %v6130 = vpop.f32.mrf.mxu0
  %v6131 = vadd.f32 0.0, %v6130
  %6132 = vmatmul.bf16.gmra.mxu0 %v6096
  %v6133 = vpop.f32.mrf.mxu0
  %v6134 = vadd.f32 0.0, %v6133
  %v6135 = vpop.f32.mrf.mxu0
  %v6136 = vadd.f32 0.0, %v6135
  %6137 = vmatmul.bf16.gmra.mxu0 %v6097
  %v6138 = vpop.f32.mrf.mxu0
  %v6139 = vadd.f32 0.0, %v6138
  %v6140 = vpop.f32.mrf.mxu0
  %v6141 = vadd.f32 0.0, %v6140
  %6142 = vmatmul.bf16.gmra.mxu0 %v6098
  %v6143 = vpop.f32.mrf.mxu0
  %v6144 = vadd.f32 0.0, %v6143
  %v6145 = vpop.f32.mrf.mxu0
  %v6146 = vadd.f32 0.0, %v6145
  %6147 = vmatmul.bf16.gmra.mxu0 %v6099
  %v6148 = vpop.f32.mrf.mxu0
  %v6149 = vadd.f32 0.0, %v6148
  %v6150 = vpop.f32.mrf.mxu0
  %v6151 = vadd.f32 0.0, %v6150
  %6152 = vmatmul.bf16.gmra.mxu0 %v6100
  %v6153 = vpop.f32.mrf.mxu0
  %v6154 = vadd.f32 0.0, %v6153
  %v6155 = vpop.f32.mrf.mxu0
  %v6156 = vadd.f32 0.0, %v6155
  %6157 = vdwg.mxu0
  %6158 = vmatpush.bf16.msra.mxu0 %v6058
  %6159 = vmatpush.bf16.msra.mxu0 %v6054
  %6160 = vmatpush.bf16.msra.mxu0 %v6050
  %6161 = vmatpush.bf16.msra.mxu0 %v6046
  %6162 = vmatpush.bf16.msra.mxu0 %v6042
  %6163 = vmatpush.bf16.msra.mxu0 %v6038
  %6164 = vmatpush.bf16.msra.mxu0 %v6034
  %6165 = vmatpush.bf16.msra.mxu0 %v6030
  %6166 = vmatmul.bf16.gmra.mxu0 %v6093
  %v6167 = vpop.f32.mrf.mxu0
  %v6168 = vadd.f32 0.0, %v6167
  %v6169 = vpop.f32.mrf.mxu0
  %v6170 = vadd.f32 0.0, %v6169
  %6171 = vmatmul.bf16.gmra.mxu0 %v6094
  %v6172 = vpop.f32.mrf.mxu0
  %v6173 = vadd.f32 0.0, %v6172
  %v6174 = vpop.f32.mrf.mxu0
  %v6175 = vadd.f32 0.0, %v6174
  %6176 = vmatmul.bf16.gmra.mxu0 %v6095
  %v6177 = vpop.f32.mrf.mxu0
  %v6178 = vadd.f32 0.0, %v6177
  %v6179 = vpop.f32.mrf.mxu0
  %v6180 = vadd.f32 0.0, %v6179
  %6181 = vmatmul.bf16.gmra.mxu0 %v6096
  %v6182 = vpop.f32.mrf.mxu0
  %v6183 = vadd.f32 0.0, %v6182
  %v6184 = vpop.f32.mrf.mxu0
  %v6185 = vadd.f32 0.0, %v6184
  %6186 = vmatmul.bf16.gmra.mxu0 %v6097
  %v6187 = vpop.f32.mrf.mxu0
  %v6188 = vadd.f32 0.0, %v6187
  %v6189 = vpop.f32.mrf.mxu0
  %v6190 = vadd.f32 0.0, %v6189
  %6191 = vmatmul.bf16.gmra.mxu0 %v6098
  %v6192 = vpop.f32.mrf.mxu0
  %v6193 = vadd.f32 0.0, %v6192
  %v6194 = vpop.f32.mrf.mxu0
  %v6195 = vadd.f32 0.0, %v6194
  %6196 = vmatmul.bf16.gmra.mxu0 %v6099
  %v6197 = vpop.f32.mrf.mxu0
  %v6198 = vadd.f32 0.0, %v6197
  %v6199 = vpop.f32.mrf.mxu0
  %v6200 = vadd.f32 0.0, %v6199
  %6201 = vmatmul.bf16.gmra.mxu0 %v6100
  %v6202 = vpop.f32.mrf.mxu0
  %v6203 = vadd.f32 0.0, %v6202
  %v6204 = vpop.f32.mrf.mxu0
  %v6205 = vadd.f32 0.0, %v6204
  %6206 = vdwg.mxu0
  %6207 = vmatpush.bf16.msra.mxu0 %v6059
  %6208 = vmatpush.bf16.msra.mxu0 %v6055
  %6209 = vmatpush.bf16.msra.mxu0 %v6051
  %6210 = vmatpush.bf16.msra.mxu0 %v6047
  %6211 = vmatpush.bf16.msra.mxu0 %v6043
  %6212 = vmatpush.bf16.msra.mxu0 %v6039
  %6213 = vmatpush.bf16.msra.mxu0 %v6035
  %6214 = vmatpush.bf16.msra.mxu0 %v6031
  %6215 = vmatmul.bf16.gmra.mxu0 %v6093
  %v6216 = vpop.f32.mrf.mxu0
  %v6217 = vadd.f32 0.0, %v6216
  %v6218 = vpop.f32.mrf.mxu0
  %v6219 = vadd.f32 0.0, %v6218
  %6220 = vmatmul.bf16.gmra.mxu0 %v6094
  %v6221 = vpop.f32.mrf.mxu0
  %v6222 = vadd.f32 0.0, %v6221
  %v6223 = vpop.f32.mrf.mxu0
  %v6224 = vadd.f32 0.0, %v6223
  %6225 = vmatmul.bf16.gmra.mxu0 %v6095
  %v6226 = vpop.f32.mrf.mxu0
  %v6227 = vadd.f32 0.0, %v6226
  %v6228 = vpop.f32.mrf.mxu0
  %v6229 = vadd.f32 0.0, %v6228
  %6230 = vmatmul.bf16.gmra.mxu0 %v6096
  %v6231 = vpop.f32.mrf.mxu0
  %v6232 = vadd.f32 0.0, %v6231
  %v6233 = vpop.f32.mrf.mxu0
  %v6234 = vadd.f32 0.0, %v6233
  %6235 = vmatmul.bf16.gmra.mxu0 %v6097
  %v6236 = vpop.f32.mrf.mxu0
  %v6237 = vadd.f32 0.0, %v6236
  %v6238 = vpop.f32.mrf.mxu0
  %v6239 = vadd.f32 0.0, %v6238
  %6240 = vmatmul.bf16.gmra.mxu0 %v6098
  %v6241 = vpop.f32.mrf.mxu0
  %v6242 = vadd.f32 0.0, %v6241
  %v6243 = vpop.f32.mrf.mxu0
  %v6244 = vadd.f32 0.0, %v6243
  %6245 = vmatmul.bf16.gmra.mxu0 %v6099
  %v6246 = vpop.f32.mrf.mxu0
  %v6247 = vadd.f32 0.0, %v6246
  %v6248 = vpop.f32.mrf.mxu0
  %v6249 = vadd.f32 0.0, %v6248
  %6250 = vmatmul.bf16.gmra.mxu0 %v6100
  %v6251 = vpop.f32.mrf.mxu0
  %v6252 = vadd.f32 0.0, %v6251
  %v6253 = vpop.f32.mrf.mxu0
  %v6254 = vadd.f32 0.0, %v6253
  %6255 = vdwg.mxu0
  %6256 = vmatpush.bf16.msra.mxu0 %v6060
  %6257 = vmatpush.bf16.msra.mxu0 %v6056
  %6258 = vmatpush.bf16.msra.mxu0 %v6052
  %6259 = vmatpush.bf16.msra.mxu0 %v6048
  %6260 = vmatpush.bf16.msra.mxu0 %v6044
  %6261 = vmatpush.bf16.msra.mxu0 %v6040
  %6262 = vmatpush.bf16.msra.mxu0 %v6036
  %6263 = vmatpush.bf16.msra.mxu0 %v6032
  %6264 = vmatmul.bf16.gmra.mxu0 %v6093
  %v6265 = vpop.f32.mrf.mxu0
  %v6266 = vadd.f32 0.0, %v6265
  %v6267 = vpop.f32.mrf.mxu0
  %v6268 = vadd.f32 0.0, %v6267
  %6269 = vmatmul.bf16.gmra.mxu0 %v6094
  %v6270 = vpop.f32.mrf.mxu0
  %v6271 = vadd.f32 0.0, %v6270
  %v6272 = vpop.f32.mrf.mxu0
  %v6273 = vadd.f32 0.0, %v6272
  %6274 = vmatmul.bf16.gmra.mxu0 %v6095
  %v6275 = vpop.f32.mrf.mxu0
  %v6276 = vadd.f32 0.0, %v6275
  %v6277 = vpop.f32.mrf.mxu0
  %v6278 = vadd.f32 0.0, %v6277
  %6279 = vmatmul.bf16.gmra.mxu0 %v6096
  %v6280 = vpop.f32.mrf.mxu0
  %v6281 = vadd.f32 0.0, %v6280
  %v6282 = vpop.f32.mrf.mxu0
  %v6283 = vadd.f32 0.0, %v6282
  %6284 = vmatmul.bf16.gmra.mxu0 %v6097
  %v6285 = vpop.f32.mrf.mxu0
  %v6286 = vadd.f32 0.0, %v6285
  %v6287 = vpop.f32.mrf.mxu0
  %v6288 = vadd.f32 0.0, %v6287
  %6289 = vmatmul.bf16.gmra.mxu0 %v6098
  %v6290 = vpop.f32.mrf.mxu0
  %v6291 = vadd.f32 0.0, %v6290
  %v6292 = vpop.f32.mrf.mxu0
  %v6293 = vadd.f32 0.0, %v6292
  %6294 = vmatmul.bf16.gmra.mxu0 %v6099
  %v6295 = vpop.f32.mrf.mxu0
  %v6296 = vadd.f32 0.0, %v6295
  %v6297 = vpop.f32.mrf.mxu0
  %v6298 = vadd.f32 0.0, %v6297
  %6299 = vmatmul.bf16.gmra.mxu0 %v6100
  %v6300 = vpop.f32.mrf.mxu0
  %v6301 = vadd.f32 0.0, %v6300
  %v6302 = vpop.f32.mrf.mxu0
  %v6303 = vadd.f32 0.0, %v6302
  %6304 = vdwg.mxu0
  %v6305 = vadd.f32 %v5634, %v6119
  %v6306 = vadd.f32 %v5683, %v6168
  %v6307 = vadd.f32 %v5732, %v6217
  %v6308 = vadd.f32 %v5781, %v6266
  %v6309 = vadd.f32 %v5636, %v6121
  %v6310 = vadd.f32 %v5685, %v6170
  %v6311 = vadd.f32 %v5734, %v6219
  %v6312 = vadd.f32 %v5783, %v6268
  %v6313 = vadd.f32 %v5639, %v6124
  %v6314 = vadd.f32 %v5688, %v6173
  %v6315 = vadd.f32 %v5737, %v6222
  %v6316 = vadd.f32 %v5786, %v6271
  %v6317 = vadd.f32 %v5641, %v6126
  %v6318 = vadd.f32 %v5690, %v6175
  %v6319 = vadd.f32 %v5739, %v6224
  %v6320 = vadd.f32 %v5788, %v6273
  %v6321 = vadd.f32 %v5644, %v6129
  %v6322 = vadd.f32 %v5693, %v6178
  %v6323 = vadd.f32 %v5742, %v6227
  %v6324 = vadd.f32 %v5791, %v6276
  %v6325 = vadd.f32 %v5646, %v6131
  %v6326 = vadd.f32 %v5695, %v6180
  %v6327 = vadd.f32 %v5744, %v6229
  %v6328 = vadd.f32 %v5793, %v6278
  %v6329 = vadd.f32 %v5649, %v6134
  %v6330 = vadd.f32 %v5698, %v6183
  %v6331 = vadd.f32 %v5747, %v6232
  %v6332 = vadd.f32 %v5796, %v6281
  %v6333 = vadd.f32 %v5651, %v6136
  %v6334 = vadd.f32 %v5700, %v6185
  %v6335 = vadd.f32 %v5749, %v6234
  %v6336 = vadd.f32 %v5798, %v6283
  %v6337 = vadd.f32 %v5654, %v6139
  %v6338 = vadd.f32 %v5703, %v6188
  %v6339 = vadd.f32 %v5752, %v6237
  %v6340 = vadd.f32 %v5801, %v6286
  %v6341 = vadd.f32 %v5656, %v6141
  %v6342 = vadd.f32 %v5705, %v6190
  %v6343 = vadd.f32 %v5754, %v6239
  %v6344 = vadd.f32 %v5803, %v6288
  %v6345 = vadd.f32 %v5659, %v6144
  %v6346 = vadd.f32 %v5708, %v6193
  %v6347 = vadd.f32 %v5757, %v6242
  %v6348 = vadd.f32 %v5806, %v6291
  %v6349 = vadd.f32 %v5661, %v6146
  %v6350 = vadd.f32 %v5710, %v6195
  %v6351 = vadd.f32 %v5759, %v6244
  %v6352 = vadd.f32 %v5808, %v6293
  %v6353 = vadd.f32 %v5664, %v6149
  %v6354 = vadd.f32 %v5713, %v6198
  %v6355 = vadd.f32 %v5762, %v6247
  %v6356 = vadd.f32 %v5811, %v6296
  %v6357 = vadd.f32 %v5666, %v6151
  %v6358 = vadd.f32 %v5715, %v6200
  %v6359 = vadd.f32 %v5764, %v6249
  %v6360 = vadd.f32 %v5813, %v6298
  %v6361 = vadd.f32 %v5669, %v6154
  %v6362 = vadd.f32 %v5718, %v6203
  %v6363 = vadd.f32 %v5767, %v6252
  %v6364 = vadd.f32 %v5816, %v6301
  %v6365 = vadd.f32 %v5671, %v6156
  %v6366 = vadd.f32 %v5720, %v6205
  %v6367 = vadd.f32 %v5769, %v6254
  %v6368 = vadd.f32 %v5818, %v6303
  %6369 = vrot.lane.b32.xlu0 %v4979, 119
  %v6370 = vpop.permute.xlu0 %6369
  %6371 = vrot.lane.b32.xlu0 %v4983, 119
  %v6372 = vpop.permute.xlu0 %6371
  %6373 = vrot.lane.b32.xlu0 %v4987, 119
  %v6374 = vpop.permute.xlu0 %6373
  %6375 = vrot.lane.b32.xlu0 %v4991, 119
  %v6376 = vpop.permute.xlu0 %6375
  %6377 = vrot.lane.b32.xlu0 %v4995, 119
  %v6378 = vpop.permute.xlu0 %6377
  %6379 = vrot.lane.b32.xlu0 %v4999, 119
  %v6380 = vpop.permute.xlu0 %6379
  %6381 = vrot.lane.b32.xlu0 %v5003, 119
  %v6382 = vpop.permute.xlu0 %6381
  %6383 = vrot.lane.b32.xlu0 %v5007, 119
  %v6384 = vpop.permute.xlu0 %6383
  %6385 = vrot.lane.b32.xlu0 %v5011, 119
  %v6386 = vpop.permute.xlu0 %6385
  %6387 = vrot.lane.b32.xlu0 %v5015, 119
  %v6388 = vpop.permute.xlu0 %6387
  %6389 = vrot.lane.b32.xlu0 %v5019, 119
  %v6390 = vpop.permute.xlu0 %6389
  %6391 = vrot.lane.b32.xlu0 %v5023, 119
  %v6392 = vpop.permute.xlu0 %6391
  %6393 = vrot.lane.b32.xlu0 %v5027, 119
  %v6394 = vpop.permute.xlu0 %6393
  %6395 = vrot.lane.b32.xlu0 %v5031, 119
  %v6396 = vpop.permute.xlu0 %6395
  %6397 = vrot.lane.b32.xlu0 %v5035, 119
  %v6398 = vpop.permute.xlu0 %6397
  %6399 = vrot.lane.b32.xlu0 %v5039, 119
  %v6400 = vpop.permute.xlu0 %6399
  %6401 = vrot.lane.b32.xlu0 %v4980, 119
  %v6402 = vpop.permute.xlu0 %6401
  %6403 = vrot.lane.b32.xlu0 %v4984, 119
  %v6404 = vpop.permute.xlu0 %6403
  %6405 = vrot.lane.b32.xlu0 %v4988, 119
  %v6406 = vpop.permute.xlu0 %6405
  %6407 = vrot.lane.b32.xlu0 %v4992, 119
  %v6408 = vpop.permute.xlu0 %6407
  %6409 = vrot.lane.b32.xlu0 %v4996, 119
  %v6410 = vpop.permute.xlu0 %6409
  %6411 = vrot.lane.b32.xlu0 %v5000, 119
  %v6412 = vpop.permute.xlu0 %6411
  %6413 = vrot.lane.b32.xlu0 %v5004, 119
  %v6414 = vpop.permute.xlu0 %6413
  %6415 = vrot.lane.b32.xlu0 %v5008, 119
  %v6416 = vpop.permute.xlu0 %6415
  %6417 = vrot.lane.b32.xlu0 %v5012, 119
  %v6418 = vpop.permute.xlu0 %6417
  %6419 = vrot.lane.b32.xlu0 %v5016, 119
  %v6420 = vpop.permute.xlu0 %6419
  %6421 = vrot.lane.b32.xlu0 %v5020, 119
  %v6422 = vpop.permute.xlu0 %6421
  %6423 = vrot.lane.b32.xlu0 %v5024, 119
  %v6424 = vpop.permute.xlu0 %6423
  %6425 = vrot.lane.b32.xlu0 %v5028, 119
  %v6426 = vpop.permute.xlu0 %6425
  %6427 = vrot.lane.b32.xlu0 %v5032, 119
  %v6428 = vpop.permute.xlu0 %6427
  %6429 = vrot.lane.b32.xlu0 %v5036, 119
  %v6430 = vpop.permute.xlu0 %6429
  %6431 = vrot.lane.b32.xlu0 %v5040, 119
  %v6432 = vpop.permute.xlu0 %6431
  %6433 = vrot.lane.b32.xlu0 %v4981, 119
  %v6434 = vpop.permute.xlu0 %6433
  %6435 = vrot.lane.b32.xlu0 %v4985, 119
  %v6436 = vpop.permute.xlu0 %6435
  %6437 = vrot.lane.b32.xlu0 %v4989, 119
  %v6438 = vpop.permute.xlu0 %6437
  %6439 = vrot.lane.b32.xlu0 %v4993, 119
  %v6440 = vpop.permute.xlu0 %6439
  %6441 = vrot.lane.b32.xlu0 %v4997, 119
  %v6442 = vpop.permute.xlu0 %6441
  %6443 = vrot.lane.b32.xlu0 %v5001, 119
  %v6444 = vpop.permute.xlu0 %6443
  %6445 = vrot.lane.b32.xlu0 %v5005, 119
  %v6446 = vpop.permute.xlu0 %6445
  %6447 = vrot.lane.b32.xlu0 %v5009, 119
  %v6448 = vpop.permute.xlu0 %6447
  %6449 = vrot.lane.b32.xlu0 %v5013, 119
  %v6450 = vpop.permute.xlu0 %6449
  %6451 = vrot.lane.b32.xlu0 %v5017, 119
  %v6452 = vpop.permute.xlu0 %6451
  %6453 = vrot.lane.b32.xlu0 %v5021, 119
  %v6454 = vpop.permute.xlu0 %6453
  %6455 = vrot.lane.b32.xlu0 %v5025, 119
  %v6456 = vpop.permute.xlu0 %6455
  %6457 = vrot.lane.b32.xlu0 %v5029, 119
  %v6458 = vpop.permute.xlu0 %6457
  %6459 = vrot.lane.b32.xlu0 %v5033, 119
  %v6460 = vpop.permute.xlu0 %6459
  %6461 = vrot.lane.b32.xlu0 %v5037, 119
  %v6462 = vpop.permute.xlu0 %6461
  %6463 = vrot.lane.b32.xlu0 %v5041, 119
  %v6464 = vpop.permute.xlu0 %6463
  %6465 = vrot.lane.b32.xlu0 %v4982, 119
  %v6466 = vpop.permute.xlu0 %6465
  %6467 = vrot.lane.b32.xlu0 %v4986, 119
  %v6468 = vpop.permute.xlu0 %6467
  %6469 = vrot.lane.b32.xlu0 %v4990, 119
  %v6470 = vpop.permute.xlu0 %6469
  %6471 = vrot.lane.b32.xlu0 %v4994, 119
  %v6472 = vpop.permute.xlu0 %6471
  %6473 = vrot.lane.b32.xlu0 %v4998, 119
  %v6474 = vpop.permute.xlu0 %6473
  %6475 = vrot.lane.b32.xlu0 %v5002, 119
  %v6476 = vpop.permute.xlu0 %6475
  %6477 = vrot.lane.b32.xlu0 %v5006, 119
  %v6478 = vpop.permute.xlu0 %6477
  %6479 = vrot.lane.b32.xlu0 %v5010, 119
  %v6480 = vpop.permute.xlu0 %6479
  %6481 = vrot.lane.b32.xlu0 %v5014, 119
  %v6482 = vpop.permute.xlu0 %6481
  %6483 = vrot.lane.b32.xlu0 %v5018, 119
  %v6484 = vpop.permute.xlu0 %6483
  %6485 = vrot.lane.b32.xlu0 %v5022, 119
  %v6486 = vpop.permute.xlu0 %6485
  %6487 = vrot.lane.b32.xlu0 %v5026, 119
  %v6488 = vpop.permute.xlu0 %6487
  %6489 = vrot.lane.b32.xlu0 %v5030, 119
  %v6490 = vpop.permute.xlu0 %6489
  %6491 = vrot.lane.b32.xlu0 %v5034, 119
  %v6492 = vpop.permute.xlu0 %6491
  %6493 = vrot.lane.b32.xlu0 %v5038, 119
  %v6494 = vpop.permute.xlu0 %6493
  %6495 = vrot.lane.b32.xlu0 %v5042, 119
  %v6496 = vpop.permute.xlu0 %6495
  %vm6497 = vcmp.lt.s32.totalorder %v187, 119
  %v6498 = vsel %vm6497, %v6434, %v6466
  %v6499 = vsel %vm6497, %v6436, %v6468
  %v6500 = vsel %vm6497, %v6438, %v6470
  %v6501 = vsel %vm6497, %v6440, %v6472
  %v6502 = vsel %vm6497, %v6442, %v6474
  %v6503 = vsel %vm6497, %v6444, %v6476
  %v6504 = vsel %vm6497, %v6446, %v6478
  %v6505 = vsel %vm6497, %v6448, %v6480
  %v6506 = vsel %vm6497, %v6450, %v6482
  %v6507 = vsel %vm6497, %v6452, %v6484
  %v6508 = vsel %vm6497, %v6454, %v6486
  %v6509 = vsel %vm6497, %v6456, %v6488
  %v6510 = vsel %vm6497, %v6458, %v6490
  %v6511 = vsel %vm6497, %v6460, %v6492
  %v6512 = vsel %vm6497, %v6462, %v6494
  %v6513 = vsel %vm6497, %v6464, %v6496
  %v6514 = vsel %vm6497, %v6402, %v6434
  %v6515 = vsel %vm6497, %v6404, %v6436
  %v6516 = vsel %vm6497, %v6406, %v6438
  %v6517 = vsel %vm6497, %v6408, %v6440
  %v6518 = vsel %vm6497, %v6410, %v6442
  %v6519 = vsel %vm6497, %v6412, %v6444
  %v6520 = vsel %vm6497, %v6414, %v6446
  %v6521 = vsel %vm6497, %v6416, %v6448
  %v6522 = vsel %vm6497, %v6418, %v6450
  %v6523 = vsel %vm6497, %v6420, %v6452
  %v6524 = vsel %vm6497, %v6422, %v6454
  %v6525 = vsel %vm6497, %v6424, %v6456
  %v6526 = vsel %vm6497, %v6426, %v6458
  %v6527 = vsel %vm6497, %v6428, %v6460
  %v6528 = vsel %vm6497, %v6430, %v6462
  %v6529 = vsel %vm6497, %v6432, %v6464
  %v6530 = vsel %vm6497, %v6370, %v6402
  %v6531 = vsel %vm6497, %v6372, %v6404
  %v6532 = vsel %vm6497, %v6374, %v6406
  %v6533 = vsel %vm6497, %v6376, %v6408
  %v6534 = vsel %vm6497, %v6378, %v6410
  %v6535 = vsel %vm6497, %v6380, %v6412
  %v6536 = vsel %vm6497, %v6382, %v6414
  %v6537 = vsel %vm6497, %v6384, %v6416
  %v6538 = vsel %vm6497, %v6386, %v6418
  %v6539 = vsel %vm6497, %v6388, %v6420
  %v6540 = vsel %vm6497, %v6390, %v6422
  %v6541 = vsel %vm6497, %v6392, %v6424
  %v6542 = vsel %vm6497, %v6394, %v6426
  %v6543 = vsel %vm6497, %v6396, %v6428
  %v6544 = vsel %vm6497, %v6398, %v6430
  %v6545 = vsel %vm6497, %v6400, %v6432
  %v6546 = vsel %vm6497, %v6466, %v6370
  %v6547 = vsel %vm6497, %v6468, %v6372
  %v6548 = vsel %vm6497, %v6470, %v6374
  %v6549 = vsel %vm6497, %v6472, %v6376
  %v6550 = vsel %vm6497, %v6474, %v6378
  %v6551 = vsel %vm6497, %v6476, %v6380
  %v6552 = vsel %vm6497, %v6478, %v6382
  %v6553 = vsel %vm6497, %v6480, %v6384
  %v6554 = vsel %vm6497, %v6482, %v6386
  %v6555 = vsel %vm6497, %v6484, %v6388
  %v6556 = vsel %vm6497, %v6486, %v6390
  %v6557 = vsel %vm6497, %v6488, %v6392
  %v6558 = vsel %vm6497, %v6490, %v6394
  %v6559 = vsel %vm6497, %v6492, %v6396
  %v6560 = vsel %vm6497, %v6494, %v6398
  %v6561 = vsel %vm6497, %v6496, %v6400
  %s6562 = scalar_lea.vmem %s3, 192
  %v6563 = vld [vmem:[%s6562] sm:$0xf]
  %v6564 = vld [vmem:[%s6562 + $0x4] sm:$0xf]
  %v6565 = vld [vmem:[%s6562 + $0x8] sm:$0xf]
  %v6566 = vld [vmem:[%s6562 + $0xc] sm:$0xf]
  %v6567 = vld [vmem:[%s6562 + $0x10] sm:$0xf]
  %v6568 = vld [vmem:[%s6562 + $0x14] sm:$0xf]
  %v6569 = vld [vmem:[%s6562 + $0x18] sm:$0xf]
  %v6570 = vld [vmem:[%s6562 + $0x1c] sm:$0xf]
  %v6571 = vld [vmem:[%s6562 + $0x20] sm:$0xf]
  %v6572 = vld [vmem:[%s6562 + $0x24] sm:$0xf]
  %v6573 = vld [vmem:[%s6562 + $0x28] sm:$0xf]
  %v6574 = vld [vmem:[%s6562 + $0x2c] sm:$0xf]
  %v6575 = vld [vmem:[%s6562 + $0x30] sm:$0xf]
  %v6576 = vld [vmem:[%s6562 + $0x34] sm:$0xf]
  %v6577 = vld [vmem:[%s6562 + $0x38] sm:$0xf]
  %v6578 = vld [vmem:[%s6562 + $0x3c] sm:$0xf]
  %v6579 = vpack.c.bf16 %v6531, %v6530
  %v6580 = vpack.c.bf16 %v6515, %v6514
  %v6581 = vpack.c.bf16 %v6499, %v6498
  %v6582 = vpack.c.bf16 %v6547, %v6546
  %v6583 = vpack.c.bf16 %v6533, %v6532
  %v6584 = vpack.c.bf16 %v6517, %v6516
  %v6585 = vpack.c.bf16 %v6501, %v6500
  %v6586 = vpack.c.bf16 %v6549, %v6548
  %v6587 = vpack.c.bf16 %v6535, %v6534
  %v6588 = vpack.c.bf16 %v6519, %v6518
  %v6589 = vpack.c.bf16 %v6503, %v6502
  %v6590 = vpack.c.bf16 %v6551, %v6550
  %v6591 = vpack.c.bf16 %v6537, %v6536
  %v6592 = vpack.c.bf16 %v6521, %v6520
  %v6593 = vpack.c.bf16 %v6505, %v6504
  %v6594 = vpack.c.bf16 %v6553, %v6552
  %v6595 = vpack.c.bf16 %v6539, %v6538
  %v6596 = vpack.c.bf16 %v6523, %v6522
  %v6597 = vpack.c.bf16 %v6507, %v6506
  %v6598 = vpack.c.bf16 %v6555, %v6554
  %v6599 = vpack.c.bf16 %v6541, %v6540
  %v6600 = vpack.c.bf16 %v6525, %v6524
  %v6601 = vpack.c.bf16 %v6509, %v6508
  %v6602 = vpack.c.bf16 %v6557, %v6556
  %v6603 = vpack.c.bf16 %v6543, %v6542
  %v6604 = vpack.c.bf16 %v6527, %v6526
  %v6605 = vpack.c.bf16 %v6511, %v6510
  %v6606 = vpack.c.bf16 %v6559, %v6558
  %v6607 = vpack.c.bf16 %v6545, %v6544
  %v6608 = vpack.c.bf16 %v6529, %v6528
  %v6609 = vpack.c.bf16 %v6513, %v6512
  %v6610 = vpack.c.bf16 %v6561, %v6560
  %v6627 = vunpack.c.l.b16 %v6563
  %v6628 = vunpack.c.l.b16 %v6564
  %v6629 = vunpack.c.l.b16 %v6565
  %v6630 = vunpack.c.l.b16 %v6566
  %v6631 = vunpack.c.l.b16 %v6567
  %v6632 = vunpack.c.l.b16 %v6568
  %v6633 = vunpack.c.l.b16 %v6569
  %v6634 = vunpack.c.l.b16 %v6570
  %v6635 = vunpack.c.l.b16 %v6571
  %v6636 = vunpack.c.l.b16 %v6572
  %v6637 = vunpack.c.l.b16 %v6573
  %v6638 = vunpack.c.l.b16 %v6574
  %v6639 = vunpack.c.l.b16 %v6575
  %v6640 = vunpack.c.l.b16 %v6576
  %v6641 = vunpack.c.l.b16 %v6577
  %v6642 = vunpack.c.l.b16 %v6578
  %v6643 = vpack.c.b16 %v6628, %v6627
  %v6644 = vpack.c.b16 %v6630, %v6629
  %v6645 = vpack.c.b16 %v6632, %v6631
  %v6646 = vpack.c.b16 %v6634, %v6633
  %v6647 = vpack.c.b16 %v6636, %v6635
  %v6648 = vpack.c.b16 %v6638, %v6637
  %v6649 = vpack.c.b16 %v6640, %v6639
  %v6650 = vpack.c.b16 %v6642, %v6641
  %6659 = vmatpush.bf16.msra.mxu0 %v6607
  %6660 = vmatpush.bf16.msra.mxu0 %v6603
  %6661 = vmatpush.bf16.msra.mxu0 %v6599
  %6662 = vmatpush.bf16.msra.mxu0 %v6595
  %6663 = vmatpush.bf16.msra.mxu0 %v6591
  %6664 = vmatpush.bf16.msra.mxu0 %v6587
  %6665 = vmatpush.bf16.msra.mxu0 %v6583
  %6666 = vmatpush.bf16.msra.mxu0 %v6579
  %6667 = vmatmul.bf16.gmra.mxu0 %v6643
  %v6668 = vpop.f32.mrf.mxu0
  %v6669 = vadd.f32 0.0, %v6668
  %v6670 = vpop.f32.mrf.mxu0
  %v6671 = vadd.f32 0.0, %v6670
  %6672 = vmatmul.bf16.gmra.mxu0 %v6644
  %v6673 = vpop.f32.mrf.mxu0
  %v6674 = vadd.f32 0.0, %v6673
  %v6675 = vpop.f32.mrf.mxu0
  %v6676 = vadd.f32 0.0, %v6675
  %6677 = vmatmul.bf16.gmra.mxu0 %v6645
  %v6678 = vpop.f32.mrf.mxu0
  %v6679 = vadd.f32 0.0, %v6678
  %v6680 = vpop.f32.mrf.mxu0
  %v6681 = vadd.f32 0.0, %v6680
  %6682 = vmatmul.bf16.gmra.mxu0 %v6646
  %v6683 = vpop.f32.mrf.mxu0
  %v6684 = vadd.f32 0.0, %v6683
  %v6685 = vpop.f32.mrf.mxu0
  %v6686 = vadd.f32 0.0, %v6685
  %6687 = vmatmul.bf16.gmra.mxu0 %v6647
  %v6688 = vpop.f32.mrf.mxu0
  %v6689 = vadd.f32 0.0, %v6688
  %v6690 = vpop.f32.mrf.mxu0
  %v6691 = vadd.f32 0.0, %v6690
  %6692 = vmatmul.bf16.gmra.mxu0 %v6648
  %v6693 = vpop.f32.mrf.mxu0
  %v6694 = vadd.f32 0.0, %v6693
  %v6695 = vpop.f32.mrf.mxu0
  %v6696 = vadd.f32 0.0, %v6695
  %6697 = vmatmul.bf16.gmra.mxu0 %v6649
  %v6698 = vpop.f32.mrf.mxu0
  %v6699 = vadd.f32 0.0, %v6698
  %v6700 = vpop.f32.mrf.mxu0
  %v6701 = vadd.f32 0.0, %v6700
  %6702 = vmatmul.bf16.gmra.mxu0 %v6650
  %v6703 = vpop.f32.mrf.mxu0
  %v6704 = vadd.f32 0.0, %v6703
  %v6705 = vpop.f32.mrf.mxu0
  %v6706 = vadd.f32 0.0, %v6705
  %6707 = vdwg.mxu0
  %6708 = vmatpush.bf16.msra.mxu0 %v6608
  %6709 = vmatpush.bf16.msra.mxu0 %v6604
  %6710 = vmatpush.bf16.msra.mxu0 %v6600
  %6711 = vmatpush.bf16.msra.mxu0 %v6596
  %6712 = vmatpush.bf16.msra.mxu0 %v6592
  %6713 = vmatpush.bf16.msra.mxu0 %v6588
  %6714 = vmatpush.bf16.msra.mxu0 %v6584
  %6715 = vmatpush.bf16.msra.mxu0 %v6580
  %6716 = vmatmul.bf16.gmra.mxu0 %v6643
  %v6717 = vpop.f32.mrf.mxu0
  %v6718 = vadd.f32 0.0, %v6717
  %v6719 = vpop.f32.mrf.mxu0
  %v6720 = vadd.f32 0.0, %v6719
  %6721 = vmatmul.bf16.gmra.mxu0 %v6644
  %v6722 = vpop.f32.mrf.mxu0
  %v6723 = vadd.f32 0.0, %v6722
  %v6724 = vpop.f32.mrf.mxu0
  %v6725 = vadd.f32 0.0, %v6724
  %6726 = vmatmul.bf16.gmra.mxu0 %v6645
  %v6727 = vpop.f32.mrf.mxu0
  %v6728 = vadd.f32 0.0, %v6727
  %v6729 = vpop.f32.mrf.mxu0
  %v6730 = vadd.f32 0.0, %v6729
  %6731 = vmatmul.bf16.gmra.mxu0 %v6646
  %v6732 = vpop.f32.mrf.mxu0
  %v6733 = vadd.f32 0.0, %v6732
  %v6734 = vpop.f32.mrf.mxu0
  %v6735 = vadd.f32 0.0, %v6734
  %6736 = vmatmul.bf16.gmra.mxu0 %v6647
  %v6737 = vpop.f32.mrf.mxu0
  %v6738 = vadd.f32 0.0, %v6737
  %v6739 = vpop.f32.mrf.mxu0
  %v6740 = vadd.f32 0.0, %v6739
  %6741 = vmatmul.bf16.gmra.mxu0 %v6648
  %v6742 = vpop.f32.mrf.mxu0
  %v6743 = vadd.f32 0.0, %v6742
  %v6744 = vpop.f32.mrf.mxu0
  %v6745 = vadd.f32 0.0, %v6744
  %6746 = vmatmul.bf16.gmra.mxu0 %v6649
  %v6747 = vpop.f32.mrf.mxu0
  %v6748 = vadd.f32 0.0, %v6747
  %v6749 = vpop.f32.mrf.mxu0
  %v6750 = vadd.f32 0.0, %v6749
  %6751 = vmatmul.bf16.gmra.mxu0 %v6650
  %v6752 = vpop.f32.mrf.mxu0
  %v6753 = vadd.f32 0.0, %v6752
  %v6754 = vpop.f32.mrf.mxu0
  %v6755 = vadd.f32 0.0, %v6754
  %6756 = vdwg.mxu0
  %6757 = vmatpush.bf16.msra.mxu0 %v6609
  %6758 = vmatpush.bf16.msra.mxu0 %v6605
  %6759 = vmatpush.bf16.msra.mxu0 %v6601
  %6760 = vmatpush.bf16.msra.mxu0 %v6597
  %6761 = vmatpush.bf16.msra.mxu0 %v6593
  %6762 = vmatpush.bf16.msra.mxu0 %v6589
  %6763 = vmatpush.bf16.msra.mxu0 %v6585
  %6764 = vmatpush.bf16.msra.mxu0 %v6581
  %6765 = vmatmul.bf16.gmra.mxu0 %v6643
  %v6766 = vpop.f32.mrf.mxu0
  %v6767 = vadd.f32 0.0, %v6766
  %v6768 = vpop.f32.mrf.mxu0
  %v6769 = vadd.f32 0.0, %v6768
  %6770 = vmatmul.bf16.gmra.mxu0 %v6644
  %v6771 = vpop.f32.mrf.mxu0
  %v6772 = vadd.f32 0.0, %v6771
  %v6773 = vpop.f32.mrf.mxu0
  %v6774 = vadd.f32 0.0, %v6773
  %6775 = vmatmul.bf16.gmra.mxu0 %v6645
  %v6776 = vpop.f32.mrf.mxu0
  %v6777 = vadd.f32 0.0, %v6776
  %v6778 = vpop.f32.mrf.mxu0
  %v6779 = vadd.f32 0.0, %v6778
  %6780 = vmatmul.bf16.gmra.mxu0 %v6646
  %v6781 = vpop.f32.mrf.mxu0
  %v6782 = vadd.f32 0.0, %v6781
  %v6783 = vpop.f32.mrf.mxu0
  %v6784 = vadd.f32 0.0, %v6783
  %6785 = vmatmul.bf16.gmra.mxu0 %v6647
  %v6786 = vpop.f32.mrf.mxu0
  %v6787 = vadd.f32 0.0, %v6786
  %v6788 = vpop.f32.mrf.mxu0
  %v6789 = vadd.f32 0.0, %v6788
  %6790 = vmatmul.bf16.gmra.mxu0 %v6648
  %v6791 = vpop.f32.mrf.mxu0
  %v6792 = vadd.f32 0.0, %v6791
  %v6793 = vpop.f32.mrf.mxu0
  %v6794 = vadd.f32 0.0, %v6793
  %6795 = vmatmul.bf16.gmra.mxu0 %v6649
  %v6796 = vpop.f32.mrf.mxu0
  %v6797 = vadd.f32 0.0, %v6796
  %v6798 = vpop.f32.mrf.mxu0
  %v6799 = vadd.f32 0.0, %v6798
  %6800 = vmatmul.bf16.gmra.mxu0 %v6650
  %v6801 = vpop.f32.mrf.mxu0
  %v6802 = vadd.f32 0.0, %v6801
  %v6803 = vpop.f32.mrf.mxu0
  %v6804 = vadd.f32 0.0, %v6803
  %6805 = vdwg.mxu0
  %6806 = vmatpush.bf16.msra.mxu0 %v6610
  %6807 = vmatpush.bf16.msra.mxu0 %v6606
  %6808 = vmatpush.bf16.msra.mxu0 %v6602
  %6809 = vmatpush.bf16.msra.mxu0 %v6598
  %6810 = vmatpush.bf16.msra.mxu0 %v6594
  %6811 = vmatpush.bf16.msra.mxu0 %v6590
  %6812 = vmatpush.bf16.msra.mxu0 %v6586
  %6813 = vmatpush.bf16.msra.mxu0 %v6582
  %6814 = vmatmul.bf16.gmra.mxu0 %v6643
  %v6815 = vpop.f32.mrf.mxu0
  %v6816 = vadd.f32 0.0, %v6815
  %v6817 = vpop.f32.mrf.mxu0
  %v6818 = vadd.f32 0.0, %v6817
  %6819 = vmatmul.bf16.gmra.mxu0 %v6644
  %v6820 = vpop.f32.mrf.mxu0
  %v6821 = vadd.f32 0.0, %v6820
  %v6822 = vpop.f32.mrf.mxu0
  %v6823 = vadd.f32 0.0, %v6822
  %6824 = vmatmul.bf16.gmra.mxu0 %v6645
  %v6825 = vpop.f32.mrf.mxu0
  %v6826 = vadd.f32 0.0, %v6825
  %v6827 = vpop.f32.mrf.mxu0
  %v6828 = vadd.f32 0.0, %v6827
  %6829 = vmatmul.bf16.gmra.mxu0 %v6646
  %v6830 = vpop.f32.mrf.mxu0
  %v6831 = vadd.f32 0.0, %v6830
  %v6832 = vpop.f32.mrf.mxu0
  %v6833 = vadd.f32 0.0, %v6832
  %6834 = vmatmul.bf16.gmra.mxu0 %v6647
  %v6835 = vpop.f32.mrf.mxu0
  %v6836 = vadd.f32 0.0, %v6835
  %v6837 = vpop.f32.mrf.mxu0
  %v6838 = vadd.f32 0.0, %v6837
  %6839 = vmatmul.bf16.gmra.mxu0 %v6648
  %v6840 = vpop.f32.mrf.mxu0
  %v6841 = vadd.f32 0.0, %v6840
  %v6842 = vpop.f32.mrf.mxu0
  %v6843 = vadd.f32 0.0, %v6842
  %6844 = vmatmul.bf16.gmra.mxu0 %v6649
  %v6845 = vpop.f32.mrf.mxu0
  %v6846 = vadd.f32 0.0, %v6845
  %v6847 = vpop.f32.mrf.mxu0
  %v6848 = vadd.f32 0.0, %v6847
  %6849 = vmatmul.bf16.gmra.mxu0 %v6650
  %v6850 = vpop.f32.mrf.mxu0
  %v6851 = vadd.f32 0.0, %v6850
  %v6852 = vpop.f32.mrf.mxu0
  %v6853 = vadd.f32 0.0, %v6852
  %6854 = vdwg.mxu0
  %v6855 = vadd.f32 %v6305, %v6669
  %v6856 = vadd.f32 %v6306, %v6718
  %v6857 = vadd.f32 %v6307, %v6767
  %v6858 = vadd.f32 %v6308, %v6816
  %v6859 = vadd.f32 %v6309, %v6671
  %v6860 = vadd.f32 %v6310, %v6720
  %v6861 = vadd.f32 %v6311, %v6769
  %v6862 = vadd.f32 %v6312, %v6818
  %v6863 = vadd.f32 %v6313, %v6674
  %v6864 = vadd.f32 %v6314, %v6723
  %v6865 = vadd.f32 %v6315, %v6772
  %v6866 = vadd.f32 %v6316, %v6821
  %v6867 = vadd.f32 %v6317, %v6676
  %v6868 = vadd.f32 %v6318, %v6725
  %v6869 = vadd.f32 %v6319, %v6774
  %v6870 = vadd.f32 %v6320, %v6823
  %v6871 = vadd.f32 %v6321, %v6679
  %v6872 = vadd.f32 %v6322, %v6728
  %v6873 = vadd.f32 %v6323, %v6777
  %v6874 = vadd.f32 %v6324, %v6826
  %v6875 = vadd.f32 %v6325, %v6681
  %v6876 = vadd.f32 %v6326, %v6730
  %v6877 = vadd.f32 %v6327, %v6779
  %v6878 = vadd.f32 %v6328, %v6828
  %v6879 = vadd.f32 %v6329, %v6684
  %v6880 = vadd.f32 %v6330, %v6733
  %v6881 = vadd.f32 %v6331, %v6782
  %v6882 = vadd.f32 %v6332, %v6831
  %v6883 = vadd.f32 %v6333, %v6686
  %v6884 = vadd.f32 %v6334, %v6735
  %v6885 = vadd.f32 %v6335, %v6784
  %v6886 = vadd.f32 %v6336, %v6833
  %v6887 = vadd.f32 %v6337, %v6689
  %v6888 = vadd.f32 %v6338, %v6738
  %v6889 = vadd.f32 %v6339, %v6787
  %v6890 = vadd.f32 %v6340, %v6836
  %v6891 = vadd.f32 %v6341, %v6691
  %v6892 = vadd.f32 %v6342, %v6740
  %v6893 = vadd.f32 %v6343, %v6789
  %v6894 = vadd.f32 %v6344, %v6838
  %v6895 = vadd.f32 %v6345, %v6694
  %v6896 = vadd.f32 %v6346, %v6743
  %v6897 = vadd.f32 %v6347, %v6792
  %v6898 = vadd.f32 %v6348, %v6841
  %v6899 = vadd.f32 %v6349, %v6696
  %v6900 = vadd.f32 %v6350, %v6745
  %v6901 = vadd.f32 %v6351, %v6794
  %v6902 = vadd.f32 %v6352, %v6843
  %v6903 = vadd.f32 %v6353, %v6699
  %v6904 = vadd.f32 %v6354, %v6748
  %v6905 = vadd.f32 %v6355, %v6797
  %v6906 = vadd.f32 %v6356, %v6846
  %v6907 = vadd.f32 %v6357, %v6701
  %v6908 = vadd.f32 %v6358, %v6750
  %v6909 = vadd.f32 %v6359, %v6799
  %v6910 = vadd.f32 %v6360, %v6848
  %v6911 = vadd.f32 %v6361, %v6704
  %v6912 = vadd.f32 %v6362, %v6753
  %v6913 = vadd.f32 %v6363, %v6802
  %v6914 = vadd.f32 %v6364, %v6851
  %v6915 = vadd.f32 %v6365, %v6706
  %v6916 = vadd.f32 %v6366, %v6755
  %v6917 = vadd.f32 %v6367, %v6804
  %v6918 = vadd.f32 %v6368, %v6853
  %6919 = vrot.lane.b32.xlu0 %v4979, 116
  %v6920 = vpop.permute.xlu0 %6919
  %6921 = vrot.lane.b32.xlu0 %v4983, 116
  %v6922 = vpop.permute.xlu0 %6921
  %6923 = vrot.lane.b32.xlu0 %v4987, 116
  %v6924 = vpop.permute.xlu0 %6923
  %6925 = vrot.lane.b32.xlu0 %v4991, 116
  %v6926 = vpop.permute.xlu0 %6925
  %6927 = vrot.lane.b32.xlu0 %v4995, 116
  %v6928 = vpop.permute.xlu0 %6927
  %6929 = vrot.lane.b32.xlu0 %v4999, 116
  %v6930 = vpop.permute.xlu0 %6929
  %6931 = vrot.lane.b32.xlu0 %v5003, 116
  %v6932 = vpop.permute.xlu0 %6931
  %6933 = vrot.lane.b32.xlu0 %v5007, 116
  %v6934 = vpop.permute.xlu0 %6933
  %6935 = vrot.lane.b32.xlu0 %v5011, 116
  %v6936 = vpop.permute.xlu0 %6935
  %6937 = vrot.lane.b32.xlu0 %v5015, 116
  %v6938 = vpop.permute.xlu0 %6937
  %6939 = vrot.lane.b32.xlu0 %v5019, 116
  %v6940 = vpop.permute.xlu0 %6939
  %6941 = vrot.lane.b32.xlu0 %v5023, 116
  %v6942 = vpop.permute.xlu0 %6941
  %6943 = vrot.lane.b32.xlu0 %v5027, 116
  %v6944 = vpop.permute.xlu0 %6943
  %6945 = vrot.lane.b32.xlu0 %v5031, 116
  %v6946 = vpop.permute.xlu0 %6945
  %6947 = vrot.lane.b32.xlu0 %v5035, 116
  %v6948 = vpop.permute.xlu0 %6947
  %6949 = vrot.lane.b32.xlu0 %v5039, 116
  %v6950 = vpop.permute.xlu0 %6949
  %6951 = vrot.lane.b32.xlu0 %v4980, 116
  %v6952 = vpop.permute.xlu0 %6951
  %6953 = vrot.lane.b32.xlu0 %v4984, 116
  %v6954 = vpop.permute.xlu0 %6953
  %6955 = vrot.lane.b32.xlu0 %v4988, 116
  %v6956 = vpop.permute.xlu0 %6955
  %6957 = vrot.lane.b32.xlu0 %v4992, 116
  %v6958 = vpop.permute.xlu0 %6957
  %6959 = vrot.lane.b32.xlu0 %v4996, 116
  %v6960 = vpop.permute.xlu0 %6959
  %6961 = vrot.lane.b32.xlu0 %v5000, 116
  %v6962 = vpop.permute.xlu0 %6961
  %6963 = vrot.lane.b32.xlu0 %v5004, 116
  %v6964 = vpop.permute.xlu0 %6963
  %6965 = vrot.lane.b32.xlu0 %v5008, 116
  %v6966 = vpop.permute.xlu0 %6965
  %6967 = vrot.lane.b32.xlu0 %v5012, 116
  %v6968 = vpop.permute.xlu0 %6967
  %6969 = vrot.lane.b32.xlu0 %v5016, 116
  %v6970 = vpop.permute.xlu0 %6969
  %6971 = vrot.lane.b32.xlu0 %v5020, 116
  %v6972 = vpop.permute.xlu0 %6971
  %6973 = vrot.lane.b32.xlu0 %v5024, 116
  %v6974 = vpop.permute.xlu0 %6973
  %6975 = vrot.lane.b32.xlu0 %v5028, 116
  %v6976 = vpop.permute.xlu0 %6975
  %6977 = vrot.lane.b32.xlu0 %v5032, 116
  %v6978 = vpop.permute.xlu0 %6977
  %6979 = vrot.lane.b32.xlu0 %v5036, 116
  %v6980 = vpop.permute.xlu0 %6979
  %6981 = vrot.lane.b32.xlu0 %v5040, 116
  %v6982 = vpop.permute.xlu0 %6981
  %6983 = vrot.lane.b32.xlu0 %v4981, 116
  %v6984 = vpop.permute.xlu0 %6983
  %6985 = vrot.lane.b32.xlu0 %v4985, 116
  %v6986 = vpop.permute.xlu0 %6985
  %6987 = vrot.lane.b32.xlu0 %v4989, 116
  %v6988 = vpop.permute.xlu0 %6987
  %6989 = vrot.lane.b32.xlu0 %v4993, 116
  %v6990 = vpop.permute.xlu0 %6989
  %6991 = vrot.lane.b32.xlu0 %v4997, 116
  %v6992 = vpop.permute.xlu0 %6991
  %6993 = vrot.lane.b32.xlu0 %v5001, 116
  %v6994 = vpop.permute.xlu0 %6993
  %6995 = vrot.lane.b32.xlu0 %v5005, 116
  %v6996 = vpop.permute.xlu0 %6995
  %6997 = vrot.lane.b32.xlu0 %v5009, 116
  %v6998 = vpop.permute.xlu0 %6997
  %6999 = vrot.lane.b32.xlu0 %v5013, 116
  %v7000 = vpop.permute.xlu0 %6999
  %7001 = vrot.lane.b32.xlu0 %v5017, 116
  %v7002 = vpop.permute.xlu0 %7001
  %7003 = vrot.lane.b32.xlu0 %v5021, 116
  %v7004 = vpop.permute.xlu0 %7003
  %7005 = vrot.lane.b32.xlu0 %v5025, 116
  %v7006 = vpop.permute.xlu0 %7005
  %7007 = vrot.lane.b32.xlu0 %v5029, 116
  %v7008 = vpop.permute.xlu0 %7007
  %7009 = vrot.lane.b32.xlu0 %v5033, 116
  %v7010 = vpop.permute.xlu0 %7009
  %7011 = vrot.lane.b32.xlu0 %v5037, 116
  %v7012 = vpop.permute.xlu0 %7011
  %7013 = vrot.lane.b32.xlu0 %v5041, 116
  %v7014 = vpop.permute.xlu0 %7013
  %7015 = vrot.lane.b32.xlu0 %v4982, 116
  %v7016 = vpop.permute.xlu0 %7015
  %7017 = vrot.lane.b32.xlu0 %v4986, 116
  %v7018 = vpop.permute.xlu0 %7017
  %7019 = vrot.lane.b32.xlu0 %v4990, 116
  %v7020 = vpop.permute.xlu0 %7019
  %7021 = vrot.lane.b32.xlu0 %v4994, 116
  %v7022 = vpop.permute.xlu0 %7021
  %7023 = vrot.lane.b32.xlu0 %v4998, 116
  %v7024 = vpop.permute.xlu0 %7023
  %7025 = vrot.lane.b32.xlu0 %v5002, 116
  %v7026 = vpop.permute.xlu0 %7025
  %7027 = vrot.lane.b32.xlu0 %v5006, 116
  %v7028 = vpop.permute.xlu0 %7027
  %7029 = vrot.lane.b32.xlu0 %v5010, 116
  %v7030 = vpop.permute.xlu0 %7029
  %7031 = vrot.lane.b32.xlu0 %v5014, 116
  %v7032 = vpop.permute.xlu0 %7031
  %7033 = vrot.lane.b32.xlu0 %v5018, 116
  %v7034 = vpop.permute.xlu0 %7033
  %7035 = vrot.lane.b32.xlu0 %v5022, 116
  %v7036 = vpop.permute.xlu0 %7035
  %7037 = vrot.lane.b32.xlu0 %v5026, 116
  %v7038 = vpop.permute.xlu0 %7037
  %7039 = vrot.lane.b32.xlu0 %v5030, 116
  %v7040 = vpop.permute.xlu0 %7039
  %7041 = vrot.lane.b32.xlu0 %v5034, 116
  %v7042 = vpop.permute.xlu0 %7041
  %7043 = vrot.lane.b32.xlu0 %v5038, 116
  %v7044 = vpop.permute.xlu0 %7043
  %7045 = vrot.lane.b32.xlu0 %v5042, 116
  %v7046 = vpop.permute.xlu0 %7045
  %vm7047 = vcmp.lt.s32.totalorder %v187, 116
  %v7048 = vsel %vm7047, %v6984, %v7016
  %v7049 = vsel %vm7047, %v6986, %v7018
  %v7050 = vsel %vm7047, %v6988, %v7020
  %v7051 = vsel %vm7047, %v6990, %v7022
  %v7052 = vsel %vm7047, %v6992, %v7024
  %v7053 = vsel %vm7047, %v6994, %v7026
  %v7054 = vsel %vm7047, %v6996, %v7028
  %v7055 = vsel %vm7047, %v6998, %v7030
  %v7056 = vsel %vm7047, %v7000, %v7032
  %v7057 = vsel %vm7047, %v7002, %v7034
  %v7058 = vsel %vm7047, %v7004, %v7036
  %v7059 = vsel %vm7047, %v7006, %v7038
  %v7060 = vsel %vm7047, %v7008, %v7040
  %v7061 = vsel %vm7047, %v7010, %v7042
  %v7062 = vsel %vm7047, %v7012, %v7044
  %v7063 = vsel %vm7047, %v7014, %v7046
  %v7064 = vsel %vm7047, %v6952, %v6984
  %v7065 = vsel %vm7047, %v6954, %v6986
  %v7066 = vsel %vm7047, %v6956, %v6988
  %v7067 = vsel %vm7047, %v6958, %v6990
  %v7068 = vsel %vm7047, %v6960, %v6992
  %v7069 = vsel %vm7047, %v6962, %v6994
  %v7070 = vsel %vm7047, %v6964, %v6996
  %v7071 = vsel %vm7047, %v6966, %v6998
  %v7072 = vsel %vm7047, %v6968, %v7000
  %v7073 = vsel %vm7047, %v6970, %v7002
  %v7074 = vsel %vm7047, %v6972, %v7004
  %v7075 = vsel %vm7047, %v6974, %v7006
  %v7076 = vsel %vm7047, %v6976, %v7008
  %v7077 = vsel %vm7047, %v6978, %v7010
  %v7078 = vsel %vm7047, %v6980, %v7012
  %v7079 = vsel %vm7047, %v6982, %v7014
  %v7080 = vsel %vm7047, %v6920, %v6952
  %v7081 = vsel %vm7047, %v6922, %v6954
  %v7082 = vsel %vm7047, %v6924, %v6956
  %v7083 = vsel %vm7047, %v6926, %v6958
  %v7084 = vsel %vm7047, %v6928, %v6960
  %v7085 = vsel %vm7047, %v6930, %v6962
  %v7086 = vsel %vm7047, %v6932, %v6964
  %v7087 = vsel %vm7047, %v6934, %v6966
  %v7088 = vsel %vm7047, %v6936, %v6968
  %v7089 = vsel %vm7047, %v6938, %v6970
  %v7090 = vsel %vm7047, %v6940, %v6972
  %v7091 = vsel %vm7047, %v6942, %v6974
  %v7092 = vsel %vm7047, %v6944, %v6976
  %v7093 = vsel %vm7047, %v6946, %v6978
  %v7094 = vsel %vm7047, %v6948, %v6980
  %v7095 = vsel %vm7047, %v6950, %v6982
  %v7096 = vsel %vm7047, %v7016, %v6920
  %v7097 = vsel %vm7047, %v7018, %v6922
  %v7098 = vsel %vm7047, %v7020, %v6924
  %v7099 = vsel %vm7047, %v7022, %v6926
  %v7100 = vsel %vm7047, %v7024, %v6928
  %v7101 = vsel %vm7047, %v7026, %v6930
  %v7102 = vsel %vm7047, %v7028, %v6932
  %v7103 = vsel %vm7047, %v7030, %v6934
  %v7104 = vsel %vm7047, %v7032, %v6936
  %v7105 = vsel %vm7047, %v7034, %v6938
  %v7106 = vsel %vm7047, %v7036, %v6940
  %v7107 = vsel %vm7047, %v7038, %v6942
  %v7108 = vsel %vm7047, %v7040, %v6944
  %v7109 = vsel %vm7047, %v7042, %v6946
  %v7110 = vsel %vm7047, %v7044, %v6948
  %v7111 = vsel %vm7047, %v7046, %v6950
  %s7112 = scalar_lea.vmem %s3, 256
  %v7113 = vld [vmem:[%s7112] sm:$0xf]
  %v7114 = vld [vmem:[%s7112 + $0x4] sm:$0xf]
  %v7115 = vld [vmem:[%s7112 + $0x8] sm:$0xf]
  %v7116 = vld [vmem:[%s7112 + $0xc] sm:$0xf]
  %v7117 = vld [vmem:[%s7112 + $0x10] sm:$0xf]
  %v7118 = vld [vmem:[%s7112 + $0x14] sm:$0xf]
  %v7119 = vld [vmem:[%s7112 + $0x18] sm:$0xf]
  %v7120 = vld [vmem:[%s7112 + $0x1c] sm:$0xf]
  %v7121 = vld [vmem:[%s7112 + $0x20] sm:$0xf]
  %v7122 = vld [vmem:[%s7112 + $0x24] sm:$0xf]
  %v7123 = vld [vmem:[%s7112 + $0x28] sm:$0xf]
  %v7124 = vld [vmem:[%s7112 + $0x2c] sm:$0xf]
  %v7125 = vld [vmem:[%s7112 + $0x30] sm:$0xf]
  %v7126 = vld [vmem:[%s7112 + $0x34] sm:$0xf]
  %v7127 = vld [vmem:[%s7112 + $0x38] sm:$0xf]
  %v7128 = vld [vmem:[%s7112 + $0x3c] sm:$0xf]
  %v7129 = vpack.c.bf16 %v7081, %v7080
  %v7130 = vpack.c.bf16 %v7065, %v7064
  %v7131 = vpack.c.bf16 %v7049, %v7048
  %v7132 = vpack.c.bf16 %v7097, %v7096
  %v7133 = vpack.c.bf16 %v7083, %v7082
  %v7134 = vpack.c.bf16 %v7067, %v7066
  %v7135 = vpack.c.bf16 %v7051, %v7050
  %v7136 = vpack.c.bf16 %v7099, %v7098
  %v7137 = vpack.c.bf16 %v7085, %v7084
  %v7138 = vpack.c.bf16 %v7069, %v7068
  %v7139 = vpack.c.bf16 %v7053, %v7052
  %v7140 = vpack.c.bf16 %v7101, %v7100
  %v7141 = vpack.c.bf16 %v7087, %v7086
  %v7142 = vpack.c.bf16 %v7071, %v7070
  %v7143 = vpack.c.bf16 %v7055, %v7054
  %v7144 = vpack.c.bf16 %v7103, %v7102
  %v7145 = vpack.c.bf16 %v7089, %v7088
  %v7146 = vpack.c.bf16 %v7073, %v7072
  %v7147 = vpack.c.bf16 %v7057, %v7056
  %v7148 = vpack.c.bf16 %v7105, %v7104
  %v7149 = vpack.c.bf16 %v7091, %v7090
  %v7150 = vpack.c.bf16 %v7075, %v7074
  %v7151 = vpack.c.bf16 %v7059, %v7058
  %v7152 = vpack.c.bf16 %v7107, %v7106
  %v7153 = vpack.c.bf16 %v7093, %v7092
  %v7154 = vpack.c.bf16 %v7077, %v7076
  %v7155 = vpack.c.bf16 %v7061, %v7060
  %v7156 = vpack.c.bf16 %v7109, %v7108
  %v7157 = vpack.c.bf16 %v7095, %v7094
  %v7158 = vpack.c.bf16 %v7079, %v7078
  %v7159 = vpack.c.bf16 %v7063, %v7062
  %v7160 = vpack.c.bf16 %v7111, %v7110
  %v7177 = vunpack.c.l.b16 %v7113
  %v7178 = vunpack.c.l.b16 %v7114
  %v7179 = vunpack.c.l.b16 %v7115
  %v7180 = vunpack.c.l.b16 %v7116
  %v7181 = vunpack.c.l.b16 %v7117
  %v7182 = vunpack.c.l.b16 %v7118
  %v7183 = vunpack.c.l.b16 %v7119
  %v7184 = vunpack.c.l.b16 %v7120
  %v7185 = vunpack.c.l.b16 %v7121
  %v7186 = vunpack.c.l.b16 %v7122
  %v7187 = vunpack.c.l.b16 %v7123
  %v7188 = vunpack.c.l.b16 %v7124
  %v7189 = vunpack.c.l.b16 %v7125
  %v7190 = vunpack.c.l.b16 %v7126
  %v7191 = vunpack.c.l.b16 %v7127
  %v7192 = vunpack.c.l.b16 %v7128
  %v7193 = vpack.c.b16 %v7178, %v7177
  %v7194 = vpack.c.b16 %v7180, %v7179
  %v7195 = vpack.c.b16 %v7182, %v7181
  %v7196 = vpack.c.b16 %v7184, %v7183
  %v7197 = vpack.c.b16 %v7186, %v7185
  %v7198 = vpack.c.b16 %v7188, %v7187
  %v7199 = vpack.c.b16 %v7190, %v7189
  %v7200 = vpack.c.b16 %v7192, %v7191
  %7209 = vmatpush.bf16.msra.mxu0 %v7157
  %7210 = vmatpush.bf16.msra.mxu0 %v7153
  %7211 = vmatpush.bf16.msra.mxu0 %v7149
  %7212 = vmatpush.bf16.msra.mxu0 %v7145
  %7213 = vmatpush.bf16.msra.mxu0 %v7141
  %7214 = vmatpush.bf16.msra.mxu0 %v7137
  %7215 = vmatpush.bf16.msra.mxu0 %v7133
  %7216 = vmatpush.bf16.msra.mxu0 %v7129
  %7217 = vmatmul.bf16.gmra.mxu0 %v7193
  %v7218 = vpop.f32.mrf.mxu0
  %v7219 = vadd.f32 0.0, %v7218
  %v7220 = vpop.f32.mrf.mxu0
  %v7221 = vadd.f32 0.0, %v7220
  %7222 = vmatmul.bf16.gmra.mxu0 %v7194
  %v7223 = vpop.f32.mrf.mxu0
  %v7224 = vadd.f32 0.0, %v7223
  %v7225 = vpop.f32.mrf.mxu0
  %v7226 = vadd.f32 0.0, %v7225
  %7227 = vmatmul.bf16.gmra.mxu0 %v7195
  %v7228 = vpop.f32.mrf.mxu0
  %v7229 = vadd.f32 0.0, %v7228
  %v7230 = vpop.f32.mrf.mxu0
  %v7231 = vadd.f32 0.0, %v7230
  %7232 = vmatmul.bf16.gmra.mxu0 %v7196
  %v7233 = vpop.f32.mrf.mxu0
  %v7234 = vadd.f32 0.0, %v7233
  %v7235 = vpop.f32.mrf.mxu0
  %v7236 = vadd.f32 0.0, %v7235
  %7237 = vmatmul.bf16.gmra.mxu0 %v7197
  %v7238 = vpop.f32.mrf.mxu0
  %v7239 = vadd.f32 0.0, %v7238
  %v7240 = vpop.f32.mrf.mxu0
  %v7241 = vadd.f32 0.0, %v7240
  %7242 = vmatmul.bf16.gmra.mxu0 %v7198
  %v7243 = vpop.f32.mrf.mxu0
  %v7244 = vadd.f32 0.0, %v7243
  %v7245 = vpop.f32.mrf.mxu0
  %v7246 = vadd.f32 0.0, %v7245
  %7247 = vmatmul.bf16.gmra.mxu0 %v7199
  %v7248 = vpop.f32.mrf.mxu0
  %v7249 = vadd.f32 0.0, %v7248
  %v7250 = vpop.f32.mrf.mxu0
  %v7251 = vadd.f32 0.0, %v7250
  %7252 = vmatmul.bf16.gmra.mxu0 %v7200
  %v7253 = vpop.f32.mrf.mxu0
  %v7254 = vadd.f32 0.0, %v7253
  %v7255 = vpop.f32.mrf.mxu0
  %v7256 = vadd.f32 0.0, %v7255
  %7257 = vdwg.mxu0
  %7258 = vmatpush.bf16.msra.mxu0 %v7158
  %7259 = vmatpush.bf16.msra.mxu0 %v7154
  %7260 = vmatpush.bf16.msra.mxu0 %v7150
  %7261 = vmatpush.bf16.msra.mxu0 %v7146
  %7262 = vmatpush.bf16.msra.mxu0 %v7142
  %7263 = vmatpush.bf16.msra.mxu0 %v7138
  %7264 = vmatpush.bf16.msra.mxu0 %v7134
  %7265 = vmatpush.bf16.msra.mxu0 %v7130
  %7266 = vmatmul.bf16.gmra.mxu0 %v7193
  %v7267 = vpop.f32.mrf.mxu0
  %v7268 = vadd.f32 0.0, %v7267
  %v7269 = vpop.f32.mrf.mxu0
  %v7270 = vadd.f32 0.0, %v7269
  %7271 = vmatmul.bf16.gmra.mxu0 %v7194
  %v7272 = vpop.f32.mrf.mxu0
  %v7273 = vadd.f32 0.0, %v7272
  %v7274 = vpop.f32.mrf.mxu0
  %v7275 = vadd.f32 0.0, %v7274
  %7276 = vmatmul.bf16.gmra.mxu0 %v7195
  %v7277 = vpop.f32.mrf.mxu0
  %v7278 = vadd.f32 0.0, %v7277
  %v7279 = vpop.f32.mrf.mxu0
  %v7280 = vadd.f32 0.0, %v7279
  %7281 = vmatmul.bf16.gmra.mxu0 %v7196
  %v7282 = vpop.f32.mrf.mxu0
  %v7283 = vadd.f32 0.0, %v7282
  %v7284 = vpop.f32.mrf.mxu0
  %v7285 = vadd.f32 0.0, %v7284
  %7286 = vmatmul.bf16.gmra.mxu0 %v7197
  %v7287 = vpop.f32.mrf.mxu0
  %v7288 = vadd.f32 0.0, %v7287
  %v7289 = vpop.f32.mrf.mxu0
  %v7290 = vadd.f32 0.0, %v7289
  %7291 = vmatmul.bf16.gmra.mxu0 %v7198
  %v7292 = vpop.f32.mrf.mxu0
  %v7293 = vadd.f32 0.0, %v7292
  %v7294 = vpop.f32.mrf.mxu0
  %v7295 = vadd.f32 0.0, %v7294
  %7296 = vmatmul.bf16.gmra.mxu0 %v7199
  %v7297 = vpop.f32.mrf.mxu0
  %v7298 = vadd.f32 0.0, %v7297
  %v7299 = vpop.f32.mrf.mxu0
  %v7300 = vadd.f32 0.0, %v7299
  %7301 = vmatmul.bf16.gmra.mxu0 %v7200
  %v7302 = vpop.f32.mrf.mxu0
  %v7303 = vadd.f32 0.0, %v7302
  %v7304 = vpop.f32.mrf.mxu0
  %v7305 = vadd.f32 0.0, %v7304
  %7306 = vdwg.mxu0
  %7307 = vmatpush.bf16.msra.mxu0 %v7159
  %7308 = vmatpush.bf16.msra.mxu0 %v7155
  %7309 = vmatpush.bf16.msra.mxu0 %v7151
  %7310 = vmatpush.bf16.msra.mxu0 %v7147
  %7311 = vmatpush.bf16.msra.mxu0 %v7143
  %7312 = vmatpush.bf16.msra.mxu0 %v7139
  %7313 = vmatpush.bf16.msra.mxu0 %v7135
  %7314 = vmatpush.bf16.msra.mxu0 %v7131
  %7315 = vmatmul.bf16.gmra.mxu0 %v7193
  %v7316 = vpop.f32.mrf.mxu0
  %v7317 = vadd.f32 0.0, %v7316
  %v7318 = vpop.f32.mrf.mxu0
  %v7319 = vadd.f32 0.0, %v7318
  %7320 = vmatmul.bf16.gmra.mxu0 %v7194
  %v7321 = vpop.f32.mrf.mxu0
  %v7322 = vadd.f32 0.0, %v7321
  %v7323 = vpop.f32.mrf.mxu0
  %v7324 = vadd.f32 0.0, %v7323
  %7325 = vmatmul.bf16.gmra.mxu0 %v7195
  %v7326 = vpop.f32.mrf.mxu0
  %v7327 = vadd.f32 0.0, %v7326
  %v7328 = vpop.f32.mrf.mxu0
  %v7329 = vadd.f32 0.0, %v7328
  %7330 = vmatmul.bf16.gmra.mxu0 %v7196
  %v7331 = vpop.f32.mrf.mxu0
  %v7332 = vadd.f32 0.0, %v7331
  %v7333 = vpop.f32.mrf.mxu0
  %v7334 = vadd.f32 0.0, %v7333
  %7335 = vmatmul.bf16.gmra.mxu0 %v7197
  %v7336 = vpop.f32.mrf.mxu0
  %v7337 = vadd.f32 0.0, %v7336
  %v7338 = vpop.f32.mrf.mxu0
  %v7339 = vadd.f32 0.0, %v7338
  %7340 = vmatmul.bf16.gmra.mxu0 %v7198
  %v7341 = vpop.f32.mrf.mxu0
  %v7342 = vadd.f32 0.0, %v7341
  %v7343 = vpop.f32.mrf.mxu0
  %v7344 = vadd.f32 0.0, %v7343
  %7345 = vmatmul.bf16.gmra.mxu0 %v7199
  %v7346 = vpop.f32.mrf.mxu0
  %v7347 = vadd.f32 0.0, %v7346
  %v7348 = vpop.f32.mrf.mxu0
  %v7349 = vadd.f32 0.0, %v7348
  %7350 = vmatmul.bf16.gmra.mxu0 %v7200
  %v7351 = vpop.f32.mrf.mxu0
  %v7352 = vadd.f32 0.0, %v7351
  %v7353 = vpop.f32.mrf.mxu0
  %v7354 = vadd.f32 0.0, %v7353
  %7355 = vdwg.mxu0
  %7356 = vmatpush.bf16.msra.mxu0 %v7160
  %7357 = vmatpush.bf16.msra.mxu0 %v7156
  %7358 = vmatpush.bf16.msra.mxu0 %v7152
  %7359 = vmatpush.bf16.msra.mxu0 %v7148
  %7360 = vmatpush.bf16.msra.mxu0 %v7144
  %7361 = vmatpush.bf16.msra.mxu0 %v7140
  %7362 = vmatpush.bf16.msra.mxu0 %v7136
  %7363 = vmatpush.bf16.msra.mxu0 %v7132
  %7364 = vmatmul.bf16.gmra.mxu0 %v7193
  %v7365 = vpop.f32.mrf.mxu0
  %v7366 = vadd.f32 0.0, %v7365
  %v7367 = vpop.f32.mrf.mxu0
  %v7368 = vadd.f32 0.0, %v7367
  %7369 = vmatmul.bf16.gmra.mxu0 %v7194
  %v7370 = vpop.f32.mrf.mxu0
  %v7371 = vadd.f32 0.0, %v7370
  %v7372 = vpop.f32.mrf.mxu0
  %v7373 = vadd.f32 0.0, %v7372
  %7374 = vmatmul.bf16.gmra.mxu0 %v7195
  %v7375 = vpop.f32.mrf.mxu0
  %v7376 = vadd.f32 0.0, %v7375
  %v7377 = vpop.f32.mrf.mxu0
  %v7378 = vadd.f32 0.0, %v7377
  %7379 = vmatmul.bf16.gmra.mxu0 %v7196
  %v7380 = vpop.f32.mrf.mxu0
  %v7381 = vadd.f32 0.0, %v7380
  %v7382 = vpop.f32.mrf.mxu0
  %v7383 = vadd.f32 0.0, %v7382
  %7384 = vmatmul.bf16.gmra.mxu0 %v7197
  %v7385 = vpop.f32.mrf.mxu0
  %v7386 = vadd.f32 0.0, %v7385
  %v7387 = vpop.f32.mrf.mxu0
  %v7388 = vadd.f32 0.0, %v7387
  %7389 = vmatmul.bf16.gmra.mxu0 %v7198
  %v7390 = vpop.f32.mrf.mxu0
  %v7391 = vadd.f32 0.0, %v7390
  %v7392 = vpop.f32.mrf.mxu0
  %v7393 = vadd.f32 0.0, %v7392
  %7394 = vmatmul.bf16.gmra.mxu0 %v7199
  %v7395 = vpop.f32.mrf.mxu0
  %v7396 = vadd.f32 0.0, %v7395
  %v7397 = vpop.f32.mrf.mxu0
  %v7398 = vadd.f32 0.0, %v7397
  %7399 = vmatmul.bf16.gmra.mxu0 %v7200
  %v7400 = vpop.f32.mrf.mxu0
  %v7401 = vadd.f32 0.0, %v7400
  %v7402 = vpop.f32.mrf.mxu0
  %v7403 = vadd.f32 0.0, %v7402
  %7404 = vdwg.mxu0
  %v7405 = vadd.f32 %v6855, %v7219
  %v7406 = vadd.f32 %v6856, %v7268
  %v7407 = vadd.f32 %v6857, %v7317
  %v7408 = vadd.f32 %v6858, %v7366
  %v7409 = vadd.f32 %v6859, %v7221
  %v7410 = vadd.f32 %v6860, %v7270
  %v7411 = vadd.f32 %v6861, %v7319
  %v7412 = vadd.f32 %v6862, %v7368
  %v7413 = vadd.f32 %v6863, %v7224
  %v7414 = vadd.f32 %v6864, %v7273
  %v7415 = vadd.f32 %v6865, %v7322
  %v7416 = vadd.f32 %v6866, %v7371
  %v7417 = vadd.f32 %v6867, %v7226
  %v7418 = vadd.f32 %v6868, %v7275
  %v7419 = vadd.f32 %v6869, %v7324
  %v7420 = vadd.f32 %v6870, %v7373
  %v7421 = vadd.f32 %v6871, %v7229
  %v7422 = vadd.f32 %v6872, %v7278
  %v7423 = vadd.f32 %v6873, %v7327
  %v7424 = vadd.f32 %v6874, %v7376
  %v7425 = vadd.f32 %v6875, %v7231
  %v7426 = vadd.f32 %v6876, %v7280
  %v7427 = vadd.f32 %v6877, %v7329
  %v7428 = vadd.f32 %v6878, %v7378
  %v7429 = vadd.f32 %v6879, %v7234
  %v7430 = vadd.f32 %v6880, %v7283
  %v7431 = vadd.f32 %v6881, %v7332
  %v7432 = vadd.f32 %v6882, %v7381
  %v7433 = vadd.f32 %v6883, %v7236
  %v7434 = vadd.f32 %v6884, %v7285
  %v7435 = vadd.f32 %v6885, %v7334
  %v7436 = vadd.f32 %v6886, %v7383
  %v7437 = vadd.f32 %v6887, %v7239
  %v7438 = vadd.f32 %v6888, %v7288
  %v7439 = vadd.f32 %v6889, %v7337
  %v7440 = vadd.f32 %v6890, %v7386
  %v7441 = vadd.f32 %v6891, %v7241
  %v7442 = vadd.f32 %v6892, %v7290
  %v7443 = vadd.f32 %v6893, %v7339
  %v7444 = vadd.f32 %v6894, %v7388
  %v7445 = vadd.f32 %v6895, %v7244
  %v7446 = vadd.f32 %v6896, %v7293
  %v7447 = vadd.f32 %v6897, %v7342
  %v7448 = vadd.f32 %v6898, %v7391
  %v7449 = vadd.f32 %v6899, %v7246
  %v7450 = vadd.f32 %v6900, %v7295
  %v7451 = vadd.f32 %v6901, %v7344
  %v7452 = vadd.f32 %v6902, %v7393
  %v7453 = vadd.f32 %v6903, %v7249
  %v7454 = vadd.f32 %v6904, %v7298
  %v7455 = vadd.f32 %v6905, %v7347
  %v7456 = vadd.f32 %v6906, %v7396
  %v7457 = vadd.f32 %v6907, %v7251
  %v7458 = vadd.f32 %v6908, %v7300
  %v7459 = vadd.f32 %v6909, %v7349
  %v7460 = vadd.f32 %v6910, %v7398
  %v7461 = vadd.f32 %v6911, %v7254
  %v7462 = vadd.f32 %v6912, %v7303
  %v7463 = vadd.f32 %v6913, %v7352
  %v7464 = vadd.f32 %v6914, %v7401
  %v7465 = vadd.f32 %v6915, %v7256
  %v7466 = vadd.f32 %v6916, %v7305
  %v7467 = vadd.f32 %v6917, %v7354
  %v7468 = vadd.f32 %v6918, %v7403
  %7469 = vrot.lane.b32.xlu0 %v4979, 113
  %v7470 = vpop.permute.xlu0 %7469
  %7471 = vrot.lane.b32.xlu0 %v4983, 113
  %v7472 = vpop.permute.xlu0 %7471
  %7473 = vrot.lane.b32.xlu0 %v4987, 113
  %v7474 = vpop.permute.xlu0 %7473
  %7475 = vrot.lane.b32.xlu0 %v4991, 113
  %v7476 = vpop.permute.xlu0 %7475
  %7477 = vrot.lane.b32.xlu0 %v4995, 113
  %v7478 = vpop.permute.xlu0 %7477
  %7479 = vrot.lane.b32.xlu0 %v4999, 113
  %v7480 = vpop.permute.xlu0 %7479
  %7481 = vrot.lane.b32.xlu0 %v5003, 113
  %v7482 = vpop.permute.xlu0 %7481
  %7483 = vrot.lane.b32.xlu0 %v5007, 113
  %v7484 = vpop.permute.xlu0 %7483
  %7485 = vrot.lane.b32.xlu0 %v5011, 113
  %v7486 = vpop.permute.xlu0 %7485
  %7487 = vrot.lane.b32.xlu0 %v5015, 113
  %v7488 = vpop.permute.xlu0 %7487
  %7489 = vrot.lane.b32.xlu0 %v5019, 113
  %v7490 = vpop.permute.xlu0 %7489
  %7491 = vrot.lane.b32.xlu0 %v5023, 113
  %v7492 = vpop.permute.xlu0 %7491
  %7493 = vrot.lane.b32.xlu0 %v5027, 113
  %v7494 = vpop.permute.xlu0 %7493
  %7495 = vrot.lane.b32.xlu0 %v5031, 113
  %v7496 = vpop.permute.xlu0 %7495
  %7497 = vrot.lane.b32.xlu0 %v5035, 113
  %v7498 = vpop.permute.xlu0 %7497
  %7499 = vrot.lane.b32.xlu0 %v5039, 113
  %v7500 = vpop.permute.xlu0 %7499
  %7501 = vrot.lane.b32.xlu0 %v4980, 113
  %v7502 = vpop.permute.xlu0 %7501
  %7503 = vrot.lane.b32.xlu0 %v4984, 113
  %v7504 = vpop.permute.xlu0 %7503
  %7505 = vrot.lane.b32.xlu0 %v4988, 113
  %v7506 = vpop.permute.xlu0 %7505
  %7507 = vrot.lane.b32.xlu0 %v4992, 113
  %v7508 = vpop.permute.xlu0 %7507
  %7509 = vrot.lane.b32.xlu0 %v4996, 113
  %v7510 = vpop.permute.xlu0 %7509
  %7511 = vrot.lane.b32.xlu0 %v5000, 113
  %v7512 = vpop.permute.xlu0 %7511
  %7513 = vrot.lane.b32.xlu0 %v5004, 113
  %v7514 = vpop.permute.xlu0 %7513
  %7515 = vrot.lane.b32.xlu0 %v5008, 113
  %v7516 = vpop.permute.xlu0 %7515
  %7517 = vrot.lane.b32.xlu0 %v5012, 113
  %v7518 = vpop.permute.xlu0 %7517
  %7519 = vrot.lane.b32.xlu0 %v5016, 113
  %v7520 = vpop.permute.xlu0 %7519
  %7521 = vrot.lane.b32.xlu0 %v5020, 113
  %v7522 = vpop.permute.xlu0 %7521
  %7523 = vrot.lane.b32.xlu0 %v5024, 113
  %v7524 = vpop.permute.xlu0 %7523
  %7525 = vrot.lane.b32.xlu0 %v5028, 113
  %v7526 = vpop.permute.xlu0 %7525
  %7527 = vrot.lane.b32.xlu0 %v5032, 113
  %v7528 = vpop.permute.xlu0 %7527
  %7529 = vrot.lane.b32.xlu0 %v5036, 113
  %v7530 = vpop.permute.xlu0 %7529
  %7531 = vrot.lane.b32.xlu0 %v5040, 113
  %v7532 = vpop.permute.xlu0 %7531
  %7533 = vrot.lane.b32.xlu0 %v4981, 113
  %v7534 = vpop.permute.xlu0 %7533
  %7535 = vrot.lane.b32.xlu0 %v4985, 113
  %v7536 = vpop.permute.xlu0 %7535
  %7537 = vrot.lane.b32.xlu0 %v4989, 113
  %v7538 = vpop.permute.xlu0 %7537
  %7539 = vrot.lane.b32.xlu0 %v4993, 113
  %v7540 = vpop.permute.xlu0 %7539
  %7541 = vrot.lane.b32.xlu0 %v4997, 113
  %v7542 = vpop.permute.xlu0 %7541
  %7543 = vrot.lane.b32.xlu0 %v5001, 113
  %v7544 = vpop.permute.xlu0 %7543
  %7545 = vrot.lane.b32.xlu0 %v5005, 113
  %v7546 = vpop.permute.xlu0 %7545
  %7547 = vrot.lane.b32.xlu0 %v5009, 113
  %v7548 = vpop.permute.xlu0 %7547
  %7549 = vrot.lane.b32.xlu0 %v5013, 113
  %v7550 = vpop.permute.xlu0 %7549
  %7551 = vrot.lane.b32.xlu0 %v5017, 113
  %v7552 = vpop.permute.xlu0 %7551
  %7553 = vrot.lane.b32.xlu0 %v5021, 113
  %v7554 = vpop.permute.xlu0 %7553
  %7555 = vrot.lane.b32.xlu0 %v5025, 113
  %v7556 = vpop.permute.xlu0 %7555
  %7557 = vrot.lane.b32.xlu0 %v5029, 113
  %v7558 = vpop.permute.xlu0 %7557
  %7559 = vrot.lane.b32.xlu0 %v5033, 113
  %v7560 = vpop.permute.xlu0 %7559
  %7561 = vrot.lane.b32.xlu0 %v5037, 113
  %v7562 = vpop.permute.xlu0 %7561
  %7563 = vrot.lane.b32.xlu0 %v5041, 113
  %v7564 = vpop.permute.xlu0 %7563
  %7565 = vrot.lane.b32.xlu0 %v4982, 113
  %v7566 = vpop.permute.xlu0 %7565
  %7567 = vrot.lane.b32.xlu0 %v4986, 113
  %v7568 = vpop.permute.xlu0 %7567
  %7569 = vrot.lane.b32.xlu0 %v4990, 113
  %v7570 = vpop.permute.xlu0 %7569
  %7571 = vrot.lane.b32.xlu0 %v4994, 113
  %v7572 = vpop.permute.xlu0 %7571
  %7573 = vrot.lane.b32.xlu0 %v4998, 113
  %v7574 = vpop.permute.xlu0 %7573
  %7575 = vrot.lane.b32.xlu0 %v5002, 113
  %v7576 = vpop.permute.xlu0 %7575
  %7577 = vrot.lane.b32.xlu0 %v5006, 113
  %v7578 = vpop.permute.xlu0 %7577
  %7579 = vrot.lane.b32.xlu0 %v5010, 113
  %v7580 = vpop.permute.xlu0 %7579
  %7581 = vrot.lane.b32.xlu0 %v5014, 113
  %v7582 = vpop.permute.xlu0 %7581
  %7583 = vrot.lane.b32.xlu0 %v5018, 113
  %v7584 = vpop.permute.xlu0 %7583
  %7585 = vrot.lane.b32.xlu0 %v5022, 113
  %v7586 = vpop.permute.xlu0 %7585
  %7587 = vrot.lane.b32.xlu0 %v5026, 113
  %v7588 = vpop.permute.xlu0 %7587
  %7589 = vrot.lane.b32.xlu0 %v5030, 113
  %v7590 = vpop.permute.xlu0 %7589
  %7591 = vrot.lane.b32.xlu0 %v5034, 113
  %v7592 = vpop.permute.xlu0 %7591
  %7593 = vrot.lane.b32.xlu0 %v5038, 113
  %v7594 = vpop.permute.xlu0 %7593
  %7595 = vrot.lane.b32.xlu0 %v5042, 113
  %v7596 = vpop.permute.xlu0 %7595
  %vm7597 = vcmp.lt.s32.totalorder %v187, 113
  %v7598 = vsel %vm7597, %v7534, %v7566
  %v7599 = vsel %vm7597, %v7536, %v7568
  %v7600 = vsel %vm7597, %v7538, %v7570
  %v7601 = vsel %vm7597, %v7540, %v7572
  %v7602 = vsel %vm7597, %v7542, %v7574
  %v7603 = vsel %vm7597, %v7544, %v7576
  %v7604 = vsel %vm7597, %v7546, %v7578
  %v7605 = vsel %vm7597, %v7548, %v7580
  %v7606 = vsel %vm7597, %v7550, %v7582
  %v7607 = vsel %vm7597, %v7552, %v7584
  %v7608 = vsel %vm7597, %v7554, %v7586
  %v7609 = vsel %vm7597, %v7556, %v7588
  %v7610 = vsel %vm7597, %v7558, %v7590
  %v7611 = vsel %vm7597, %v7560, %v7592
  %v7612 = vsel %vm7597, %v7562, %v7594
  %v7613 = vsel %vm7597, %v7564, %v7596
  %v7614 = vsel %vm7597, %v7502, %v7534
  %v7615 = vsel %vm7597, %v7504, %v7536
  %v7616 = vsel %vm7597, %v7506, %v7538
  %v7617 = vsel %vm7597, %v7508, %v7540
  %v7618 = vsel %vm7597, %v7510, %v7542
  %v7619 = vsel %vm7597, %v7512, %v7544
  %v7620 = vsel %vm7597, %v7514, %v7546
  %v7621 = vsel %vm7597, %v7516, %v7548
  %v7622 = vsel %vm7597, %v7518, %v7550
  %v7623 = vsel %vm7597, %v7520, %v7552
  %v7624 = vsel %vm7597, %v7522, %v7554
  %v7625 = vsel %vm7597, %v7524, %v7556
  %v7626 = vsel %vm7597, %v7526, %v7558
  %v7627 = vsel %vm7597, %v7528, %v7560
  %v7628 = vsel %vm7597, %v7530, %v7562
  %v7629 = vsel %vm7597, %v7532, %v7564
  %v7630 = vsel %vm7597, %v7470, %v7502
  %v7631 = vsel %vm7597, %v7472, %v7504
  %v7632 = vsel %vm7597, %v7474, %v7506
  %v7633 = vsel %vm7597, %v7476, %v7508
  %v7634 = vsel %vm7597, %v7478, %v7510
  %v7635 = vsel %vm7597, %v7480, %v7512
  %v7636 = vsel %vm7597, %v7482, %v7514
  %v7637 = vsel %vm7597, %v7484, %v7516
  %v7638 = vsel %vm7597, %v7486, %v7518
  %v7639 = vsel %vm7597, %v7488, %v7520
  %v7640 = vsel %vm7597, %v7490, %v7522
  %v7641 = vsel %vm7597, %v7492, %v7524
  %v7642 = vsel %vm7597, %v7494, %v7526
  %v7643 = vsel %vm7597, %v7496, %v7528
  %v7644 = vsel %vm7597, %v7498, %v7530
  %v7645 = vsel %vm7597, %v7500, %v7532
  %v7646 = vsel %vm7597, %v7566, %v7470
  %v7647 = vsel %vm7597, %v7568, %v7472
  %v7648 = vsel %vm7597, %v7570, %v7474
  %v7649 = vsel %vm7597, %v7572, %v7476
  %v7650 = vsel %vm7597, %v7574, %v7478
  %v7651 = vsel %vm7597, %v7576, %v7480
  %v7652 = vsel %vm7597, %v7578, %v7482
  %v7653 = vsel %vm7597, %v7580, %v7484
  %v7654 = vsel %vm7597, %v7582, %v7486
  %v7655 = vsel %vm7597, %v7584, %v7488
  %v7656 = vsel %vm7597, %v7586, %v7490
  %v7657 = vsel %vm7597, %v7588, %v7492
  %v7658 = vsel %vm7597, %v7590, %v7494
  %v7659 = vsel %vm7597, %v7592, %v7496
  %v7660 = vsel %vm7597, %v7594, %v7498
  %v7661 = vsel %vm7597, %v7596, %v7500
  %s7662 = scalar_lea.vmem %s3, 320
  %v7663 = vld [vmem:[%s7662] sm:$0xf]
  %v7664 = vld [vmem:[%s7662 + $0x4] sm:$0xf]
  %v7665 = vld [vmem:[%s7662 + $0x8] sm:$0xf]
  %v7666 = vld [vmem:[%s7662 + $0xc] sm:$0xf]
  %v7667 = vld [vmem:[%s7662 + $0x10] sm:$0xf]
  %v7668 = vld [vmem:[%s7662 + $0x14] sm:$0xf]
  %v7669 = vld [vmem:[%s7662 + $0x18] sm:$0xf]
  %v7670 = vld [vmem:[%s7662 + $0x1c] sm:$0xf]
  %v7671 = vld [vmem:[%s7662 + $0x20] sm:$0xf]
  %v7672 = vld [vmem:[%s7662 + $0x24] sm:$0xf]
  %v7673 = vld [vmem:[%s7662 + $0x28] sm:$0xf]
  %v7674 = vld [vmem:[%s7662 + $0x2c] sm:$0xf]
  %v7675 = vld [vmem:[%s7662 + $0x30] sm:$0xf]
  %v7676 = vld [vmem:[%s7662 + $0x34] sm:$0xf]
  %v7677 = vld [vmem:[%s7662 + $0x38] sm:$0xf]
  %v7678 = vld [vmem:[%s7662 + $0x3c] sm:$0xf]
  %v7679 = vpack.c.bf16 %v7631, %v7630
  %v7680 = vpack.c.bf16 %v7615, %v7614
  %v7681 = vpack.c.bf16 %v7599, %v7598
  %v7682 = vpack.c.bf16 %v7647, %v7646
  %v7683 = vpack.c.bf16 %v7633, %v7632
  %v7684 = vpack.c.bf16 %v7617, %v7616
  %v7685 = vpack.c.bf16 %v7601, %v7600
  %v7686 = vpack.c.bf16 %v7649, %v7648
  %v7687 = vpack.c.bf16 %v7635, %v7634
  %v7688 = vpack.c.bf16 %v7619, %v7618
  %v7689 = vpack.c.bf16 %v7603, %v7602
  %v7690 = vpack.c.bf16 %v7651, %v7650
  %v7691 = vpack.c.bf16 %v7637, %v7636
  %v7692 = vpack.c.bf16 %v7621, %v7620
  %v7693 = vpack.c.bf16 %v7605, %v7604
  %v7694 = vpack.c.bf16 %v7653, %v7652
  %v7695 = vpack.c.bf16 %v7639, %v7638
  %v7696 = vpack.c.bf16 %v7623, %v7622
  %v7697 = vpack.c.bf16 %v7607, %v7606
  %v7698 = vpack.c.bf16 %v7655, %v7654
  %v7699 = vpack.c.bf16 %v7641, %v7640
  %v7700 = vpack.c.bf16 %v7625, %v7624
  %v7701 = vpack.c.bf16 %v7609, %v7608
  %v7702 = vpack.c.bf16 %v7657, %v7656
  %v7703 = vpack.c.bf16 %v7643, %v7642
  %v7704 = vpack.c.bf16 %v7627, %v7626
  %v7705 = vpack.c.bf16 %v7611, %v7610
  %v7706 = vpack.c.bf16 %v7659, %v7658
  %v7707 = vpack.c.bf16 %v7645, %v7644
  %v7708 = vpack.c.bf16 %v7629, %v7628
  %v7709 = vpack.c.bf16 %v7613, %v7612
  %v7710 = vpack.c.bf16 %v7661, %v7660
  %v7727 = vunpack.c.l.b16 %v7663
  %v7728 = vunpack.c.l.b16 %v7664
  %v7729 = vunpack.c.l.b16 %v7665
  %v7730 = vunpack.c.l.b16 %v7666
  %v7731 = vunpack.c.l.b16 %v7667
  %v7732 = vunpack.c.l.b16 %v7668
  %v7733 = vunpack.c.l.b16 %v7669
  %v7734 = vunpack.c.l.b16 %v7670
  %v7735 = vunpack.c.l.b16 %v7671
  %v7736 = vunpack.c.l.b16 %v7672
  %v7737 = vunpack.c.l.b16 %v7673
  %v7738 = vunpack.c.l.b16 %v7674
  %v7739 = vunpack.c.l.b16 %v7675
  %v7740 = vunpack.c.l.b16 %v7676
  %v7741 = vunpack.c.l.b16 %v7677
  %v7742 = vunpack.c.l.b16 %v7678
  %v7743 = vpack.c.b16 %v7728, %v7727
  %v7744 = vpack.c.b16 %v7730, %v7729
  %v7745 = vpack.c.b16 %v7732, %v7731
  %v7746 = vpack.c.b16 %v7734, %v7733
  %v7747 = vpack.c.b16 %v7736, %v7735
  %v7748 = vpack.c.b16 %v7738, %v7737
  %v7749 = vpack.c.b16 %v7740, %v7739
  %v7750 = vpack.c.b16 %v7742, %v7741
  %7759 = vmatpush.bf16.msra.mxu0 %v7707
  %7760 = vmatpush.bf16.msra.mxu0 %v7703
  %7761 = vmatpush.bf16.msra.mxu0 %v7699
  %7762 = vmatpush.bf16.msra.mxu0 %v7695
  %7763 = vmatpush.bf16.msra.mxu0 %v7691
  %7764 = vmatpush.bf16.msra.mxu0 %v7687
  %7765 = vmatpush.bf16.msra.mxu0 %v7683
  %7766 = vmatpush.bf16.msra.mxu0 %v7679
  %7767 = vmatmul.bf16.gmra.mxu0 %v7743
  %v7768 = vpop.f32.mrf.mxu0
  %v7769 = vadd.f32 0.0, %v7768
  %v7770 = vpop.f32.mrf.mxu0
  %v7771 = vadd.f32 0.0, %v7770
  %7772 = vmatmul.bf16.gmra.mxu0 %v7744
  %v7773 = vpop.f32.mrf.mxu0
  %v7774 = vadd.f32 0.0, %v7773
  %v7775 = vpop.f32.mrf.mxu0
  %v7776 = vadd.f32 0.0, %v7775
  %7777 = vmatmul.bf16.gmra.mxu0 %v7745
  %v7778 = vpop.f32.mrf.mxu0
  %v7779 = vadd.f32 0.0, %v7778
  %v7780 = vpop.f32.mrf.mxu0
  %v7781 = vadd.f32 0.0, %v7780
  %7782 = vmatmul.bf16.gmra.mxu0 %v7746
  %v7783 = vpop.f32.mrf.mxu0
  %v7784 = vadd.f32 0.0, %v7783
  %v7785 = vpop.f32.mrf.mxu0
  %v7786 = vadd.f32 0.0, %v7785
  %7787 = vmatmul.bf16.gmra.mxu0 %v7747
  %v7788 = vpop.f32.mrf.mxu0
  %v7789 = vadd.f32 0.0, %v7788
  %v7790 = vpop.f32.mrf.mxu0
  %v7791 = vadd.f32 0.0, %v7790
  %7792 = vmatmul.bf16.gmra.mxu0 %v7748
  %v7793 = vpop.f32.mrf.mxu0
  %v7794 = vadd.f32 0.0, %v7793
  %v7795 = vpop.f32.mrf.mxu0
  %v7796 = vadd.f32 0.0, %v7795
  %7797 = vmatmul.bf16.gmra.mxu0 %v7749
  %v7798 = vpop.f32.mrf.mxu0
  %v7799 = vadd.f32 0.0, %v7798
  %v7800 = vpop.f32.mrf.mxu0
  %v7801 = vadd.f32 0.0, %v7800
  %7802 = vmatmul.bf16.gmra.mxu0 %v7750
  %v7803 = vpop.f32.mrf.mxu0
  %v7804 = vadd.f32 0.0, %v7803
  %v7805 = vpop.f32.mrf.mxu0
  %v7806 = vadd.f32 0.0, %v7805
  %7807 = vdwg.mxu0
  %7808 = vmatpush.bf16.msra.mxu0 %v7708
  %7809 = vmatpush.bf16.msra.mxu0 %v7704
  %7810 = vmatpush.bf16.msra.mxu0 %v7700
  %7811 = vmatpush.bf16.msra.mxu0 %v7696
  %7812 = vmatpush.bf16.msra.mxu0 %v7692
  %7813 = vmatpush.bf16.msra.mxu0 %v7688
  %7814 = vmatpush.bf16.msra.mxu0 %v7684
  %7815 = vmatpush.bf16.msra.mxu0 %v7680
  %7816 = vmatmul.bf16.gmra.mxu0 %v7743
  %v7817 = vpop.f32.mrf.mxu0
  %v7818 = vadd.f32 0.0, %v7817
  %v7819 = vpop.f32.mrf.mxu0
  %v7820 = vadd.f32 0.0, %v7819
  %7821 = vmatmul.bf16.gmra.mxu0 %v7744
  %v7822 = vpop.f32.mrf.mxu0
  %v7823 = vadd.f32 0.0, %v7822
  %v7824 = vpop.f32.mrf.mxu0
  %v7825 = vadd.f32 0.0, %v7824
  %7826 = vmatmul.bf16.gmra.mxu0 %v7745
  %v7827 = vpop.f32.mrf.mxu0
  %v7828 = vadd.f32 0.0, %v7827
  %v7829 = vpop.f32.mrf.mxu0
  %v7830 = vadd.f32 0.0, %v7829
  %7831 = vmatmul.bf16.gmra.mxu0 %v7746
  %v7832 = vpop.f32.mrf.mxu0
  %v7833 = vadd.f32 0.0, %v7832
  %v7834 = vpop.f32.mrf.mxu0
  %v7835 = vadd.f32 0.0, %v7834
  %7836 = vmatmul.bf16.gmra.mxu0 %v7747
  %v7837 = vpop.f32.mrf.mxu0
  %v7838 = vadd.f32 0.0, %v7837
  %v7839 = vpop.f32.mrf.mxu0
  %v7840 = vadd.f32 0.0, %v7839
  %7841 = vmatmul.bf16.gmra.mxu0 %v7748
  %v7842 = vpop.f32.mrf.mxu0
  %v7843 = vadd.f32 0.0, %v7842
  %v7844 = vpop.f32.mrf.mxu0
  %v7845 = vadd.f32 0.0, %v7844
  %7846 = vmatmul.bf16.gmra.mxu0 %v7749
  %v7847 = vpop.f32.mrf.mxu0
  %v7848 = vadd.f32 0.0, %v7847
  %v7849 = vpop.f32.mrf.mxu0
  %v7850 = vadd.f32 0.0, %v7849
  %7851 = vmatmul.bf16.gmra.mxu0 %v7750
  %v7852 = vpop.f32.mrf.mxu0
  %v7853 = vadd.f32 0.0, %v7852
  %v7854 = vpop.f32.mrf.mxu0
  %v7855 = vadd.f32 0.0, %v7854
  %7856 = vdwg.mxu0
  %7857 = vmatpush.bf16.msra.mxu0 %v7709
  %7858 = vmatpush.bf16.msra.mxu0 %v7705
  %7859 = vmatpush.bf16.msra.mxu0 %v7701
  %7860 = vmatpush.bf16.msra.mxu0 %v7697
  %7861 = vmatpush.bf16.msra.mxu0 %v7693
  %7862 = vmatpush.bf16.msra.mxu0 %v7689
  %7863 = vmatpush.bf16.msra.mxu0 %v7685
  %7864 = vmatpush.bf16.msra.mxu0 %v7681
  %7865 = vmatmul.bf16.gmra.mxu0 %v7743
  %v7866 = vpop.f32.mrf.mxu0
  %v7867 = vadd.f32 0.0, %v7866
  %v7868 = vpop.f32.mrf.mxu0
  %v7869 = vadd.f32 0.0, %v7868
  %7870 = vmatmul.bf16.gmra.mxu0 %v7744
  %v7871 = vpop.f32.mrf.mxu0
  %v7872 = vadd.f32 0.0, %v7871
  %v7873 = vpop.f32.mrf.mxu0
  %v7874 = vadd.f32 0.0, %v7873
  %7875 = vmatmul.bf16.gmra.mxu0 %v7745
  %v7876 = vpop.f32.mrf.mxu0
  %v7877 = vadd.f32 0.0, %v7876
  %v7878 = vpop.f32.mrf.mxu0
  %v7879 = vadd.f32 0.0, %v7878
  %7880 = vmatmul.bf16.gmra.mxu0 %v7746
  %v7881 = vpop.f32.mrf.mxu0
  %v7882 = vadd.f32 0.0, %v7881
  %v7883 = vpop.f32.mrf.mxu0
  %v7884 = vadd.f32 0.0, %v7883
  %7885 = vmatmul.bf16.gmra.mxu0 %v7747
  %v7886 = vpop.f32.mrf.mxu0
  %v7887 = vadd.f32 0.0, %v7886
  %v7888 = vpop.f32.mrf.mxu0
  %v7889 = vadd.f32 0.0, %v7888
  %7890 = vmatmul.bf16.gmra.mxu0 %v7748
  %v7891 = vpop.f32.mrf.mxu0
  %v7892 = vadd.f32 0.0, %v7891
  %v7893 = vpop.f32.mrf.mxu0
  %v7894 = vadd.f32 0.0, %v7893
  %7895 = vmatmul.bf16.gmra.mxu0 %v7749
  %v7896 = vpop.f32.mrf.mxu0
  %v7897 = vadd.f32 0.0, %v7896
  %v7898 = vpop.f32.mrf.mxu0
  %v7899 = vadd.f32 0.0, %v7898
  %7900 = vmatmul.bf16.gmra.mxu0 %v7750
  %v7901 = vpop.f32.mrf.mxu0
  %v7902 = vadd.f32 0.0, %v7901
  %v7903 = vpop.f32.mrf.mxu0
  %v7904 = vadd.f32 0.0, %v7903
  %7905 = vdwg.mxu0
  %7906 = vmatpush.bf16.msra.mxu0 %v7710
  %7907 = vmatpush.bf16.msra.mxu0 %v7706
  %7908 = vmatpush.bf16.msra.mxu0 %v7702
  %7909 = vmatpush.bf16.msra.mxu0 %v7698
  %7910 = vmatpush.bf16.msra.mxu0 %v7694
  %7911 = vmatpush.bf16.msra.mxu0 %v7690
  %7912 = vmatpush.bf16.msra.mxu0 %v7686
  %7913 = vmatpush.bf16.msra.mxu0 %v7682
  %7914 = vmatmul.bf16.gmra.mxu0 %v7743
  %v7915 = vpop.f32.mrf.mxu0
  %v7916 = vadd.f32 0.0, %v7915
  %v7917 = vpop.f32.mrf.mxu0
  %v7918 = vadd.f32 0.0, %v7917
  %7919 = vmatmul.bf16.gmra.mxu0 %v7744
  %v7920 = vpop.f32.mrf.mxu0
  %v7921 = vadd.f32 0.0, %v7920
  %v7922 = vpop.f32.mrf.mxu0
  %v7923 = vadd.f32 0.0, %v7922
  %7924 = vmatmul.bf16.gmra.mxu0 %v7745
  %v7925 = vpop.f32.mrf.mxu0
  %v7926 = vadd.f32 0.0, %v7925
  %v7927 = vpop.f32.mrf.mxu0
  %v7928 = vadd.f32 0.0, %v7927
  %7929 = vmatmul.bf16.gmra.mxu0 %v7746
  %v7930 = vpop.f32.mrf.mxu0
  %v7931 = vadd.f32 0.0, %v7930
  %v7932 = vpop.f32.mrf.mxu0
  %v7933 = vadd.f32 0.0, %v7932
  %7934 = vmatmul.bf16.gmra.mxu0 %v7747
  %v7935 = vpop.f32.mrf.mxu0
  %v7936 = vadd.f32 0.0, %v7935
  %v7937 = vpop.f32.mrf.mxu0
  %v7938 = vadd.f32 0.0, %v7937
  %7939 = vmatmul.bf16.gmra.mxu0 %v7748
  %v7940 = vpop.f32.mrf.mxu0
  %v7941 = vadd.f32 0.0, %v7940
  %v7942 = vpop.f32.mrf.mxu0
  %v7943 = vadd.f32 0.0, %v7942
  %7944 = vmatmul.bf16.gmra.mxu0 %v7749
  %v7945 = vpop.f32.mrf.mxu0
  %v7946 = vadd.f32 0.0, %v7945
  %v7947 = vpop.f32.mrf.mxu0
  %v7948 = vadd.f32 0.0, %v7947
  %7949 = vmatmul.bf16.gmra.mxu0 %v7750
  %v7950 = vpop.f32.mrf.mxu0
  %v7951 = vadd.f32 0.0, %v7950
  %v7952 = vpop.f32.mrf.mxu0
  %v7953 = vadd.f32 0.0, %v7952
  %7954 = vdwg.mxu0
  %v7955 = vadd.f32 %v7405, %v7769
  %v7956 = vadd.f32 %v7406, %v7818
  %v7957 = vadd.f32 %v7407, %v7867
  %v7958 = vadd.f32 %v7408, %v7916
  %v7959 = vadd.f32 %v7409, %v7771
  %v7960 = vadd.f32 %v7410, %v7820
  %v7961 = vadd.f32 %v7411, %v7869
  %v7962 = vadd.f32 %v7412, %v7918
  %v7963 = vadd.f32 %v7413, %v7774
  %v7964 = vadd.f32 %v7414, %v7823
  %v7965 = vadd.f32 %v7415, %v7872
  %v7966 = vadd.f32 %v7416, %v7921
  %v7967 = vadd.f32 %v7417, %v7776
  %v7968 = vadd.f32 %v7418, %v7825
  %v7969 = vadd.f32 %v7419, %v7874
  %v7970 = vadd.f32 %v7420, %v7923
  %v7971 = vadd.f32 %v7421, %v7779
  %v7972 = vadd.f32 %v7422, %v7828
  %v7973 = vadd.f32 %v7423, %v7877
  %v7974 = vadd.f32 %v7424, %v7926
  %v7975 = vadd.f32 %v7425, %v7781
  %v7976 = vadd.f32 %v7426, %v7830
  %v7977 = vadd.f32 %v7427, %v7879
  %v7978 = vadd.f32 %v7428, %v7928
  %v7979 = vadd.f32 %v7429, %v7784
  %v7980 = vadd.f32 %v7430, %v7833
  %v7981 = vadd.f32 %v7431, %v7882
  %v7982 = vadd.f32 %v7432, %v7931
  %v7983 = vadd.f32 %v7433, %v7786
  %v7984 = vadd.f32 %v7434, %v7835
  %v7985 = vadd.f32 %v7435, %v7884
  %v7986 = vadd.f32 %v7436, %v7933
  %v7987 = vadd.f32 %v7437, %v7789
  %v7988 = vadd.f32 %v7438, %v7838
  %v7989 = vadd.f32 %v7439, %v7887
  %v7990 = vadd.f32 %v7440, %v7936
  %v7991 = vadd.f32 %v7441, %v7791
  %v7992 = vadd.f32 %v7442, %v7840
  %v7993 = vadd.f32 %v7443, %v7889
  %v7994 = vadd.f32 %v7444, %v7938
  %v7995 = vadd.f32 %v7445, %v7794
  %v7996 = vadd.f32 %v7446, %v7843
  %v7997 = vadd.f32 %v7447, %v7892
  %v7998 = vadd.f32 %v7448, %v7941
  %v7999 = vadd.f32 %v7449, %v7796
  %v8000 = vadd.f32 %v7450, %v7845
  %v8001 = vadd.f32 %v7451, %v7894
  %v8002 = vadd.f32 %v7452, %v7943
  %v8003 = vadd.f32 %v7453, %v7799
  %v8004 = vadd.f32 %v7454, %v7848
  %v8005 = vadd.f32 %v7455, %v7897
  %v8006 = vadd.f32 %v7456, %v7946
  %v8007 = vadd.f32 %v7457, %v7801
  %v8008 = vadd.f32 %v7458, %v7850
  %v8009 = vadd.f32 %v7459, %v7899
  %v8010 = vadd.f32 %v7460, %v7948
  %v8011 = vadd.f32 %v7461, %v7804
  %v8012 = vadd.f32 %v7462, %v7853
  %v8013 = vadd.f32 %v7463, %v7902
  %v8014 = vadd.f32 %v7464, %v7951
  %v8015 = vadd.f32 %v7465, %v7806
  %v8016 = vadd.f32 %v7466, %v7855
  %v8017 = vadd.f32 %v7467, %v7904
  %v8018 = vadd.f32 %v7468, %v7953
  %8019 = vrot.lane.b32.xlu0 %v4979, 110
  %v8020 = vpop.permute.xlu0 %8019
  %8021 = vrot.lane.b32.xlu0 %v4983, 110
  %v8022 = vpop.permute.xlu0 %8021
  %8023 = vrot.lane.b32.xlu0 %v4987, 110
  %v8024 = vpop.permute.xlu0 %8023
  %8025 = vrot.lane.b32.xlu0 %v4991, 110
  %v8026 = vpop.permute.xlu0 %8025
  %8027 = vrot.lane.b32.xlu0 %v4995, 110
  %v8028 = vpop.permute.xlu0 %8027
  %8029 = vrot.lane.b32.xlu0 %v4999, 110
  %v8030 = vpop.permute.xlu0 %8029
  %8031 = vrot.lane.b32.xlu0 %v5003, 110
  %v8032 = vpop.permute.xlu0 %8031
  %8033 = vrot.lane.b32.xlu0 %v5007, 110
  %v8034 = vpop.permute.xlu0 %8033
  %8035 = vrot.lane.b32.xlu0 %v5011, 110
  %v8036 = vpop.permute.xlu0 %8035
  %8037 = vrot.lane.b32.xlu0 %v5015, 110
  %v8038 = vpop.permute.xlu0 %8037
  %8039 = vrot.lane.b32.xlu0 %v5019, 110
  %v8040 = vpop.permute.xlu0 %8039
  %8041 = vrot.lane.b32.xlu0 %v5023, 110
  %v8042 = vpop.permute.xlu0 %8041
  %8043 = vrot.lane.b32.xlu0 %v5027, 110
  %v8044 = vpop.permute.xlu0 %8043
  %8045 = vrot.lane.b32.xlu0 %v5031, 110
  %v8046 = vpop.permute.xlu0 %8045
  %8047 = vrot.lane.b32.xlu0 %v5035, 110
  %v8048 = vpop.permute.xlu0 %8047
  %8049 = vrot.lane.b32.xlu0 %v5039, 110
  %v8050 = vpop.permute.xlu0 %8049
  %8051 = vrot.lane.b32.xlu0 %v4980, 110
  %v8052 = vpop.permute.xlu0 %8051
  %8053 = vrot.lane.b32.xlu0 %v4984, 110
  %v8054 = vpop.permute.xlu0 %8053
  %8055 = vrot.lane.b32.xlu0 %v4988, 110
  %v8056 = vpop.permute.xlu0 %8055
  %8057 = vrot.lane.b32.xlu0 %v4992, 110
  %v8058 = vpop.permute.xlu0 %8057
  %8059 = vrot.lane.b32.xlu0 %v4996, 110
  %v8060 = vpop.permute.xlu0 %8059
  %8061 = vrot.lane.b32.xlu0 %v5000, 110
  %v8062 = vpop.permute.xlu0 %8061
  %8063 = vrot.lane.b32.xlu0 %v5004, 110
  %v8064 = vpop.permute.xlu0 %8063
  %8065 = vrot.lane.b32.xlu0 %v5008, 110
  %v8066 = vpop.permute.xlu0 %8065
  %8067 = vrot.lane.b32.xlu0 %v5012, 110
  %v8068 = vpop.permute.xlu0 %8067
  %8069 = vrot.lane.b32.xlu0 %v5016, 110
  %v8070 = vpop.permute.xlu0 %8069
  %8071 = vrot.lane.b32.xlu0 %v5020, 110
  %v8072 = vpop.permute.xlu0 %8071
  %8073 = vrot.lane.b32.xlu0 %v5024, 110
  %v8074 = vpop.permute.xlu0 %8073
  %8075 = vrot.lane.b32.xlu0 %v5028, 110
  %v8076 = vpop.permute.xlu0 %8075
  %8077 = vrot.lane.b32.xlu0 %v5032, 110
  %v8078 = vpop.permute.xlu0 %8077
  %8079 = vrot.lane.b32.xlu0 %v5036, 110
  %v8080 = vpop.permute.xlu0 %8079
  %8081 = vrot.lane.b32.xlu0 %v5040, 110
  %v8082 = vpop.permute.xlu0 %8081
  %8083 = vrot.lane.b32.xlu0 %v4981, 110
  %v8084 = vpop.permute.xlu0 %8083
  %8085 = vrot.lane.b32.xlu0 %v4985, 110
  %v8086 = vpop.permute.xlu0 %8085
  %8087 = vrot.lane.b32.xlu0 %v4989, 110
  %v8088 = vpop.permute.xlu0 %8087
  %8089 = vrot.lane.b32.xlu0 %v4993, 110
  %v8090 = vpop.permute.xlu0 %8089
  %8091 = vrot.lane.b32.xlu0 %v4997, 110
  %v8092 = vpop.permute.xlu0 %8091
  %8093 = vrot.lane.b32.xlu0 %v5001, 110
  %v8094 = vpop.permute.xlu0 %8093
  %8095 = vrot.lane.b32.xlu0 %v5005, 110
  %v8096 = vpop.permute.xlu0 %8095
  %8097 = vrot.lane.b32.xlu0 %v5009, 110
  %v8098 = vpop.permute.xlu0 %8097
  %8099 = vrot.lane.b32.xlu0 %v5013, 110
  %v8100 = vpop.permute.xlu0 %8099
  %8101 = vrot.lane.b32.xlu0 %v5017, 110
  %v8102 = vpop.permute.xlu0 %8101
  %8103 = vrot.lane.b32.xlu0 %v5021, 110
  %v8104 = vpop.permute.xlu0 %8103
  %8105 = vrot.lane.b32.xlu0 %v5025, 110
  %v8106 = vpop.permute.xlu0 %8105
  %8107 = vrot.lane.b32.xlu0 %v5029, 110
  %v8108 = vpop.permute.xlu0 %8107
  %8109 = vrot.lane.b32.xlu0 %v5033, 110
  %v8110 = vpop.permute.xlu0 %8109
  %8111 = vrot.lane.b32.xlu0 %v5037, 110
  %v8112 = vpop.permute.xlu0 %8111
  %8113 = vrot.lane.b32.xlu0 %v5041, 110
  %v8114 = vpop.permute.xlu0 %8113
  %8115 = vrot.lane.b32.xlu0 %v4982, 110
  %v8116 = vpop.permute.xlu0 %8115
  %8117 = vrot.lane.b32.xlu0 %v4986, 110
  %v8118 = vpop.permute.xlu0 %8117
  %8119 = vrot.lane.b32.xlu0 %v4990, 110
  %v8120 = vpop.permute.xlu0 %8119
  %8121 = vrot.lane.b32.xlu0 %v4994, 110
  %v8122 = vpop.permute.xlu0 %8121
  %8123 = vrot.lane.b32.xlu0 %v4998, 110
  %v8124 = vpop.permute.xlu0 %8123
  %8125 = vrot.lane.b32.xlu0 %v5002, 110
  %v8126 = vpop.permute.xlu0 %8125
  %8127 = vrot.lane.b32.xlu0 %v5006, 110
  %v8128 = vpop.permute.xlu0 %8127
  %8129 = vrot.lane.b32.xlu0 %v5010, 110
  %v8130 = vpop.permute.xlu0 %8129
  %8131 = vrot.lane.b32.xlu0 %v5014, 110
  %v8132 = vpop.permute.xlu0 %8131
  %8133 = vrot.lane.b32.xlu0 %v5018, 110
  %v8134 = vpop.permute.xlu0 %8133
  %8135 = vrot.lane.b32.xlu0 %v5022, 110
  %v8136 = vpop.permute.xlu0 %8135
  %8137 = vrot.lane.b32.xlu0 %v5026, 110
  %v8138 = vpop.permute.xlu0 %8137
  %8139 = vrot.lane.b32.xlu0 %v5030, 110
  %v8140 = vpop.permute.xlu0 %8139
  %8141 = vrot.lane.b32.xlu0 %v5034, 110
  %v8142 = vpop.permute.xlu0 %8141
  %8143 = vrot.lane.b32.xlu0 %v5038, 110
  %v8144 = vpop.permute.xlu0 %8143
  %8145 = vrot.lane.b32.xlu0 %v5042, 110
  %v8146 = vpop.permute.xlu0 %8145
  %vm8147 = vcmp.lt.s32.totalorder %v187, 110
  %v8148 = vsel %vm8147, %v8084, %v8116
  %v8149 = vsel %vm8147, %v8086, %v8118
  %v8150 = vsel %vm8147, %v8088, %v8120
  %v8151 = vsel %vm8147, %v8090, %v8122
  %v8152 = vsel %vm8147, %v8092, %v8124
  %v8153 = vsel %vm8147, %v8094, %v8126
  %v8154 = vsel %vm8147, %v8096, %v8128
  %v8155 = vsel %vm8147, %v8098, %v8130
  %v8156 = vsel %vm8147, %v8100, %v8132
  %v8157 = vsel %vm8147, %v8102, %v8134
  %v8158 = vsel %vm8147, %v8104, %v8136
  %v8159 = vsel %vm8147, %v8106, %v8138
  %v8160 = vsel %vm8147, %v8108, %v8140
  %v8161 = vsel %vm8147, %v8110, %v8142
  %v8162 = vsel %vm8147, %v8112, %v8144
  %v8163 = vsel %vm8147, %v8114, %v8146
  %v8164 = vsel %vm8147, %v8052, %v8084
  %v8165 = vsel %vm8147, %v8054, %v8086
  %v8166 = vsel %vm8147, %v8056, %v8088
  %v8167 = vsel %vm8147, %v8058, %v8090
  %v8168 = vsel %vm8147, %v8060, %v8092
  %v8169 = vsel %vm8147, %v8062, %v8094
  %v8170 = vsel %vm8147, %v8064, %v8096
  %v8171 = vsel %vm8147, %v8066, %v8098
  %v8172 = vsel %vm8147, %v8068, %v8100
  %v8173 = vsel %vm8147, %v8070, %v8102
  %v8174 = vsel %vm8147, %v8072, %v8104
  %v8175 = vsel %vm8147, %v8074, %v8106
  %v8176 = vsel %vm8147, %v8076, %v8108
  %v8177 = vsel %vm8147, %v8078, %v8110
  %v8178 = vsel %vm8147, %v8080, %v8112
  %v8179 = vsel %vm8147, %v8082, %v8114
  %v8180 = vsel %vm8147, %v8020, %v8052
  %v8181 = vsel %vm8147, %v8022, %v8054
  %v8182 = vsel %vm8147, %v8024, %v8056
  %v8183 = vsel %vm8147, %v8026, %v8058
  %v8184 = vsel %vm8147, %v8028, %v8060
  %v8185 = vsel %vm8147, %v8030, %v8062
  %v8186 = vsel %vm8147, %v8032, %v8064
  %v8187 = vsel %vm8147, %v8034, %v8066
  %v8188 = vsel %vm8147, %v8036, %v8068
  %v8189 = vsel %vm8147, %v8038, %v8070
  %v8190 = vsel %vm8147, %v8040, %v8072
  %v8191 = vsel %vm8147, %v8042, %v8074
  %v8192 = vsel %vm8147, %v8044, %v8076
  %v8193 = vsel %vm8147, %v8046, %v8078
  %v8194 = vsel %vm8147, %v8048, %v8080
  %v8195 = vsel %vm8147, %v8050, %v8082
  %v8196 = vsel %vm8147, %v8116, %v8020
  %v8197 = vsel %vm8147, %v8118, %v8022
  %v8198 = vsel %vm8147, %v8120, %v8024
  %v8199 = vsel %vm8147, %v8122, %v8026
  %v8200 = vsel %vm8147, %v8124, %v8028
  %v8201 = vsel %vm8147, %v8126, %v8030
  %v8202 = vsel %vm8147, %v8128, %v8032
  %v8203 = vsel %vm8147, %v8130, %v8034
  %v8204 = vsel %vm8147, %v8132, %v8036
  %v8205 = vsel %vm8147, %v8134, %v8038
  %v8206 = vsel %vm8147, %v8136, %v8040
  %v8207 = vsel %vm8147, %v8138, %v8042
  %v8208 = vsel %vm8147, %v8140, %v8044
  %v8209 = vsel %vm8147, %v8142, %v8046
  %v8210 = vsel %vm8147, %v8144, %v8048
  %v8211 = vsel %vm8147, %v8146, %v8050
  %s8212 = scalar_lea.vmem %s3, 384
  %v8213 = vld [vmem:[%s8212] sm:$0xf]
  %v8214 = vld [vmem:[%s8212 + $0x4] sm:$0xf]
  %v8215 = vld [vmem:[%s8212 + $0x8] sm:$0xf]
  %v8216 = vld [vmem:[%s8212 + $0xc] sm:$0xf]
  %v8217 = vld [vmem:[%s8212 + $0x10] sm:$0xf]
  %v8218 = vld [vmem:[%s8212 + $0x14] sm:$0xf]
  %v8219 = vld [vmem:[%s8212 + $0x18] sm:$0xf]
  %v8220 = vld [vmem:[%s8212 + $0x1c] sm:$0xf]
  %v8221 = vld [vmem:[%s8212 + $0x20] sm:$0xf]
  %v8222 = vld [vmem:[%s8212 + $0x24] sm:$0xf]
  %v8223 = vld [vmem:[%s8212 + $0x28] sm:$0xf]
  %v8224 = vld [vmem:[%s8212 + $0x2c] sm:$0xf]
  %v8225 = vld [vmem:[%s8212 + $0x30] sm:$0xf]
  %v8226 = vld [vmem:[%s8212 + $0x34] sm:$0xf]
  %v8227 = vld [vmem:[%s8212 + $0x38] sm:$0xf]
  %v8228 = vld [vmem:[%s8212 + $0x3c] sm:$0xf]
  %v8229 = vpack.c.bf16 %v8181, %v8180
  %v8230 = vpack.c.bf16 %v8165, %v8164
  %v8231 = vpack.c.bf16 %v8149, %v8148
  %v8232 = vpack.c.bf16 %v8197, %v8196
  %v8233 = vpack.c.bf16 %v8183, %v8182
  %v8234 = vpack.c.bf16 %v8167, %v8166
  %v8235 = vpack.c.bf16 %v8151, %v8150
  %v8236 = vpack.c.bf16 %v8199, %v8198
  %v8237 = vpack.c.bf16 %v8185, %v8184
  %v8238 = vpack.c.bf16 %v8169, %v8168
  %v8239 = vpack.c.bf16 %v8153, %v8152
  %v8240 = vpack.c.bf16 %v8201, %v8200
  %v8241 = vpack.c.bf16 %v8187, %v8186
  %v8242 = vpack.c.bf16 %v8171, %v8170
  %v8243 = vpack.c.bf16 %v8155, %v8154
  %v8244 = vpack.c.bf16 %v8203, %v8202
  %v8245 = vpack.c.bf16 %v8189, %v8188
  %v8246 = vpack.c.bf16 %v8173, %v8172
  %v8247 = vpack.c.bf16 %v8157, %v8156
  %v8248 = vpack.c.bf16 %v8205, %v8204
  %v8249 = vpack.c.bf16 %v8191, %v8190
  %v8250 = vpack.c.bf16 %v8175, %v8174
  %v8251 = vpack.c.bf16 %v8159, %v8158
  %v8252 = vpack.c.bf16 %v8207, %v8206
  %v8253 = vpack.c.bf16 %v8193, %v8192
  %v8254 = vpack.c.bf16 %v8177, %v8176
  %v8255 = vpack.c.bf16 %v8161, %v8160
  %v8256 = vpack.c.bf16 %v8209, %v8208
  %v8257 = vpack.c.bf16 %v8195, %v8194
  %v8258 = vpack.c.bf16 %v8179, %v8178
  %v8259 = vpack.c.bf16 %v8163, %v8162
  %v8260 = vpack.c.bf16 %v8211, %v8210
  %v8277 = vunpack.c.l.b16 %v8213
  %v8278 = vunpack.c.l.b16 %v8214
  %v8279 = vunpack.c.l.b16 %v8215
  %v8280 = vunpack.c.l.b16 %v8216
  %v8281 = vunpack.c.l.b16 %v8217
  %v8282 = vunpack.c.l.b16 %v8218
  %v8283 = vunpack.c.l.b16 %v8219
  %v8284 = vunpack.c.l.b16 %v8220
  %v8285 = vunpack.c.l.b16 %v8221
  %v8286 = vunpack.c.l.b16 %v8222
  %v8287 = vunpack.c.l.b16 %v8223
  %v8288 = vunpack.c.l.b16 %v8224
  %v8289 = vunpack.c.l.b16 %v8225
  %v8290 = vunpack.c.l.b16 %v8226
  %v8291 = vunpack.c.l.b16 %v8227
  %v8292 = vunpack.c.l.b16 %v8228
  %v8293 = vpack.c.b16 %v8278, %v8277
  %v8294 = vpack.c.b16 %v8280, %v8279
  %v8295 = vpack.c.b16 %v8282, %v8281
  %v8296 = vpack.c.b16 %v8284, %v8283
  %v8297 = vpack.c.b16 %v8286, %v8285
  %v8298 = vpack.c.b16 %v8288, %v8287
  %v8299 = vpack.c.b16 %v8290, %v8289
  %v8300 = vpack.c.b16 %v8292, %v8291
  %8309 = vmatpush.bf16.msra.mxu0 %v8257
  %8310 = vmatpush.bf16.msra.mxu0 %v8253
  %8311 = vmatpush.bf16.msra.mxu0 %v8249
  %8312 = vmatpush.bf16.msra.mxu0 %v8245
  %8313 = vmatpush.bf16.msra.mxu0 %v8241
  %8314 = vmatpush.bf16.msra.mxu0 %v8237
  %8315 = vmatpush.bf16.msra.mxu0 %v8233
  %8316 = vmatpush.bf16.msra.mxu0 %v8229
  %8317 = vmatmul.bf16.gmra.mxu0 %v8293
  %v8318 = vpop.f32.mrf.mxu0
  %v8319 = vadd.f32 0.0, %v8318
  %v8320 = vpop.f32.mrf.mxu0
  %v8321 = vadd.f32 0.0, %v8320
  %8322 = vmatmul.bf16.gmra.mxu0 %v8294
  %v8323 = vpop.f32.mrf.mxu0
  %v8324 = vadd.f32 0.0, %v8323
  %v8325 = vpop.f32.mrf.mxu0
  %v8326 = vadd.f32 0.0, %v8325
  %8327 = vmatmul.bf16.gmra.mxu0 %v8295
  %v8328 = vpop.f32.mrf.mxu0
  %v8329 = vadd.f32 0.0, %v8328
  %v8330 = vpop.f32.mrf.mxu0
  %v8331 = vadd.f32 0.0, %v8330
  %8332 = vmatmul.bf16.gmra.mxu0 %v8296
  %v8333 = vpop.f32.mrf.mxu0
  %v8334 = vadd.f32 0.0, %v8333
  %v8335 = vpop.f32.mrf.mxu0
  %v8336 = vadd.f32 0.0, %v8335
  %8337 = vmatmul.bf16.gmra.mxu0 %v8297
  %v8338 = vpop.f32.mrf.mxu0
  %v8339 = vadd.f32 0.0, %v8338
  %v8340 = vpop.f32.mrf.mxu0
  %v8341 = vadd.f32 0.0, %v8340
  %8342 = vmatmul.bf16.gmra.mxu0 %v8298
  %v8343 = vpop.f32.mrf.mxu0
  %v8344 = vadd.f32 0.0, %v8343
  %v8345 = vpop.f32.mrf.mxu0
  %v8346 = vadd.f32 0.0, %v8345
  %8347 = vmatmul.bf16.gmra.mxu0 %v8299
  %v8348 = vpop.f32.mrf.mxu0
  %v8349 = vadd.f32 0.0, %v8348
  %v8350 = vpop.f32.mrf.mxu0
  %v8351 = vadd.f32 0.0, %v8350
  %8352 = vmatmul.bf16.gmra.mxu0 %v8300
  %v8353 = vpop.f32.mrf.mxu0
  %v8354 = vadd.f32 0.0, %v8353
  %v8355 = vpop.f32.mrf.mxu0
  %v8356 = vadd.f32 0.0, %v8355
  %8357 = vdwg.mxu0
  %8358 = vmatpush.bf16.msra.mxu0 %v8258
  %8359 = vmatpush.bf16.msra.mxu0 %v8254
  %8360 = vmatpush.bf16.msra.mxu0 %v8250
  %8361 = vmatpush.bf16.msra.mxu0 %v8246
  %8362 = vmatpush.bf16.msra.mxu0 %v8242
  %8363 = vmatpush.bf16.msra.mxu0 %v8238
  %8364 = vmatpush.bf16.msra.mxu0 %v8234
  %8365 = vmatpush.bf16.msra.mxu0 %v8230
  %8366 = vmatmul.bf16.gmra.mxu0 %v8293
  %v8367 = vpop.f32.mrf.mxu0
  %v8368 = vadd.f32 0.0, %v8367
  %v8369 = vpop.f32.mrf.mxu0
  %v8370 = vadd.f32 0.0, %v8369
  %8371 = vmatmul.bf16.gmra.mxu0 %v8294
  %v8372 = vpop.f32.mrf.mxu0
  %v8373 = vadd.f32 0.0, %v8372
  %v8374 = vpop.f32.mrf.mxu0
  %v8375 = vadd.f32 0.0, %v8374
  %8376 = vmatmul.bf16.gmra.mxu0 %v8295
  %v8377 = vpop.f32.mrf.mxu0
  %v8378 = vadd.f32 0.0, %v8377
  %v8379 = vpop.f32.mrf.mxu0
  %v8380 = vadd.f32 0.0, %v8379
  %8381 = vmatmul.bf16.gmra.mxu0 %v8296
  %v8382 = vpop.f32.mrf.mxu0
  %v8383 = vadd.f32 0.0, %v8382
  %v8384 = vpop.f32.mrf.mxu0
  %v8385 = vadd.f32 0.0, %v8384
  %8386 = vmatmul.bf16.gmra.mxu0 %v8297
  %v8387 = vpop.f32.mrf.mxu0
  %v8388 = vadd.f32 0.0, %v8387
  %v8389 = vpop.f32.mrf.mxu0
  %v8390 = vadd.f32 0.0, %v8389
  %8391 = vmatmul.bf16.gmra.mxu0 %v8298
  %v8392 = vpop.f32.mrf.mxu0
  %v8393 = vadd.f32 0.0, %v8392
  %v8394 = vpop.f32.mrf.mxu0
  %v8395 = vadd.f32 0.0, %v8394
  %8396 = vmatmul.bf16.gmra.mxu0 %v8299
  %v8397 = vpop.f32.mrf.mxu0
  %v8398 = vadd.f32 0.0, %v8397
  %v8399 = vpop.f32.mrf.mxu0
  %v8400 = vadd.f32 0.0, %v8399
  %8401 = vmatmul.bf16.gmra.mxu0 %v8300
  %v8402 = vpop.f32.mrf.mxu0
  %v8403 = vadd.f32 0.0, %v8402
  %v8404 = vpop.f32.mrf.mxu0
  %v8405 = vadd.f32 0.0, %v8404
  %8406 = vdwg.mxu0
  %8407 = vmatpush.bf16.msra.mxu0 %v8259
  %8408 = vmatpush.bf16.msra.mxu0 %v8255
  %8409 = vmatpush.bf16.msra.mxu0 %v8251
  %8410 = vmatpush.bf16.msra.mxu0 %v8247
  %8411 = vmatpush.bf16.msra.mxu0 %v8243
  %8412 = vmatpush.bf16.msra.mxu0 %v8239
  %8413 = vmatpush.bf16.msra.mxu0 %v8235
  %8414 = vmatpush.bf16.msra.mxu0 %v8231
  %8415 = vmatmul.bf16.gmra.mxu0 %v8293
  %v8416 = vpop.f32.mrf.mxu0
  %v8417 = vadd.f32 0.0, %v8416
  %v8418 = vpop.f32.mrf.mxu0
  %v8419 = vadd.f32 0.0, %v8418
  %8420 = vmatmul.bf16.gmra.mxu0 %v8294
  %v8421 = vpop.f32.mrf.mxu0
  %v8422 = vadd.f32 0.0, %v8421
  %v8423 = vpop.f32.mrf.mxu0
  %v8424 = vadd.f32 0.0, %v8423
  %8425 = vmatmul.bf16.gmra.mxu0 %v8295
  %v8426 = vpop.f32.mrf.mxu0
  %v8427 = vadd.f32 0.0, %v8426
  %v8428 = vpop.f32.mrf.mxu0
  %v8429 = vadd.f32 0.0, %v8428
  %8430 = vmatmul.bf16.gmra.mxu0 %v8296
  %v8431 = vpop.f32.mrf.mxu0
  %v8432 = vadd.f32 0.0, %v8431
  %v8433 = vpop.f32.mrf.mxu0
  %v8434 = vadd.f32 0.0, %v8433
  %8435 = vmatmul.bf16.gmra.mxu0 %v8297
  %v8436 = vpop.f32.mrf.mxu0
  %v8437 = vadd.f32 0.0, %v8436
  %v8438 = vpop.f32.mrf.mxu0
  %v8439 = vadd.f32 0.0, %v8438
  %8440 = vmatmul.bf16.gmra.mxu0 %v8298
  %v8441 = vpop.f32.mrf.mxu0
  %v8442 = vadd.f32 0.0, %v8441
  %v8443 = vpop.f32.mrf.mxu0
  %v8444 = vadd.f32 0.0, %v8443
  %8445 = vmatmul.bf16.gmra.mxu0 %v8299
  %v8446 = vpop.f32.mrf.mxu0
  %v8447 = vadd.f32 0.0, %v8446
  %v8448 = vpop.f32.mrf.mxu0
  %v8449 = vadd.f32 0.0, %v8448
  %8450 = vmatmul.bf16.gmra.mxu0 %v8300
  %v8451 = vpop.f32.mrf.mxu0
  %v8452 = vadd.f32 0.0, %v8451
  %v8453 = vpop.f32.mrf.mxu0
  %v8454 = vadd.f32 0.0, %v8453
  %8455 = vdwg.mxu0
  %8456 = vmatpush.bf16.msra.mxu0 %v8260
  %8457 = vmatpush.bf16.msra.mxu0 %v8256
  %8458 = vmatpush.bf16.msra.mxu0 %v8252
  %8459 = vmatpush.bf16.msra.mxu0 %v8248
  %8460 = vmatpush.bf16.msra.mxu0 %v8244
  %8461 = vmatpush.bf16.msra.mxu0 %v8240
  %8462 = vmatpush.bf16.msra.mxu0 %v8236
  %8463 = vmatpush.bf16.msra.mxu0 %v8232
  %8464 = vmatmul.bf16.gmra.mxu0 %v8293
  %v8465 = vpop.f32.mrf.mxu0
  %v8466 = vadd.f32 0.0, %v8465
  %v8467 = vpop.f32.mrf.mxu0
  %v8468 = vadd.f32 0.0, %v8467
  %8469 = vmatmul.bf16.gmra.mxu0 %v8294
  %v8470 = vpop.f32.mrf.mxu0
  %v8471 = vadd.f32 0.0, %v8470
  %v8472 = vpop.f32.mrf.mxu0
  %v8473 = vadd.f32 0.0, %v8472
  %8474 = vmatmul.bf16.gmra.mxu0 %v8295
  %v8475 = vpop.f32.mrf.mxu0
  %v8476 = vadd.f32 0.0, %v8475
  %v8477 = vpop.f32.mrf.mxu0
  %v8478 = vadd.f32 0.0, %v8477
  %8479 = vmatmul.bf16.gmra.mxu0 %v8296
  %v8480 = vpop.f32.mrf.mxu0
  %v8481 = vadd.f32 0.0, %v8480
  %v8482 = vpop.f32.mrf.mxu0
  %v8483 = vadd.f32 0.0, %v8482
  %8484 = vmatmul.bf16.gmra.mxu0 %v8297
  %v8485 = vpop.f32.mrf.mxu0
  %v8486 = vadd.f32 0.0, %v8485
  %v8487 = vpop.f32.mrf.mxu0
  %v8488 = vadd.f32 0.0, %v8487
  %8489 = vmatmul.bf16.gmra.mxu0 %v8298
  %v8490 = vpop.f32.mrf.mxu0
  %v8491 = vadd.f32 0.0, %v8490
  %v8492 = vpop.f32.mrf.mxu0
  %v8493 = vadd.f32 0.0, %v8492
  %8494 = vmatmul.bf16.gmra.mxu0 %v8299
  %v8495 = vpop.f32.mrf.mxu0
  %v8496 = vadd.f32 0.0, %v8495
  %v8497 = vpop.f32.mrf.mxu0
  %v8498 = vadd.f32 0.0, %v8497
  %8499 = vmatmul.bf16.gmra.mxu0 %v8300
  %v8500 = vpop.f32.mrf.mxu0
  %v8501 = vadd.f32 0.0, %v8500
  %v8502 = vpop.f32.mrf.mxu0
  %v8503 = vadd.f32 0.0, %v8502
  %8504 = vdwg.mxu0
  %v8505 = vadd.f32 %v7955, %v8319
  %v8506 = vadd.f32 %v7956, %v8368
  %v8507 = vadd.f32 %v7957, %v8417
  %v8508 = vadd.f32 %v7958, %v8466
  %v8509 = vadd.f32 %v7959, %v8321
  %v8510 = vadd.f32 %v7960, %v8370
  %v8511 = vadd.f32 %v7961, %v8419
  %v8512 = vadd.f32 %v7962, %v8468
  %v8513 = vadd.f32 %v7963, %v8324
  %v8514 = vadd.f32 %v7964, %v8373
  %v8515 = vadd.f32 %v7965, %v8422
  %v8516 = vadd.f32 %v7966, %v8471
  %v8517 = vadd.f32 %v7967, %v8326
  %v8518 = vadd.f32 %v7968, %v8375
  %v8519 = vadd.f32 %v7969, %v8424
  %v8520 = vadd.f32 %v7970, %v8473
  %v8521 = vadd.f32 %v7971, %v8329
  %v8522 = vadd.f32 %v7972, %v8378
  %v8523 = vadd.f32 %v7973, %v8427
  %v8524 = vadd.f32 %v7974, %v8476
  %v8525 = vadd.f32 %v7975, %v8331
  %v8526 = vadd.f32 %v7976, %v8380
  %v8527 = vadd.f32 %v7977, %v8429
  %v8528 = vadd.f32 %v7978, %v8478
  %v8529 = vadd.f32 %v7979, %v8334
  %v8530 = vadd.f32 %v7980, %v8383
  %v8531 = vadd.f32 %v7981, %v8432
  %v8532 = vadd.f32 %v7982, %v8481
  %v8533 = vadd.f32 %v7983, %v8336
  %v8534 = vadd.f32 %v7984, %v8385
  %v8535 = vadd.f32 %v7985, %v8434
  %v8536 = vadd.f32 %v7986, %v8483
  %v8537 = vadd.f32 %v7987, %v8339
  %v8538 = vadd.f32 %v7988, %v8388
  %v8539 = vadd.f32 %v7989, %v8437
  %v8540 = vadd.f32 %v7990, %v8486
  %v8541 = vadd.f32 %v7991, %v8341
  %v8542 = vadd.f32 %v7992, %v8390
  %v8543 = vadd.f32 %v7993, %v8439
  %v8544 = vadd.f32 %v7994, %v8488
  %v8545 = vadd.f32 %v7995, %v8344
  %v8546 = vadd.f32 %v7996, %v8393
  %v8547 = vadd.f32 %v7997, %v8442
  %v8548 = vadd.f32 %v7998, %v8491
  %v8549 = vadd.f32 %v7999, %v8346
  %v8550 = vadd.f32 %v8000, %v8395
  %v8551 = vadd.f32 %v8001, %v8444
  %v8552 = vadd.f32 %v8002, %v8493
  %v8553 = vadd.f32 %v8003, %v8349
  %v8554 = vadd.f32 %v8004, %v8398
  %v8555 = vadd.f32 %v8005, %v8447
  %v8556 = vadd.f32 %v8006, %v8496
  %v8557 = vadd.f32 %v8007, %v8351
  %v8558 = vadd.f32 %v8008, %v8400
  %v8559 = vadd.f32 %v8009, %v8449
  %v8560 = vadd.f32 %v8010, %v8498
  %v8561 = vadd.f32 %v8011, %v8354
  %v8562 = vadd.f32 %v8012, %v8403
  %v8563 = vadd.f32 %v8013, %v8452
  %v8564 = vadd.f32 %v8014, %v8501
  %v8565 = vadd.f32 %v8015, %v8356
  %v8566 = vadd.f32 %v8016, %v8405
  %v8567 = vadd.f32 %v8017, %v8454
  %v8568 = vadd.f32 %v8018, %v8503
  %8569 = vset.pattern.permute.xlu0 2
  %8570 = vperm.xlu0 %8569, %v42
  %v8571 = vpop.permute.xlu0 %8570
  %8573 = vset.pattern.permute.xlu0 2
  %8574 = vperm.xlu0 %8573, %v43
  %v8575 = vpop.permute.xlu0 %8574
  %8577 = vset.pattern.permute.xlu0 2
  %8578 = vperm.xlu0 %8577, %v44
  %v8579 = vpop.permute.xlu0 %8578
  %8581 = vset.pattern.permute.xlu0 2
  %8582 = vperm.xlu0 %8581, %v45
  %v8583 = vpop.permute.xlu0 %8582
  %8585 = vset.pattern.permute.xlu0 2
  %8586 = vperm.xlu0 %8585, %v46
  %v8587 = vpop.permute.xlu0 %8586
  %8589 = vset.pattern.permute.xlu0 2
  %8590 = vperm.xlu0 %8589, %v47
  %v8591 = vpop.permute.xlu0 %8590
  %8593 = vset.pattern.permute.xlu0 2
  %8594 = vperm.xlu0 %8593, %v48
  %v8595 = vpop.permute.xlu0 %8594
  %8597 = vset.pattern.permute.xlu0 2
  %8598 = vperm.xlu0 %8597, %v49
  %v8599 = vpop.permute.xlu0 %8598
  %8601 = vset.pattern.permute.xlu0 2
  %8602 = vperm.xlu0 %8601, %v50
  %v8603 = vpop.permute.xlu0 %8602
  %8605 = vset.pattern.permute.xlu0 2
  %8606 = vperm.xlu0 %8605, %v51
  %v8607 = vpop.permute.xlu0 %8606
  %8609 = vset.pattern.permute.xlu0 2
  %8610 = vperm.xlu0 %8609, %v52
  %v8611 = vpop.permute.xlu0 %8610
  %8613 = vset.pattern.permute.xlu0 2
  %8614 = vperm.xlu0 %8613, %v53
  %v8615 = vpop.permute.xlu0 %8614
  %8617 = vset.pattern.permute.xlu0 2
  %8618 = vperm.xlu0 %8617, %v54
  %v8619 = vpop.permute.xlu0 %8618
  %8621 = vset.pattern.permute.xlu0 2
  %8622 = vperm.xlu0 %8621, %v55
  %v8623 = vpop.permute.xlu0 %8622
  %8625 = vset.pattern.permute.xlu0 2
  %8626 = vperm.xlu0 %8625, %v56
  %v8627 = vpop.permute.xlu0 %8626
  %8629 = vset.pattern.permute.xlu0 2
  %8630 = vperm.xlu0 %8629, %v57
  %v8631 = vpop.permute.xlu0 %8630
  %v8633 = vadd.f32 %v8505, %v8571
  %v8634 = vadd.f32 %v8506, %v8571
  %v8635 = vadd.f32 %v8507, %v8571
  %v8636 = vadd.f32 %v8508, %v8571
  %v8637 = vadd.f32 %v8509, %v8575
  %v8638 = vadd.f32 %v8510, %v8575
  %v8639 = vadd.f32 %v8511, %v8575
  %v8640 = vadd.f32 %v8512, %v8575
  %v8641 = vadd.f32 %v8513, %v8579
  %v8642 = vadd.f32 %v8514, %v8579
  %v8643 = vadd.f32 %v8515, %v8579
  %v8644 = vadd.f32 %v8516, %v8579
  %v8645 = vadd.f32 %v8517, %v8583
  %v8646 = vadd.f32 %v8518, %v8583
  %v8647 = vadd.f32 %v8519, %v8583
  %v8648 = vadd.f32 %v8520, %v8583
  %v8649 = vadd.f32 %v8521, %v8587
  %v8650 = vadd.f32 %v8522, %v8587
  %v8651 = vadd.f32 %v8523, %v8587
  %v8652 = vadd.f32 %v8524, %v8587
  %v8653 = vadd.f32 %v8525, %v8591
  %v8654 = vadd.f32 %v8526, %v8591
  %v8655 = vadd.f32 %v8527, %v8591
  %v8656 = vadd.f32 %v8528, %v8591
  %v8657 = vadd.f32 %v8529, %v8595
  %v8658 = vadd.f32 %v8530, %v8595
  %v8659 = vadd.f32 %v8531, %v8595
  %v8660 = vadd.f32 %v8532, %v8595
  %v8661 = vadd.f32 %v8533, %v8599
  %v8662 = vadd.f32 %v8534, %v8599
  %v8663 = vadd.f32 %v8535, %v8599
  %v8664 = vadd.f32 %v8536, %v8599
  %v8665 = vadd.f32 %v8537, %v8603
  %v8666 = vadd.f32 %v8538, %v8603
  %v8667 = vadd.f32 %v8539, %v8603
  %v8668 = vadd.f32 %v8540, %v8603
  %v8669 = vadd.f32 %v8541, %v8607
  %v8670 = vadd.f32 %v8542, %v8607
  %v8671 = vadd.f32 %v8543, %v8607
  %v8672 = vadd.f32 %v8544, %v8607
  %v8673 = vadd.f32 %v8545, %v8611
  %v8674 = vadd.f32 %v8546, %v8611
  %v8675 = vadd.f32 %v8547, %v8611
  %v8676 = vadd.f32 %v8548, %v8611
  %v8677 = vadd.f32 %v8549, %v8615
  %v8678 = vadd.f32 %v8550, %v8615
  %v8679 = vadd.f32 %v8551, %v8615
  %v8680 = vadd.f32 %v8552, %v8615
  %v8681 = vadd.f32 %v8553, %v8619
  %v8682 = vadd.f32 %v8554, %v8619
  %v8683 = vadd.f32 %v8555, %v8619
  %v8684 = vadd.f32 %v8556, %v8619
  %v8685 = vadd.f32 %v8557, %v8623
  %v8686 = vadd.f32 %v8558, %v8623
  %v8687 = vadd.f32 %v8559, %v8623
  %v8688 = vadd.f32 %v8560, %v8623
  %v8689 = vadd.f32 %v8561, %v8627
  %v8690 = vadd.f32 %v8562, %v8627
  %v8691 = vadd.f32 %v8563, %v8627
  %v8692 = vadd.f32 %v8564, %v8627
  %v8693 = vadd.f32 %v8565, %v8631
  %v8694 = vadd.f32 %v8566, %v8631
  %v8695 = vadd.f32 %v8567, %v8631
  %v8696 = vadd.f32 %v8568, %v8631
  %v8697 = vmax.f32 %v8633, 0.0
  %v8698 = vmax.f32 %v8634, 0.0
  %v8699 = vmax.f32 %v8635, 0.0
  %v8700 = vmax.f32 %v8636, 0.0
  %v8701 = vmax.f32 %v8637, 0.0
  %v8702 = vmax.f32 %v8638, 0.0
  %v8703 = vmax.f32 %v8639, 0.0
  %v8704 = vmax.f32 %v8640, 0.0
  %v8705 = vmax.f32 %v8641, 0.0
  %v8706 = vmax.f32 %v8642, 0.0
  %v8707 = vmax.f32 %v8643, 0.0
  %v8708 = vmax.f32 %v8644, 0.0
  %v8709 = vmax.f32 %v8645, 0.0
  %v8710 = vmax.f32 %v8646, 0.0
  %v8711 = vmax.f32 %v8647, 0.0
  %v8712 = vmax.f32 %v8648, 0.0
  %v8713 = vmax.f32 %v8649, 0.0
  %v8714 = vmax.f32 %v8650, 0.0
  %v8715 = vmax.f32 %v8651, 0.0
  %v8716 = vmax.f32 %v8652, 0.0
  %v8717 = vmax.f32 %v8653, 0.0
  %v8718 = vmax.f32 %v8654, 0.0
  %v8719 = vmax.f32 %v8655, 0.0
  %v8720 = vmax.f32 %v8656, 0.0
  %v8721 = vmax.f32 %v8657, 0.0
  %v8722 = vmax.f32 %v8658, 0.0
  %v8723 = vmax.f32 %v8659, 0.0
  %v8724 = vmax.f32 %v8660, 0.0
  %v8725 = vmax.f32 %v8661, 0.0
  %v8726 = vmax.f32 %v8662, 0.0
  %v8727 = vmax.f32 %v8663, 0.0
  %v8728 = vmax.f32 %v8664, 0.0
  %v8729 = vmax.f32 %v8665, 0.0
  %v8730 = vmax.f32 %v8666, 0.0
  %v8731 = vmax.f32 %v8667, 0.0
  %v8732 = vmax.f32 %v8668, 0.0
  %v8733 = vmax.f32 %v8669, 0.0
  %v8734 = vmax.f32 %v8670, 0.0
  %v8735 = vmax.f32 %v8671, 0.0
  %v8736 = vmax.f32 %v8672, 0.0
  %v8737 = vmax.f32 %v8673, 0.0
  %v8738 = vmax.f32 %v8674, 0.0
  %v8739 = vmax.f32 %v8675, 0.0
  %v8740 = vmax.f32 %v8676, 0.0
  %v8741 = vmax.f32 %v8677, 0.0
  %v8742 = vmax.f32 %v8678, 0.0
  %v8743 = vmax.f32 %v8679, 0.0
  %v8744 = vmax.f32 %v8680, 0.0
  %v8745 = vmax.f32 %v8681, 0.0
  %v8746 = vmax.f32 %v8682, 0.0
  %v8747 = vmax.f32 %v8683, 0.0
  %v8748 = vmax.f32 %v8684, 0.0
  %v8749 = vmax.f32 %v8685, 0.0
  %v8750 = vmax.f32 %v8686, 0.0
  %v8751 = vmax.f32 %v8687, 0.0
  %v8752 = vmax.f32 %v8688, 0.0
  %v8753 = vmax.f32 %v8689, 0.0
  %v8754 = vmax.f32 %v8690, 0.0
  %v8755 = vmax.f32 %v8691, 0.0
  %v8756 = vmax.f32 %v8692, 0.0
  %v8757 = vmax.f32 %v8693, 0.0
  %v8758 = vmax.f32 %v8694, 0.0
  %v8759 = vmax.f32 %v8695, 0.0
  %v8760 = vmax.f32 %v8696, 0.0
  %v8761 = vld [vmem:[%s4] sm:$0xf]
  %v8762 = vld [vmem:[%s4 + $0x4] sm:$0xf]
  %v8763 = vld [vmem:[%s4 + $0x8] sm:$0xf]
  %v8764 = vld [vmem:[%s4 + $0xc] sm:$0xf]
  %v8765 = vld [vmem:[%s4 + $0x10] sm:$0xf]
  %v8766 = vld [vmem:[%s4 + $0x14] sm:$0xf]
  %v8767 = vld [vmem:[%s4 + $0x18] sm:$0xf]
  %v8768 = vld [vmem:[%s4 + $0x1c] sm:$0xf]
  %v8769 = vld [vmem:[%s4 + $0x20] sm:$0xf]
  %v8770 = vld [vmem:[%s4 + $0x24] sm:$0xf]
  %v8771 = vld [vmem:[%s4 + $0x28] sm:$0xf]
  %v8772 = vld [vmem:[%s4 + $0x2c] sm:$0xf]
  %v8773 = vld [vmem:[%s4 + $0x30] sm:$0xf]
  %v8774 = vld [vmem:[%s4 + $0x34] sm:$0xf]
  %v8775 = vld [vmem:[%s4 + $0x38] sm:$0xf]
  %v8776 = vld [vmem:[%s4 + $0x3c] sm:$0xf]
  %v8777 = vpack.c.bf16 %v8701, %v8697
  %v8778 = vpack.c.bf16 %v8702, %v8698
  %v8779 = vpack.c.bf16 %v8703, %v8699
  %v8780 = vpack.c.bf16 %v8704, %v8700
  %v8781 = vpack.c.bf16 %v8709, %v8705
  %v8782 = vpack.c.bf16 %v8710, %v8706
  %v8783 = vpack.c.bf16 %v8711, %v8707
  %v8784 = vpack.c.bf16 %v8712, %v8708
  %v8785 = vpack.c.bf16 %v8717, %v8713
  %v8786 = vpack.c.bf16 %v8718, %v8714
  %v8787 = vpack.c.bf16 %v8719, %v8715
  %v8788 = vpack.c.bf16 %v8720, %v8716
  %v8789 = vpack.c.bf16 %v8725, %v8721
  %v8790 = vpack.c.bf16 %v8726, %v8722
  %v8791 = vpack.c.bf16 %v8727, %v8723
  %v8792 = vpack.c.bf16 %v8728, %v8724
  %v8793 = vpack.c.bf16 %v8733, %v8729
  %v8794 = vpack.c.bf16 %v8734, %v8730
  %v8795 = vpack.c.bf16 %v8735, %v8731
  %v8796 = vpack.c.bf16 %v8736, %v8732
  %v8797 = vpack.c.bf16 %v8741, %v8737
  %v8798 = vpack.c.bf16 %v8742, %v8738
  %v8799 = vpack.c.bf16 %v8743, %v8739
  %v8800 = vpack.c.bf16 %v8744, %v8740
  %v8801 = vpack.c.bf16 %v8749, %v8745
  %v8802 = vpack.c.bf16 %v8750, %v8746
  %v8803 = vpack.c.bf16 %v8751, %v8747
  %v8804 = vpack.c.bf16 %v8752, %v8748
  %v8805 = vpack.c.bf16 %v8757, %v8753
  %v8806 = vpack.c.bf16 %v8758, %v8754
  %v8807 = vpack.c.bf16 %v8759, %v8755
  %v8808 = vpack.c.bf16 %v8760, %v8756
  %8809 = vset.pattern.permute.xlu0 3
  %8810 = vperm.xlu0 %8809, %v42
  %v8811 = vpop.permute.xlu0 %8810
  %8813 = vset.pattern.permute.xlu0 3
  %8814 = vperm.xlu0 %8813, %v43
  %v8815 = vpop.permute.xlu0 %8814
  %8817 = vset.pattern.permute.xlu0 3
  %8818 = vperm.xlu0 %8817, %v44
  %v8819 = vpop.permute.xlu0 %8818
  %8821 = vset.pattern.permute.xlu0 3
  %8822 = vperm.xlu0 %8821, %v45
  %v8823 = vpop.permute.xlu0 %8822
  %8825 = vset.pattern.permute.xlu0 3
  %8826 = vperm.xlu0 %8825, %v46
  %v8827 = vpop.permute.xlu0 %8826
  %8829 = vset.pattern.permute.xlu0 3
  %8830 = vperm.xlu0 %8829, %v47
  %v8831 = vpop.permute.xlu0 %8830
  %8833 = vset.pattern.permute.xlu0 3
  %8834 = vperm.xlu0 %8833, %v48
  %v8835 = vpop.permute.xlu0 %8834
  %8837 = vset.pattern.permute.xlu0 3
  %8838 = vperm.xlu0 %8837, %v49
  %v8839 = vpop.permute.xlu0 %8838
  %8841 = vset.pattern.permute.xlu0 3
  %8842 = vperm.xlu0 %8841, %v50
  %v8843 = vpop.permute.xlu0 %8842
  %8845 = vset.pattern.permute.xlu0 3
  %8846 = vperm.xlu0 %8845, %v51
  %v8847 = vpop.permute.xlu0 %8846
  %8849 = vset.pattern.permute.xlu0 3
  %8850 = vperm.xlu0 %8849, %v52
  %v8851 = vpop.permute.xlu0 %8850
  %8853 = vset.pattern.permute.xlu0 3
  %8854 = vperm.xlu0 %8853, %v53
  %v8855 = vpop.permute.xlu0 %8854
  %8857 = vset.pattern.permute.xlu0 3
  %8858 = vperm.xlu0 %8857, %v54
  %v8859 = vpop.permute.xlu0 %8858
  %8861 = vset.pattern.permute.xlu0 3
  %8862 = vperm.xlu0 %8861, %v55
  %v8863 = vpop.permute.xlu0 %8862
  %8865 = vset.pattern.permute.xlu0 3
  %8866 = vperm.xlu0 %8865, %v56
  %v8867 = vpop.permute.xlu0 %8866
  %8869 = vset.pattern.permute.xlu0 3
  %8870 = vperm.xlu0 %8869, %v57
  %v8871 = vpop.permute.xlu0 %8870
  %v8889 = vunpack.c.l.b16 %v8761
  %v8890 = vunpack.c.l.b16 %v8762
  %v8891 = vunpack.c.l.b16 %v8763
  %v8892 = vunpack.c.l.b16 %v8764
  %v8893 = vunpack.c.l.b16 %v8765
  %v8894 = vunpack.c.l.b16 %v8766
  %v8895 = vunpack.c.l.b16 %v8767
  %v8896 = vunpack.c.l.b16 %v8768
  %v8897 = vunpack.c.l.b16 %v8769
  %v8898 = vunpack.c.l.b16 %v8770
  %v8899 = vunpack.c.l.b16 %v8771
  %v8900 = vunpack.c.l.b16 %v8772
  %v8901 = vunpack.c.l.b16 %v8773
  %v8902 = vunpack.c.l.b16 %v8774
  %v8903 = vunpack.c.l.b16 %v8775
  %v8904 = vunpack.c.l.b16 %v8776
  %v8905 = vpack.c.b16 %v8890, %v8889
  %v8906 = vpack.c.b16 %v8892, %v8891
  %v8907 = vpack.c.b16 %v8894, %v8893
  %v8908 = vpack.c.b16 %v8896, %v8895
  %v8909 = vpack.c.b16 %v8898, %v8897
  %v8910 = vpack.c.b16 %v8900, %v8899
  %v8911 = vpack.c.b16 %v8902, %v8901
  %v8912 = vpack.c.b16 %v8904, %v8903
  %8921 = vmatpush.bf16.msra.mxu0 %v8805
  %8922 = vmatpush.bf16.msra.mxu0 %v8801
  %8923 = vmatpush.bf16.msra.mxu0 %v8797
  %8924 = vmatpush.bf16.msra.mxu0 %v8793
  %8925 = vmatpush.bf16.msra.mxu0 %v8789
  %8926 = vmatpush.bf16.msra.mxu0 %v8785
  %8927 = vmatpush.bf16.msra.mxu0 %v8781
  %8928 = vmatpush.bf16.msra.mxu0 %v8777
  %8929 = vmatmul.bf16.gmra.mxu0 %v8905
  %v8930 = vpop.f32.mrf.mxu0
  %v8931 = vadd.f32 %v8811, %v8930
  %v8932 = vpop.f32.mrf.mxu0
  %v8933 = vadd.f32 %v8815, %v8932
  %8934 = vmatmul.bf16.gmra.mxu0 %v8906
  %v8935 = vpop.f32.mrf.mxu0
  %v8936 = vadd.f32 %v8819, %v8935
  %v8937 = vpop.f32.mrf.mxu0
  %v8938 = vadd.f32 %v8823, %v8937
  %8939 = vmatmul.bf16.gmra.mxu0 %v8907
  %v8940 = vpop.f32.mrf.mxu0
  %v8941 = vadd.f32 %v8827, %v8940
  %v8942 = vpop.f32.mrf.mxu0
  %v8943 = vadd.f32 %v8831, %v8942
  %8944 = vmatmul.bf16.gmra.mxu0 %v8908
  %v8945 = vpop.f32.mrf.mxu0
  %v8946 = vadd.f32 %v8835, %v8945
  %v8947 = vpop.f32.mrf.mxu0
  %v8948 = vadd.f32 %v8839, %v8947
  %8949 = vmatmul.bf16.gmra.mxu0 %v8909
  %v8950 = vpop.f32.mrf.mxu0
  %v8951 = vadd.f32 %v8843, %v8950
  %v8952 = vpop.f32.mrf.mxu0
  %v8953 = vadd.f32 %v8847, %v8952
  %8954 = vmatmul.bf16.gmra.mxu0 %v8910
  %v8955 = vpop.f32.mrf.mxu0
  %v8956 = vadd.f32 %v8851, %v8955
  %v8957 = vpop.f32.mrf.mxu0
  %v8958 = vadd.f32 %v8855, %v8957
  %8959 = vmatmul.bf16.gmra.mxu0 %v8911
  %v8960 = vpop.f32.mrf.mxu0
  %v8961 = vadd.f32 %v8859, %v8960
  %v8962 = vpop.f32.mrf.mxu0
  %v8963 = vadd.f32 %v8863, %v8962
  %8964 = vmatmul.bf16.gmra.mxu0 %v8912
  %v8965 = vpop.f32.mrf.mxu0
  %v8966 = vadd.f32 %v8867, %v8965
  %v8967 = vpop.f32.mrf.mxu0
  %v8968 = vadd.f32 %v8871, %v8967
  %8969 = vdwg.mxu0
  %8970 = vmatpush.bf16.msra.mxu0 %v8806
  %8971 = vmatpush.bf16.msra.mxu0 %v8802
  %8972 = vmatpush.bf16.msra.mxu0 %v8798
  %8973 = vmatpush.bf16.msra.mxu0 %v8794
  %8974 = vmatpush.bf16.msra.mxu0 %v8790
  %8975 = vmatpush.bf16.msra.mxu0 %v8786
  %8976 = vmatpush.bf16.msra.mxu0 %v8782
  %8977 = vmatpush.bf16.msra.mxu0 %v8778
  %8978 = vmatmul.bf16.gmra.mxu0 %v8905
  %v8979 = vpop.f32.mrf.mxu0
  %v8980 = vadd.f32 %v8811, %v8979
  %v8981 = vpop.f32.mrf.mxu0
  %v8982 = vadd.f32 %v8815, %v8981
  %8983 = vmatmul.bf16.gmra.mxu0 %v8906
  %v8984 = vpop.f32.mrf.mxu0
  %v8985 = vadd.f32 %v8819, %v8984
  %v8986 = vpop.f32.mrf.mxu0
  %v8987 = vadd.f32 %v8823, %v8986
  %8988 = vmatmul.bf16.gmra.mxu0 %v8907
  %v8989 = vpop.f32.mrf.mxu0
  %v8990 = vadd.f32 %v8827, %v8989
  %v8991 = vpop.f32.mrf.mxu0
  %v8992 = vadd.f32 %v8831, %v8991
  %8993 = vmatmul.bf16.gmra.mxu0 %v8908
  %v8994 = vpop.f32.mrf.mxu0
  %v8995 = vadd.f32 %v8835, %v8994
  %v8996 = vpop.f32.mrf.mxu0
  %v8997 = vadd.f32 %v8839, %v8996
  %8998 = vmatmul.bf16.gmra.mxu0 %v8909
  %v8999 = vpop.f32.mrf.mxu0
  %v9000 = vadd.f32 %v8843, %v8999
  %v9001 = vpop.f32.mrf.mxu0
  %v9002 = vadd.f32 %v8847, %v9001
  %9003 = vmatmul.bf16.gmra.mxu0 %v8910
  %v9004 = vpop.f32.mrf.mxu0
  %v9005 = vadd.f32 %v8851, %v9004
  %v9006 = vpop.f32.mrf.mxu0
  %v9007 = vadd.f32 %v8855, %v9006
  %9008 = vmatmul.bf16.gmra.mxu0 %v8911
  %v9009 = vpop.f32.mrf.mxu0
  %v9010 = vadd.f32 %v8859, %v9009
  %v9011 = vpop.f32.mrf.mxu0
  %v9012 = vadd.f32 %v8863, %v9011
  %9013 = vmatmul.bf16.gmra.mxu0 %v8912
  %v9014 = vpop.f32.mrf.mxu0
  %v9015 = vadd.f32 %v8867, %v9014
  %v9016 = vpop.f32.mrf.mxu0
  %v9017 = vadd.f32 %v8871, %v9016
  %9018 = vdwg.mxu0
  %9019 = vmatpush.bf16.msra.mxu0 %v8807
  %9020 = vmatpush.bf16.msra.mxu0 %v8803
  %9021 = vmatpush.bf16.msra.mxu0 %v8799
  %9022 = vmatpush.bf16.msra.mxu0 %v8795
  %9023 = vmatpush.bf16.msra.mxu0 %v8791
  %9024 = vmatpush.bf16.msra.mxu0 %v8787
  %9025 = vmatpush.bf16.msra.mxu0 %v8783
  %9026 = vmatpush.bf16.msra.mxu0 %v8779
  %9027 = vmatmul.bf16.gmra.mxu0 %v8905
  %v9028 = vpop.f32.mrf.mxu0
  %v9029 = vadd.f32 %v8811, %v9028
  %v9030 = vpop.f32.mrf.mxu0
  %v9031 = vadd.f32 %v8815, %v9030
  %9032 = vmatmul.bf16.gmra.mxu0 %v8906
  %v9033 = vpop.f32.mrf.mxu0
  %v9034 = vadd.f32 %v8819, %v9033
  %v9035 = vpop.f32.mrf.mxu0
  %v9036 = vadd.f32 %v8823, %v9035
  %9037 = vmatmul.bf16.gmra.mxu0 %v8907
  %v9038 = vpop.f32.mrf.mxu0
  %v9039 = vadd.f32 %v8827, %v9038
  %v9040 = vpop.f32.mrf.mxu0
  %v9041 = vadd.f32 %v8831, %v9040
  %9042 = vmatmul.bf16.gmra.mxu0 %v8908
  %v9043 = vpop.f32.mrf.mxu0
  %v9044 = vadd.f32 %v8835, %v9043
  %v9045 = vpop.f32.mrf.mxu0
  %v9046 = vadd.f32 %v8839, %v9045
  %9047 = vmatmul.bf16.gmra.mxu0 %v8909
  %v9048 = vpop.f32.mrf.mxu0
  %v9049 = vadd.f32 %v8843, %v9048
  %v9050 = vpop.f32.mrf.mxu0
  %v9051 = vadd.f32 %v8847, %v9050
  %9052 = vmatmul.bf16.gmra.mxu0 %v8910
  %v9053 = vpop.f32.mrf.mxu0
  %v9054 = vadd.f32 %v8851, %v9053
  %v9055 = vpop.f32.mrf.mxu0
  %v9056 = vadd.f32 %v8855, %v9055
  %9057 = vmatmul.bf16.gmra.mxu0 %v8911
  %v9058 = vpop.f32.mrf.mxu0
  %v9059 = vadd.f32 %v8859, %v9058
  %v9060 = vpop.f32.mrf.mxu0
  %v9061 = vadd.f32 %v8863, %v9060
  %9062 = vmatmul.bf16.gmra.mxu0 %v8912
  %v9063 = vpop.f32.mrf.mxu0
  %v9064 = vadd.f32 %v8867, %v9063
  %v9065 = vpop.f32.mrf.mxu0
  %v9066 = vadd.f32 %v8871, %v9065
  %9067 = vdwg.mxu0
  %9068 = vmatpush.bf16.msra.mxu0 %v8808
  %9069 = vmatpush.bf16.msra.mxu0 %v8804
  %9070 = vmatpush.bf16.msra.mxu0 %v8800
  %9071 = vmatpush.bf16.msra.mxu0 %v8796
  %9072 = vmatpush.bf16.msra.mxu0 %v8792
  %9073 = vmatpush.bf16.msra.mxu0 %v8788
  %9074 = vmatpush.bf16.msra.mxu0 %v8784
  %9075 = vmatpush.bf16.msra.mxu0 %v8780
  %9076 = vmatmul.bf16.gmra.mxu0 %v8905
  %v9077 = vpop.f32.mrf.mxu0
  %v9078 = vadd.f32 %v8811, %v9077
  %v9079 = vpop.f32.mrf.mxu0
  %v9080 = vadd.f32 %v8815, %v9079
  %9081 = vmatmul.bf16.gmra.mxu0 %v8906
  %v9082 = vpop.f32.mrf.mxu0
  %v9083 = vadd.f32 %v8819, %v9082
  %v9084 = vpop.f32.mrf.mxu0
  %v9085 = vadd.f32 %v8823, %v9084
  %9086 = vmatmul.bf16.gmra.mxu0 %v8907
  %v9087 = vpop.f32.mrf.mxu0
  %v9088 = vadd.f32 %v8827, %v9087
  %v9089 = vpop.f32.mrf.mxu0
  %v9090 = vadd.f32 %v8831, %v9089
  %9091 = vmatmul.bf16.gmra.mxu0 %v8908
  %v9092 = vpop.f32.mrf.mxu0
  %v9093 = vadd.f32 %v8835, %v9092
  %v9094 = vpop.f32.mrf.mxu0
  %v9095 = vadd.f32 %v8839, %v9094
  %9096 = vmatmul.bf16.gmra.mxu0 %v8909
  %v9097 = vpop.f32.mrf.mxu0
  %v9098 = vadd.f32 %v8843, %v9097
  %v9099 = vpop.f32.mrf.mxu0
  %v9100 = vadd.f32 %v8847, %v9099
  %9101 = vmatmul.bf16.gmra.mxu0 %v8910
  %v9102 = vpop.f32.mrf.mxu0
  %v9103 = vadd.f32 %v8851, %v9102
  %v9104 = vpop.f32.mrf.mxu0
  %v9105 = vadd.f32 %v8855, %v9104
  %9106 = vmatmul.bf16.gmra.mxu0 %v8911
  %v9107 = vpop.f32.mrf.mxu0
  %v9108 = vadd.f32 %v8859, %v9107
  %v9109 = vpop.f32.mrf.mxu0
  %v9110 = vadd.f32 %v8863, %v9109
  %9111 = vmatmul.bf16.gmra.mxu0 %v8912
  %v9112 = vpop.f32.mrf.mxu0
  %v9113 = vadd.f32 %v8867, %v9112
  %v9114 = vpop.f32.mrf.mxu0
  %v9115 = vadd.f32 %v8871, %v9114
  %9116 = vdwg.mxu0
  %v9117 = vmax.f32 %v8931, 0.0
  %v9118 = vmax.f32 %v8980, 0.0
  %v9119 = vmax.f32 %v9029, 0.0
  %v9120 = vmax.f32 %v9078, 0.0
  %v9121 = vmax.f32 %v8933, 0.0
  %v9122 = vmax.f32 %v8982, 0.0
  %v9123 = vmax.f32 %v9031, 0.0
  %v9124 = vmax.f32 %v9080, 0.0
  %v9125 = vmax.f32 %v8936, 0.0
  %v9126 = vmax.f32 %v8985, 0.0
  %v9127 = vmax.f32 %v9034, 0.0
  %v9128 = vmax.f32 %v9083, 0.0
  %v9129 = vmax.f32 %v8938, 0.0
  %v9130 = vmax.f32 %v8987, 0.0
  %v9131 = vmax.f32 %v9036, 0.0
  %v9132 = vmax.f32 %v9085, 0.0
  %v9133 = vmax.f32 %v8941, 0.0
  %v9134 = vmax.f32 %v8990, 0.0
  %v9135 = vmax.f32 %v9039, 0.0
  %v9136 = vmax.f32 %v9088, 0.0
  %v9137 = vmax.f32 %v8943, 0.0
  %v9138 = vmax.f32 %v8992, 0.0
  %v9139 = vmax.f32 %v9041, 0.0
  %v9140 = vmax.f32 %v9090, 0.0
  %v9141 = vmax.f32 %v8946, 0.0
  %v9142 = vmax.f32 %v8995, 0.0
  %v9143 = vmax.f32 %v9044, 0.0
  %v9144 = vmax.f32 %v9093, 0.0
  %v9145 = vmax.f32 %v8948, 0.0
  %v9146 = vmax.f32 %v8997, 0.0
  %v9147 = vmax.f32 %v9046, 0.0
  %v9148 = vmax.f32 %v9095, 0.0
  %v9149 = vmax.f32 %v8951, 0.0
  %v9150 = vmax.f32 %v9000, 0.0
  %v9151 = vmax.f32 %v9049, 0.0
  %v9152 = vmax.f32 %v9098, 0.0
  %v9153 = vmax.f32 %v8953, 0.0
  %v9154 = vmax.f32 %v9002, 0.0
  %v9155 = vmax.f32 %v9051, 0.0
  %v9156 = vmax.f32 %v9100, 0.0
  %v9157 = vmax.f32 %v8956, 0.0
  %v9158 = vmax.f32 %v9005, 0.0
  %v9159 = vmax.f32 %v9054, 0.0
  %v9160 = vmax.f32 %v9103, 0.0
  %v9161 = vmax.f32 %v8958, 0.0
  %v9162 = vmax.f32 %v9007, 0.0
  %v9163 = vmax.f32 %v9056, 0.0
  %v9164 = vmax.f32 %v9105, 0.0
  %v9165 = vmax.f32 %v8961, 0.0
  %v9166 = vmax.f32 %v9010, 0.0
  %v9167 = vmax.f32 %v9059, 0.0
  %v9168 = vmax.f32 %v9108, 0.0
  %v9169 = vmax.f32 %v8963, 0.0
  %v9170 = vmax.f32 %v9012, 0.0
  %v9171 = vmax.f32 %v9061, 0.0
  %v9172 = vmax.f32 %v9110, 0.0
  %v9173 = vmax.f32 %v8966, 0.0
  %v9174 = vmax.f32 %v9015, 0.0
  %v9175 = vmax.f32 %v9064, 0.0
  %v9176 = vmax.f32 %v9113, 0.0
  %v9177 = vmax.f32 %v8968, 0.0
  %v9178 = vmax.f32 %v9017, 0.0
  %v9179 = vmax.f32 %v9066, 0.0
  %v9180 = vmax.f32 %v9115, 0.0
  %v9181 = vld [vmem:[%s5] sm:$0xf]
  %v9182 = vld [vmem:[%s5 + $0x4] sm:$0xf]
  %v9183 = vld [vmem:[%s5 + $0x8] sm:$0xf]
  %v9184 = vld [vmem:[%s5 + $0xc] sm:$0xf]
  %v9185 = vld [vmem:[%s5 + $0x10] sm:$0xf]
  %v9186 = vld [vmem:[%s5 + $0x14] sm:$0xf]
  %v9187 = vld [vmem:[%s5 + $0x18] sm:$0xf]
  %v9188 = vld [vmem:[%s5 + $0x1c] sm:$0xf]
  %v9189 = vld [vmem:[%s5 + $0x20] sm:$0xf]
  %v9190 = vld [vmem:[%s5 + $0x24] sm:$0xf]
  %v9191 = vld [vmem:[%s5 + $0x28] sm:$0xf]
  %v9192 = vld [vmem:[%s5 + $0x2c] sm:$0xf]
  %v9193 = vld [vmem:[%s5 + $0x30] sm:$0xf]
  %v9194 = vld [vmem:[%s5 + $0x34] sm:$0xf]
  %v9195 = vld [vmem:[%s5 + $0x38] sm:$0xf]
  %v9196 = vld [vmem:[%s5 + $0x3c] sm:$0xf]
  %v9197 = vpack.c.bf16 %v9121, %v9117
  %v9198 = vpack.c.bf16 %v9122, %v9118
  %v9199 = vpack.c.bf16 %v9123, %v9119
  %v9200 = vpack.c.bf16 %v9124, %v9120
  %v9201 = vpack.c.bf16 %v9129, %v9125
  %v9202 = vpack.c.bf16 %v9130, %v9126
  %v9203 = vpack.c.bf16 %v9131, %v9127
  %v9204 = vpack.c.bf16 %v9132, %v9128
  %v9205 = vpack.c.bf16 %v9137, %v9133
  %v9206 = vpack.c.bf16 %v9138, %v9134
  %v9207 = vpack.c.bf16 %v9139, %v9135
  %v9208 = vpack.c.bf16 %v9140, %v9136
  %v9209 = vpack.c.bf16 %v9145, %v9141
  %v9210 = vpack.c.bf16 %v9146, %v9142
  %v9211 = vpack.c.bf16 %v9147, %v9143
  %v9212 = vpack.c.bf16 %v9148, %v9144
  %v9213 = vpack.c.bf16 %v9153, %v9149
  %v9214 = vpack.c.bf16 %v9154, %v9150
  %v9215 = vpack.c.bf16 %v9155, %v9151
  %v9216 = vpack.c.bf16 %v9156, %v9152
  %v9217 = vpack.c.bf16 %v9161, %v9157
  %v9218 = vpack.c.bf16 %v9162, %v9158
  %v9219 = vpack.c.bf16 %v9163, %v9159
  %v9220 = vpack.c.bf16 %v9164, %v9160
  %v9221 = vpack.c.bf16 %v9169, %v9165
  %v9222 = vpack.c.bf16 %v9170, %v9166
  %v9223 = vpack.c.bf16 %v9171, %v9167
  %v9224 = vpack.c.bf16 %v9172, %v9168
  %v9225 = vpack.c.bf16 %v9177, %v9173
  %v9226 = vpack.c.bf16 %v9178, %v9174
  %v9227 = vpack.c.bf16 %v9179, %v9175
  %v9228 = vpack.c.bf16 %v9180, %v9176
  %9229 = vset.pattern.permute.xlu0 4
  %9230 = vperm.xlu0 %9229, %v42
  %v9231 = vpop.permute.xlu0 %9230
  %9233 = vset.pattern.permute.xlu0 4
  %9234 = vperm.xlu0 %9233, %v43
  %v9235 = vpop.permute.xlu0 %9234
  %9237 = vset.pattern.permute.xlu0 4
  %9238 = vperm.xlu0 %9237, %v44
  %v9239 = vpop.permute.xlu0 %9238
  %9241 = vset.pattern.permute.xlu0 4
  %9242 = vperm.xlu0 %9241, %v45
  %v9243 = vpop.permute.xlu0 %9242
  %9245 = vset.pattern.permute.xlu0 4
  %9246 = vperm.xlu0 %9245, %v46
  %v9247 = vpop.permute.xlu0 %9246
  %9249 = vset.pattern.permute.xlu0 4
  %9250 = vperm.xlu0 %9249, %v47
  %v9251 = vpop.permute.xlu0 %9250
  %9253 = vset.pattern.permute.xlu0 4
  %9254 = vperm.xlu0 %9253, %v48
  %v9255 = vpop.permute.xlu0 %9254
  %9257 = vset.pattern.permute.xlu0 4
  %9258 = vperm.xlu0 %9257, %v49
  %v9259 = vpop.permute.xlu0 %9258
  %9261 = vset.pattern.permute.xlu0 4
  %9262 = vperm.xlu0 %9261, %v50
  %v9263 = vpop.permute.xlu0 %9262
  %9265 = vset.pattern.permute.xlu0 4
  %9266 = vperm.xlu0 %9265, %v51
  %v9267 = vpop.permute.xlu0 %9266
  %9269 = vset.pattern.permute.xlu0 4
  %9270 = vperm.xlu0 %9269, %v52
  %v9271 = vpop.permute.xlu0 %9270
  %9273 = vset.pattern.permute.xlu0 4
  %9274 = vperm.xlu0 %9273, %v53
  %v9275 = vpop.permute.xlu0 %9274
  %9277 = vset.pattern.permute.xlu0 4
  %9278 = vperm.xlu0 %9277, %v54
  %v9279 = vpop.permute.xlu0 %9278
  %9281 = vset.pattern.permute.xlu0 4
  %9282 = vperm.xlu0 %9281, %v55
  %v9283 = vpop.permute.xlu0 %9282
  %9285 = vset.pattern.permute.xlu0 4
  %9286 = vperm.xlu0 %9285, %v56
  %v9287 = vpop.permute.xlu0 %9286
  %9289 = vset.pattern.permute.xlu0 4
  %9290 = vperm.xlu0 %9289, %v57
  %v9291 = vpop.permute.xlu0 %9290
  %v9309 = vunpack.c.l.b16 %v9181
  %v9310 = vunpack.c.l.b16 %v9182
  %v9311 = vunpack.c.l.b16 %v9183
  %v9312 = vunpack.c.l.b16 %v9184
  %v9313 = vunpack.c.l.b16 %v9185
  %v9314 = vunpack.c.l.b16 %v9186
  %v9315 = vunpack.c.l.b16 %v9187
  %v9316 = vunpack.c.l.b16 %v9188
  %v9317 = vunpack.c.l.b16 %v9189
  %v9318 = vunpack.c.l.b16 %v9190
  %v9319 = vunpack.c.l.b16 %v9191
  %v9320 = vunpack.c.l.b16 %v9192
  %v9321 = vunpack.c.l.b16 %v9193
  %v9322 = vunpack.c.l.b16 %v9194
  %v9323 = vunpack.c.l.b16 %v9195
  %v9324 = vunpack.c.l.b16 %v9196
  %v9325 = vpack.c.b16 %v9310, %v9309
  %v9326 = vpack.c.b16 %v9312, %v9311
  %v9327 = vpack.c.b16 %v9314, %v9313
  %v9328 = vpack.c.b16 %v9316, %v9315
  %v9329 = vpack.c.b16 %v9318, %v9317
  %v9330 = vpack.c.b16 %v9320, %v9319
  %v9331 = vpack.c.b16 %v9322, %v9321
  %v9332 = vpack.c.b16 %v9324, %v9323
  %9341 = vmatpush.bf16.msra.mxu0 %v9225
  %9342 = vmatpush.bf16.msra.mxu0 %v9221
  %9343 = vmatpush.bf16.msra.mxu0 %v9217
  %9344 = vmatpush.bf16.msra.mxu0 %v9213
  %9345 = vmatpush.bf16.msra.mxu0 %v9209
  %9346 = vmatpush.bf16.msra.mxu0 %v9205
  %9347 = vmatpush.bf16.msra.mxu0 %v9201
  %9348 = vmatpush.bf16.msra.mxu0 %v9197
  %9349 = vmatmul.bf16.gmra.mxu0 %v9325
  %v9350 = vpop.f32.mrf.mxu0
  %v9351 = vadd.f32 %v9231, %v9350
  %v9352 = vpop.f32.mrf.mxu0
  %v9353 = vadd.f32 %v9235, %v9352
  %9354 = vmatmul.bf16.gmra.mxu0 %v9326
  %v9355 = vpop.f32.mrf.mxu0
  %v9356 = vadd.f32 %v9239, %v9355
  %v9357 = vpop.f32.mrf.mxu0
  %v9358 = vadd.f32 %v9243, %v9357
  %9359 = vmatmul.bf16.gmra.mxu0 %v9327
  %v9360 = vpop.f32.mrf.mxu0
  %v9361 = vadd.f32 %v9247, %v9360
  %v9362 = vpop.f32.mrf.mxu0
  %v9363 = vadd.f32 %v9251, %v9362
  %9364 = vmatmul.bf16.gmra.mxu0 %v9328
  %v9365 = vpop.f32.mrf.mxu0
  %v9366 = vadd.f32 %v9255, %v9365
  %v9367 = vpop.f32.mrf.mxu0
  %v9368 = vadd.f32 %v9259, %v9367
  %9369 = vmatmul.bf16.gmra.mxu0 %v9329
  %v9370 = vpop.f32.mrf.mxu0
  %v9371 = vadd.f32 %v9263, %v9370
  %v9372 = vpop.f32.mrf.mxu0
  %v9373 = vadd.f32 %v9267, %v9372
  %9374 = vmatmul.bf16.gmra.mxu0 %v9330
  %v9375 = vpop.f32.mrf.mxu0
  %v9376 = vadd.f32 %v9271, %v9375
  %v9377 = vpop.f32.mrf.mxu0
  %v9378 = vadd.f32 %v9275, %v9377
  %9379 = vmatmul.bf16.gmra.mxu0 %v9331
  %v9380 = vpop.f32.mrf.mxu0
  %v9381 = vadd.f32 %v9279, %v9380
  %v9382 = vpop.f32.mrf.mxu0
  %v9383 = vadd.f32 %v9283, %v9382
  %9384 = vmatmul.bf16.gmra.mxu0 %v9332
  %v9385 = vpop.f32.mrf.mxu0
  %v9386 = vadd.f32 %v9287, %v9385
  %v9387 = vpop.f32.mrf.mxu0
  %v9388 = vadd.f32 %v9291, %v9387
  %9389 = vdwg.mxu0
  %9390 = vmatpush.bf16.msra.mxu0 %v9226
  %9391 = vmatpush.bf16.msra.mxu0 %v9222
  %9392 = vmatpush.bf16.msra.mxu0 %v9218
  %9393 = vmatpush.bf16.msra.mxu0 %v9214
  %9394 = vmatpush.bf16.msra.mxu0 %v9210
  %9395 = vmatpush.bf16.msra.mxu0 %v9206
  %9396 = vmatpush.bf16.msra.mxu0 %v9202
  %9397 = vmatpush.bf16.msra.mxu0 %v9198
  %9398 = vmatmul.bf16.gmra.mxu0 %v9325
  %v9399 = vpop.f32.mrf.mxu0
  %v9400 = vadd.f32 %v9231, %v9399
  %v9401 = vpop.f32.mrf.mxu0
  %v9402 = vadd.f32 %v9235, %v9401
  %9403 = vmatmul.bf16.gmra.mxu0 %v9326
  %v9404 = vpop.f32.mrf.mxu0
  %v9405 = vadd.f32 %v9239, %v9404
  %v9406 = vpop.f32.mrf.mxu0
  %v9407 = vadd.f32 %v9243, %v9406
  %9408 = vmatmul.bf16.gmra.mxu0 %v9327
  %v9409 = vpop.f32.mrf.mxu0
  %v9410 = vadd.f32 %v9247, %v9409
  %v9411 = vpop.f32.mrf.mxu0
  %v9412 = vadd.f32 %v9251, %v9411
  %9413 = vmatmul.bf16.gmra.mxu0 %v9328
  %v9414 = vpop.f32.mrf.mxu0
  %v9415 = vadd.f32 %v9255, %v9414
  %v9416 = vpop.f32.mrf.mxu0
  %v9417 = vadd.f32 %v9259, %v9416
  %9418 = vmatmul.bf16.gmra.mxu0 %v9329
  %v9419 = vpop.f32.mrf.mxu0
  %v9420 = vadd.f32 %v9263, %v9419
  %v9421 = vpop.f32.mrf.mxu0
  %v9422 = vadd.f32 %v9267, %v9421
  %9423 = vmatmul.bf16.gmra.mxu0 %v9330
  %v9424 = vpop.f32.mrf.mxu0
  %v9425 = vadd.f32 %v9271, %v9424
  %v9426 = vpop.f32.mrf.mxu0
  %v9427 = vadd.f32 %v9275, %v9426
  %9428 = vmatmul.bf16.gmra.mxu0 %v9331
  %v9429 = vpop.f32.mrf.mxu0
  %v9430 = vadd.f32 %v9279, %v9429
  %v9431 = vpop.f32.mrf.mxu0
  %v9432 = vadd.f32 %v9283, %v9431
  %9433 = vmatmul.bf16.gmra.mxu0 %v9332
  %v9434 = vpop.f32.mrf.mxu0
  %v9435 = vadd.f32 %v9287, %v9434
  %v9436 = vpop.f32.mrf.mxu0
  %v9437 = vadd.f32 %v9291, %v9436
  %9438 = vdwg.mxu0
  %9439 = vmatpush.bf16.msra.mxu0 %v9227
  %9440 = vmatpush.bf16.msra.mxu0 %v9223
  %9441 = vmatpush.bf16.msra.mxu0 %v9219
  %9442 = vmatpush.bf16.msra.mxu0 %v9215
  %9443 = vmatpush.bf16.msra.mxu0 %v9211
  %9444 = vmatpush.bf16.msra.mxu0 %v9207
  %9445 = vmatpush.bf16.msra.mxu0 %v9203
  %9446 = vmatpush.bf16.msra.mxu0 %v9199
  %9447 = vmatmul.bf16.gmra.mxu0 %v9325
  %v9448 = vpop.f32.mrf.mxu0
  %v9449 = vadd.f32 %v9231, %v9448
  %v9450 = vpop.f32.mrf.mxu0
  %v9451 = vadd.f32 %v9235, %v9450
  %9452 = vmatmul.bf16.gmra.mxu0 %v9326
  %v9453 = vpop.f32.mrf.mxu0
  %v9454 = vadd.f32 %v9239, %v9453
  %v9455 = vpop.f32.mrf.mxu0
  %v9456 = vadd.f32 %v9243, %v9455
  %9457 = vmatmul.bf16.gmra.mxu0 %v9327
  %v9458 = vpop.f32.mrf.mxu0
  %v9459 = vadd.f32 %v9247, %v9458
  %v9460 = vpop.f32.mrf.mxu0
  %v9461 = vadd.f32 %v9251, %v9460
  %9462 = vmatmul.bf16.gmra.mxu0 %v9328
  %v9463 = vpop.f32.mrf.mxu0
  %v9464 = vadd.f32 %v9255, %v9463
  %v9465 = vpop.f32.mrf.mxu0
  %v9466 = vadd.f32 %v9259, %v9465
  %9467 = vmatmul.bf16.gmra.mxu0 %v9329
  %v9468 = vpop.f32.mrf.mxu0
  %v9469 = vadd.f32 %v9263, %v9468
  %v9470 = vpop.f32.mrf.mxu0
  %v9471 = vadd.f32 %v9267, %v9470
  %9472 = vmatmul.bf16.gmra.mxu0 %v9330
  %v9473 = vpop.f32.mrf.mxu0
  %v9474 = vadd.f32 %v9271, %v9473
  %v9475 = vpop.f32.mrf.mxu0
  %v9476 = vadd.f32 %v9275, %v9475
  %9477 = vmatmul.bf16.gmra.mxu0 %v9331
  %v9478 = vpop.f32.mrf.mxu0
  %v9479 = vadd.f32 %v9279, %v9478
  %v9480 = vpop.f32.mrf.mxu0
  %v9481 = vadd.f32 %v9283, %v9480
  %9482 = vmatmul.bf16.gmra.mxu0 %v9332
  %v9483 = vpop.f32.mrf.mxu0
  %v9484 = vadd.f32 %v9287, %v9483
  %v9485 = vpop.f32.mrf.mxu0
  %v9486 = vadd.f32 %v9291, %v9485
  %9487 = vdwg.mxu0
  %9488 = vmatpush.bf16.msra.mxu0 %v9228
  %9489 = vmatpush.bf16.msra.mxu0 %v9224
  %9490 = vmatpush.bf16.msra.mxu0 %v9220
  %9491 = vmatpush.bf16.msra.mxu0 %v9216
  %9492 = vmatpush.bf16.msra.mxu0 %v9212
  %9493 = vmatpush.bf16.msra.mxu0 %v9208
  %9494 = vmatpush.bf16.msra.mxu0 %v9204
  %9495 = vmatpush.bf16.msra.mxu0 %v9200
  %9496 = vmatmul.bf16.gmra.mxu0 %v9325
  %v9497 = vpop.f32.mrf.mxu0
  %v9498 = vadd.f32 %v9231, %v9497
  %v9499 = vpop.f32.mrf.mxu0
  %v9500 = vadd.f32 %v9235, %v9499
  %9501 = vmatmul.bf16.gmra.mxu0 %v9326
  %v9502 = vpop.f32.mrf.mxu0
  %v9503 = vadd.f32 %v9239, %v9502
  %v9504 = vpop.f32.mrf.mxu0
  %v9505 = vadd.f32 %v9243, %v9504
  %9506 = vmatmul.bf16.gmra.mxu0 %v9327
  %v9507 = vpop.f32.mrf.mxu0
  %v9508 = vadd.f32 %v9247, %v9507
  %v9509 = vpop.f32.mrf.mxu0
  %v9510 = vadd.f32 %v9251, %v9509
  %9511 = vmatmul.bf16.gmra.mxu0 %v9328
  %v9512 = vpop.f32.mrf.mxu0
  %v9513 = vadd.f32 %v9255, %v9512
  %v9514 = vpop.f32.mrf.mxu0
  %v9515 = vadd.f32 %v9259, %v9514
  %9516 = vmatmul.bf16.gmra.mxu0 %v9329
  %v9517 = vpop.f32.mrf.mxu0
  %v9518 = vadd.f32 %v9263, %v9517
  %v9519 = vpop.f32.mrf.mxu0
  %v9520 = vadd.f32 %v9267, %v9519
  %9521 = vmatmul.bf16.gmra.mxu0 %v9330
  %v9522 = vpop.f32.mrf.mxu0
  %v9523 = vadd.f32 %v9271, %v9522
  %v9524 = vpop.f32.mrf.mxu0
  %v9525 = vadd.f32 %v9275, %v9524
  %9526 = vmatmul.bf16.gmra.mxu0 %v9331
  %v9527 = vpop.f32.mrf.mxu0
  %v9528 = vadd.f32 %v9279, %v9527
  %v9529 = vpop.f32.mrf.mxu0
  %v9530 = vadd.f32 %v9283, %v9529
  %9531 = vmatmul.bf16.gmra.mxu0 %v9332
  %v9532 = vpop.f32.mrf.mxu0
  %v9533 = vadd.f32 %v9287, %v9532
  %v9534 = vpop.f32.mrf.mxu0
  %v9535 = vadd.f32 %v9291, %v9534
  %9536 = vdwg.mxu0
  %v9537 = vmax.f32 %v9351, 0.0
  %v9538 = vmax.f32 %v9400, 0.0
  %v9539 = vmax.f32 %v9449, 0.0
  %v9540 = vmax.f32 %v9498, 0.0
  %v9541 = vmax.f32 %v9353, 0.0
  %v9542 = vmax.f32 %v9402, 0.0
  %v9543 = vmax.f32 %v9451, 0.0
  %v9544 = vmax.f32 %v9500, 0.0
  %v9545 = vmax.f32 %v9356, 0.0
  %v9546 = vmax.f32 %v9405, 0.0
  %v9547 = vmax.f32 %v9454, 0.0
  %v9548 = vmax.f32 %v9503, 0.0
  %v9549 = vmax.f32 %v9358, 0.0
  %v9550 = vmax.f32 %v9407, 0.0
  %v9551 = vmax.f32 %v9456, 0.0
  %v9552 = vmax.f32 %v9505, 0.0
  %v9553 = vmax.f32 %v9361, 0.0
  %v9554 = vmax.f32 %v9410, 0.0
  %v9555 = vmax.f32 %v9459, 0.0
  %v9556 = vmax.f32 %v9508, 0.0
  %v9557 = vmax.f32 %v9363, 0.0
  %v9558 = vmax.f32 %v9412, 0.0
  %v9559 = vmax.f32 %v9461, 0.0
  %v9560 = vmax.f32 %v9510, 0.0
  %v9561 = vmax.f32 %v9366, 0.0
  %v9562 = vmax.f32 %v9415, 0.0
  %v9563 = vmax.f32 %v9464, 0.0
  %v9564 = vmax.f32 %v9513, 0.0
  %v9565 = vmax.f32 %v9368, 0.0
  %v9566 = vmax.f32 %v9417, 0.0
  %v9567 = vmax.f32 %v9466, 0.0
  %v9568 = vmax.f32 %v9515, 0.0
  %v9569 = vmax.f32 %v9371, 0.0
  %v9570 = vmax.f32 %v9420, 0.0
  %v9571 = vmax.f32 %v9469, 0.0
  %v9572 = vmax.f32 %v9518, 0.0
  %v9573 = vmax.f32 %v9373, 0.0
  %v9574 = vmax.f32 %v9422, 0.0
  %v9575 = vmax.f32 %v9471, 0.0
  %v9576 = vmax.f32 %v9520, 0.0
  %v9577 = vmax.f32 %v9376, 0.0
  %v9578 = vmax.f32 %v9425, 0.0
  %v9579 = vmax.f32 %v9474, 0.0
  %v9580 = vmax.f32 %v9523, 0.0
  %v9581 = vmax.f32 %v9378, 0.0
  %v9582 = vmax.f32 %v9427, 0.0
  %v9583 = vmax.f32 %v9476, 0.0
  %v9584 = vmax.f32 %v9525, 0.0
  %v9585 = vmax.f32 %v9381, 0.0
  %v9586 = vmax.f32 %v9430, 0.0
  %v9587 = vmax.f32 %v9479, 0.0
  %v9588 = vmax.f32 %v9528, 0.0
  %v9589 = vmax.f32 %v9383, 0.0
  %v9590 = vmax.f32 %v9432, 0.0
  %v9591 = vmax.f32 %v9481, 0.0
  %v9592 = vmax.f32 %v9530, 0.0
  %v9593 = vmax.f32 %v9386, 0.0
  %v9594 = vmax.f32 %v9435, 0.0
  %v9595 = vmax.f32 %v9484, 0.0
  %v9596 = vmax.f32 %v9533, 0.0
  %v9597 = vmax.f32 %v9388, 0.0
  %v9598 = vmax.f32 %v9437, 0.0
  %v9599 = vmax.f32 %v9486, 0.0
  %v9600 = vmax.f32 %v9535, 0.0
  %v9601 = vpack.c.bf16 %v9541, %v9537
  %v9602 = vpack.c.bf16 %v9542, %v9538
  %v9603 = vpack.c.bf16 %v9543, %v9539
  %v9604 = vpack.c.bf16 %v9544, %v9540
  %v9605 = vpack.c.bf16 %v9549, %v9545
  %v9606 = vpack.c.bf16 %v9550, %v9546
  %v9607 = vpack.c.bf16 %v9551, %v9547
  %v9608 = vpack.c.bf16 %v9552, %v9548
  %v9609 = vpack.c.bf16 %v9557, %v9553
  %v9610 = vpack.c.bf16 %v9558, %v9554
  %v9611 = vpack.c.bf16 %v9559, %v9555
  %v9612 = vpack.c.bf16 %v9560, %v9556
  %v9613 = vpack.c.bf16 %v9565, %v9561
  %v9614 = vpack.c.bf16 %v9566, %v9562
  %v9615 = vpack.c.bf16 %v9567, %v9563
  %v9616 = vpack.c.bf16 %v9568, %v9564
  %v9617 = vpack.c.bf16 %v9573, %v9569
  %v9618 = vpack.c.bf16 %v9574, %v9570
  %v9619 = vpack.c.bf16 %v9575, %v9571
  %v9620 = vpack.c.bf16 %v9576, %v9572
  %v9621 = vpack.c.bf16 %v9581, %v9577
  %v9622 = vpack.c.bf16 %v9582, %v9578
  %v9623 = vpack.c.bf16 %v9583, %v9579
  %v9624 = vpack.c.bf16 %v9584, %v9580
  %v9625 = vpack.c.bf16 %v9589, %v9585
  %v9626 = vpack.c.bf16 %v9590, %v9586
  %v9627 = vpack.c.bf16 %v9591, %v9587
  %v9628 = vpack.c.bf16 %v9592, %v9588
  %v9629 = vpack.c.bf16 %v9597, %v9593
  %v9630 = vpack.c.bf16 %v9598, %v9594
  %v9631 = vpack.c.bf16 %v9599, %v9595
  %v9632 = vpack.c.bf16 %v9600, %v9596
  %v9633 = vld [vmem:[%s6] sm:$0xf]
  %v9634 = vld [vmem:[%s6 + $0x4] sm:$0xf]
  %v9635 = vld [vmem:[%s6 + $0x8] sm:$0xf]
  %v9636 = vld [vmem:[%s6 + $0xc] sm:$0xf]
  %9637 = vset.pattern.permute.xlu0 5
  %9638 = vperm.xlu0 %9637, %v42
  %v9639 = vpop.permute.xlu0 %9638
  %9641 = vset.pattern.permute.xlu0 5
  %9642 = vperm.xlu0 %9641, %v43
  %v9643 = vpop.permute.xlu0 %9642
  %9645 = vset.pattern.permute.xlu0 5
  %9646 = vperm.xlu0 %9645, %v44
  %v9647 = vpop.permute.xlu0 %9646
  %9649 = vset.pattern.permute.xlu0 5
  %9650 = vperm.xlu0 %9649, %v45
  %v9651 = vpop.permute.xlu0 %9650
  %v9657 = vunpack.c.l.b16 %v9633
  %v9658 = vunpack.c.l.b16 %v9634
  %v9659 = vunpack.c.l.b16 %v9635
  %v9660 = vunpack.c.l.b16 %v9636
  %v9661 = vpack.c.b16 %v9658, %v9657
  %v9662 = vpack.c.b16 %v9660, %v9659
  %9665 = vmatpush.bf16.msra.mxu0 %v9629
  %9666 = vmatpush.bf16.msra.mxu0 %v9625
  %9667 = vmatpush.bf16.msra.mxu0 %v9621
  %9668 = vmatpush.bf16.msra.mxu0 %v9617
  %9669 = vmatpush.bf16.msra.mxu0 %v9613
  %9670 = vmatpush.bf16.msra.mxu0 %v9609
  %9671 = vmatpush.bf16.msra.mxu0 %v9605
  %9672 = vmatpush.bf16.msra.mxu0 %v9601
  %9673 = vmatmul.bf16.gmra.mxu0 %v9661
  %v9674 = vpop.f32.mrf.mxu0
  %v9675 = vadd.f32 %v9639, %v9674
  %v9676 = vpop.f32.mrf.mxu0
  %v9677 = vadd.f32 %v9643, %v9676
  %9678 = vmatmul.bf16.gmra.mxu0 %v9662
  %v9679 = vpop.f32.mrf.mxu0
  %v9680 = vadd.f32 %v9647, %v9679
  %v9681 = vpop.f32.mrf.mxu0
  %v9682 = vadd.f32 %v9651, %v9681
  %9683 = vdwg.mxu0
  %9684 = vmatpush.bf16.msra.mxu0 %v9630
  %9685 = vmatpush.bf16.msra.mxu0 %v9626
  %9686 = vmatpush.bf16.msra.mxu0 %v9622
  %9687 = vmatpush.bf16.msra.mxu0 %v9618
  %9688 = vmatpush.bf16.msra.mxu0 %v9614
  %9689 = vmatpush.bf16.msra.mxu0 %v9610
  %9690 = vmatpush.bf16.msra.mxu0 %v9606
  %9691 = vmatpush.bf16.msra.mxu0 %v9602
  %9692 = vmatmul.bf16.gmra.mxu0 %v9661
  %v9693 = vpop.f32.mrf.mxu0
  %v9694 = vadd.f32 %v9639, %v9693
  %v9695 = vpop.f32.mrf.mxu0
  %v9696 = vadd.f32 %v9643, %v9695
  %9697 = vmatmul.bf16.gmra.mxu0 %v9662
  %v9698 = vpop.f32.mrf.mxu0
  %v9699 = vadd.f32 %v9647, %v9698
  %v9700 = vpop.f32.mrf.mxu0
  %v9701 = vadd.f32 %v9651, %v9700
  %9702 = vdwg.mxu0
  %9703 = vmatpush.bf16.msra.mxu0 %v9631
  %9704 = vmatpush.bf16.msra.mxu0 %v9627
  %9705 = vmatpush.bf16.msra.mxu0 %v9623
  %9706 = vmatpush.bf16.msra.mxu0 %v9619
  %9707 = vmatpush.bf16.msra.mxu0 %v9615
  %9708 = vmatpush.bf16.msra.mxu0 %v9611
  %9709 = vmatpush.bf16.msra.mxu0 %v9607
  %9710 = vmatpush.bf16.msra.mxu0 %v9603
  %9711 = vmatmul.bf16.gmra.mxu0 %v9661
  %v9712 = vpop.f32.mrf.mxu0
  %v9713 = vadd.f32 %v9639, %v9712
  %v9714 = vpop.f32.mrf.mxu0
  %v9715 = vadd.f32 %v9643, %v9714
  %9716 = vmatmul.bf16.gmra.mxu0 %v9662
  %v9717 = vpop.f32.mrf.mxu0
  %v9718 = vadd.f32 %v9647, %v9717
  %v9719 = vpop.f32.mrf.mxu0
  %v9720 = vadd.f32 %v9651, %v9719
  %9721 = vdwg.mxu0
  %9722 = vmatpush.bf16.msra.mxu0 %v9632
  %9723 = vmatpush.bf16.msra.mxu0 %v9628
  %9724 = vmatpush.bf16.msra.mxu0 %v9624
  %9725 = vmatpush.bf16.msra.mxu0 %v9620
  %9726 = vmatpush.bf16.msra.mxu0 %v9616
  %9727 = vmatpush.bf16.msra.mxu0 %v9612
  %9728 = vmatpush.bf16.msra.mxu0 %v9608
  %9729 = vmatpush.bf16.msra.mxu0 %v9604
  %9730 = vmatmul.bf16.gmra.mxu0 %v9661
  %v9731 = vpop.f32.mrf.mxu0
  %v9732 = vadd.f32 %v9639, %v9731
  %v9733 = vpop.f32.mrf.mxu0
  %v9734 = vadd.f32 %v9643, %v9733
  %9735 = vmatmul.bf16.gmra.mxu0 %v9662
  %v9736 = vpop.f32.mrf.mxu0
  %v9737 = vadd.f32 %v9647, %v9736
  %v9738 = vpop.f32.mrf.mxu0
  %v9739 = vadd.f32 %v9651, %v9738
  %9740 = vdwg.mxu0
  %v9741 = vmax.f32 %v9675, 0.0
  %v9742 = vmax.f32 %v9694, 0.0
  %v9743 = vmax.f32 %v9713, 0.0
  %v9744 = vmax.f32 %v9732, 0.0
  %v9745 = vmax.f32 %v9677, 0.0
  %v9746 = vmax.f32 %v9696, 0.0
  %v9747 = vmax.f32 %v9715, 0.0
  %v9748 = vmax.f32 %v9734, 0.0
  %v9749 = vmax.f32 %v9680, 0.0
  %v9750 = vmax.f32 %v9699, 0.0
  %v9751 = vmax.f32 %v9718, 0.0
  %v9752 = vmax.f32 %v9737, 0.0
  %v9753 = vmax.f32 %v9682, 0.0
  %v9754 = vmax.f32 %v9701, 0.0
  %v9755 = vmax.f32 %v9720, 0.0
  %v9756 = vmax.f32 %v9739, 0.0
  %v9757 = vld [vmem:[%s7] sm:$0xf]
  %v9758 = vld [vmem:[%s7 + $0x4] sm:$0xf]
  %v9759 = vld [vmem:[%s7 + $0x8] sm:$0xf]
  %v9760 = vld [vmem:[%s7 + $0xc] sm:$0xf]
  %v9761 = vld [vmem:[%s7 + $0x10] sm:$0xf]
  %v9762 = vld [vmem:[%s7 + $0x14] sm:$0xf]
  %v9763 = vld [vmem:[%s7 + $0x18] sm:$0xf]
  %v9764 = vld [vmem:[%s7 + $0x1c] sm:$0xf]
  %v9765 = vld [vmem:[%s7 + $0x20] sm:$0xf]
  %v9766 = vld [vmem:[%s7 + $0x24] sm:$0xf]
  %v9767 = vld [vmem:[%s7 + $0x28] sm:$0xf]
  %v9768 = vld [vmem:[%s7 + $0x2c] sm:$0xf]
  %v9769 = vld [vmem:[%s7 + $0x30] sm:$0xf]
  %v9770 = vld [vmem:[%s7 + $0x34] sm:$0xf]
  %v9771 = vld [vmem:[%s7 + $0x38] sm:$0xf]
  %v9772 = vld [vmem:[%s7 + $0x3c] sm:$0xf]
  %v9773 = vpack.c.bf16 %v9745, %v9741
  %v9774 = vpack.c.bf16 %v9746, %v9742
  %v9775 = vpack.c.bf16 %v9747, %v9743
  %v9776 = vpack.c.bf16 %v9748, %v9744
  %v9777 = vpack.c.bf16 %v9753, %v9749
  %v9778 = vpack.c.bf16 %v9754, %v9750
  %v9779 = vpack.c.bf16 %v9755, %v9751
  %v9780 = vpack.c.bf16 %v9756, %v9752
  %9781 = vset.pattern.permute.xlu0 6
  %9782 = vperm.xlu0 %9781, %v42
  %v9783 = vpop.permute.xlu0 %9782
  %9785 = vset.pattern.permute.xlu0 6
  %9786 = vperm.xlu0 %9785, %v43
  %v9787 = vpop.permute.xlu0 %9786
  %9789 = vset.pattern.permute.xlu0 6
  %9790 = vperm.xlu0 %9789, %v44
  %v9791 = vpop.permute.xlu0 %9790
  %9793 = vset.pattern.permute.xlu0 6
  %9794 = vperm.xlu0 %9793, %v45
  %v9795 = vpop.permute.xlu0 %9794
  %9797 = vset.pattern.permute.xlu0 6
  %9798 = vperm.xlu0 %9797, %v46
  %v9799 = vpop.permute.xlu0 %9798
  %9801 = vset.pattern.permute.xlu0 6
  %9802 = vperm.xlu0 %9801, %v47
  %v9803 = vpop.permute.xlu0 %9802
  %9805 = vset.pattern.permute.xlu0 6
  %9806 = vperm.xlu0 %9805, %v48
  %v9807 = vpop.permute.xlu0 %9806
  %9809 = vset.pattern.permute.xlu0 6
  %9810 = vperm.xlu0 %9809, %v49
  %v9811 = vpop.permute.xlu0 %9810
  %9813 = vset.pattern.permute.xlu0 6
  %9814 = vperm.xlu0 %9813, %v50
  %v9815 = vpop.permute.xlu0 %9814
  %9817 = vset.pattern.permute.xlu0 6
  %9818 = vperm.xlu0 %9817, %v51
  %v9819 = vpop.permute.xlu0 %9818
  %9821 = vset.pattern.permute.xlu0 6
  %9822 = vperm.xlu0 %9821, %v52
  %v9823 = vpop.permute.xlu0 %9822
  %9825 = vset.pattern.permute.xlu0 6
  %9826 = vperm.xlu0 %9825, %v53
  %v9827 = vpop.permute.xlu0 %9826
  %9829 = vset.pattern.permute.xlu0 6
  %9830 = vperm.xlu0 %9829, %v54
  %v9831 = vpop.permute.xlu0 %9830
  %9833 = vset.pattern.permute.xlu0 6
  %9834 = vperm.xlu0 %9833, %v55
  %v9835 = vpop.permute.xlu0 %9834
  %9837 = vset.pattern.permute.xlu0 6
  %9838 = vperm.xlu0 %9837, %v56
  %v9839 = vpop.permute.xlu0 %9838
  %9841 = vset.pattern.permute.xlu0 6
  %9842 = vperm.xlu0 %9841, %v57
  %v9843 = vpop.permute.xlu0 %9842
  %v9861 = vunpack.c.l.b16 %v9757
  %v9862 = vunpack.c.l.b16 %v9758
  %v9863 = vunpack.c.l.b16 %v9759
  %v9864 = vunpack.c.l.b16 %v9760
  %v9865 = vunpack.c.l.b16 %v9761
  %v9866 = vunpack.c.l.b16 %v9762
  %v9867 = vunpack.c.l.b16 %v9763
  %v9868 = vunpack.c.l.b16 %v9764
  %v9869 = vunpack.c.l.b16 %v9765
  %v9870 = vunpack.c.l.b16 %v9766
  %v9871 = vunpack.c.l.b16 %v9767
  %v9872 = vunpack.c.l.b16 %v9768
  %v9873 = vunpack.c.l.b16 %v9769
  %v9874 = vunpack.c.l.b16 %v9770
  %v9875 = vunpack.c.l.b16 %v9771
  %v9876 = vunpack.c.l.b16 %v9772
  %v9877 = vpack.c.b16 %v9862, %v9861
  %v9878 = vpack.c.b16 %v9864, %v9863
  %v9879 = vpack.c.b16 %v9866, %v9865
  %v9880 = vpack.c.b16 %v9868, %v9867
  %v9881 = vpack.c.b16 %v9870, %v9869
  %v9882 = vpack.c.b16 %v9872, %v9871
  %v9883 = vpack.c.b16 %v9874, %v9873
  %v9884 = vpack.c.b16 %v9876, %v9875
  %vm9885 = vcmask 261120
  %v9887 = vsel %vm9885, %v9877, 0
  %v9890 = vsel %vm9885, %v9878, 0
  %v9893 = vsel %vm9885, %v9879, 0
  %v9896 = vsel %vm9885, %v9880, 0
  %v9899 = vsel %vm9885, %v9881, 0
  %v9902 = vsel %vm9885, %v9882, 0
  %v9905 = vsel %vm9885, %v9883, 0
  %v9908 = vsel %vm9885, %v9884, 0
  %9910 = vmatpush.bf16.msra.mxu0 0
  %9911 = vmatpush.bf16.msra.mxu0 0
  %9912 = vmatpush.bf16.msra.mxu0 0
  %9913 = vmatpush.bf16.msra.mxu0 0
  %9914 = vmatpush.bf16.msra.mxu0 0
  %9915 = vmatpush.bf16.msra.mxu0 0
  %9916 = vmatpush.bf16.msra.mxu0 %v9777
  %9917 = vmatpush.bf16.msra.mxu0 %v9773
  %9918 = vmatmul.bf16.gmra.mxu0 %v9887
  %v9919 = vpop.f32.mrf.mxu0
  %v9920 = vadd.f32 %v9783, %v9919
  %v9921 = vpop.f32.mrf.mxu0
  %v9922 = vadd.f32 %v9787, %v9921
  %9923 = vmatmul.bf16.gmra.mxu0 %v9890
  %v9924 = vpop.f32.mrf.mxu0
  %v9925 = vadd.f32 %v9791, %v9924
  %v9926 = vpop.f32.mrf.mxu0
  %v9927 = vadd.f32 %v9795, %v9926
  %9928 = vmatmul.bf16.gmra.mxu0 %v9893
  %v9929 = vpop.f32.mrf.mxu0
  %v9930 = vadd.f32 %v9799, %v9929
  %v9931 = vpop.f32.mrf.mxu0
  %v9932 = vadd.f32 %v9803, %v9931
  %9933 = vmatmul.bf16.gmra.mxu0 %v9896
  %v9934 = vpop.f32.mrf.mxu0
  %v9935 = vadd.f32 %v9807, %v9934
  %v9936 = vpop.f32.mrf.mxu0
  %v9937 = vadd.f32 %v9811, %v9936
  %9938 = vmatmul.bf16.gmra.mxu0 %v9899
  %v9939 = vpop.f32.mrf.mxu0
  %v9940 = vadd.f32 %v9815, %v9939
  %v9941 = vpop.f32.mrf.mxu0
  %v9942 = vadd.f32 %v9819, %v9941
  %9943 = vmatmul.bf16.gmra.mxu0 %v9902
  %v9944 = vpop.f32.mrf.mxu0
  %v9945 = vadd.f32 %v9823, %v9944
  %v9946 = vpop.f32.mrf.mxu0
  %v9947 = vadd.f32 %v9827, %v9946
  %9948 = vmatmul.bf16.gmra.mxu0 %v9905
  %v9949 = vpop.f32.mrf.mxu0
  %v9950 = vadd.f32 %v9831, %v9949
  %v9951 = vpop.f32.mrf.mxu0
  %v9952 = vadd.f32 %v9835, %v9951
  %9953 = vmatmul.bf16.gmra.mxu0 %v9908
  %v9954 = vpop.f32.mrf.mxu0
  %v9955 = vadd.f32 %v9839, %v9954
  %v9956 = vpop.f32.mrf.mxu0
  %v9957 = vadd.f32 %v9843, %v9956
  %9958 = vdwg.mxu0
  %9959 = vmatpush.bf16.msra.mxu0 0
  %9960 = vmatpush.bf16.msra.mxu0 0
  %9961 = vmatpush.bf16.msra.mxu0 0
  %9962 = vmatpush.bf16.msra.mxu0 0
  %9963 = vmatpush.bf16.msra.mxu0 0
  %9964 = vmatpush.bf16.msra.mxu0 0
  %9965 = vmatpush.bf16.msra.mxu0 %v9778
  %9966 = vmatpush.bf16.msra.mxu0 %v9774
  %9967 = vmatmul.bf16.gmra.mxu0 %v9887
  %v9968 = vpop.f32.mrf.mxu0
  %v9969 = vadd.f32 %v9783, %v9968
  %v9970 = vpop.f32.mrf.mxu0
  %v9971 = vadd.f32 %v9787, %v9970
  %9972 = vmatmul.bf16.gmra.mxu0 %v9890
  %v9973 = vpop.f32.mrf.mxu0
  %v9974 = vadd.f32 %v9791, %v9973
  %v9975 = vpop.f32.mrf.mxu0
  %v9976 = vadd.f32 %v9795, %v9975
  %9977 = vmatmul.bf16.gmra.mxu0 %v9893
  %v9978 = vpop.f32.mrf.mxu0
  %v9979 = vadd.f32 %v9799, %v9978
  %v9980 = vpop.f32.mrf.mxu0
  %v9981 = vadd.f32 %v9803, %v9980
  %9982 = vmatmul.bf16.gmra.mxu0 %v9896
  %v9983 = vpop.f32.mrf.mxu0
  %v9984 = vadd.f32 %v9807, %v9983
  %v9985 = vpop.f32.mrf.mxu0
  %v9986 = vadd.f32 %v9811, %v9985
  %9987 = vmatmul.bf16.gmra.mxu0 %v9899
  %v9988 = vpop.f32.mrf.mxu0
  %v9989 = vadd.f32 %v9815, %v9988
  %v9990 = vpop.f32.mrf.mxu0
  %v9991 = vadd.f32 %v9819, %v9990
  %9992 = vmatmul.bf16.gmra.mxu0 %v9902
  %v9993 = vpop.f32.mrf.mxu0
  %v9994 = vadd.f32 %v9823, %v9993
  %v9995 = vpop.f32.mrf.mxu0
  %v9996 = vadd.f32 %v9827, %v9995
  %9997 = vmatmul.bf16.gmra.mxu0 %v9905
  %v9998 = vpop.f32.mrf.mxu0
  %v9999 = vadd.f32 %v9831, %v9998
  %v10000 = vpop.f32.mrf.mxu0
  %v10001 = vadd.f32 %v9835, %v10000
  %10002 = vmatmul.bf16.gmra.mxu0 %v9908
  %v10003 = vpop.f32.mrf.mxu0
  %v10004 = vadd.f32 %v9839, %v10003
  %v10005 = vpop.f32.mrf.mxu0
  %v10006 = vadd.f32 %v9843, %v10005
  %10007 = vdwg.mxu0
  %10008 = vmatpush.bf16.msra.mxu0 0
  %10009 = vmatpush.bf16.msra.mxu0 0
  %10010 = vmatpush.bf16.msra.mxu0 0
  %10011 = vmatpush.bf16.msra.mxu0 0
  %10012 = vmatpush.bf16.msra.mxu0 0
  %10013 = vmatpush.bf16.msra.mxu0 0
  %10014 = vmatpush.bf16.msra.mxu0 %v9779
  %10015 = vmatpush.bf16.msra.mxu0 %v9775
  %10016 = vmatmul.bf16.gmra.mxu0 %v9887
  %v10017 = vpop.f32.mrf.mxu0
  %v10018 = vadd.f32 %v9783, %v10017
  %v10019 = vpop.f32.mrf.mxu0
  %v10020 = vadd.f32 %v9787, %v10019
  %10021 = vmatmul.bf16.gmra.mxu0 %v9890
  %v10022 = vpop.f32.mrf.mxu0
  %v10023 = vadd.f32 %v9791, %v10022
  %v10024 = vpop.f32.mrf.mxu0
  %v10025 = vadd.f32 %v9795, %v10024
  %10026 = vmatmul.bf16.gmra.mxu0 %v9893
  %v10027 = vpop.f32.mrf.mxu0
  %v10028 = vadd.f32 %v9799, %v10027
  %v10029 = vpop.f32.mrf.mxu0
  %v10030 = vadd.f32 %v9803, %v10029
  %10031 = vmatmul.bf16.gmra.mxu0 %v9896
  %v10032 = vpop.f32.mrf.mxu0
  %v10033 = vadd.f32 %v9807, %v10032
  %v10034 = vpop.f32.mrf.mxu0
  %v10035 = vadd.f32 %v9811, %v10034
  %10036 = vmatmul.bf16.gmra.mxu0 %v9899
  %v10037 = vpop.f32.mrf.mxu0
  %v10038 = vadd.f32 %v9815, %v10037
  %v10039 = vpop.f32.mrf.mxu0
  %v10040 = vadd.f32 %v9819, %v10039
  %10041 = vmatmul.bf16.gmra.mxu0 %v9902
  %v10042 = vpop.f32.mrf.mxu0
  %v10043 = vadd.f32 %v9823, %v10042
  %v10044 = vpop.f32.mrf.mxu0
  %v10045 = vadd.f32 %v9827, %v10044
  %10046 = vmatmul.bf16.gmra.mxu0 %v9905
  %v10047 = vpop.f32.mrf.mxu0
  %v10048 = vadd.f32 %v9831, %v10047
  %v10049 = vpop.f32.mrf.mxu0
  %v10050 = vadd.f32 %v9835, %v10049
  %10051 = vmatmul.bf16.gmra.mxu0 %v9908
  %v10052 = vpop.f32.mrf.mxu0
  %v10053 = vadd.f32 %v9839, %v10052
  %v10054 = vpop.f32.mrf.mxu0
  %v10055 = vadd.f32 %v9843, %v10054
  %10056 = vdwg.mxu0
  %10057 = vmatpush.bf16.msra.mxu0 0
  %10058 = vmatpush.bf16.msra.mxu0 0
  %10059 = vmatpush.bf16.msra.mxu0 0
  %10060 = vmatpush.bf16.msra.mxu0 0
  %10061 = vmatpush.bf16.msra.mxu0 0
  %10062 = vmatpush.bf16.msra.mxu0 0
  %10063 = vmatpush.bf16.msra.mxu0 %v9780
  %10064 = vmatpush.bf16.msra.mxu0 %v9776
  %10065 = vmatmul.bf16.gmra.mxu0 %v9887
  %v10066 = vpop.f32.mrf.mxu0
  %v10067 = vadd.f32 %v9783, %v10066
  %v10068 = vpop.f32.mrf.mxu0
  %v10069 = vadd.f32 %v9787, %v10068
  %10070 = vmatmul.bf16.gmra.mxu0 %v9890
  %v10071 = vpop.f32.mrf.mxu0
  %v10072 = vadd.f32 %v9791, %v10071
  %v10073 = vpop.f32.mrf.mxu0
  %v10074 = vadd.f32 %v9795, %v10073
  %10075 = vmatmul.bf16.gmra.mxu0 %v9893
  %v10076 = vpop.f32.mrf.mxu0
  %v10077 = vadd.f32 %v9799, %v10076
  %v10078 = vpop.f32.mrf.mxu0
  %v10079 = vadd.f32 %v9803, %v10078
  %10080 = vmatmul.bf16.gmra.mxu0 %v9896
  %v10081 = vpop.f32.mrf.mxu0
  %v10082 = vadd.f32 %v9807, %v10081
  %v10083 = vpop.f32.mrf.mxu0
  %v10084 = vadd.f32 %v9811, %v10083
  %10085 = vmatmul.bf16.gmra.mxu0 %v9899
  %v10086 = vpop.f32.mrf.mxu0
  %v10087 = vadd.f32 %v9815, %v10086
  %v10088 = vpop.f32.mrf.mxu0
  %v10089 = vadd.f32 %v9819, %v10088
  %10090 = vmatmul.bf16.gmra.mxu0 %v9902
  %v10091 = vpop.f32.mrf.mxu0
  %v10092 = vadd.f32 %v9823, %v10091
  %v10093 = vpop.f32.mrf.mxu0
  %v10094 = vadd.f32 %v9827, %v10093
  %10095 = vmatmul.bf16.gmra.mxu0 %v9905
  %v10096 = vpop.f32.mrf.mxu0
  %v10097 = vadd.f32 %v9831, %v10096
  %v10098 = vpop.f32.mrf.mxu0
  %v10099 = vadd.f32 %v9835, %v10098
  %10100 = vmatmul.bf16.gmra.mxu0 %v9908
  %v10101 = vpop.f32.mrf.mxu0
  %v10102 = vadd.f32 %v9839, %v10101
  %v10103 = vpop.f32.mrf.mxu0
  %v10104 = vadd.f32 %v9843, %v10103
  %10105 = vdwg.mxu0
  %v10106 = vld [vmem:[%s11] sm:$0xf]
  %v10108 = vperm.slane %v10106, 0
  %v10109 = vperm.slane %v10106, 1
  %v10110 = vperm.slane %v10106, 2
  %v10111 = vperm.slane %v10106, 3
  %v10116 = vadd.f32 %v9920, %v10108
  %v10117 = vadd.f32 %v9969, %v10109
  %v10118 = vadd.f32 %v10018, %v10110
  %v10119 = vadd.f32 %v10067, %v10111
  %v10120 = vadd.f32 %v9922, %v10108
  %v10121 = vadd.f32 %v9971, %v10109
  %v10122 = vadd.f32 %v10020, %v10110
  %v10123 = vadd.f32 %v10069, %v10111
  %v10124 = vadd.f32 %v9925, %v10108
  %v10125 = vadd.f32 %v9974, %v10109
  %v10126 = vadd.f32 %v10023, %v10110
  %v10127 = vadd.f32 %v10072, %v10111
  %v10128 = vadd.f32 %v9927, %v10108
  %v10129 = vadd.f32 %v9976, %v10109
  %v10130 = vadd.f32 %v10025, %v10110
  %v10131 = vadd.f32 %v10074, %v10111
  %v10132 = vadd.f32 %v9930, %v10108
  %v10133 = vadd.f32 %v9979, %v10109
  %v10134 = vadd.f32 %v10028, %v10110
  %v10135 = vadd.f32 %v10077, %v10111
  %v10136 = vadd.f32 %v9932, %v10108
  %v10137 = vadd.f32 %v9981, %v10109
  %v10138 = vadd.f32 %v10030, %v10110
  %v10139 = vadd.f32 %v10079, %v10111
  %v10140 = vadd.f32 %v9935, %v10108
  %v10141 = vadd.f32 %v9984, %v10109
  %v10142 = vadd.f32 %v10033, %v10110
  %v10143 = vadd.f32 %v10082, %v10111
  %v10144 = vadd.f32 %v9937, %v10108
  %v10145 = vadd.f32 %v9986, %v10109
  %v10146 = vadd.f32 %v10035, %v10110
  %v10147 = vadd.f32 %v10084, %v10111
  %v10148 = vadd.f32 %v9940, %v10108
  %v10149 = vadd.f32 %v9989, %v10109
  %v10150 = vadd.f32 %v10038, %v10110
  %v10151 = vadd.f32 %v10087, %v10111
  %v10152 = vadd.f32 %v9942, %v10108
  %v10153 = vadd.f32 %v9991, %v10109
  %v10154 = vadd.f32 %v10040, %v10110
  %v10155 = vadd.f32 %v10089, %v10111
  %v10156 = vadd.f32 %v9945, %v10108
  %v10157 = vadd.f32 %v9994, %v10109
  %v10158 = vadd.f32 %v10043, %v10110
  %v10159 = vadd.f32 %v10092, %v10111
  %v10160 = vadd.f32 %v9947, %v10108
  %v10161 = vadd.f32 %v9996, %v10109
  %v10162 = vadd.f32 %v10045, %v10110
  %v10163 = vadd.f32 %v10094, %v10111
  %v10164 = vadd.f32 %v9950, %v10108
  %v10165 = vadd.f32 %v9999, %v10109
  %v10166 = vadd.f32 %v10048, %v10110
  %v10167 = vadd.f32 %v10097, %v10111
  %v10168 = vadd.f32 %v9952, %v10108
  %v10169 = vadd.f32 %v10001, %v10109
  %v10170 = vadd.f32 %v10050, %v10110
  %v10171 = vadd.f32 %v10099, %v10111
  %v10172 = vadd.f32 %v9955, %v10108
  %v10173 = vadd.f32 %v10004, %v10109
  %v10174 = vadd.f32 %v10053, %v10110
  %v10175 = vadd.f32 %v10102, %v10111
  %v10176 = vadd.f32 %v9957, %v10108
  %v10177 = vadd.f32 %v10006, %v10109
  %v10178 = vadd.f32 %v10055, %v10110
  %v10179 = vadd.f32 %v10104, %v10111
  %v10180 = vmax.f32 %v10116, %v10117
  %v10181 = vmax.f32 %v10180, %v10118
  %v10182 = vmax.f32 %v10181, %v10119
  %10183 = vmax.xlane.f32.xlu0 %v10182
  %v10184 = vpop.xlane.xlu0 %10183
  %v10185 = vmax.f32 %v10120, %v10121
  %v10186 = vmax.f32 %v10185, %v10122
  %v10187 = vmax.f32 %v10186, %v10123
  %10188 = vmax.xlane.f32.xlu0 %v10187
  %v10189 = vpop.xlane.xlu0 %10188
  %v10190 = vmax.f32 %v10124, %v10125
  %v10191 = vmax.f32 %v10190, %v10126
  %v10192 = vmax.f32 %v10191, %v10127
  %10193 = vmax.xlane.f32.xlu0 %v10192
  %v10194 = vpop.xlane.xlu0 %10193
  %v10195 = vmax.f32 %v10128, %v10129
  %v10196 = vmax.f32 %v10195, %v10130
  %v10197 = vmax.f32 %v10196, %v10131
  %10198 = vmax.xlane.f32.xlu0 %v10197
  %v10199 = vpop.xlane.xlu0 %10198
  %v10200 = vmax.f32 %v10132, %v10133
  %v10201 = vmax.f32 %v10200, %v10134
  %v10202 = vmax.f32 %v10201, %v10135
  %10203 = vmax.xlane.f32.xlu0 %v10202
  %v10204 = vpop.xlane.xlu0 %10203
  %v10205 = vmax.f32 %v10136, %v10137
  %v10206 = vmax.f32 %v10205, %v10138
  %v10207 = vmax.f32 %v10206, %v10139
  %10208 = vmax.xlane.f32.xlu0 %v10207
  %v10209 = vpop.xlane.xlu0 %10208
  %v10210 = vmax.f32 %v10140, %v10141
  %v10211 = vmax.f32 %v10210, %v10142
  %v10212 = vmax.f32 %v10211, %v10143
  %10213 = vmax.xlane.f32.xlu0 %v10212
  %v10214 = vpop.xlane.xlu0 %10213
  %v10215 = vmax.f32 %v10144, %v10145
  %v10216 = vmax.f32 %v10215, %v10146
  %v10217 = vmax.f32 %v10216, %v10147
  %10218 = vmax.xlane.f32.xlu0 %v10217
  %v10219 = vpop.xlane.xlu0 %10218
  %v10220 = vmax.f32 %v10148, %v10149
  %v10221 = vmax.f32 %v10220, %v10150
  %v10222 = vmax.f32 %v10221, %v10151
  %10223 = vmax.xlane.f32.xlu0 %v10222
  %v10224 = vpop.xlane.xlu0 %10223
  %v10225 = vmax.f32 %v10152, %v10153
  %v10226 = vmax.f32 %v10225, %v10154
  %v10227 = vmax.f32 %v10226, %v10155
  %10228 = vmax.xlane.f32.xlu0 %v10227
  %v10229 = vpop.xlane.xlu0 %10228
  %v10230 = vmax.f32 %v10156, %v10157
  %v10231 = vmax.f32 %v10230, %v10158
  %v10232 = vmax.f32 %v10231, %v10159
  %10233 = vmax.xlane.f32.xlu0 %v10232
  %v10234 = vpop.xlane.xlu0 %10233
  %v10235 = vmax.f32 %v10160, %v10161
  %v10236 = vmax.f32 %v10235, %v10162
  %v10237 = vmax.f32 %v10236, %v10163
  %10238 = vmax.xlane.f32.xlu0 %v10237
  %v10239 = vpop.xlane.xlu0 %10238
  %v10240 = vmax.f32 %v10164, %v10165
  %v10241 = vmax.f32 %v10240, %v10166
  %v10242 = vmax.f32 %v10241, %v10167
  %10243 = vmax.xlane.f32.xlu0 %v10242
  %v10244 = vpop.xlane.xlu0 %10243
  %v10245 = vmax.f32 %v10168, %v10169
  %v10246 = vmax.f32 %v10245, %v10170
  %v10247 = vmax.f32 %v10246, %v10171
  %10248 = vmax.xlane.f32.xlu0 %v10247
  %v10249 = vpop.xlane.xlu0 %10248
  %v10250 = vmax.f32 %v10172, %v10173
  %v10251 = vmax.f32 %v10250, %v10174
  %v10252 = vmax.f32 %v10251, %v10175
  %10253 = vmax.xlane.f32.xlu0 %v10252
  %v10254 = vpop.xlane.xlu0 %10253
  %v10255 = vmax.f32 %v10176, %v10177
  %v10256 = vmax.f32 %v10255, %v10178
  %v10257 = vmax.f32 %v10256, %v10179
  %10258 = vmax.xlane.f32.xlu0 %v10257
  %v10259 = vpop.xlane.xlu0 %10258
  %v10260 = vsub.f32 %v10116, %v10184
  %v10261 = vsub.f32 %v10117, %v10184
  %v10262 = vsub.f32 %v10118, %v10184
  %v10263 = vsub.f32 %v10119, %v10184
  %v10264 = vsub.f32 %v10120, %v10189
  %v10265 = vsub.f32 %v10121, %v10189
  %v10266 = vsub.f32 %v10122, %v10189
  %v10267 = vsub.f32 %v10123, %v10189
  %v10268 = vsub.f32 %v10124, %v10194
  %v10269 = vsub.f32 %v10125, %v10194
  %v10270 = vsub.f32 %v10126, %v10194
  %v10271 = vsub.f32 %v10127, %v10194
  %v10272 = vsub.f32 %v10128, %v10199
  %v10273 = vsub.f32 %v10129, %v10199
  %v10274 = vsub.f32 %v10130, %v10199
  %v10275 = vsub.f32 %v10131, %v10199
  %v10276 = vsub.f32 %v10132, %v10204
  %v10277 = vsub.f32 %v10133, %v10204
  %v10278 = vsub.f32 %v10134, %v10204
  %v10279 = vsub.f32 %v10135, %v10204
  %v10280 = vsub.f32 %v10136, %v10209
  %v10281 = vsub.f32 %v10137, %v10209
  %v10282 = vsub.f32 %v10138, %v10209
  %v10283 = vsub.f32 %v10139, %v10209
  %v10284 = vsub.f32 %v10140, %v10214
  %v10285 = vsub.f32 %v10141, %v10214
  %v10286 = vsub.f32 %v10142, %v10214
  %v10287 = vsub.f32 %v10143, %v10214
  %v10288 = vsub.f32 %v10144, %v10219
  %v10289 = vsub.f32 %v10145, %v10219
  %v10290 = vsub.f32 %v10146, %v10219
  %v10291 = vsub.f32 %v10147, %v10219
  %v10292 = vsub.f32 %v10148, %v10224
  %v10293 = vsub.f32 %v10149, %v10224
  %v10294 = vsub.f32 %v10150, %v10224
  %v10295 = vsub.f32 %v10151, %v10224
  %v10296 = vsub.f32 %v10152, %v10229
  %v10297 = vsub.f32 %v10153, %v10229
  %v10298 = vsub.f32 %v10154, %v10229
  %v10299 = vsub.f32 %v10155, %v10229
  %v10300 = vsub.f32 %v10156, %v10234
  %v10301 = vsub.f32 %v10157, %v10234
  %v10302 = vsub.f32 %v10158, %v10234
  %v10303 = vsub.f32 %v10159, %v10234
  %v10304 = vsub.f32 %v10160, %v10239
  %v10305 = vsub.f32 %v10161, %v10239
  %v10306 = vsub.f32 %v10162, %v10239
  %v10307 = vsub.f32 %v10163, %v10239
  %v10308 = vsub.f32 %v10164, %v10244
  %v10309 = vsub.f32 %v10165, %v10244
  %v10310 = vsub.f32 %v10166, %v10244
  %v10311 = vsub.f32 %v10167, %v10244
  %v10312 = vsub.f32 %v10168, %v10249
  %v10313 = vsub.f32 %v10169, %v10249
  %v10314 = vsub.f32 %v10170, %v10249
  %v10315 = vsub.f32 %v10171, %v10249
  %v10316 = vsub.f32 %v10172, %v10254
  %v10317 = vsub.f32 %v10173, %v10254
  %v10318 = vsub.f32 %v10174, %v10254
  %v10319 = vsub.f32 %v10175, %v10254
  %v10320 = vsub.f32 %v10176, %v10259
  %v10321 = vsub.f32 %v10177, %v10259
  %v10322 = vsub.f32 %v10178, %v10259
  %v10323 = vsub.f32 %v10179, %v10259
  %v10324 = vmul.f32 %v10260, 1.442695
  %v10325 = vpow.pop %v10324
  %v10326 = vmul.f32 %v10261, 1.442695
  %v10327 = vpow.pop %v10326
  %v10328 = vmul.f32 %v10262, 1.442695
  %v10329 = vpow.pop %v10328
  %v10330 = vmul.f32 %v10263, 1.442695
  %v10331 = vpow.pop %v10330
  %v10332 = vmul.f32 %v10264, 1.442695
  %v10333 = vpow.pop %v10332
  %v10334 = vmul.f32 %v10265, 1.442695
  %v10335 = vpow.pop %v10334
  %v10336 = vmul.f32 %v10266, 1.442695
  %v10337 = vpow.pop %v10336
  %v10338 = vmul.f32 %v10267, 1.442695
  %v10339 = vpow.pop %v10338
  %v10340 = vmul.f32 %v10268, 1.442695
  %v10341 = vpow.pop %v10340
  %v10342 = vmul.f32 %v10269, 1.442695
  %v10343 = vpow.pop %v10342
  %v10344 = vmul.f32 %v10270, 1.442695
  %v10345 = vpow.pop %v10344
  %v10346 = vmul.f32 %v10271, 1.442695
  %v10347 = vpow.pop %v10346
  %v10348 = vmul.f32 %v10272, 1.442695
  %v10349 = vpow.pop %v10348
  %v10350 = vmul.f32 %v10273, 1.442695
  %v10351 = vpow.pop %v10350
  %v10352 = vmul.f32 %v10274, 1.442695
  %v10353 = vpow.pop %v10352
  %v10354 = vmul.f32 %v10275, 1.442695
  %v10355 = vpow.pop %v10354
  %v10356 = vmul.f32 %v10276, 1.442695
  %v10357 = vpow.pop %v10356
  %v10358 = vmul.f32 %v10277, 1.442695
  %v10359 = vpow.pop %v10358
  %v10360 = vmul.f32 %v10278, 1.442695
  %v10361 = vpow.pop %v10360
  %v10362 = vmul.f32 %v10279, 1.442695
  %v10363 = vpow.pop %v10362
  %v10364 = vmul.f32 %v10280, 1.442695
  %v10365 = vpow.pop %v10364
  %v10366 = vmul.f32 %v10281, 1.442695
  %v10367 = vpow.pop %v10366
  %v10368 = vmul.f32 %v10282, 1.442695
  %v10369 = vpow.pop %v10368
  %v10370 = vmul.f32 %v10283, 1.442695
  %v10371 = vpow.pop %v10370
  %v10372 = vmul.f32 %v10284, 1.442695
  %v10373 = vpow.pop %v10372
  %v10374 = vmul.f32 %v10285, 1.442695
  %v10375 = vpow.pop %v10374
  %v10376 = vmul.f32 %v10286, 1.442695
  %v10377 = vpow.pop %v10376
  %v10378 = vmul.f32 %v10287, 1.442695
  %v10379 = vpow.pop %v10378
  %v10380 = vmul.f32 %v10288, 1.442695
  %v10381 = vpow.pop %v10380
  %v10382 = vmul.f32 %v10289, 1.442695
  %v10383 = vpow.pop %v10382
  %v10384 = vmul.f32 %v10290, 1.442695
  %v10385 = vpow.pop %v10384
  %v10386 = vmul.f32 %v10291, 1.442695
  %v10387 = vpow.pop %v10386
  %v10388 = vmul.f32 %v10292, 1.442695
  %v10389 = vpow.pop %v10388
  %v10390 = vmul.f32 %v10293, 1.442695
  %v10391 = vpow.pop %v10390
  %v10392 = vmul.f32 %v10294, 1.442695
  %v10393 = vpow.pop %v10392
  %v10394 = vmul.f32 %v10295, 1.442695
  %v10395 = vpow.pop %v10394
  %v10396 = vmul.f32 %v10296, 1.442695
  %v10397 = vpow.pop %v10396
  %v10398 = vmul.f32 %v10297, 1.442695
  %v10399 = vpow.pop %v10398
  %v10400 = vmul.f32 %v10298, 1.442695
  %v10401 = vpow.pop %v10400
  %v10402 = vmul.f32 %v10299, 1.442695
  %v10403 = vpow.pop %v10402
  %v10404 = vmul.f32 %v10300, 1.442695
  %v10405 = vpow.pop %v10404
  %v10406 = vmul.f32 %v10301, 1.442695
  %v10407 = vpow.pop %v10406
  %v10408 = vmul.f32 %v10302, 1.442695
  %v10409 = vpow.pop %v10408
  %v10410 = vmul.f32 %v10303, 1.442695
  %v10411 = vpow.pop %v10410
  %v10412 = vmul.f32 %v10304, 1.442695
  %v10413 = vpow.pop %v10412
  %v10414 = vmul.f32 %v10305, 1.442695
  %v10415 = vpow.pop %v10414
  %v10416 = vmul.f32 %v10306, 1.442695
  %v10417 = vpow.pop %v10416
  %v10418 = vmul.f32 %v10307, 1.442695
  %v10419 = vpow.pop %v10418
  %v10420 = vmul.f32 %v10308, 1.442695
  %v10421 = vpow.pop %v10420
  %v10422 = vmul.f32 %v10309, 1.442695
  %v10423 = vpow.pop %v10422
  %v10424 = vmul.f32 %v10310, 1.442695
  %v10425 = vpow.pop %v10424
  %v10426 = vmul.f32 %v10311, 1.442695
  %v10427 = vpow.pop %v10426
  %v10428 = vmul.f32 %v10312, 1.442695
  %v10429 = vpow.pop %v10428
  %v10430 = vmul.f32 %v10313, 1.442695
  %v10431 = vpow.pop %v10430
  %v10432 = vmul.f32 %v10314, 1.442695
  %v10433 = vpow.pop %v10432
  %v10434 = vmul.f32 %v10315, 1.442695
  %v10435 = vpow.pop %v10434
  %v10436 = vmul.f32 %v10316, 1.442695
  %v10437 = vpow.pop %v10436
  %v10438 = vmul.f32 %v10317, 1.442695
  %v10439 = vpow.pop %v10438
  %v10440 = vmul.f32 %v10318, 1.442695
  %v10441 = vpow.pop %v10440
  %v10442 = vmul.f32 %v10319, 1.442695
  %v10443 = vpow.pop %v10442
  %v10444 = vmul.f32 %v10320, 1.442695
  %v10445 = vpow.pop %v10444
  %v10446 = vmul.f32 %v10321, 1.442695
  %v10447 = vpow.pop %v10446
  %v10448 = vmul.f32 %v10322, 1.442695
  %v10449 = vpow.pop %v10448
  %v10450 = vmul.f32 %v10323, 1.442695
  %v10451 = vpow.pop %v10450
  %v10452 = vld [vmem:[%s10] sm:$0xff]
  %v10453 = vld [vmem:[%s10 + $0x8] sm:$0xff]
  %v10454 = vld [vmem:[%s10 + $0x10] sm:$0xff]
  %v10455 = vld [vmem:[%s10 + $0x18] sm:$0xff]
  %v10456 = vld [vmem:[%s10 + $0x20] sm:$0xff]
  %v10457 = vld [vmem:[%s10 + $0x28] sm:$0xff]
  %v10458 = vld [vmem:[%s10 + $0x30] sm:$0xff]
  %v10459 = vld [vmem:[%s10 + $0x38] sm:$0xff]
  %v10460 = vld [vmem:[%s10 + $0x40] sm:$0xff]
  %v10461 = vld [vmem:[%s10 + $0x48] sm:$0xff]
  %v10462 = vld [vmem:[%s10 + $0x50] sm:$0xff]
  %v10463 = vld [vmem:[%s10 + $0x58] sm:$0xff]
  %v10464 = vld [vmem:[%s10 + $0x60] sm:$0xff]
  %v10465 = vld [vmem:[%s10 + $0x68] sm:$0xff]
  %v10466 = vld [vmem:[%s10 + $0x70] sm:$0xff]
  %v10467 = vld [vmem:[%s10 + $0x78] sm:$0xff]
  %v10468 = vld [vmem:[%s10 + $0x80] sm:$0xff]
  %v10469 = vld [vmem:[%s10 + $0x88] sm:$0xff]
  %v10470 = vld [vmem:[%s10 + $0x90] sm:$0xff]
  %v10471 = vld [vmem:[%s10 + $0x98] sm:$0xff]
  %v10472 = vld [vmem:[%s10 + $0xa0] sm:$0xff]
  %v10473 = vld [vmem:[%s10 + $0xa8] sm:$0xff]
  %v10474 = vld [vmem:[%s10 + $0xb0] sm:$0xff]
  %v10475 = vld [vmem:[%s10 + $0xb8] sm:$0xff]
  %v10476 = vld [vmem:[%s10 + $0xc0] sm:$0xff]
  %v10477 = vld [vmem:[%s10 + $0xc8] sm:$0xff]
  %v10478 = vld [vmem:[%s10 + $0xd0] sm:$0xff]
  %v10479 = vld [vmem:[%s10 + $0xd8] sm:$0xff]
  %v10480 = vld [vmem:[%s10 + $0xe0] sm:$0xff]
  %v10481 = vld [vmem:[%s10 + $0xe8] sm:$0xff]
  %v10482 = vld [vmem:[%s10 + $0xf0] sm:$0xff]
  %v10483 = vld [vmem:[%s10 + $0xf8] sm:$0xff]
  %v10484 = vld [vmem:[%s10 + $0x100] sm:$0xff]
  %v10485 = vld [vmem:[%s10 + $0x108] sm:$0xff]
  %v10486 = vld [vmem:[%s10 + $0x110] sm:$0xff]
  %v10487 = vld [vmem:[%s10 + $0x118] sm:$0xff]
  %v10488 = vld [vmem:[%s10 + $0x120] sm:$0xff]
  %v10489 = vld [vmem:[%s10 + $0x128] sm:$0xff]
  %v10490 = vld [vmem:[%s10 + $0x130] sm:$0xff]
  %v10491 = vld [vmem:[%s10 + $0x138] sm:$0xff]
  %v10492 = vld [vmem:[%s10 + $0x140] sm:$0xff]
  %v10493 = vld [vmem:[%s10 + $0x148] sm:$0xff]
  %v10494 = vld [vmem:[%s10 + $0x150] sm:$0xff]
  %v10495 = vld [vmem:[%s10 + $0x158] sm:$0xff]
  %v10496 = vld [vmem:[%s10 + $0x160] sm:$0xff]
  %v10497 = vld [vmem:[%s10 + $0x168] sm:$0xff]
  %v10498 = vld [vmem:[%s10 + $0x170] sm:$0xff]
  %v10499 = vld [vmem:[%s10 + $0x178] sm:$0xff]
  %v10500 = vld [vmem:[%s10 + $0x180] sm:$0xff]
  %v10501 = vld [vmem:[%s10 + $0x188] sm:$0xff]
  %v10502 = vld [vmem:[%s10 + $0x190] sm:$0xff]
  %v10503 = vld [vmem:[%s10 + $0x198] sm:$0xff]
  %v10504 = vld [vmem:[%s10 + $0x1a0] sm:$0xff]
  %v10505 = vld [vmem:[%s10 + $0x1a8] sm:$0xff]
  %v10506 = vld [vmem:[%s10 + $0x1b0] sm:$0xff]
  %v10507 = vld [vmem:[%s10 + $0x1b8] sm:$0xff]
  %v10508 = vld [vmem:[%s10 + $0x1c0] sm:$0xff]
  %v10509 = vld [vmem:[%s10 + $0x1c8] sm:$0xff]
  %v10510 = vld [vmem:[%s10 + $0x1d0] sm:$0xff]
  %v10511 = vld [vmem:[%s10 + $0x1d8] sm:$0xff]
  %v10512 = vld [vmem:[%s10 + $0x1e0] sm:$0xff]
  %v10513 = vld [vmem:[%s10 + $0x1e8] sm:$0xff]
  %v10514 = vld [vmem:[%s10 + $0x1f0] sm:$0xff]
  %v10515 = vld [vmem:[%s10 + $0x1f8] sm:$0xff]
  %v10516 = vmul.f32 %v9537, %v10325
  %v10517 = vmul.f32 %v9538, %v10327
  %v10518 = vmul.f32 %v9539, %v10329
  %v10519 = vmul.f32 %v9540, %v10331
  %v10520 = vmul.f32 %v9541, %v10333
  %v10521 = vmul.f32 %v9542, %v10335
  %v10522 = vmul.f32 %v9543, %v10337
  %v10523 = vmul.f32 %v9544, %v10339
  %v10524 = vmul.f32 %v9545, %v10341
  %v10525 = vmul.f32 %v9546, %v10343
  %v10526 = vmul.f32 %v9547, %v10345
  %v10527 = vmul.f32 %v9548, %v10347
  %v10528 = vmul.f32 %v9549, %v10349
  %v10529 = vmul.f32 %v9550, %v10351
  %v10530 = vmul.f32 %v9551, %v10353
  %v10531 = vmul.f32 %v9552, %v10355
  %v10532 = vmul.f32 %v9553, %v10357
  %v10533 = vmul.f32 %v9554, %v10359
  %v10534 = vmul.f32 %v9555, %v10361
  %v10535 = vmul.f32 %v9556, %v10363
  %v10536 = vmul.f32 %v9557, %v10365
  %v10537 = vmul.f32 %v9558, %v10367
  %v10538 = vmul.f32 %v9559, %v10369
  %v10539 = vmul.f32 %v9560, %v10371
  %v10540 = vmul.f32 %v9561, %v10373
  %v10541 = vmul.f32 %v9562, %v10375
  %v10542 = vmul.f32 %v9563, %v10377
  %v10543 = vmul.f32 %v9564, %v10379
  %v10544 = vmul.f32 %v9565, %v10381
  %v10545 = vmul.f32 %v9566, %v10383
  %v10546 = vmul.f32 %v9567, %v10385
  %v10547 = vmul.f32 %v9568, %v10387
  %v10548 = vmul.f32 %v9569, %v10389
  %v10549 = vmul.f32 %v9570, %v10391
  %v10550 = vmul.f32 %v9571, %v10393
  %v10551 = vmul.f32 %v9572, %v10395
  %v10552 = vmul.f32 %v9573, %v10397
  %v10553 = vmul.f32 %v9574, %v10399
  %v10554 = vmul.f32 %v9575, %v10401
  %v10555 = vmul.f32 %v9576, %v10403
  %v10556 = vmul.f32 %v9577, %v10405
  %v10557 = vmul.f32 %v9578, %v10407
  %v10558 = vmul.f32 %v9579, %v10409
  %v10559 = vmul.f32 %v9580, %v10411
  %v10560 = vmul.f32 %v9581, %v10413
  %v10561 = vmul.f32 %v9582, %v10415
  %v10562 = vmul.f32 %v9583, %v10417
  %v10563 = vmul.f32 %v9584, %v10419
  %v10564 = vmul.f32 %v9585, %v10421
  %v10565 = vmul.f32 %v9586, %v10423
  %v10566 = vmul.f32 %v9587, %v10425
  %v10567 = vmul.f32 %v9588, %v10427
  %v10568 = vmul.f32 %v9589, %v10429
  %v10569 = vmul.f32 %v9590, %v10431
  %v10570 = vmul.f32 %v9591, %v10433
  %v10571 = vmul.f32 %v9592, %v10435
  %v10572 = vmul.f32 %v9593, %v10437
  %v10573 = vmul.f32 %v9594, %v10439
  %v10574 = vmul.f32 %v9595, %v10441
  %v10575 = vmul.f32 %v9596, %v10443
  %v10576 = vmul.f32 %v9597, %v10445
  %v10577 = vmul.f32 %v9598, %v10447
  %v10578 = vmul.f32 %v9599, %v10449
  %v10579 = vmul.f32 %v9600, %v10451
  %10580 = vmatpush.msra.mxu0 %v10467
  %10581 = vmatpush.msra.mxu0 %v10466
  %10582 = vmatpush.msra.mxu0 %v10465
  %10583 = vmatpush.msra.mxu0 %v10464
  %10584 = vmatpush.msra.mxu0 %v10463
  %10585 = vmatpush.msra.mxu0 %v10462
  %10586 = vmatpush.msra.mxu0 %v10461
  %10587 = vmatpush.msra.mxu0 %v10460
  %10588 = vmatpush.msra.mxu0 %v10459
  %10589 = vmatpush.msra.mxu0 %v10458
  %10590 = vmatpush.msra.mxu0 %v10457
  %10591 = vmatpush.msra.mxu0 %v10456
  %10592 = vmatpush.msra.mxu0 %v10455
  %10593 = vmatpush.msra.mxu0 %v10454
  %10594 = vmatpush.msra.mxu0 %v10453
  %10595 = vmatpush.msra.mxu0 %v10452
  %10596 = vmatmul.f32.gmra.mxu0 %v10325
  %v10597 = vpop.f32.mrf.mxu0
  %v10598 = vadd.f32 0.0, %v10597
  %10599 = vmatmul.f32.gmra.mxu0 %v10333
  %v10600 = vpop.f32.mrf.mxu0
  %v10601 = vadd.f32 0.0, %v10600
  %10602 = vmatmul.f32.gmra.mxu0 %v10341
  %v10603 = vpop.f32.mrf.mxu0
  %v10604 = vadd.f32 0.0, %v10603
  %10605 = vmatmul.f32.gmra.mxu0 %v10349
  %v10606 = vpop.f32.mrf.mxu0
  %v10607 = vadd.f32 0.0, %v10606
  %10608 = vmatmul.f32.gmra.mxu0 %v10357
  %v10609 = vpop.f32.mrf.mxu0
  %v10610 = vadd.f32 0.0, %v10609
  %10611 = vmatmul.f32.gmra.mxu0 %v10365
  %v10612 = vpop.f32.mrf.mxu0
  %v10613 = vadd.f32 0.0, %v10612
  %10614 = vmatmul.f32.gmra.mxu0 %v10373
  %v10615 = vpop.f32.mrf.mxu0
  %v10616 = vadd.f32 0.0, %v10615
  %10617 = vmatmul.f32.gmra.mxu0 %v10381
  %v10618 = vpop.f32.mrf.mxu0
  %v10619 = vadd.f32 0.0, %v10618
  %10620 = vmatmul.f32.gmra.mxu0 %v10389
  %v10621 = vpop.f32.mrf.mxu0
  %v10622 = vadd.f32 0.0, %v10621
  %10623 = vmatmul.f32.gmra.mxu0 %v10397
  %v10624 = vpop.f32.mrf.mxu0
  %v10625 = vadd.f32 0.0, %v10624
  %10626 = vmatmul.f32.gmra.mxu0 %v10405
  %v10627 = vpop.f32.mrf.mxu0
  %v10628 = vadd.f32 0.0, %v10627
  %10629 = vmatmul.f32.gmra.mxu0 %v10413
  %v10630 = vpop.f32.mrf.mxu0
  %v10631 = vadd.f32 0.0, %v10630
  %10632 = vmatmul.f32.gmra.mxu0 %v10421
  %v10633 = vpop.f32.mrf.mxu0
  %v10634 = vadd.f32 0.0, %v10633
  %10635 = vmatmul.f32.gmra.mxu0 %v10429
  %v10636 = vpop.f32.mrf.mxu0
  %v10637 = vadd.f32 0.0, %v10636
  %10638 = vmatmul.f32.gmra.mxu0 %v10437
  %v10639 = vpop.f32.mrf.mxu0
  %v10640 = vadd.f32 0.0, %v10639
  %10641 = vmatmul.f32.gmra.mxu0 %v10445
  %v10642 = vpop.f32.mrf.mxu0
  %v10643 = vadd.f32 0.0, %v10642
  %10644 = vdwg.mxu0
  %10645 = vmatpush.msra.mxu0 %v10483
  %10646 = vmatpush.msra.mxu0 %v10482
  %10647 = vmatpush.msra.mxu0 %v10481
  %10648 = vmatpush.msra.mxu0 %v10480
  %10649 = vmatpush.msra.mxu0 %v10479
  %10650 = vmatpush.msra.mxu0 %v10478
  %10651 = vmatpush.msra.mxu0 %v10477
  %10652 = vmatpush.msra.mxu0 %v10476
  %10653 = vmatpush.msra.mxu0 %v10475
  %10654 = vmatpush.msra.mxu0 %v10474
  %10655 = vmatpush.msra.mxu0 %v10473
  %10656 = vmatpush.msra.mxu0 %v10472
  %10657 = vmatpush.msra.mxu0 %v10471
  %10658 = vmatpush.msra.mxu0 %v10470
  %10659 = vmatpush.msra.mxu0 %v10469
  %10660 = vmatpush.msra.mxu0 %v10468
  %10661 = vmatmul.f32.gmra.mxu0 %v10327
  %v10662 = vpop.f32.mrf.mxu0
  %v10663 = vadd.f32 %v10598, %v10662
  %10664 = vmatmul.f32.gmra.mxu0 %v10335
  %v10665 = vpop.f32.mrf.mxu0
  %v10666 = vadd.f32 %v10601, %v10665
  %10667 = vmatmul.f32.gmra.mxu0 %v10343
  %v10668 = vpop.f32.mrf.mxu0
  %v10669 = vadd.f32 %v10604, %v10668
  %10670 = vmatmul.f32.gmra.mxu0 %v10351
  %v10671 = vpop.f32.mrf.mxu0
  %v10672 = vadd.f32 %v10607, %v10671
  %10673 = vmatmul.f32.gmra.mxu0 %v10359
  %v10674 = vpop.f32.mrf.mxu0
  %v10675 = vadd.f32 %v10610, %v10674
  %10676 = vmatmul.f32.gmra.mxu0 %v10367
  %v10677 = vpop.f32.mrf.mxu0
  %v10678 = vadd.f32 %v10613, %v10677
  %10679 = vmatmul.f32.gmra.mxu0 %v10375
  %v10680 = vpop.f32.mrf.mxu0
  %v10681 = vadd.f32 %v10616, %v10680
  %10682 = vmatmul.f32.gmra.mxu0 %v10383
  %v10683 = vpop.f32.mrf.mxu0
  %v10684 = vadd.f32 %v10619, %v10683
  %10685 = vmatmul.f32.gmra.mxu0 %v10391
  %v10686 = vpop.f32.mrf.mxu0
  %v10687 = vadd.f32 %v10622, %v10686
  %10688 = vmatmul.f32.gmra.mxu0 %v10399
  %v10689 = vpop.f32.mrf.mxu0
  %v10690 = vadd.f32 %v10625, %v10689
  %10691 = vmatmul.f32.gmra.mxu0 %v10407
  %v10692 = vpop.f32.mrf.mxu0
  %v10693 = vadd.f32 %v10628, %v10692
  %10694 = vmatmul.f32.gmra.mxu0 %v10415
  %v10695 = vpop.f32.mrf.mxu0
  %v10696 = vadd.f32 %v10631, %v10695
  %10697 = vmatmul.f32.gmra.mxu0 %v10423
  %v10698 = vpop.f32.mrf.mxu0
  %v10699 = vadd.f32 %v10634, %v10698
  %10700 = vmatmul.f32.gmra.mxu0 %v10431
  %v10701 = vpop.f32.mrf.mxu0
  %v10702 = vadd.f32 %v10637, %v10701
  %10703 = vmatmul.f32.gmra.mxu0 %v10439
  %v10704 = vpop.f32.mrf.mxu0
  %v10705 = vadd.f32 %v10640, %v10704
  %10706 = vmatmul.f32.gmra.mxu0 %v10447
  %v10707 = vpop.f32.mrf.mxu0
  %v10708 = vadd.f32 %v10643, %v10707
  %10709 = vdwg.mxu0
  %10710 = vmatpush.msra.mxu0 %v10499
  %10711 = vmatpush.msra.mxu0 %v10498
  %10712 = vmatpush.msra.mxu0 %v10497
  %10713 = vmatpush.msra.mxu0 %v10496
  %10714 = vmatpush.msra.mxu0 %v10495
  %10715 = vmatpush.msra.mxu0 %v10494
  %10716 = vmatpush.msra.mxu0 %v10493
  %10717 = vmatpush.msra.mxu0 %v10492
  %10718 = vmatpush.msra.mxu0 %v10491
  %10719 = vmatpush.msra.mxu0 %v10490
  %10720 = vmatpush.msra.mxu0 %v10489
  %10721 = vmatpush.msra.mxu0 %v10488
  %10722 = vmatpush.msra.mxu0 %v10487
  %10723 = vmatpush.msra.mxu0 %v10486
  %10724 = vmatpush.msra.mxu0 %v10485
  %10725 = vmatpush.msra.mxu0 %v10484
  %10726 = vmatmul.f32.gmra.mxu0 %v10329
  %v10727 = vpop.f32.mrf.mxu0
  %v10728 = vadd.f32 %v10663, %v10727
  %10729 = vmatmul.f32.gmra.mxu0 %v10337
  %v10730 = vpop.f32.mrf.mxu0
  %v10731 = vadd.f32 %v10666, %v10730
  %10732 = vmatmul.f32.gmra.mxu0 %v10345
  %v10733 = vpop.f32.mrf.mxu0
  %v10734 = vadd.f32 %v10669, %v10733
  %10735 = vmatmul.f32.gmra.mxu0 %v10353
  %v10736 = vpop.f32.mrf.mxu0
  %v10737 = vadd.f32 %v10672, %v10736
  %10738 = vmatmul.f32.gmra.mxu0 %v10361
  %v10739 = vpop.f32.mrf.mxu0
  %v10740 = vadd.f32 %v10675, %v10739
  %10741 = vmatmul.f32.gmra.mxu0 %v10369
  %v10742 = vpop.f32.mrf.mxu0
  %v10743 = vadd.f32 %v10678, %v10742
  %10744 = vmatmul.f32.gmra.mxu0 %v10377
  %v10745 = vpop.f32.mrf.mxu0
  %v10746 = vadd.f32 %v10681, %v10745
  %10747 = vmatmul.f32.gmra.mxu0 %v10385
  %v10748 = vpop.f32.mrf.mxu0
  %v10749 = vadd.f32 %v10684, %v10748
  %10750 = vmatmul.f32.gmra.mxu0 %v10393
  %v10751 = vpop.f32.mrf.mxu0
  %v10752 = vadd.f32 %v10687, %v10751
  %10753 = vmatmul.f32.gmra.mxu0 %v10401
  %v10754 = vpop.f32.mrf.mxu0
  %v10755 = vadd.f32 %v10690, %v10754
  %10756 = vmatmul.f32.gmra.mxu0 %v10409
  %v10757 = vpop.f32.mrf.mxu0
  %v10758 = vadd.f32 %v10693, %v10757
  %10759 = vmatmul.f32.gmra.mxu0 %v10417
  %v10760 = vpop.f32.mrf.mxu0
  %v10761 = vadd.f32 %v10696, %v10760
  %10762 = vmatmul.f32.gmra.mxu0 %v10425
  %v10763 = vpop.f32.mrf.mxu0
  %v10764 = vadd.f32 %v10699, %v10763
  %10765 = vmatmul.f32.gmra.mxu0 %v10433
  %v10766 = vpop.f32.mrf.mxu0
  %v10767 = vadd.f32 %v10702, %v10766
  %10768 = vmatmul.f32.gmra.mxu0 %v10441
  %v10769 = vpop.f32.mrf.mxu0
  %v10770 = vadd.f32 %v10705, %v10769
  %10771 = vmatmul.f32.gmra.mxu0 %v10449
  %v10772 = vpop.f32.mrf.mxu0
  %v10773 = vadd.f32 %v10708, %v10772
  %10774 = vdwg.mxu0
  %10775 = vmatpush.msra.mxu0 %v10515
  %10776 = vmatpush.msra.mxu0 %v10514
  %10777 = vmatpush.msra.mxu0 %v10513
  %10778 = vmatpush.msra.mxu0 %v10512
  %10779 = vmatpush.msra.mxu0 %v10511
  %10780 = vmatpush.msra.mxu0 %v10510
  %10781 = vmatpush.msra.mxu0 %v10509
  %10782 = vmatpush.msra.mxu0 %v10508
  %10783 = vmatpush.msra.mxu0 %v10507
  %10784 = vmatpush.msra.mxu0 %v10506
  %10785 = vmatpush.msra.mxu0 %v10505
  %10786 = vmatpush.msra.mxu0 %v10504
  %10787 = vmatpush.msra.mxu0 %v10503
  %10788 = vmatpush.msra.mxu0 %v10502
  %10789 = vmatpush.msra.mxu0 %v10501
  %10790 = vmatpush.msra.mxu0 %v10500
  %10791 = vmatmul.f32.gmra.mxu0 %v10331
  %v10792 = vpop.f32.mrf.mxu0
  %v10793 = vadd.f32 %v10728, %v10792
  %10794 = vmatmul.f32.gmra.mxu0 %v10339
  %v10795 = vpop.f32.mrf.mxu0
  %v10796 = vadd.f32 %v10731, %v10795
  %10797 = vmatmul.f32.gmra.mxu0 %v10347
  %v10798 = vpop.f32.mrf.mxu0
  %v10799 = vadd.f32 %v10734, %v10798
  %10800 = vmatmul.f32.gmra.mxu0 %v10355
  %v10801 = vpop.f32.mrf.mxu0
  %v10802 = vadd.f32 %v10737, %v10801
  %10803 = vmatmul.f32.gmra.mxu0 %v10363
  %v10804 = vpop.f32.mrf.mxu0
  %v10805 = vadd.f32 %v10740, %v10804
  %10806 = vmatmul.f32.gmra.mxu0 %v10371
  %v10807 = vpop.f32.mrf.mxu0
  %v10808 = vadd.f32 %v10743, %v10807
  %10809 = vmatmul.f32.gmra.mxu0 %v10379
  %v10810 = vpop.f32.mrf.mxu0
  %v10811 = vadd.f32 %v10746, %v10810
  %10812 = vmatmul.f32.gmra.mxu0 %v10387
  %v10813 = vpop.f32.mrf.mxu0
  %v10814 = vadd.f32 %v10749, %v10813
  %10815 = vmatmul.f32.gmra.mxu0 %v10395
  %v10816 = vpop.f32.mrf.mxu0
  %v10817 = vadd.f32 %v10752, %v10816
  %10818 = vmatmul.f32.gmra.mxu0 %v10403
  %v10819 = vpop.f32.mrf.mxu0
  %v10820 = vadd.f32 %v10755, %v10819
  %10821 = vmatmul.f32.gmra.mxu0 %v10411
  %v10822 = vpop.f32.mrf.mxu0
  %v10823 = vadd.f32 %v10758, %v10822
  %10824 = vmatmul.f32.gmra.mxu0 %v10419
  %v10825 = vpop.f32.mrf.mxu0
  %v10826 = vadd.f32 %v10761, %v10825
  %10827 = vmatmul.f32.gmra.mxu0 %v10427
  %v10828 = vpop.f32.mrf.mxu0
  %v10829 = vadd.f32 %v10764, %v10828
  %10830 = vmatmul.f32.gmra.mxu0 %v10435
  %v10831 = vpop.f32.mrf.mxu0
  %v10832 = vadd.f32 %v10767, %v10831
  %10833 = vmatmul.f32.gmra.mxu0 %v10443
  %v10834 = vpop.f32.mrf.mxu0
  %v10835 = vadd.f32 %v10770, %v10834
  %10836 = vmatmul.f32.gmra.mxu0 %v10451
  %v10837 = vpop.f32.mrf.mxu0
  %v10838 = vadd.f32 %v10773, %v10837
  %10839 = vdwg.mxu0
  %10840 = vmatpush.msra.mxu0 %v10467
  %10841 = vmatpush.msra.mxu0 %v10466
  %10842 = vmatpush.msra.mxu0 %v10465
  %10843 = vmatpush.msra.mxu0 %v10464
  %10844 = vmatpush.msra.mxu0 %v10463
  %10845 = vmatpush.msra.mxu0 %v10462
  %10846 = vmatpush.msra.mxu0 %v10461
  %10847 = vmatpush.msra.mxu0 %v10460
  %10848 = vmatpush.msra.mxu0 %v10459
  %10849 = vmatpush.msra.mxu0 %v10458
  %10850 = vmatpush.msra.mxu0 %v10457
  %10851 = vmatpush.msra.mxu0 %v10456
  %10852 = vmatpush.msra.mxu0 %v10455
  %10853 = vmatpush.msra.mxu0 %v10454
  %10854 = vmatpush.msra.mxu0 %v10453
  %10855 = vmatpush.msra.mxu0 %v10452
  %10856 = vmatmul.f32.gmra.mxu0 %v10516
  %v10857 = vpop.f32.mrf.mxu0
  %v10858 = vadd.f32 0.0, %v10857
  %10859 = vmatmul.f32.gmra.mxu0 %v10520
  %v10860 = vpop.f32.mrf.mxu0
  %v10861 = vadd.f32 0.0, %v10860
  %10862 = vmatmul.f32.gmra.mxu0 %v10524
  %v10863 = vpop.f32.mrf.mxu0
  %v10864 = vadd.f32 0.0, %v10863
  %10865 = vmatmul.f32.gmra.mxu0 %v10528
  %v10866 = vpop.f32.mrf.mxu0
  %v10867 = vadd.f32 0.0, %v10866
  %10868 = vmatmul.f32.gmra.mxu0 %v10532
  %v10869 = vpop.f32.mrf.mxu0
  %v10870 = vadd.f32 0.0, %v10869
  %10871 = vmatmul.f32.gmra.mxu0 %v10536
  %v10872 = vpop.f32.mrf.mxu0
  %v10873 = vadd.f32 0.0, %v10872
  %10874 = vmatmul.f32.gmra.mxu0 %v10540
  %v10875 = vpop.f32.mrf.mxu0
  %v10876 = vadd.f32 0.0, %v10875
  %10877 = vmatmul.f32.gmra.mxu0 %v10544
  %v10878 = vpop.f32.mrf.mxu0
  %v10879 = vadd.f32 0.0, %v10878
  %10880 = vmatmul.f32.gmra.mxu0 %v10548
  %v10881 = vpop.f32.mrf.mxu0
  %v10882 = vadd.f32 0.0, %v10881
  %10883 = vmatmul.f32.gmra.mxu0 %v10552
  %v10884 = vpop.f32.mrf.mxu0
  %v10885 = vadd.f32 0.0, %v10884
  %10886 = vmatmul.f32.gmra.mxu0 %v10556
  %v10887 = vpop.f32.mrf.mxu0
  %v10888 = vadd.f32 0.0, %v10887
  %10889 = vmatmul.f32.gmra.mxu0 %v10560
  %v10890 = vpop.f32.mrf.mxu0
  %v10891 = vadd.f32 0.0, %v10890
  %10892 = vmatmul.f32.gmra.mxu0 %v10564
  %v10893 = vpop.f32.mrf.mxu0
  %v10894 = vadd.f32 0.0, %v10893
  %10895 = vmatmul.f32.gmra.mxu0 %v10568
  %v10896 = vpop.f32.mrf.mxu0
  %v10897 = vadd.f32 0.0, %v10896
  %10898 = vmatmul.f32.gmra.mxu0 %v10572
  %v10899 = vpop.f32.mrf.mxu0
  %v10900 = vadd.f32 0.0, %v10899
  %10901 = vmatmul.f32.gmra.mxu0 %v10576
  %v10902 = vpop.f32.mrf.mxu0
  %v10903 = vadd.f32 0.0, %v10902
  %10904 = vdwg.mxu0
  %10905 = vmatpush.msra.mxu0 %v10483
  %10906 = vmatpush.msra.mxu0 %v10482
  %10907 = vmatpush.msra.mxu0 %v10481
  %10908 = vmatpush.msra.mxu0 %v10480
  %10909 = vmatpush.msra.mxu0 %v10479
  %10910 = vmatpush.msra.mxu0 %v10478
  %10911 = vmatpush.msra.mxu0 %v10477
  %10912 = vmatpush.msra.mxu0 %v10476
  %10913 = vmatpush.msra.mxu0 %v10475
  %10914 = vmatpush.msra.mxu0 %v10474
  %10915 = vmatpush.msra.mxu0 %v10473
  %10916 = vmatpush.msra.mxu0 %v10472
  %10917 = vmatpush.msra.mxu0 %v10471
  %10918 = vmatpush.msra.mxu0 %v10470
  %10919 = vmatpush.msra.mxu0 %v10469
  %10920 = vmatpush.msra.mxu0 %v10468
  %10921 = vmatmul.f32.gmra.mxu0 %v10517
  %v10922 = vpop.f32.mrf.mxu0
  %v10923 = vadd.f32 %v10858, %v10922
  %10924 = vmatmul.f32.gmra.mxu0 %v10521
  %v10925 = vpop.f32.mrf.mxu0
  %v10926 = vadd.f32 %v10861, %v10925
  %10927 = vmatmul.f32.gmra.mxu0 %v10525
  %v10928 = vpop.f32.mrf.mxu0
  %v10929 = vadd.f32 %v10864, %v10928
  %10930 = vmatmul.f32.gmra.mxu0 %v10529
  %v10931 = vpop.f32.mrf.mxu0
  %v10932 = vadd.f32 %v10867, %v10931
  %10933 = vmatmul.f32.gmra.mxu0 %v10533
  %v10934 = vpop.f32.mrf.mxu0
  %v10935 = vadd.f32 %v10870, %v10934
  %10936 = vmatmul.f32.gmra.mxu0 %v10537
  %v10937 = vpop.f32.mrf.mxu0
  %v10938 = vadd.f32 %v10873, %v10937
  %10939 = vmatmul.f32.gmra.mxu0 %v10541
  %v10940 = vpop.f32.mrf.mxu0
  %v10941 = vadd.f32 %v10876, %v10940
  %10942 = vmatmul.f32.gmra.mxu0 %v10545
  %v10943 = vpop.f32.mrf.mxu0
  %v10944 = vadd.f32 %v10879, %v10943
  %10945 = vmatmul.f32.gmra.mxu0 %v10549
  %v10946 = vpop.f32.mrf.mxu0
  %v10947 = vadd.f32 %v10882, %v10946
  %10948 = vmatmul.f32.gmra.mxu0 %v10553
  %v10949 = vpop.f32.mrf.mxu0
  %v10950 = vadd.f32 %v10885, %v10949
  %10951 = vmatmul.f32.gmra.mxu0 %v10557
  %v10952 = vpop.f32.mrf.mxu0
  %v10953 = vadd.f32 %v10888, %v10952
  %10954 = vmatmul.f32.gmra.mxu0 %v10561
  %v10955 = vpop.f32.mrf.mxu0
  %v10956 = vadd.f32 %v10891, %v10955
  %10957 = vmatmul.f32.gmra.mxu0 %v10565
  %v10958 = vpop.f32.mrf.mxu0
  %v10959 = vadd.f32 %v10894, %v10958
  %10960 = vmatmul.f32.gmra.mxu0 %v10569
  %v10961 = vpop.f32.mrf.mxu0
  %v10962 = vadd.f32 %v10897, %v10961
  %10963 = vmatmul.f32.gmra.mxu0 %v10573
  %v10964 = vpop.f32.mrf.mxu0
  %v10965 = vadd.f32 %v10900, %v10964
  %10966 = vmatmul.f32.gmra.mxu0 %v10577
  %v10967 = vpop.f32.mrf.mxu0
  %v10968 = vadd.f32 %v10903, %v10967
  %10969 = vdwg.mxu0
  %10970 = vmatpush.msra.mxu0 %v10499
  %10971 = vmatpush.msra.mxu0 %v10498
  %10972 = vmatpush.msra.mxu0 %v10497
  %10973 = vmatpush.msra.mxu0 %v10496
  %10974 = vmatpush.msra.mxu0 %v10495
  %10975 = vmatpush.msra.mxu0 %v10494
  %10976 = vmatpush.msra.mxu0 %v10493
  %10977 = vmatpush.msra.mxu0 %v10492
  %10978 = vmatpush.msra.mxu0 %v10491
  %10979 = vmatpush.msra.mxu0 %v10490
  %10980 = vmatpush.msra.mxu0 %v10489
  %10981 = vmatpush.msra.mxu0 %v10488
  %10982 = vmatpush.msra.mxu0 %v10487
  %10983 = vmatpush.msra.mxu0 %v10486
  %10984 = vmatpush.msra.mxu0 %v10485
  %10985 = vmatpush.msra.mxu0 %v10484
  %10986 = vmatmul.f32.gmra.mxu0 %v10518
  %v10987 = vpop.f32.mrf.mxu0
  %v10988 = vadd.f32 %v10923, %v10987
  %10989 = vmatmul.f32.gmra.mxu0 %v10522
  %v10990 = vpop.f32.mrf.mxu0
  %v10991 = vadd.f32 %v10926, %v10990
  %10992 = vmatmul.f32.gmra.mxu0 %v10526
  %v10993 = vpop.f32.mrf.mxu0
  %v10994 = vadd.f32 %v10929, %v10993
  %10995 = vmatmul.f32.gmra.mxu0 %v10530
  %v10996 = vpop.f32.mrf.mxu0
  %v10997 = vadd.f32 %v10932, %v10996
  %10998 = vmatmul.f32.gmra.mxu0 %v10534
  %v10999 = vpop.f32.mrf.mxu0
  %v11000 = vadd.f32 %v10935, %v10999
  %11001 = vmatmul.f32.gmra.mxu0 %v10538
  %v11002 = vpop.f32.mrf.mxu0
  %v11003 = vadd.f32 %v10938, %v11002
  %11004 = vmatmul.f32.gmra.mxu0 %v10542
  %v11005 = vpop.f32.mrf.mxu0
  %v11006 = vadd.f32 %v10941, %v11005
  %11007 = vmatmul.f32.gmra.mxu0 %v10546
  %v11008 = vpop.f32.mrf.mxu0
  %v11009 = vadd.f32 %v10944, %v11008
  %11010 = vmatmul.f32.gmra.mxu0 %v10550
  %v11011 = vpop.f32.mrf.mxu0
  %v11012 = vadd.f32 %v10947, %v11011
  %11013 = vmatmul.f32.gmra.mxu0 %v10554
  %v11014 = vpop.f32.mrf.mxu0
  %v11015 = vadd.f32 %v10950, %v11014
  %11016 = vmatmul.f32.gmra.mxu0 %v10558
  %v11017 = vpop.f32.mrf.mxu0
  %v11018 = vadd.f32 %v10953, %v11017
  %11019 = vmatmul.f32.gmra.mxu0 %v10562
  %v11020 = vpop.f32.mrf.mxu0
  %v11021 = vadd.f32 %v10956, %v11020
  %11022 = vmatmul.f32.gmra.mxu0 %v10566
  %v11023 = vpop.f32.mrf.mxu0
  %v11024 = vadd.f32 %v10959, %v11023
  %11025 = vmatmul.f32.gmra.mxu0 %v10570
  %v11026 = vpop.f32.mrf.mxu0
  %v11027 = vadd.f32 %v10962, %v11026
  %11028 = vmatmul.f32.gmra.mxu0 %v10574
  %v11029 = vpop.f32.mrf.mxu0
  %v11030 = vadd.f32 %v10965, %v11029
  %11031 = vmatmul.f32.gmra.mxu0 %v10578
  %v11032 = vpop.f32.mrf.mxu0
  %v11033 = vadd.f32 %v10968, %v11032
  %11034 = vdwg.mxu0
  %11035 = vmatpush.msra.mxu0 %v10515
  %11036 = vmatpush.msra.mxu0 %v10514
  %11037 = vmatpush.msra.mxu0 %v10513
  %11038 = vmatpush.msra.mxu0 %v10512
  %11039 = vmatpush.msra.mxu0 %v10511
  %11040 = vmatpush.msra.mxu0 %v10510
  %11041 = vmatpush.msra.mxu0 %v10509
  %11042 = vmatpush.msra.mxu0 %v10508
  %11043 = vmatpush.msra.mxu0 %v10507
  %11044 = vmatpush.msra.mxu0 %v10506
  %11045 = vmatpush.msra.mxu0 %v10505
  %11046 = vmatpush.msra.mxu0 %v10504
  %11047 = vmatpush.msra.mxu0 %v10503
  %11048 = vmatpush.msra.mxu0 %v10502
  %11049 = vmatpush.msra.mxu0 %v10501
  %11050 = vmatpush.msra.mxu0 %v10500
  %11051 = vmatmul.f32.gmra.mxu0 %v10519
  %v11052 = vpop.f32.mrf.mxu0
  %v11053 = vadd.f32 %v10988, %v11052
  %11054 = vmatmul.f32.gmra.mxu0 %v10523
  %v11055 = vpop.f32.mrf.mxu0
  %v11056 = vadd.f32 %v10991, %v11055
  %11057 = vmatmul.f32.gmra.mxu0 %v10527
  %v11058 = vpop.f32.mrf.mxu0
  %v11059 = vadd.f32 %v10994, %v11058
  %11060 = vmatmul.f32.gmra.mxu0 %v10531
  %v11061 = vpop.f32.mrf.mxu0
  %v11062 = vadd.f32 %v10997, %v11061
  %11063 = vmatmul.f32.gmra.mxu0 %v10535
  %v11064 = vpop.f32.mrf.mxu0
  %v11065 = vadd.f32 %v11000, %v11064
  %11066 = vmatmul.f32.gmra.mxu0 %v10539
  %v11067 = vpop.f32.mrf.mxu0
  %v11068 = vadd.f32 %v11003, %v11067
  %11069 = vmatmul.f32.gmra.mxu0 %v10543
  %v11070 = vpop.f32.mrf.mxu0
  %v11071 = vadd.f32 %v11006, %v11070
  %11072 = vmatmul.f32.gmra.mxu0 %v10547
  %v11073 = vpop.f32.mrf.mxu0
  %v11074 = vadd.f32 %v11009, %v11073
  %11075 = vmatmul.f32.gmra.mxu0 %v10551
  %v11076 = vpop.f32.mrf.mxu0
  %v11077 = vadd.f32 %v11012, %v11076
  %11078 = vmatmul.f32.gmra.mxu0 %v10555
  %v11079 = vpop.f32.mrf.mxu0
  %v11080 = vadd.f32 %v11015, %v11079
  %11081 = vmatmul.f32.gmra.mxu0 %v10559
  %v11082 = vpop.f32.mrf.mxu0
  %v11083 = vadd.f32 %v11018, %v11082
  %11084 = vmatmul.f32.gmra.mxu0 %v10563
  %v11085 = vpop.f32.mrf.mxu0
  %v11086 = vadd.f32 %v11021, %v11085
  %11087 = vmatmul.f32.gmra.mxu0 %v10567
  %v11088 = vpop.f32.mrf.mxu0
  %v11089 = vadd.f32 %v11024, %v11088
  %11090 = vmatmul.f32.gmra.mxu0 %v10571
  %v11091 = vpop.f32.mrf.mxu0
  %v11092 = vadd.f32 %v11027, %v11091
  %11093 = vmatmul.f32.gmra.mxu0 %v10575
  %v11094 = vpop.f32.mrf.mxu0
  %v11095 = vadd.f32 %v11030, %v11094
  %11096 = vmatmul.f32.gmra.mxu0 %v10579
  %v11097 = vpop.f32.mrf.mxu0
  %v11098 = vadd.f32 %v11033, %v11097
  %11099 = vdwg.mxu0
  %v11100 = vmul.f32 %v10516, %v9537
  %v11101 = vmul.f32 %v10517, %v9538
  %v11102 = vmul.f32 %v10518, %v9539
  %v11103 = vmul.f32 %v10519, %v9540
  %v11104 = vmul.f32 %v10520, %v9541
  %v11105 = vmul.f32 %v10521, %v9542
  %v11106 = vmul.f32 %v10522, %v9543
  %v11107 = vmul.f32 %v10523, %v9544
  %v11108 = vmul.f32 %v10524, %v9545
  %v11109 = vmul.f32 %v10525, %v9546
  %v11110 = vmul.f32 %v10526, %v9547
  %v11111 = vmul.f32 %v10527, %v9548
  %v11112 = vmul.f32 %v10528, %v9549
  %v11113 = vmul.f32 %v10529, %v9550
  %v11114 = vmul.f32 %v10530, %v9551
  %v11115 = vmul.f32 %v10531, %v9552
  %v11116 = vmul.f32 %v10532, %v9553
  %v11117 = vmul.f32 %v10533, %v9554
  %v11118 = vmul.f32 %v10534, %v9555
  %v11119 = vmul.f32 %v10535, %v9556
  %v11120 = vmul.f32 %v10536, %v9557
  %v11121 = vmul.f32 %v10537, %v9558
  %v11122 = vmul.f32 %v10538, %v9559
  %v11123 = vmul.f32 %v10539, %v9560
  %v11124 = vmul.f32 %v10540, %v9561
  %v11125 = vmul.f32 %v10541, %v9562
  %v11126 = vmul.f32 %v10542, %v9563
  %v11127 = vmul.f32 %v10543, %v9564
  %v11128 = vmul.f32 %v10544, %v9565
  %v11129 = vmul.f32 %v10545, %v9566
  %v11130 = vmul.f32 %v10546, %v9567
  %v11131 = vmul.f32 %v10547, %v9568
  %v11132 = vmul.f32 %v10548, %v9569
  %v11133 = vmul.f32 %v10549, %v9570
  %v11134 = vmul.f32 %v10550, %v9571
  %v11135 = vmul.f32 %v10551, %v9572
  %v11136 = vmul.f32 %v10552, %v9573
  %v11137 = vmul.f32 %v10553, %v9574
  %v11138 = vmul.f32 %v10554, %v9575
  %v11139 = vmul.f32 %v10555, %v9576
  %v11140 = vmul.f32 %v10556, %v9577
  %v11141 = vmul.f32 %v10557, %v9578
  %v11142 = vmul.f32 %v10558, %v9579
  %v11143 = vmul.f32 %v10559, %v9580
  %v11144 = vmul.f32 %v10560, %v9581
  %v11145 = vmul.f32 %v10561, %v9582
  %v11146 = vmul.f32 %v10562, %v9583
  %v11147 = vmul.f32 %v10563, %v9584
  %v11148 = vmul.f32 %v10564, %v9585
  %v11149 = vmul.f32 %v10565, %v9586
  %v11150 = vmul.f32 %v10566, %v9587
  %v11151 = vmul.f32 %v10567, %v9588
  %v11152 = vmul.f32 %v10568, %v9589
  %v11153 = vmul.f32 %v10569, %v9590
  %v11154 = vmul.f32 %v10570, %v9591
  %v11155 = vmul.f32 %v10571, %v9592
  %v11156 = vmul.f32 %v10572, %v9593
  %v11157 = vmul.f32 %v10573, %v9594
  %v11158 = vmul.f32 %v10574, %v9595
  %v11159 = vmul.f32 %v10575, %v9596
  %v11160 = vmul.f32 %v10576, %v9597
  %v11161 = vmul.f32 %v10577, %v9598
  %v11162 = vmul.f32 %v10578, %v9599
  %v11163 = vmul.f32 %v10579, %v9600
  %11164 = vmatpush.msra.mxu0 %v10467
  %11165 = vmatpush.msra.mxu0 %v10466
  %11166 = vmatpush.msra.mxu0 %v10465
  %11167 = vmatpush.msra.mxu0 %v10464
  %11168 = vmatpush.msra.mxu0 %v10463
  %11169 = vmatpush.msra.mxu0 %v10462
  %11170 = vmatpush.msra.mxu0 %v10461
  %11171 = vmatpush.msra.mxu0 %v10460
  %11172 = vmatpush.msra.mxu0 %v10459
  %11173 = vmatpush.msra.mxu0 %v10458
  %11174 = vmatpush.msra.mxu0 %v10457
  %11175 = vmatpush.msra.mxu0 %v10456
  %11176 = vmatpush.msra.mxu0 %v10455
  %11177 = vmatpush.msra.mxu0 %v10454
  %11178 = vmatpush.msra.mxu0 %v10453
  %11179 = vmatpush.msra.mxu0 %v10452
  %11180 = vmatmul.f32.gmra.mxu0 %v11100
  %v11181 = vpop.f32.mrf.mxu0
  %v11182 = vadd.f32 0.0, %v11181
  %11183 = vmatmul.f32.gmra.mxu0 %v11104
  %v11184 = vpop.f32.mrf.mxu0
  %v11185 = vadd.f32 0.0, %v11184
  %11186 = vmatmul.f32.gmra.mxu0 %v11108
  %v11187 = vpop.f32.mrf.mxu0
  %v11188 = vadd.f32 0.0, %v11187
  %11189 = vmatmul.f32.gmra.mxu0 %v11112
  %v11190 = vpop.f32.mrf.mxu0
  %v11191 = vadd.f32 0.0, %v11190
  %11192 = vmatmul.f32.gmra.mxu0 %v11116
  %v11193 = vpop.f32.mrf.mxu0
  %v11194 = vadd.f32 0.0, %v11193
  %11195 = vmatmul.f32.gmra.mxu0 %v11120
  %v11196 = vpop.f32.mrf.mxu0
  %v11197 = vadd.f32 0.0, %v11196
  %11198 = vmatmul.f32.gmra.mxu0 %v11124
  %v11199 = vpop.f32.mrf.mxu0
  %v11200 = vadd.f32 0.0, %v11199
  %11201 = vmatmul.f32.gmra.mxu0 %v11128
  %v11202 = vpop.f32.mrf.mxu0
  %v11203 = vadd.f32 0.0, %v11202
  %11204 = vmatmul.f32.gmra.mxu0 %v11132
  %v11205 = vpop.f32.mrf.mxu0
  %v11206 = vadd.f32 0.0, %v11205
  %11207 = vmatmul.f32.gmra.mxu0 %v11136
  %v11208 = vpop.f32.mrf.mxu0
  %v11209 = vadd.f32 0.0, %v11208
  %11210 = vmatmul.f32.gmra.mxu0 %v11140
  %v11211 = vpop.f32.mrf.mxu0
  %v11212 = vadd.f32 0.0, %v11211
  %11213 = vmatmul.f32.gmra.mxu0 %v11144
  %v11214 = vpop.f32.mrf.mxu0
  %v11215 = vadd.f32 0.0, %v11214
  %11216 = vmatmul.f32.gmra.mxu0 %v11148
  %v11217 = vpop.f32.mrf.mxu0
  %v11218 = vadd.f32 0.0, %v11217
  %11219 = vmatmul.f32.gmra.mxu0 %v11152
  %v11220 = vpop.f32.mrf.mxu0
  %v11221 = vadd.f32 0.0, %v11220
  %11222 = vmatmul.f32.gmra.mxu0 %v11156
  %v11223 = vpop.f32.mrf.mxu0
  %v11224 = vadd.f32 0.0, %v11223
  %11225 = vmatmul.f32.gmra.mxu0 %v11160
  %v11226 = vpop.f32.mrf.mxu0
  %v11227 = vadd.f32 0.0, %v11226
  %11228 = vdwg.mxu0
  %11229 = vmatpush.msra.mxu0 %v10483
  %11230 = vmatpush.msra.mxu0 %v10482
  %11231 = vmatpush.msra.mxu0 %v10481
  %11232 = vmatpush.msra.mxu0 %v10480
  %11233 = vmatpush.msra.mxu0 %v10479
  %11234 = vmatpush.msra.mxu0 %v10478
  %11235 = vmatpush.msra.mxu0 %v10477
  %11236 = vmatpush.msra.mxu0 %v10476
  %11237 = vmatpush.msra.mxu0 %v10475
  %11238 = vmatpush.msra.mxu0 %v10474
  %11239 = vmatpush.msra.mxu0 %v10473
  %11240 = vmatpush.msra.mxu0 %v10472
  %11241 = vmatpush.msra.mxu0 %v10471
  %11242 = vmatpush.msra.mxu0 %v10470
  %11243 = vmatpush.msra.mxu0 %v10469
  %11244 = vmatpush.msra.mxu0 %v10468
  %11245 = vmatmul.f32.gmra.mxu0 %v11101
  %v11246 = vpop.f32.mrf.mxu0
  %v11247 = vadd.f32 %v11182, %v11246
  %11248 = vmatmul.f32.gmra.mxu0 %v11105
  %v11249 = vpop.f32.mrf.mxu0
  %v11250 = vadd.f32 %v11185, %v11249
  %11251 = vmatmul.f32.gmra.mxu0 %v11109
  %v11252 = vpop.f32.mrf.mxu0
  %v11253 = vadd.f32 %v11188, %v11252
  %11254 = vmatmul.f32.gmra.mxu0 %v11113
  %v11255 = vpop.f32.mrf.mxu0
  %v11256 = vadd.f32 %v11191, %v11255
  %11257 = vmatmul.f32.gmra.mxu0 %v11117
  %v11258 = vpop.f32.mrf.mxu0
  %v11259 = vadd.f32 %v11194, %v11258
  %11260 = vmatmul.f32.gmra.mxu0 %v11121
  %v11261 = vpop.f32.mrf.mxu0
  %v11262 = vadd.f32 %v11197, %v11261
  %11263 = vmatmul.f32.gmra.mxu0 %v11125
  %v11264 = vpop.f32.mrf.mxu0
  %v11265 = vadd.f32 %v11200, %v11264
  %11266 = vmatmul.f32.gmra.mxu0 %v11129
  %v11267 = vpop.f32.mrf.mxu0
  %v11268 = vadd.f32 %v11203, %v11267
  %11269 = vmatmul.f32.gmra.mxu0 %v11133
  %v11270 = vpop.f32.mrf.mxu0
  %v11271 = vadd.f32 %v11206, %v11270
  %11272 = vmatmul.f32.gmra.mxu0 %v11137
  %v11273 = vpop.f32.mrf.mxu0
  %v11274 = vadd.f32 %v11209, %v11273
  %11275 = vmatmul.f32.gmra.mxu0 %v11141
  %v11276 = vpop.f32.mrf.mxu0
  %v11277 = vadd.f32 %v11212, %v11276
  %11278 = vmatmul.f32.gmra.mxu0 %v11145
  %v11279 = vpop.f32.mrf.mxu0
  %v11280 = vadd.f32 %v11215, %v11279
  %11281 = vmatmul.f32.gmra.mxu0 %v11149
  %v11282 = vpop.f32.mrf.mxu0
  %v11283 = vadd.f32 %v11218, %v11282
  %11284 = vmatmul.f32.gmra.mxu0 %v11153
  %v11285 = vpop.f32.mrf.mxu0
  %v11286 = vadd.f32 %v11221, %v11285
  %11287 = vmatmul.f32.gmra.mxu0 %v11157
  %v11288 = vpop.f32.mrf.mxu0
  %v11289 = vadd.f32 %v11224, %v11288
  %11290 = vmatmul.f32.gmra.mxu0 %v11161
  %v11291 = vpop.f32.mrf.mxu0
  %v11292 = vadd.f32 %v11227, %v11291
  %11293 = vdwg.mxu0
  %11294 = vmatpush.msra.mxu0 %v10499
  %11295 = vmatpush.msra.mxu0 %v10498
  %11296 = vmatpush.msra.mxu0 %v10497
  %11297 = vmatpush.msra.mxu0 %v10496
  %11298 = vmatpush.msra.mxu0 %v10495
  %11299 = vmatpush.msra.mxu0 %v10494
  %11300 = vmatpush.msra.mxu0 %v10493
  %11301 = vmatpush.msra.mxu0 %v10492
  %11302 = vmatpush.msra.mxu0 %v10491
  %11303 = vmatpush.msra.mxu0 %v10490
  %11304 = vmatpush.msra.mxu0 %v10489
  %11305 = vmatpush.msra.mxu0 %v10488
  %11306 = vmatpush.msra.mxu0 %v10487
  %11307 = vmatpush.msra.mxu0 %v10486
  %11308 = vmatpush.msra.mxu0 %v10485
  %11309 = vmatpush.msra.mxu0 %v10484
  %11310 = vmatmul.f32.gmra.mxu0 %v11102
  %v11311 = vpop.f32.mrf.mxu0
  %v11312 = vadd.f32 %v11247, %v11311
  %11313 = vmatmul.f32.gmra.mxu0 %v11106
  %v11314 = vpop.f32.mrf.mxu0
  %v11315 = vadd.f32 %v11250, %v11314
  %11316 = vmatmul.f32.gmra.mxu0 %v11110
  %v11317 = vpop.f32.mrf.mxu0
  %v11318 = vadd.f32 %v11253, %v11317
  %11319 = vmatmul.f32.gmra.mxu0 %v11114
  %v11320 = vpop.f32.mrf.mxu0
  %v11321 = vadd.f32 %v11256, %v11320
  %11322 = vmatmul.f32.gmra.mxu0 %v11118
  %v11323 = vpop.f32.mrf.mxu0
  %v11324 = vadd.f32 %v11259, %v11323
  %11325 = vmatmul.f32.gmra.mxu0 %v11122
  %v11326 = vpop.f32.mrf.mxu0
  %v11327 = vadd.f32 %v11262, %v11326
  %11328 = vmatmul.f32.gmra.mxu0 %v11126
  %v11329 = vpop.f32.mrf.mxu0
  %v11330 = vadd.f32 %v11265, %v11329
  %11331 = vmatmul.f32.gmra.mxu0 %v11130
  %v11332 = vpop.f32.mrf.mxu0
  %v11333 = vadd.f32 %v11268, %v11332
  %11334 = vmatmul.f32.gmra.mxu0 %v11134
  %v11335 = vpop.f32.mrf.mxu0
  %v11336 = vadd.f32 %v11271, %v11335
  %11337 = vmatmul.f32.gmra.mxu0 %v11138
  %v11338 = vpop.f32.mrf.mxu0
  %v11339 = vadd.f32 %v11274, %v11338
  %11340 = vmatmul.f32.gmra.mxu0 %v11142
  %v11341 = vpop.f32.mrf.mxu0
  %v11342 = vadd.f32 %v11277, %v11341
  %11343 = vmatmul.f32.gmra.mxu0 %v11146
  %v11344 = vpop.f32.mrf.mxu0
  %v11345 = vadd.f32 %v11280, %v11344
  %11346 = vmatmul.f32.gmra.mxu0 %v11150
  %v11347 = vpop.f32.mrf.mxu0
  %v11348 = vadd.f32 %v11283, %v11347
  %11349 = vmatmul.f32.gmra.mxu0 %v11154
  %v11350 = vpop.f32.mrf.mxu0
  %v11351 = vadd.f32 %v11286, %v11350
  %11352 = vmatmul.f32.gmra.mxu0 %v11158
  %v11353 = vpop.f32.mrf.mxu0
  %v11354 = vadd.f32 %v11289, %v11353
  %11355 = vmatmul.f32.gmra.mxu0 %v11162
  %v11356 = vpop.f32.mrf.mxu0
  %v11357 = vadd.f32 %v11292, %v11356
  %11358 = vdwg.mxu0
  %11359 = vmatpush.msra.mxu0 %v10515
  %11360 = vmatpush.msra.mxu0 %v10514
  %11361 = vmatpush.msra.mxu0 %v10513
  %11362 = vmatpush.msra.mxu0 %v10512
  %11363 = vmatpush.msra.mxu0 %v10511
  %11364 = vmatpush.msra.mxu0 %v10510
  %11365 = vmatpush.msra.mxu0 %v10509
  %11366 = vmatpush.msra.mxu0 %v10508
  %11367 = vmatpush.msra.mxu0 %v10507
  %11368 = vmatpush.msra.mxu0 %v10506
  %11369 = vmatpush.msra.mxu0 %v10505
  %11370 = vmatpush.msra.mxu0 %v10504
  %11371 = vmatpush.msra.mxu0 %v10503
  %11372 = vmatpush.msra.mxu0 %v10502
  %11373 = vmatpush.msra.mxu0 %v10501
  %11374 = vmatpush.msra.mxu0 %v10500
  %11375 = vmatmul.f32.gmra.mxu0 %v11103
  %v11376 = vpop.f32.mrf.mxu0
  %v11377 = vadd.f32 %v11312, %v11376
  %11378 = vmatmul.f32.gmra.mxu0 %v11107
  %v11379 = vpop.f32.mrf.mxu0
  %v11380 = vadd.f32 %v11315, %v11379
  %11381 = vmatmul.f32.gmra.mxu0 %v11111
  %v11382 = vpop.f32.mrf.mxu0
  %v11383 = vadd.f32 %v11318, %v11382
  %11384 = vmatmul.f32.gmra.mxu0 %v11115
  %v11385 = vpop.f32.mrf.mxu0
  %v11386 = vadd.f32 %v11321, %v11385
  %11387 = vmatmul.f32.gmra.mxu0 %v11119
  %v11388 = vpop.f32.mrf.mxu0
  %v11389 = vadd.f32 %v11324, %v11388
  %11390 = vmatmul.f32.gmra.mxu0 %v11123
  %v11391 = vpop.f32.mrf.mxu0
  %v11392 = vadd.f32 %v11327, %v11391
  %11393 = vmatmul.f32.gmra.mxu0 %v11127
  %v11394 = vpop.f32.mrf.mxu0
  %v11395 = vadd.f32 %v11330, %v11394
  %11396 = vmatmul.f32.gmra.mxu0 %v11131
  %v11397 = vpop.f32.mrf.mxu0
  %v11398 = vadd.f32 %v11333, %v11397
  %11399 = vmatmul.f32.gmra.mxu0 %v11135
  %v11400 = vpop.f32.mrf.mxu0
  %v11401 = vadd.f32 %v11336, %v11400
  %11402 = vmatmul.f32.gmra.mxu0 %v11139
  %v11403 = vpop.f32.mrf.mxu0
  %v11404 = vadd.f32 %v11339, %v11403
  %11405 = vmatmul.f32.gmra.mxu0 %v11143
  %v11406 = vpop.f32.mrf.mxu0
  %v11407 = vadd.f32 %v11342, %v11406
  %11408 = vmatmul.f32.gmra.mxu0 %v11147
  %v11409 = vpop.f32.mrf.mxu0
  %v11410 = vadd.f32 %v11345, %v11409
  %11411 = vmatmul.f32.gmra.mxu0 %v11151
  %v11412 = vpop.f32.mrf.mxu0
  %v11413 = vadd.f32 %v11348, %v11412
  %11414 = vmatmul.f32.gmra.mxu0 %v11155
  %v11415 = vpop.f32.mrf.mxu0
  %v11416 = vadd.f32 %v11351, %v11415
  %11417 = vmatmul.f32.gmra.mxu0 %v11159
  %v11418 = vpop.f32.mrf.mxu0
  %v11419 = vadd.f32 %v11354, %v11418
  %11420 = vmatmul.f32.gmra.mxu0 %v11163
  %v11421 = vpop.f32.mrf.mxu0
  %v11422 = vadd.f32 %v11357, %v11421
  %11423 = vdwg.mxu0
  %v11424 = vrcp.pop %v10793
  %v11425 = vrcp.pop %v10796
  %v11426 = vrcp.pop %v10799
  %v11427 = vrcp.pop %v10802
  %v11428 = vrcp.pop %v10805
  %v11429 = vrcp.pop %v10808
  %v11430 = vrcp.pop %v10811
  %v11431 = vrcp.pop %v10814
  %v11432 = vrcp.pop %v10817
  %v11433 = vrcp.pop %v10820
  %v11434 = vrcp.pop %v10823
  %v11435 = vrcp.pop %v10826
  %v11436 = vrcp.pop %v10829
  %v11437 = vrcp.pop %v10832
  %v11438 = vrcp.pop %v10835
  %v11439 = vrcp.pop %v10838
  %v11440 = vmul.f32 %v11053, %v11424
  %v11441 = vmul.f32 %v11056, %v11425
  %v11442 = vmul.f32 %v11059, %v11426
  %v11443 = vmul.f32 %v11062, %v11427
  %v11444 = vmul.f32 %v11065, %v11428
  %v11445 = vmul.f32 %v11068, %v11429
  %v11446 = vmul.f32 %v11071, %v11430
  %v11447 = vmul.f32 %v11074, %v11431
  %v11448 = vmul.f32 %v11077, %v11432
  %v11449 = vmul.f32 %v11080, %v11433
  %v11450 = vmul.f32 %v11083, %v11434
  %v11451 = vmul.f32 %v11086, %v11435
  %v11452 = vmul.f32 %v11089, %v11436
  %v11453 = vmul.f32 %v11092, %v11437
  %v11454 = vmul.f32 %v11095, %v11438
  %v11455 = vmul.f32 %v11098, %v11439
  %v11456 = vmul.f32 %v11377, %v11424
  %v11457 = vmul.f32 %v11380, %v11425
  %v11458 = vmul.f32 %v11383, %v11426
  %v11459 = vmul.f32 %v11386, %v11427
  %v11460 = vmul.f32 %v11389, %v11428
  %v11461 = vmul.f32 %v11392, %v11429
  %v11462 = vmul.f32 %v11395, %v11430
  %v11463 = vmul.f32 %v11398, %v11431
  %v11464 = vmul.f32 %v11401, %v11432
  %v11465 = vmul.f32 %v11404, %v11433
  %v11466 = vmul.f32 %v11407, %v11434
  %v11467 = vmul.f32 %v11410, %v11435
  %v11468 = vmul.f32 %v11413, %v11436
  %v11469 = vmul.f32 %v11416, %v11437
  %v11470 = vmul.f32 %v11419, %v11438
  %v11471 = vmul.f32 %v11422, %v11439
  %v11472 = vmul.f32 %v11440, %v11440
  %v11473 = vmul.f32 %v11441, %v11441
  %v11474 = vmul.f32 %v11442, %v11442
  %v11475 = vmul.f32 %v11443, %v11443
  %v11476 = vmul.f32 %v11444, %v11444
  %v11477 = vmul.f32 %v11445, %v11445
  %v11478 = vmul.f32 %v11446, %v11446
  %v11479 = vmul.f32 %v11447, %v11447
  %v11480 = vmul.f32 %v11448, %v11448
  %v11481 = vmul.f32 %v11449, %v11449
  %v11482 = vmul.f32 %v11450, %v11450
  %v11483 = vmul.f32 %v11451, %v11451
  %v11484 = vmul.f32 %v11452, %v11452
  %v11485 = vmul.f32 %v11453, %v11453
  %v11486 = vmul.f32 %v11454, %v11454
  %v11487 = vmul.f32 %v11455, %v11455
  %v11488 = vsub.f32 %v11456, %v11472
  %v11489 = vsub.f32 %v11457, %v11473
  %v11490 = vsub.f32 %v11458, %v11474
  %v11491 = vsub.f32 %v11459, %v11475
  %v11492 = vsub.f32 %v11460, %v11476
  %v11493 = vsub.f32 %v11461, %v11477
  %v11494 = vsub.f32 %v11462, %v11478
  %v11495 = vsub.f32 %v11463, %v11479
  %v11496 = vsub.f32 %v11464, %v11480
  %v11497 = vsub.f32 %v11465, %v11481
  %v11498 = vsub.f32 %v11466, %v11482
  %v11499 = vsub.f32 %v11467, %v11483
  %v11500 = vsub.f32 %v11468, %v11484
  %v11501 = vsub.f32 %v11469, %v11485
  %v11502 = vsub.f32 %v11470, %v11486
  %v11503 = vsub.f32 %v11471, %v11487
  %v11504 = vmax.f32 %v11488, 1e-05
  %v11505 = vmax.f32 %v11489, 1e-05
  %v11506 = vmax.f32 %v11490, 1e-05
  %v11507 = vmax.f32 %v11491, 1e-05
  %v11508 = vmax.f32 %v11492, 1e-05
  %v11509 = vmax.f32 %v11493, 1e-05
  %v11510 = vmax.f32 %v11494, 1e-05
  %v11511 = vmax.f32 %v11495, 1e-05
  %v11512 = vmax.f32 %v11496, 1e-05
  %v11513 = vmax.f32 %v11497, 1e-05
  %v11514 = vmax.f32 %v11498, 1e-05
  %v11515 = vmax.f32 %v11499, 1e-05
  %v11516 = vmax.f32 %v11500, 1e-05
  %v11517 = vmax.f32 %v11501, 1e-05
  %v11518 = vmax.f32 %v11502, 1e-05
  %v11519 = vmax.f32 %v11503, 1e-05
  %v11520 = vrsqrt.pop %v11504
  %v11521 = vmul.f32 %v11520, %v11504
  %v11522 = vmul.f32 %v11521, %v11520
  %v11523 = vmul.f32 0.5, %v11522
  %v11524 = vsub.f32 1.5, %v11523
  %v11525 = vmul.f32 %v11520, %v11524
  %v11526 = vmul.f32 %v11504, %v11525
  %vm11527 = vcmp.eq.f32.partialorder %v11504, inf
  %v11528 = vsel %vm11527, %v11504, %v11526
  %vm11529 = vcmp.eq.f32.partialorder %v11504, 0.0
  %v11530 = vand.u32 %v11504, 2147483648
  %v11531 = vsel %vm11529, %v11530, %v11528
  %v11532 = vrsqrt.pop %v11505
  %v11533 = vmul.f32 %v11532, %v11505
  %v11534 = vmul.f32 %v11533, %v11532
  %v11535 = vmul.f32 0.5, %v11534
  %v11536 = vsub.f32 1.5, %v11535
  %v11537 = vmul.f32 %v11532, %v11536
  %v11538 = vmul.f32 %v11505, %v11537
  %vm11539 = vcmp.eq.f32.partialorder %v11505, inf
  %v11540 = vsel %vm11539, %v11505, %v11538
  %vm11541 = vcmp.eq.f32.partialorder %v11505, 0.0
  %v11542 = vand.u32 %v11505, 2147483648
  %v11543 = vsel %vm11541, %v11542, %v11540
  %v11544 = vrsqrt.pop %v11506
  %v11545 = vmul.f32 %v11544, %v11506
  %v11546 = vmul.f32 %v11545, %v11544
  %v11547 = vmul.f32 0.5, %v11546
  %v11548 = vsub.f32 1.5, %v11547
  %v11549 = vmul.f32 %v11544, %v11548
  %v11550 = vmul.f32 %v11506, %v11549
  %vm11551 = vcmp.eq.f32.partialorder %v11506, inf
  %v11552 = vsel %vm11551, %v11506, %v11550
  %vm11553 = vcmp.eq.f32.partialorder %v11506, 0.0
  %v11554 = vand.u32 %v11506, 2147483648
  %v11555 = vsel %vm11553, %v11554, %v11552
  %v11556 = vrsqrt.pop %v11507
  %v11557 = vmul.f32 %v11556, %v11507
  %v11558 = vmul.f32 %v11557, %v11556
  %v11559 = vmul.f32 0.5, %v11558
  %v11560 = vsub.f32 1.5, %v11559
  %v11561 = vmul.f32 %v11556, %v11560
  %v11562 = vmul.f32 %v11507, %v11561
  %vm11563 = vcmp.eq.f32.partialorder %v11507, inf
  %v11564 = vsel %vm11563, %v11507, %v11562
  %vm11565 = vcmp.eq.f32.partialorder %v11507, 0.0
  %v11566 = vand.u32 %v11507, 2147483648
  %v11567 = vsel %vm11565, %v11566, %v11564
  %v11568 = vrsqrt.pop %v11508
  %v11569 = vmul.f32 %v11568, %v11508
  %v11570 = vmul.f32 %v11569, %v11568
  %v11571 = vmul.f32 0.5, %v11570
  %v11572 = vsub.f32 1.5, %v11571
  %v11573 = vmul.f32 %v11568, %v11572
  %v11574 = vmul.f32 %v11508, %v11573
  %vm11575 = vcmp.eq.f32.partialorder %v11508, inf
  %v11576 = vsel %vm11575, %v11508, %v11574
  %vm11577 = vcmp.eq.f32.partialorder %v11508, 0.0
  %v11578 = vand.u32 %v11508, 2147483648
  %v11579 = vsel %vm11577, %v11578, %v11576
  %v11580 = vrsqrt.pop %v11509
  %v11581 = vmul.f32 %v11580, %v11509
  %v11582 = vmul.f32 %v11581, %v11580
  %v11583 = vmul.f32 0.5, %v11582
  %v11584 = vsub.f32 1.5, %v11583
  %v11585 = vmul.f32 %v11580, %v11584
  %v11586 = vmul.f32 %v11509, %v11585
  %vm11587 = vcmp.eq.f32.partialorder %v11509, inf
  %v11588 = vsel %vm11587, %v11509, %v11586
  %vm11589 = vcmp.eq.f32.partialorder %v11509, 0.0
  %v11590 = vand.u32 %v11509, 2147483648
  %v11591 = vsel %vm11589, %v11590, %v11588
  %v11592 = vrsqrt.pop %v11510
  %v11593 = vmul.f32 %v11592, %v11510
  %v11594 = vmul.f32 %v11593, %v11592
  %v11595 = vmul.f32 0.5, %v11594
  %v11596 = vsub.f32 1.5, %v11595
  %v11597 = vmul.f32 %v11592, %v11596
  %v11598 = vmul.f32 %v11510, %v11597
  %vm11599 = vcmp.eq.f32.partialorder %v11510, inf
  %v11600 = vsel %vm11599, %v11510, %v11598
  %vm11601 = vcmp.eq.f32.partialorder %v11510, 0.0
  %v11602 = vand.u32 %v11510, 2147483648
  %v11603 = vsel %vm11601, %v11602, %v11600
  %v11604 = vrsqrt.pop %v11511
  %v11605 = vmul.f32 %v11604, %v11511
  %v11606 = vmul.f32 %v11605, %v11604
  %v11607 = vmul.f32 0.5, %v11606
  %v11608 = vsub.f32 1.5, %v11607
  %v11609 = vmul.f32 %v11604, %v11608
  %v11610 = vmul.f32 %v11511, %v11609
  %vm11611 = vcmp.eq.f32.partialorder %v11511, inf
  %v11612 = vsel %vm11611, %v11511, %v11610
  %vm11613 = vcmp.eq.f32.partialorder %v11511, 0.0
  %v11614 = vand.u32 %v11511, 2147483648
  %v11615 = vsel %vm11613, %v11614, %v11612
  %v11616 = vrsqrt.pop %v11512
  %v11617 = vmul.f32 %v11616, %v11512
  %v11618 = vmul.f32 %v11617, %v11616
  %v11619 = vmul.f32 0.5, %v11618
  %v11620 = vsub.f32 1.5, %v11619
  %v11621 = vmul.f32 %v11616, %v11620
  %v11622 = vmul.f32 %v11512, %v11621
  %vm11623 = vcmp.eq.f32.partialorder %v11512, inf
  %v11624 = vsel %vm11623, %v11512, %v11622
  %vm11625 = vcmp.eq.f32.partialorder %v11512, 0.0
  %v11626 = vand.u32 %v11512, 2147483648
  %v11627 = vsel %vm11625, %v11626, %v11624
  %v11628 = vrsqrt.pop %v11513
  %v11629 = vmul.f32 %v11628, %v11513
  %v11630 = vmul.f32 %v11629, %v11628
  %v11631 = vmul.f32 0.5, %v11630
  %v11632 = vsub.f32 1.5, %v11631
  %v11633 = vmul.f32 %v11628, %v11632
  %v11634 = vmul.f32 %v11513, %v11633
  %vm11635 = vcmp.eq.f32.partialorder %v11513, inf
  %v11636 = vsel %vm11635, %v11513, %v11634
  %vm11637 = vcmp.eq.f32.partialorder %v11513, 0.0
  %v11638 = vand.u32 %v11513, 2147483648
  %v11639 = vsel %vm11637, %v11638, %v11636
  %v11640 = vrsqrt.pop %v11514
  %v11641 = vmul.f32 %v11640, %v11514
  %v11642 = vmul.f32 %v11641, %v11640
  %v11643 = vmul.f32 0.5, %v11642
  %v11644 = vsub.f32 1.5, %v11643
  %v11645 = vmul.f32 %v11640, %v11644
  %v11646 = vmul.f32 %v11514, %v11645
  %vm11647 = vcmp.eq.f32.partialorder %v11514, inf
  %v11648 = vsel %vm11647, %v11514, %v11646
  %vm11649 = vcmp.eq.f32.partialorder %v11514, 0.0
  %v11650 = vand.u32 %v11514, 2147483648
  %v11651 = vsel %vm11649, %v11650, %v11648
  %v11652 = vrsqrt.pop %v11515
  %v11653 = vmul.f32 %v11652, %v11515
  %v11654 = vmul.f32 %v11653, %v11652
  %v11655 = vmul.f32 0.5, %v11654
  %v11656 = vsub.f32 1.5, %v11655
  %v11657 = vmul.f32 %v11652, %v11656
  %v11658 = vmul.f32 %v11515, %v11657
  %vm11659 = vcmp.eq.f32.partialorder %v11515, inf
  %v11660 = vsel %vm11659, %v11515, %v11658
  %vm11661 = vcmp.eq.f32.partialorder %v11515, 0.0
  %v11662 = vand.u32 %v11515, 2147483648
  %v11663 = vsel %vm11661, %v11662, %v11660
  %v11664 = vrsqrt.pop %v11516
  %v11665 = vmul.f32 %v11664, %v11516
  %v11666 = vmul.f32 %v11665, %v11664
  %v11667 = vmul.f32 0.5, %v11666
  %v11668 = vsub.f32 1.5, %v11667
  %v11669 = vmul.f32 %v11664, %v11668
  %v11670 = vmul.f32 %v11516, %v11669
  %vm11671 = vcmp.eq.f32.partialorder %v11516, inf
  %v11672 = vsel %vm11671, %v11516, %v11670
  %vm11673 = vcmp.eq.f32.partialorder %v11516, 0.0
  %v11674 = vand.u32 %v11516, 2147483648
  %v11675 = vsel %vm11673, %v11674, %v11672
  %v11676 = vrsqrt.pop %v11517
  %v11677 = vmul.f32 %v11676, %v11517
  %v11678 = vmul.f32 %v11677, %v11676
  %v11679 = vmul.f32 0.5, %v11678
  %v11680 = vsub.f32 1.5, %v11679
  %v11681 = vmul.f32 %v11676, %v11680
  %v11682 = vmul.f32 %v11517, %v11681
  %vm11683 = vcmp.eq.f32.partialorder %v11517, inf
  %v11684 = vsel %vm11683, %v11517, %v11682
  %vm11685 = vcmp.eq.f32.partialorder %v11517, 0.0
  %v11686 = vand.u32 %v11517, 2147483648
  %v11687 = vsel %vm11685, %v11686, %v11684
  %v11688 = vrsqrt.pop %v11518
  %v11689 = vmul.f32 %v11688, %v11518
  %v11690 = vmul.f32 %v11689, %v11688
  %v11691 = vmul.f32 0.5, %v11690
  %v11692 = vsub.f32 1.5, %v11691
  %v11693 = vmul.f32 %v11688, %v11692
  %v11694 = vmul.f32 %v11518, %v11693
  %vm11695 = vcmp.eq.f32.partialorder %v11518, inf
  %v11696 = vsel %vm11695, %v11518, %v11694
  %vm11697 = vcmp.eq.f32.partialorder %v11518, 0.0
  %v11698 = vand.u32 %v11518, 2147483648
  %v11699 = vsel %vm11697, %v11698, %v11696
  %v11700 = vrsqrt.pop %v11519
  %v11701 = vmul.f32 %v11700, %v11519
  %v11702 = vmul.f32 %v11701, %v11700
  %v11703 = vmul.f32 0.5, %v11702
  %v11704 = vsub.f32 1.5, %v11703
  %v11705 = vmul.f32 %v11700, %v11704
  %v11706 = vmul.f32 %v11519, %v11705
  %vm11707 = vcmp.eq.f32.partialorder %v11519, inf
  %v11708 = vsel %vm11707, %v11519, %v11706
  %vm11709 = vcmp.eq.f32.partialorder %v11519, 0.0
  %v11710 = vand.u32 %v11519, 2147483648
  %v11711 = vsel %vm11709, %v11710, %v11708
  %v11712 = vld [vmem:[%s8] sm:$0xff]
  %v11713 = vld [vmem:[%s8 + $0x8] sm:$0xff]
  %v11714 = vld [vmem:[%s8 + $0x10] sm:$0x3]
  %v11715 = vld [vmem:[%s8 + $0x18] sm:$0x3]
  %11716 = vmatpush.msra.mxu0 %v11711
  %11717 = vmatpush.msra.mxu0 %v11699
  %11718 = vmatpush.msra.mxu0 %v11687
  %11719 = vmatpush.msra.mxu0 %v11675
  %11720 = vmatpush.msra.mxu0 %v11663
  %11721 = vmatpush.msra.mxu0 %v11651
  %11722 = vmatpush.msra.mxu0 %v11639
  %11723 = vmatpush.msra.mxu0 %v11627
  %11724 = vmatpush.msra.mxu0 %v11615
  %11725 = vmatpush.msra.mxu0 %v11603
  %11726 = vmatpush.msra.mxu0 %v11591
  %11727 = vmatpush.msra.mxu0 %v11579
  %11728 = vmatpush.msra.mxu0 %v11567
  %11729 = vmatpush.msra.mxu0 %v11555
  %11730 = vmatpush.msra.mxu0 %v11543
  %11731 = vmatpush.msra.mxu0 %v11531
  %11732 = vmatmul.f32.gmra.mxu0 %v11713
  %v11733 = vpop.f32.mrf.mxu0
  %v11734 = vadd.f32 0.0, %v11733
  %11735 = vmatmul.f32.gmra.mxu0 %v11715
  %v11736 = vpop.f32.mrf.mxu0
  %v11737 = vadd.f32 0.0, %v11736
  %11738 = vdwg.mxu0
  %11739 = vmatpush.msra.mxu0 %v11455
  %11740 = vmatpush.msra.mxu0 %v11454
  %11741 = vmatpush.msra.mxu0 %v11453
  %11742 = vmatpush.msra.mxu0 %v11452
  %11743 = vmatpush.msra.mxu0 %v11451
  %11744 = vmatpush.msra.mxu0 %v11450
  %11745 = vmatpush.msra.mxu0 %v11449
  %11746 = vmatpush.msra.mxu0 %v11448
  %11747 = vmatpush.msra.mxu0 %v11447
  %11748 = vmatpush.msra.mxu0 %v11446
  %11749 = vmatpush.msra.mxu0 %v11445
  %11750 = vmatpush.msra.mxu0 %v11444
  %11751 = vmatpush.msra.mxu0 %v11443
  %11752 = vmatpush.msra.mxu0 %v11442
  %11753 = vmatpush.msra.mxu0 %v11441
  %11754 = vmatpush.msra.mxu0 %v11440
  %11755 = vmatmul.f32.gmra.mxu0 %v11712
  %v11756 = vpop.f32.mrf.mxu0
  %v11757 = vadd.f32 %v11734, %v11756
  %11758 = vmatmul.f32.gmra.mxu0 %v11714
  %v11759 = vpop.f32.mrf.mxu0
  %v11760 = vadd.f32 %v11737, %v11759
  %11761 = vdwg.mxu0
  %11762 = vset.pattern.permute.xlu0 7
  %11763 = vperm.xlu0 %11762, %v42
  %v11764 = vpop.permute.xlu0 %11763
  %11766 = vset.pattern.permute.xlu0 7
  %11767 = vperm.xlu0 %11766, %v43
  %v11768 = vpop.permute.xlu0 %11767
  %v11770 = vadd.f32 %v11757, %v11764
  %v11771 = vadd.f32 %v11760, %v11768
  %vm11772 = vcmask 64512
  %11773 = vst.msk [vmem:[%s12] sm:$0xff] %vm11772, %v11770
  %vm11774 = vcmask 58368
  %11775 = vst.msk [vmem:[%s12 + $0x8] sm:$0x3] %vm11774, %v11771
  // Predicated region
  $region50: #{xvec_forward.1} parent=0 // pred_check
    _
  $region51: #{xvec_forward.1} parent=0 // pred_check_branch
    %11777 = sbr.rel (0) target = $region53
  $region52: #{xvec_forward.1} parent=0 // pred_region
    _
  $region53: #{xvec_forward.1} parent=0 // pred_fallthru
    _
  // Predicated region
  $region54: #{xvec_forward.1} parent=0 // pred_check
    _
  $region55: #{xvec_forward.1} parent=0 // pred_check_branch
    %11779 = sbr.rel (0) target = $region57
  $region56: #{xvec_forward.1} parent=0 // pred_region
    _
  $region57: #{xvec_forward.1} parent=0 // pred_fallthru
    _

</llo_original>
